<compile_context>
chip_gen: v6e
topology: v6e:2x2x1
jax: 0.10.0
libtpu: 0.0.40
codegen_flags: <defaults>
</compile_context>

<pallas_src>
import functools
import numpy as np
import jax
import jax.numpy as jnp
from jax.experimental import pallas as pl
from jax.experimental.pallas import tpu as pltpu

# -------------------------- constants from the module --------------------------
NUM_T_STEPS = 2
REVERSE_SEED = 0
SSIGMA = 0.12
T_TOTAL = 100
DIFFUSION_STEPS = 1000

IMAGENET_MEAN = np.array([0.485, 0.456, 0.406], np.float32)
IMAGENET_STD = np.array([0.229, 0.224, 0.225], np.float32)

# MetricModel checkpoint scalars k, b (synthetic deterministic values).
METRIC_K = 1.0
METRIC_B = 54.5
DIAP = 83.22696685791016 - 25.780681610107422
BUCKET_B0 = 25.780681610107422
N_BUCKETS = 10

BN_EPS = 1e-5


def _pick(dim, candidates):
    """Largest candidate tile that divides `dim`, else the full dim."""
    for c in candidates:
        if c <= dim and dim % c == 0:
            return c
    return dim


# ------------------------------ Pallas kernels ---------------------------------
def _matmul_kernel(x_ref, w_ref, b_ref, o_ref, acc_ref, *, activation, compute_dtype):
    k = pl.program_id(2)

    @pl.when(k == 0)
    def _init():
        acc_ref[...] = jnp.zeros_like(acc_ref)

    acc_ref[...] += jnp.dot(
        x_ref[...].astype(compute_dtype),
        w_ref[...].astype(compute_dtype),
        preferred_element_type=jnp.float32,
    )

    @pl.when(k == pl.num_programs(2) - 1)
    def _finalize():
        y = acc_ref[...] + b_ref[...]
        if activation == "relu":
            y = jnp.maximum(y, 0.0)
        o_ref[...] = y.astype(o_ref.dtype)


def linear(x, w, b, activation=None):
    """y = act(x @ w + b), tiled over (M, N, K) with an f32 accumulator.

    If `w` is stored in bfloat16, the activation tile is cast to bf16 in-kernel
    so the MXU runs in bf16 with f32 accumulation.
    """
    M, K = x.shape
    K2, N = w.shape
    assert K == K2
    tm = _pick(M, (512, 256, 128, 64, 32, 16, 8))
    tn = _pick(N, (256, 128))
    tk = _pick(K, (512, 256, 128))
    compute_dtype = jnp.bfloat16 if w.dtype == jnp.bfloat16 else jnp.float32
    grid = (M // tm, N // tn, K // tk)
    return pl.pallas_call(
        functools.partial(_matmul_kernel, activation=activation,
                          compute_dtype=compute_dtype),
        out_shape=jax.ShapeDtypeStruct((M, N), jnp.float32),
        grid=grid,
        in_specs=[
            pl.BlockSpec((tm, tk), lambda i, j, k: (i, k)),
            pl.BlockSpec((tk, tn), lambda i, j, k: (k, j)),
            pl.BlockSpec((1, tn), lambda i, j, k: (0, j)),
        ],
        out_specs=pl.BlockSpec((tm, tn), lambda i, j, k: (i, j)),
        scratch_shapes=[pltpu.VMEM((tm, tn), jnp.float32)],
        compiler_params=pltpu.CompilerParams(
            dimension_semantics=("parallel", "parallel", "arbitrary")),
    )(x, w, b.reshape(1, N))


def _diff_step_kernel(coef_ref, cols_ref, w_ref, b_ref, x_ref, noise_ref, o_ref, *, C):
    """Fused 3x3 eps-conv (as matmul), eps slice, and clipped DDPM posterior.

    Transposed layout: channels on sublanes, B*H*W (lane-dense) on lanes.
    """
    a = coef_ref[0]    # sqrt(1/alphas_cumprod[t])
    bb = coef_ref[1]   # sqrt(1/alphas_cumprod[t] - 1)
    c1 = coef_ref[2]   # posterior_mean_coef1[t]
    c2 = coef_ref[3]   # posterior_mean_coef2[t]
    sig = coef_ref[4]  # nonzero_mask * exp(0.5 * posterior_log_variance_clipped[t])
    eps_all = jnp.dot(w_ref[...], cols_ref[...],
                      preferred_element_type=jnp.float32) + b_ref[...]
    eps = eps_all[:C, :]                       # learned-variance channels ignored
    x = x_ref[...]
    pred_x0 = jnp.clip(a * x - bb * eps, -1.0, 1.0)   # clip_denoised=True
    mean = c1 * pred_x0 + c2 * x
    o_ref[...] = mean + sig * noise_ref[...]


def diffusion_step(coefs, colsT, w_epsT, b_eps, xT, noiseT):
    C, M = xT.shape
    K = colsT.shape[0]       # 9*C
    C2 = w_epsT.shape[0]     # 2*C (learn_sigma=True)
    tm = _pick(M, (4096, 2048, 1024, 512, 256, 128))
    return pl.pallas_call(
        functools.partial(_diff_step_kernel, C=C),
        out_shape=jax.ShapeDtypeStruct((C, M), jnp.float32),
        grid=(M // tm,),
        in_specs=[
            pl.BlockSpec(memory_space=pltpu.MemorySpace.SMEM),
            pl.BlockSpec((K, tm), lambda i: (0, i)),
            pl.BlockSpec((C2, K), lambda i: (0, 0)),
            pl.BlockSpec((C2, 1), lambda i: (0, 0)),
            pl.BlockSpec((C, tm), lambda i: (0, i)),
            pl.BlockSpec((C, tm), lambda i: (0, i)),
        ],
        out_specs=pl.BlockSpec((C, tm), lambda i: (0, i)),
        compiler_params=pltpu.CompilerParams(dimension_semantics=("parallel",)),
    )(coefs, colsT, w_epsT, b_eps.reshape(C2, 1), xT, noiseT)


def _gap_kernel(x_ref, o_ref, acc_ref, *, inv_hw):
    s = pl.program_id(0)

    @pl.when(s == 0)
    def _init():
        acc_ref[...] = jnp.zeros_like(acc_ref)

    acc_ref[...] += jnp.sum(x_ref[...], axis=1)

    @pl.when(s == pl.num_programs(0) - 1)
    def _finalize():
        o_ref[...] = acc_ref[...] * inv_hw


def global_avg_pool(x):
    """SPSP(P=1, method='avg'): global spatial mean, tiled over the HW axis."""
    B, HW, C = x.shape
    thw = _pick(HW, (256, 128, 64, 32, 16, 8))
    return pl.pallas_call(
        functools.partial(_gap_kernel, inv_hw=float(1.0 / HW)),
        out_shape=jax.ShapeDtypeStruct((B, C), jnp.float32),
        grid=(HW // thw,),
        in_specs=[pl.BlockSpec((B, thw, C), lambda i: (0, i, 0))],
        out_specs=pl.BlockSpec((B, C), lambda i: (0, 0)),
        scratch_shapes=[pltpu.VMEM((B, C), jnp.float32)],
        compiler_params=pltpu.CompilerParams(dimension_semantics=("arbitrary",)),
    )(x)


def _head_kernel(f_ref, w_ref, b_ref, sc_ref, cls_ref, *, k, off, b0, d, nbins):
    """Fused regr6/regr7/regression heads + MetricModel k*s+b + bucketize."""
    scores = jnp.dot(f_ref[...], w_ref[...],
                     preferred_element_type=jnp.float32) + b_ref[...]
    sc_ref[...] = scores                       # [pq6, pq7, s] (pq6/pq7 unused downstream)
    s = scores[:, 2:3]                         # regression output == pq[-1]
    sm = s * k + off                           # MetricModel: s*k + b
    idx = jnp.ceil((sm - b0) / d)
    cur = jnp.where(sm <= b0, 0.0,
                    jnp.where(sm > b0 + nbins * d, nbins + 1.0, idx))
    cls_ref[...] = cur.astype(jnp.int32)


def heads_and_bucketize(f, w_heads, b_heads):
    B = f.shape[0]
    scores, cls = pl.pallas_call(
        functools.partial(_head_kernel, k=float(METRIC_K), off=float(METRIC_B),
                          b0=float(BUCKET_B0), d=float(DIAP / N_BUCKETS),
                          nbins=float(N_BUCKETS)),
        out_shape=(jax.ShapeDtypeStruct((B, 3), jnp.float32),
                   jax.ShapeDtypeStruct((B, 1), jnp.int32)),
        grid=(1,),
        in_specs=[
            pl.BlockSpec((B, 128), lambda i: (0, 0)),
            pl.BlockSpec((128, 3), lambda i: (0, 0)),
            pl.BlockSpec((1, 3), lambda i: (0, 0)),
        ],
        out_specs=(pl.BlockSpec((B, 3), lambda i: (0, 0)),
                   pl.BlockSpec((B, 1), lambda i: (0, 0))),
        compiler_params=pltpu.CompilerParams(dimension_semantics=("arbitrary",)),
    )(f, w_heads, b_heads)
    return scores, cls


# ------------------------------- JAX glue ---------------------------------------
# TODO(synk): im2col still materializes the 9x patch tensor in HBM; a fully
# in-kernel shifted-accumulation conv would remove that extra write.
def conv_colsT(xT, B, C, H, W):
    """xT: (C, B*H*W) -> transposed im2col (9*C, B*H*W) for a 3x3 pad-1 conv."""
    x = xT.reshape(C, B, H, W)
    xp = jnp.pad(x, ((0, 0), (0, 0), (1, 1), (1, 1)))
    sl = [xp[:, :, di:di + H, dj:dj + W] for di in range(3) for dj in range(3)]
    cols = jnp.stack(sl, axis=0)               # (9, C, B, H, W)
    return cols.reshape(9 * C, B * H * W)


def conv_cols_s2(xT, B, C, H, W):
    """xT: (C, B*H*W) -> row-major im2col (B*Ho*Wo, 9*C) for a 3x3 stride-2 pad-1 conv."""
    x = xT.reshape(C, B, H, W)
    xp = jnp.pad(x, ((0, 0), (0, 0), (1, 1), (1, 1)))
    Ho = (H + 2 - 3) // 2 + 1
    Wo = (W + 2 - 3) // 2 + 1
    sl = [xp[:, :, di:di + 2 * Ho:2, dj:dj + 2 * Wo:2]
          for di in range(3) for dj in range(3)]
    cols = jnp.stack(sl, axis=0)               # (9, C, B, Ho, Wo)
    cols = cols.transpose(2, 3, 4, 0, 1)       # (B, Ho, Wo, 9, C)
    return cols.reshape(B * Ho * Wo, 9 * C), (Ho, Wo)


def build_schedule():
    """GuidedDiffusion.__init__ schedule + timestep selection (linear betas, 1000 steps)."""
    betas = np.linspace(1e-4, 0.02, DIFFUSION_STEPS, dtype=np.float64)
    alphas = 1.0 - betas
    alphas_cumprod = np.cumprod(alphas)
    alphas_cumprod_prev = np.append(1.0, alphas_cumprod[:-1])
    sqrt_recip = np.sqrt(1.0 / alphas_cumprod)
    sqrt_recipm1 = np.sqrt(1.0 / alphas_cumprod - 1.0)
    posterior_variance = betas * (1.0 - alphas_cumprod_prev) / (1.0 - alphas_cumprod)
    posterior_log_variance_clipped = np.log(np.append(posterior_variance[1], posterior_variance[1:]))
    posterior_mean_coef1 = betas * np.sqrt(alphas_cumprod_prev) / (1.0 - alphas_cumprod)
    posterior_mean_coef2 = (1.0 - alphas_cumprod_prev) * np.sqrt(alphas) / (1.0 - alphas_cumprod)

    sigma = SSIGMA
    a = 1.0 / (1.0 + (sigma * 2) ** 2)
    scale = a ** 0.5
    sigma = sigma * 2
    t_sel = len(alphas_cumprod) - 1
    for t in range(len(sqrt_recipm1) - 1):
        if sqrt_recipm1[t] < sigma and sqrt_recipm1[t + 1] >= sigma:
            if sigma - sqrt_recipm1[t] > sqrt_recipm1[t + 1] - sigma:
                t_sel = t + 1
            else:
                t_sel = t
            break
        t_sel = len(alphas_cumprod) - 1
    inter = t_sel / NUM_T_STEPS
    indices_t_steps = [round(t_sel - i * inter) for i in range(NUM_T_STEPS)]
    return dict(
        scale=float(scale),
        indices_t_steps=indices_t_steps,
        sqrt_recip_alphas_cumprod=sqrt_recip,
        sqrt_recipm1_alphas_cumprod=sqrt_recipm1,
        posterior_mean_coef1=posterior_mean_coef1,
        posterior_mean_coef2=posterior_mean_coef2,
        posterior_log_variance_clipped=posterior_log_variance_clipped,
    )


def init_params(key):
    def dense(k, fan_in, fan_out):
        w = jax.random.normal(k, (fan_in, fan_out), jnp.float32) * (1.0 / np.sqrt(fan_in))
        return w, jnp.zeros((fan_out,), jnp.float32)

    ks = jax.random.split(key, 13)
    # eval-mode BatchNorm1d with identity stats == scale by 1/sqrt(1+eps); fold into W, b.
    bn_scale = np.float32(1.0 / np.sqrt(1.0 + BN_EPS))

    def bn_folded_bf16(k, fi, fo):
        w, b = dense(k, fi, fo)
        return (w * bn_scale).astype(jnp.bfloat16), b * bn_scale

    p = {}
    # TODO(synk): pretrained 256x256 guided-diffusion UNet replaced by a synthetic 3x3
    # conv eps-model with 2*C output channels (learn_sigma=True); stored transposed
    # (out_ch, 9*in_ch) for the lane-dense fused diffusion-step kernel.
    w_eps, b_eps = dense(ks[0], 3 * 3 * 3, 6)
    p["eps"] = (jnp.transpose(w_eps), b_eps)
    # TODO(synk): resnext101_32x8d backbone replaced by a synthetic conv stack with the
    # same id1/id2 feature widths (1024 / 2048 channels).
    p["c1"] = dense(ks[1], 3 * 3 * 3, 64)                      # 3x3 stride-2 conv (f32)
    w2, b2 = dense(ks[2], 64, 1024)
    p["c2"] = (w2.astype(jnp.bfloat16), b2)                    # 1x1 conv -> id1 (1024ch)
    w3, b3 = dense(ks[3], 1024, 2048)
    p["c3"] = (w3.astype(jnp.bfloat16), b3)                    # 1x1 conv -> id2 (2048ch)
    # dr6 / dr7: Linear+BN, Linear+BN, Linear+BN, ReLU (BN folded, bf16 weights).
    p["dr6"] = [bn_folded_bf16(ks[4], 1024, 1024),
                bn_folded_bf16(ks[5], 1024, 256),
                bn_folded_bf16(ks[6], 256, 64)]
    p["dr7"] = [bn_folded_bf16(ks[7], 2048, 1024),
                bn_folded_bf16(ks[8], 1024, 256),
                bn_folded_bf16(ks[9], 256, 64)]
    p["regr6"] = dense(ks[10], 64, 1)
    p["regr7"] = dense(ks[11], 64, 1)
    p["regression"] = dense(ks[12], 128, 1)
    return p


def densepure_certify_forward(params, sched, x_nchw):
    """x_nchw: (B, 3, H, W) float32 in [0, 1]. Returns int32 class index per image."""
    B, C, H, W = x_nchw.shape
    M = B * H * W

    # ---- GuidedDiffusion.image_editing_sample((x - 0.5) * 2) ----
    # Layout: channel-major (C, B*H*W) so the diffusion kernels are lane-dense.
    scale = sched["scale"]
    xT = jnp.transpose(x_nchw, (1, 0, 2, 3)).reshape(C, M)
    xT = xT * (2.0 * scale) - scale            # (x-0.5)*2, then *scale (XLA-fused pass)

    indices_t_steps = sched["indices_t_steps"]
    key = jax.random.PRNGKey(REVERSE_SEED)     # TODO(synk): torch RNG stream not reproducible in JAX
    w_epsT, b_eps = params["eps"]
    for i in range(len(indices_t_steps)):
        real_t = int(indices_t_steps[i])
        colsT = conv_colsT(xT, B, C, H, W)
        key, sub = jax.random.split(key)
        noiseT = jax.random.normal(sub, (C, M), jnp.float32)
        nonzero = 1.0 if (len(indices_t_steps) - i - 1) != 0 else 0.0
        # TODO(synk): custom respaced p_sample (indices_t_steps/T/step args) approximated
        # by the standard DDPM posterior evaluated at real_t.
        coefs = jnp.array([
            sched["sqrt_recip_alphas_cumprod"][real_t],
            sched["sqrt_recipm1_alphas_cumprod"][real_t],
            sched["posterior_mean_coef1"][real_t],
            sched["posterior_mean_coef2"][real_t],
            nonzero * np.exp(0.5 * sched["posterior_log_variance_clipped"][real_t]),
            0.0, 0.0, 0.0], dtype=jnp.float32)
        xT = diffusion_step(coefs, colsT, w_epsT, b_eps, xT, noiseT)
    # xT is now x_re in (C, B*H*W) layout.

    # ---- classifier((x_re + 1) * 0.5) ----
    # (x+1)*0.5 followed by Normalize(mean, std) is a per-input-channel affine;
    # fold it exactly into the first conv's weights and bias (no extra HBM pass).
    a_c = (0.5 / IMAGENET_STD).astype(np.float32)
    b_c = ((0.5 - IMAGENET_MEAN) / IMAGENET_STD).astype(np.float32)
    a_vec = jnp.asarray(np.tile(a_c, 9))       # index k = patch*C + c
    b_vec = jnp.asarray(np.tile(b_c, 9))
    wc1, bc1 = params["c1"]
    wc1_eff = wc1 * a_vec[:, None]
    bc1_eff = bc1 + b_vec @ wc1

    cols1, (H1, W1) = conv_cols_s2(xT, B, C, H, W)
    h = linear(cols1, wc1_eff, bc1_eff, activation="relu")                 # (B*H1*W1, 64)
    f6 = linear(h, *params["c2"], activation="relu")                       # (B*H1*W1, 1024)
    f6_map = f6.reshape(B, H1, W1, 1024)
    p2 = f6_map.reshape(B, H1 // 2, 2, W1 // 2, 2, 1024).mean(axis=(2, 4))  # 2x2 avg pool (glue)
    f7 = linear(p2.reshape(-1, 1024), *params["c3"], activation="relu")    # (B*H2*W2, 2048)

    # SPSP(P=1, 'avg') == global average pool (tiled reduction kernel)
    x6 = global_avg_pool(f6.reshape(B, H1 * W1, 1024))
    x7 = global_avg_pool(f7.reshape(B, (H1 // 2) * (W1 // 2), 2048))

    # dr6 / dr7 (BatchNorm1d eval scale already folded into the weights)
    def dr(xin, layers):
        hcur = xin
        for li, (w, bb) in enumerate(layers):
            hcur = linear(hcur, w, bb,
                          activation="relu" if li == len(layers) - 1 else None)
        return hcur

    x6d = dr(x6, params["dr6"])
    x7d = dr(x7, params["dr7"])
    f = jnp.concatenate([x6d, x7d], axis=1)                                # (B, 128)

    # Fused heads: [regr6(x6d), regr7(x7d), regression(f)] as one (128,3) matmul,
    # then MetricModel k*s+b and MetricClassifier bucketization.
    w6, b6 = params["regr6"]
    w7, b7 = params["regr7"]
    wr, br = params["regression"]
    z64 = jnp.zeros((64, 1), jnp.float32)
    w_heads = jnp.concatenate([jnp.concatenate([w6, z64], axis=0),
                               jnp.concatenate([z64, w7], axis=0),
                               wr], axis=1)                                 # (128, 3)
    b_heads = jnp.stack([b6[0], b7[0], br[0]]).reshape(1, 3)
    _scores, cls = heads_and_bucketize(f, w_heads, b_heads)
    return cls.reshape(-1)  # (B,) int32 class indices (torch returns int64)


if __name__ == "__main__":
    key = jax.random.PRNGKey(0)
    pkey, xkey = jax.random.split(key)
    params = init_params(pkey)
    sched = build_schedule()
    x = jax.random.uniform(xkey, (2, 3, 16, 16), dtype=jnp.float32)  # NCHW batch in [0,1]
    fwd = jax.jit(lambda p, xx: densepure_certify_forward(p, sched, xx))
    out = jax.block_until_ready(fwd(params, x))
    assert out.shape == (2,) and out.dtype == jnp.int32
    print("KERNEL_OK")
</pallas_src>

<mosaic_0001>
module attributes {stable_mosaic.version = 11 : i64} {
  func.func @_diff_step_kernel(%arg0: i32, %arg1: memref<8xf32, #tpu.memory_space<smem>>, %arg2: memref<27x512xf32, #tpu.memory_space<vmem>>, %arg3: memref<6x27xf32, #tpu.memory_space<vmem>>, %arg4: memref<6x1xf32, #tpu.memory_space<vmem>>, %arg5: memref<3x512xf32, #tpu.memory_space<vmem>>, %arg6: memref<3x512xf32, #tpu.memory_space<vmem>>, %arg7: memref<3x512xf32, #tpu.memory_space<vmem>>) attributes {dimension_semantics = [#tpu.dimension_semantics<parallel>], iteration_bounds = array<i64: 1>, scalar_prefetch = 0 : i64, scratch_operands = 0 : i64, tpu.core_type = #tpu.core_type<tc>, window_params = [{transform_indices = @transform_0, window_bounds = array<i64: 8>}, {transform_indices = @transform_1, window_bounds = array<i64: 27, 512>}, {pipeline_mode = #tpu.pipeline_mode<synchronous>, transform_indices = @transform_2, window_bounds = array<i64: 6, 27>}, {pipeline_mode = #tpu.pipeline_mode<synchronous>, transform_indices = @transform_3, window_bounds = array<i64: 6, 1>}, {transform_indices = @transform_4, window_bounds = array<i64: 3, 512>}, {transform_indices = @transform_5, window_bounds = array<i64: 3, 512>}, {transform_indices = @transform_6, window_bounds = array<i64: 3, 512>}]} {
    %c0 = arith.constant 0 : index
    %0 = memref.load %arg1[%c0] : memref<8xf32, #tpu.memory_space<smem>>
    %c1 = arith.constant 1 : index
    %1 = memref.load %arg1[%c1] : memref<8xf32, #tpu.memory_space<smem>>
    %c2 = arith.constant 2 : index
    %2 = memref.load %arg1[%c2] : memref<8xf32, #tpu.memory_space<smem>>
    %c3 = arith.constant 3 : index
    %3 = memref.load %arg1[%c3] : memref<8xf32, #tpu.memory_space<smem>>
    %c4 = arith.constant 4 : index
    %4 = memref.load %arg1[%c4] : memref<8xf32, #tpu.memory_space<smem>>
    %c0_0 = arith.constant 0 : index
    %c0_1 = arith.constant 0 : index
    %5 = vector.load %arg3[%c0_0, %c0_1] : memref<6x27xf32, #tpu.memory_space<vmem>>, vector<6x27xf32>
    %c0_2 = arith.constant 0 : index
    %c0_3 = arith.constant 0 : index
    %6 = vector.load %arg2[%c0_2, %c0_3] : memref<27x512xf32, #tpu.memory_space<vmem>>, vector<27x512xf32>
    %cst = arith.constant dense<0.000000e+00> : vector<6x512xf32>
    %7 = tpu.matmul %5, %6, %cst {dimension_numbers = #tpu.dot_dimension_numbers<[1], [0], [0], [1], [0, 0, 1, 1], [], []>} : vector<6x27xf32>, vector<27x512xf32>, vector<6x512xf32> -> vector<6x512xf32>
    %c0_4 = arith.constant 0 : index
    %c0_5 = arith.constant 0 : index
    %8 = vector.load %arg4[%c0_4, %c0_5] : memref<6x1xf32, #tpu.memory_space<vmem>>, vector<6x1xf32>
    %9 = vector.broadcast %8 : vector<6x1xf32> to vector<6x512xf32>
    %10 = arith.addf %7, %9 : vector<6x512xf32>
    %11 = vector.extract_strided_slice %10 {offsets = [0, 0], sizes = [3, 512], strides = [1, 1]} : vector<6x512xf32> to vector<3x512xf32>
    %c0_6 = arith.constant 0 : index
    %c0_7 = arith.constant 0 : index
    %12 = vector.load %arg5[%c0_6, %c0_7] : memref<3x512xf32, #tpu.memory_space<vmem>>, vector<3x512xf32>
    %13 = vector.broadcast %0 : f32 to vector<3x512xf32>
    %14 = arith.mulf %13, %12 : vector<3x512xf32>
    %15 = vector.broadcast %1 : f32 to vector<3x512xf32>
    %16 = arith.mulf %15, %11 : vector<3x512xf32>
    %17 = arith.subf %14, %16 : vector<3x512xf32>
    %cst_8 = arith.constant -1.000000e+00 : f32
    %cst_9 = arith.constant 1.000000e+00 : f32
    %18 = vector.broadcast %cst_8 : f32 to vector<3x512xf32>
    %19 = arith.maximumf %18, %17 : vector<3x512xf32>
    %20 = vector.broadcast %cst_9 : f32 to vector<3x512xf32>
    %21 = arith.minimumf %20, %19 : vector<3x512xf32>
    %22 = vector.broadcast %2 : f32 to vector<3x512xf32>
    %23 = arith.mulf %22, %21 : vector<3x512xf32>
    %24 = vector.broadcast %3 : f32 to vector<3x512xf32>
    %25 = arith.mulf %24, %12 : vector<3x512xf32>
    %26 = arith.addf %23, %25 : vector<3x512xf32>
    %c0_10 = arith.constant 0 : index
    %c0_11 = arith.constant 0 : index
    %27 = vector.load %arg6[%c0_10, %c0_11] : memref<3x512xf32, #tpu.memory_space<vmem>>, vector<3x512xf32>
    %28 = vector.broadcast %4 : f32 to vector<3x512xf32>
    %29 = arith.mulf %28, %27 : vector<3x512xf32>
    %30 = arith.addf %26, %29 : vector<3x512xf32>
    %c0_12 = arith.constant 0 : index
    %c0_13 = arith.constant 0 : index
    %31 = vector.load %arg7[%c0_12, %c0_13] : memref<3x512xf32, #tpu.memory_space<vmem>>, vector<3x512xf32>
    tpu.vector_store %arg7[%c0_12, %c0_13], %30 {strides = array<i32>} : memref<3x512xf32, #tpu.memory_space<vmem>>, vector<3x512xf32>,
    return
  }
  func.func @transform_0(%arg0: i32) -> i32 {
    %c0_i32 = arith.constant 0 : i32
    %c0_i32_0 = arith.constant 0 : i32
    return %c0_i32 : i32
  }
  func.func @transform_1(%arg0: i32) -> (i32, i32) {
    %c0_i32 = arith.constant 0 : i32
    %c0_i32_0 = arith.constant 0 : i32
    return %c0_i32, %arg0 : i32, i32
  }
  func.func @transform_2(%arg0: i32) -> (i32, i32) {
    %c0_i32 = arith.constant 0 : i32
    %c0_i32_0 = arith.constant 0 : i32
    %c0_i32_1 = arith.constant 0 : i32
    return %c0_i32, %c0_i32_0 : i32, i32
  }
  func.func @transform_3(%arg0: i32) -> (i32, i32) {
    %c0_i32 = arith.constant 0 : i32
    %c0_i32_0 = arith.constant 0 : i32
    %c0_i32_1 = arith.constant 0 : i32
    return %c0_i32, %c0_i32_0 : i32, i32
  }
  func.func @transform_4(%arg0: i32) -> (i32, i32) {
    %c0_i32 = arith.constant 0 : i32
    %c0_i32_0 = arith.constant 0 : i32
    return %c0_i32, %arg0 : i32, i32
  }
  func.func @transform_5(%arg0: i32) -> (i32, i32) {
    %c0_i32 = arith.constant 0 : i32
    %c0_i32_0 = arith.constant 0 : i32
    return %c0_i32, %arg0 : i32, i32
  }
  func.func @transform_6(%arg0: i32) -> (i32, i32) {
    %c0_i32 = arith.constant 0 : i32
    %c0_i32_0 = arith.constant 0 : i32
    return %c0_i32, %arg0 : i32, i32
  }
}

module attributes {stable_mosaic.version = 11 : i64} {
  func.func @_diff_step_kernel(%arg0: i32, %arg1: memref<8xf32, #tpu.memory_space<smem>>, %arg2: memref<27x512xf32, #tpu.memory_space<vmem>>, %arg3: memref<6x27xf32, #tpu.memory_space<vmem>>, %arg4: memref<6x1xf32, #tpu.memory_space<vmem>>, %arg5: memref<3x512xf32, #tpu.memory_space<vmem>>, %arg6: memref<3x512xf32, #tpu.memory_space<vmem>>, %arg7: memref<3x512xf32, #tpu.memory_space<vmem>>) attributes {dimension_semantics = [#tpu.dimension_semantics<parallel>], iteration_bounds = array<i64: 1>, scalar_prefetch = 0 : i64, scratch_operands = 0 : i64, tpu.core_type = #tpu.core_type<tc>, window_params = [{transform_indices = @transform_0, window_bounds = array<i64: 8>}, {transform_indices = @transform_1, window_bounds = array<i64: 27, 512>}, {pipeline_mode = #tpu.pipeline_mode<synchronous>, transform_indices = @transform_2, window_bounds = array<i64: 6, 27>}, {pipeline_mode = #tpu.pipeline_mode<synchronous>, transform_indices = @transform_3, window_bounds = array<i64: 6, 1>}, {transform_indices = @transform_4, window_bounds = array<i64: 3, 512>}, {transform_indices = @transform_5, window_bounds = array<i64: 3, 512>}, {transform_indices = @transform_6, window_bounds = array<i64: 3, 512>}]} {
    %c0 = arith.constant 0 : index
    %0 = memref.load %arg1[%c0] : memref<8xf32, #tpu.memory_space<smem>>
    %c1 = arith.constant 1 : index
    %1 = memref.load %arg1[%c1] : memref<8xf32, #tpu.memory_space<smem>>
    %c2 = arith.constant 2 : index
    %2 = memref.load %arg1[%c2] : memref<8xf32, #tpu.memory_space<smem>>
    %c3 = arith.constant 3 : index
    %3 = memref.load %arg1[%c3] : memref<8xf32, #tpu.memory_space<smem>>
    %c4 = arith.constant 4 : index
    %4 = memref.load %arg1[%c4] : memref<8xf32, #tpu.memory_space<smem>>
    %c0_0 = arith.constant 0 : index
    %c0_1 = arith.constant 0 : index
    %5 = vector.load %arg3[%c0_0, %c0_1] : memref<6x27xf32, #tpu.memory_space<vmem>>, vector<6x27xf32>
    %c0_2 = arith.constant 0 : index
    %c0_3 = arith.constant 0 : index
    %6 = vector.load %arg2[%c0_2, %c0_3] : memref<27x512xf32, #tpu.memory_space<vmem>>, vector<27x512xf32>
    %cst = arith.constant dense<0.000000e+00> : vector<6x512xf32>
    %7 = tpu.matmul %5, %6, %cst {dimension_numbers = #tpu.dot_dimension_numbers<[1], [0], [0], [1], [0, 0, 1, 1], [], []>} : vector<6x27xf32>, vector<27x512xf32>, vector<6x512xf32> -> vector<6x512xf32>
    %c0_4 = arith.constant 0 : index
    %c0_5 = arith.constant 0 : index
    %8 = vector.load %arg4[%c0_4, %c0_5] : memref<6x1xf32, #tpu.memory_space<vmem>>, vector<6x1xf32>
    %9 = vector.broadcast %8 : vector<6x1xf32> to vector<6x512xf32>
    %10 = arith.addf %7, %9 : vector<6x512xf32>
    %11 = vector.extract_strided_slice %10 {offsets = [0, 0], sizes = [3, 512], strides = [1, 1]} : vector<6x512xf32> to vector<3x512xf32>
    %c0_6 = arith.constant 0 : index
    %c0_7 = arith.constant 0 : index
    %12 = vector.load %arg5[%c0_6, %c0_7] : memref<3x512xf32, #tpu.memory_space<vmem>>, vector<3x512xf32>
    %13 = vector.broadcast %0 : f32 to vector<3x512xf32>
    %14 = arith.mulf %13, %12 : vector<3x512xf32>
    %15 = vector.broadcast %1 : f32 to vector<3x512xf32>
    %16 = arith.mulf %15, %11 : vector<3x512xf32>
    %17 = arith.subf %14, %16 : vector<3x512xf32>
    %cst_8 = arith.constant -1.000000e+00 : f32
    %cst_9 = arith.constant 1.000000e+00 : f32
    %18 = vector.broadcast %cst_8 : f32 to vector<3x512xf32>
    %19 = arith.maximumf %18, %17 : vector<3x512xf32>
    %20 = vector.broadcast %cst_9 : f32 to vector<3x512xf32>
    %21 = arith.minimumf %20, %19 : vector<3x512xf32>
    %22 = vector.broadcast %2 : f32 to vector<3x512xf32>
    %23 = arith.mulf %22, %21 : vector<3x512xf32>
    %24 = vector.broadcast %3 : f32 to vector<3x512xf32>
    %25 = arith.mulf %24, %12 : vector<3x512xf32>
    %26 = arith.addf %23, %25 : vector<3x512xf32>
    %c0_10 = arith.constant 0 : index
    %c0_11 = arith.constant 0 : index
    %27 = vector.load %arg6[%c0_10, %c0_11] : memref<3x512xf32, #tpu.memory_space<vmem>>, vector<3x512xf32>
    %28 = vector.broadcast %4 : f32 to vector<3x512xf32>
    %29 = arith.mulf %28, %27 : vector<3x512xf32>
    %30 = arith.addf %26, %29 : vector<3x512xf32>
    %c0_12 = arith.constant 0 : index
    %c0_13 = arith.constant 0 : index
    %31 = vector.load %arg7[%c0_12, %c0_13] : memref<3x512xf32, #tpu.memory_space<vmem>>, vector<3x512xf32>
    tpu.vector_store %arg7[%c0_12, %c0_13], %30 {strides = array<i32>} : memref<3x512xf32, #tpu.memory_space<vmem>>, vector<3x512xf32>,
    return
  }
  func.func @transform_0(%arg0: i32) -> i32 {
    %c0_i32 = arith.constant 0 : i32
    %c0_i32_0 = arith.constant 0 : i32
    return %c0_i32 : i32
  }
  func.func @transform_1(%arg0: i32) -> (i32, i32) {
    %c0_i32 = arith.constant 0 : i32
    %c0_i32_0 = arith.constant 0 : i32
    return %c0_i32, %arg0 : i32, i32
  }
  func.func @transform_2(%arg0: i32) -> (i32, i32) {
    %c0_i32 = arith.constant 0 : i32
    %c0_i32_0 = arith.constant 0 : i32
    %c0_i32_1 = arith.constant 0 : i32
    return %c0_i32, %c0_i32_0 : i32, i32
  }
  func.func @transform_3(%arg0: i32) -> (i32, i32) {
    %c0_i32 = arith.constant 0 : i32
    %c0_i32_0 = arith.constant 0 : i32
    %c0_i32_1 = arith.constant 0 : i32
    return %c0_i32, %c0_i32_0 : i32, i32
  }
  func.func @transform_4(%arg0: i32) -> (i32, i32) {
    %c0_i32 = arith.constant 0 : i32
    %c0_i32_0 = arith.constant 0 : i32
    return %c0_i32, %arg0 : i32, i32
  }
  func.func @transform_5(%arg0: i32) -> (i32, i32) {
    %c0_i32 = arith.constant 0 : i32
    %c0_i32_0 = arith.constant 0 : i32
    return %c0_i32, %arg0 : i32, i32
  }
  func.func @transform_6(%arg0: i32) -> (i32, i32) {
    %c0_i32 = arith.constant 0 : i32
    %c0_i32_0 = arith.constant 0 : i32
    return %c0_i32, %arg0 : i32, i32
  }
}

module attributes {stable_mosaic.version = 11 : i64} {
  func.func @_matmul_kernel(%arg0: i32, %arg1: i32, %arg2: i32, %arg3: memref<128x27xf32, #tpu.memory_space<vmem>>, %arg4: memref<27x64xf32, #tpu.memory_space<vmem>>, %arg5: memref<1x64xf32, #tpu.memory_space<vmem>>, %arg6: memref<128x64xf32, #tpu.memory_space<vmem>>, %arg7: memref<128x64xf32, #tpu.memory_space<vmem>>) attributes {dimension_semantics = [#tpu.dimension_semantics<parallel>, #tpu.dimension_semantics<parallel>, #tpu.dimension_semantics<arbitrary>], iteration_bounds = array<i64: 1, 1, 1>, scalar_prefetch = 0 : i64, scratch_operands = 1 : i64, tpu.core_type = #tpu.core_type<tc>, window_params = [{transform_indices = @transform_0, window_bounds = array<i64: 128, 27>}, {transform_indices = @transform_1, window_bounds = array<i64: 27, 64>}, {transform_indices = @transform_2, window_bounds = array<i64: 1, 64>}, {transform_indices = @transform_3, window_bounds = array<i64: 128, 64>}]} {
    %c0_i32 = arith.constant 0 : i32
    %0 = arith.cmpi eq, %arg2, %c0_i32 : i32
    %1 = arith.extui %0 : i1 to i32
    %c0_i32_0 = arith.constant 0 : i32
    %2 = arith.cmpi ne, %1, %c0_i32_0 : i32
    scf.if %2 {
      %cst_10 = arith.constant 0.000000e+00 : f32
      %12 = vector.broadcast %cst_10 : f32 to vector<128x64xf32>
      %c0_11 = arith.constant 0 : index
      %c0_12 = arith.constant 0 : index
      %13 = vector.load %arg7[%c0_11, %c0_12] : memref<128x64xf32, #tpu.memory_space<vmem>>, vector<128x64xf32>
      tpu.vector_store %arg7[%c0_11, %c0_12], %12 {strides = array<i32>} : memref<128x64xf32, #tpu.memory_space<vmem>>, vector<128x64xf32>,
    } else {
    }
    %c0 = arith.constant 0 : index
    %c0_1 = arith.constant 0 : index
    %3 = vector.load %arg7[%c0, %c0_1] : memref<128x64xf32, #tpu.memory_space<vmem>>, vector<128x64xf32>
    %c0_2 = arith.constant 0 : index
    %c0_3 = arith.constant 0 : index
    %4 = vector.load %arg3[%c0_2, %c0_3] : memref<128x27xf32, #tpu.memory_space<vmem>>, vector<128x27xf32>
    %c0_4 = arith.constant 0 : index
    %c0_5 = arith.constant 0 : index
    %5 = vector.load %arg4[%c0_4, %c0_5] : memref<27x64xf32, #tpu.memory_space<vmem>>, vector<27x64xf32>
    %cst = arith.constant dense<0.000000e+00> : vector<128x64xf32>
    %6 = tpu.matmul %4, %5, %cst {dimension_numbers = #tpu.dot_dimension_numbers<[1], [0], [0], [1], [0, 0, 1, 1], [], []>} : vector<128x27xf32>, vector<27x64xf32>, vector<128x64xf32> -> vector<128x64xf32>
    %7 = arith.addf %3, %6 : vector<128x64xf32>
    %c0_6 = arith.constant 0 : index
    %c0_7 = arith.constant 0 : index
    %8 = vector.load %arg7[%c0_6, %c0_7] : memref<128x64xf32, #tpu.memory_space<vmem>>, vector<128x64xf32>
    tpu.vector_store %arg7[%c0_6, %c0_7], %7 {strides = array<i32>} : memref<128x64xf32, #tpu.memory_space<vmem>>, vector<128x64xf32>,
    %c0_i32_8 = arith.constant 0 : i32
    %9 = arith.cmpi eq, %arg2, %c0_i32_8 : i32
    %10 = arith.extui %9 : i1 to i32
    %c0_i32_9 = arith.constant 0 : i32
    %11 = arith.cmpi ne, %10, %c0_i32_9 : i32
    scf.if %11 {
      %c0_10 = arith.constant 0 : index
      %c0_11 = arith.constant 0 : index
      %12 = vector.load %arg7[%c0_10, %c0_11] : memref<128x64xf32, #tpu.memory_space<vmem>>, vector<128x64xf32>
      %c0_12 = arith.constant 0 : index
      %c0_13 = arith.constant 0 : index
      %13 = vector.load %arg5[%c0_12, %c0_13] : memref<1x64xf32, #tpu.memory_space<vmem>>, vector<1x64xf32>
      %14 = vector.broadcast %13 : vector<1x64xf32> to vector<128x64xf32>
      %15 = arith.addf %12, %14 : vector<128x64xf32>
      %cst_14 = arith.constant 0.000000e+00 : f32
      %16 = vector.broadcast %cst_14 : f32 to vector<128x64xf32>
      %17 = arith.maximumf %15, %16 : vector<128x64xf32>
      %c0_15 = arith.constant 0 : index
      %c0_16 = arith.constant 0 : index
      %18 = vector.load %arg6[%c0_15, %c0_16] : memref<128x64xf32, #tpu.memory_space<vmem>>, vector<128x64xf32>
      tpu.vector_store %arg6[%c0_15, %c0_16], %17 {strides = array<i32>} : memref<128x64xf32, #tpu.memory_space<vmem>>, vector<128x64xf32>,
    } else {
    }
    return
  }
  func.func @transform_0(%arg0: i32, %arg1: i32, %arg2: i32) -> (i32, i32) {
    %c0_i32 = arith.constant 0 : i32
    return %arg0, %arg2 : i32, i32
  }
  func.func @transform_1(%arg0: i32, %arg1: i32, %arg2: i32) -> (i32, i32) {
    %c0_i32 = arith.constant 0 : i32
    return %arg2, %arg1 : i32, i32
  }
  func.func @transform_2(%arg0: i32, %arg1: i32, %arg2: i32) -> (i32, i32) {
    %c0_i32 = arith.constant 0 : i32
    %c0_i32_0 = arith.constant 0 : i32
    return %c0_i32, %arg1 : i32, i32
  }
  func.func @transform_3(%arg0: i32, %arg1: i32, %arg2: i32) -> (i32, i32) {
    %c0_i32 = arith.constant 0 : i32
    return %arg0, %arg1 : i32, i32
  }
}

module attributes {stable_mosaic.version = 11 : i64} {
  func.func @_matmul_kernel(%arg0: i32, %arg1: i32, %arg2: i32, %arg3: memref<128x64xf32, #tpu.memory_space<vmem>>, %arg4: memref<64x256xbf16, #tpu.memory_space<vmem>>, %arg5: memref<1x256xf32, #tpu.memory_space<vmem>>, %arg6: memref<128x256xf32, #tpu.memory_space<vmem>>, %arg7: memref<128x256xf32, #tpu.memory_space<vmem>>) attributes {dimension_semantics = [#tpu.dimension_semantics<parallel>, #tpu.dimension_semantics<parallel>, #tpu.dimension_semantics<arbitrary>], iteration_bounds = array<i64: 1, 4, 1>, scalar_prefetch = 0 : i64, scratch_operands = 1 : i64, tpu.core_type = #tpu.core_type<tc>, window_params = [{transform_indices = @transform_0, window_bounds = array<i64: 128, 64>}, {transform_indices = @transform_1, window_bounds = array<i64: 64, 256>}, {transform_indices = @transform_2, window_bounds = array<i64: 1, 256>}, {transform_indices = @transform_3, window_bounds = array<i64: 128, 256>}]} {
    %c0_i32 = arith.constant 0 : i32
    %0 = arith.cmpi eq, %arg2, %c0_i32 : i32
    %1 = arith.extui %0 : i1 to i32
    %c0_i32_0 = arith.constant 0 : i32
    %2 = arith.cmpi ne, %1, %c0_i32_0 : i32
    scf.if %2 {
      %cst_10 = arith.constant 0.000000e+00 : f32
      %13 = vector.broadcast %cst_10 : f32 to vector<128x256xf32>
      %c0_11 = arith.constant 0 : index
      %c0_12 = arith.constant 0 : index
      %14 = vector.load %arg7[%c0_11, %c0_12] : memref<128x256xf32, #tpu.memory_space<vmem>>, vector<128x256xf32>
      tpu.vector_store %arg7[%c0_11, %c0_12], %13 {strides = array<i32>} : memref<128x256xf32, #tpu.memory_space<vmem>>, vector<128x256xf32>,
    } else {
    }
    %c0 = arith.constant 0 : index
    %c0_1 = arith.constant 0 : index
    %3 = vector.load %arg7[%c0, %c0_1] : memref<128x256xf32, #tpu.memory_space<vmem>>, vector<128x256xf32>
    %c0_2 = arith.constant 0 : index
    %c0_3 = arith.constant 0 : index
    %4 = vector.load %arg3[%c0_2, %c0_3] : memref<128x64xf32, #tpu.memory_space<vmem>>, vector<128x64xf32>
    %5 = arith.truncf %4 : vector<128x64xf32> to vector<128x64xbf16>
    %c0_4 = arith.constant 0 : index
    %c0_5 = arith.constant 0 : index
    %6 = vector.load %arg4[%c0_4, %c0_5] : memref<64x256xbf16, #tpu.memory_space<vmem>>, vector<64x256xbf16>
    %cst = arith.constant dense<0.000000e+00> : vector<128x256xf32>
    %7 = tpu.matmul %5, %6, %cst {dimension_numbers = #tpu.dot_dimension_numbers<[1], [0], [0], [1], [0, 0, 1, 1], [], []>} : vector<128x64xbf16>, vector<64x256xbf16>, vector<128x256xf32> -> vector<128x256xf32>
    %8 = arith.addf %3, %7 : vector<128x256xf32>
    %c0_6 = arith.constant 0 : index
    %c0_7 = arith.constant 0 : index
    %9 = vector.load %arg7[%c0_6, %c0_7] : memref<128x256xf32, #tpu.memory_space<vmem>>, vector<128x256xf32>
    tpu.vector_store %arg7[%c0_6, %c0_7], %8 {strides = array<i32>} : memref<128x256xf32, #tpu.memory_space<vmem>>, vector<128x256xf32>,
    %c0_i32_8 = arith.constant 0 : i32
    %10 = arith.cmpi eq, %arg2, %c0_i32_8 : i32
    %11 = arith.extui %10 : i1 to i32
    %c0_i32_9 = arith.constant 0 : i32
    %12 = arith.cmpi ne, %11, %c0_i32_9 : i32
    scf.if %12 {
      %c0_10 = arith.constant 0 : index
      %c0_11 = arith.constant 0 : index
      %13 = vector.load %arg7[%c0_10, %c0_11] : memref<128x256xf32, #tpu.memory_space<vmem>>, vector<128x256xf32>
      %c0_12 = arith.constant 0 : index
      %c0_13 = arith.constant 0 : index
      %14 = vector.load %arg5[%c0_12, %c0_13] : memref<1x256xf32, #tpu.memory_space<vmem>>, vector<1x256xf32>
      %15 = vector.broadcast %14 : vector<1x256xf32> to vector<128x256xf32>
      %16 = arith.addf %13, %15 : vector<128x256xf32>
      %cst_14 = arith.constant 0.000000e+00 : f32
      %17 = vector.broadcast %cst_14 : f32 to vector<128x256xf32>
      %18 = arith.maximumf %16, %17 : vector<128x256xf32>
      %c0_15 = arith.constant 0 : index
      %c0_16 = arith.constant 0 : index
      %19 = vector.load %arg6[%c0_15, %c0_16] : memref<128x256xf32, #tpu.memory_space<vmem>>, vector<128x256xf32>
      tpu.vector_store %arg6[%c0_15, %c0_16], %18 {strides = array<i32>} : memref<128x256xf32, #tpu.memory_space<vmem>>, vector<128x256xf32>,
    } else {
    }
    return
  }
  func.func @transform_0(%arg0: i32, %arg1: i32, %arg2: i32) -> (i32, i32) {
    %c0_i32 = arith.constant 0 : i32
    return %arg0, %arg2 : i32, i32
  }
  func.func @transform_1(%arg0: i32, %arg1: i32, %arg2: i32) -> (i32, i32) {
    %c0_i32 = arith.constant 0 : i32
    return %arg2, %arg1 : i32, i32
  }
  func.func @transform_2(%arg0: i32, %arg1: i32, %arg2: i32) -> (i32, i32) {
    %c0_i32 = arith.constant 0 : i32
    %c0_i32_0 = arith.constant 0 : i32
    return %c0_i32, %arg1 : i32, i32
  }
  func.func @transform_3(%arg0: i32, %arg1: i32, %arg2: i32) -> (i32, i32) {
    %c0_i32 = arith.constant 0 : i32
    return %arg0, %arg1 : i32, i32
  }
}

module attributes {stable_mosaic.version = 11 : i64} {
  func.func @_matmul_kernel(%arg0: i32, %arg1: i32, %arg2: i32, %arg3: memref<32x512xf32, #tpu.memory_space<vmem>>, %arg4: memref<512x256xbf16, #tpu.memory_space<vmem>>, %arg5: memref<1x256xf32, #tpu.memory_space<vmem>>, %arg6: memref<32x256xf32, #tpu.memory_space<vmem>>, %arg7: memref<32x256xf32, #tpu.memory_space<vmem>>) attributes {dimension_semantics = [#tpu.dimension_semantics<parallel>, #tpu.dimension_semantics<parallel>, #tpu.dimension_semantics<arbitrary>], iteration_bounds = array<i64: 1, 8, 2>, scalar_prefetch = 0 : i64, scratch_operands = 1 : i64, tpu.core_type = #tpu.core_type<tc>, window_params = [{transform_indices = @transform_0, window_bounds = array<i64: 32, 512>}, {transform_indices = @transform_1, window_bounds = array<i64: 512, 256>}, {transform_indices = @transform_2, window_bounds = array<i64: 1, 256>}, {transform_indices = @transform_3, window_bounds = array<i64: 32, 256>}]} {
    %c0_i32 = arith.constant 0 : i32
    %0 = arith.cmpi eq, %arg2, %c0_i32 : i32
    %1 = arith.extui %0 : i1 to i32
    %c0_i32_0 = arith.constant 0 : i32
    %2 = arith.cmpi ne, %1, %c0_i32_0 : i32
    scf.if %2 {
      %cst_9 = arith.constant 0.000000e+00 : f32
      %13 = vector.broadcast %cst_9 : f32 to vector<32x256xf32>
      %c0_10 = arith.constant 0 : index
      %c0_11 = arith.constant 0 : index
      %14 = vector.load %arg7[%c0_10, %c0_11] : memref<32x256xf32, #tpu.memory_space<vmem>>, vector<32x256xf32>
      tpu.vector_store %arg7[%c0_10, %c0_11], %13 {strides = array<i32>} : memref<32x256xf32, #tpu.memory_space<vmem>>, vector<32x256xf32>,
    } else {
    }
    %c0 = arith.constant 0 : index
    %c0_1 = arith.constant 0 : index
    %3 = vector.load %arg7[%c0, %c0_1] : memref<32x256xf32, #tpu.memory_space<vmem>>, vector<32x256xf32>
    %c0_2 = arith.constant 0 : index
    %c0_3 = arith.constant 0 : index
    %4 = vector.load %arg3[%c0_2, %c0_3] : memref<32x512xf32, #tpu.memory_space<vmem>>, vector<32x512xf32>
    %5 = arith.truncf %4 : vector<32x512xf32> to vector<32x512xbf16>
    %c0_4 = arith.constant 0 : index
    %c0_5 = arith.constant 0 : index
    %6 = vector.load %arg4[%c0_4, %c0_5] : memref<512x256xbf16, #tpu.memory_space<vmem>>, vector<512x256xbf16>
    %cst = arith.constant dense<0.000000e+00> : vector<32x256xf32>
    %7 = tpu.matmul %5, %6, %cst {dimension_numbers = #tpu.dot_dimension_numbers<[1], [0], [0], [1], [0, 0, 1, 1], [], []>} : vector<32x512xbf16>, vector<512x256xbf16>, vector<32x256xf32> -> vector<32x256xf32>
    %8 = arith.addf %3, %7 : vector<32x256xf32>
    %c0_6 = arith.constant 0 : index
    %c0_7 = arith.constant 0 : index
    %9 = vector.load %arg7[%c0_6, %c0_7] : memref<32x256xf32, #tpu.memory_space<vmem>>, vector<32x256xf32>
    tpu.vector_store %arg7[%c0_6, %c0_7], %8 {strides = array<i32>} : memref<32x256xf32, #tpu.memory_space<vmem>>, vector<32x256xf32>,
    %c1_i32 = arith.constant 1 : i32
    %10 = arith.cmpi eq, %arg2, %c1_i32 : i32
    %11 = arith.extui %10 : i1 to i32
    %c0_i32_8 = arith.constant 0 : i32
    %12 = arith.cmpi ne, %11, %c0_i32_8 : i32
    scf.if %12 {
      %c0_9 = arith.constant 0 : index
      %c0_10 = arith.constant 0 : index
      %13 = vector.load %arg7[%c0_9, %c0_10] : memref<32x256xf32, #tpu.memory_space<vmem>>, vector<32x256xf32>
      %c0_11 = arith.constant 0 : index
      %c0_12 = arith.constant 0 : index
      %14 = vector.load %arg5[%c0_11, %c0_12] : memref<1x256xf32, #tpu.memory_space<vmem>>, vector<1x256xf32>
      %15 = vector.broadcast %14 : vector<1x256xf32> to vector<32x256xf32>
      %16 = arith.addf %13, %15 : vector<32x256xf32>
      %cst_13 = arith.constant 0.000000e+00 : f32
      %17 = vector.broadcast %cst_13 : f32 to vector<32x256xf32>
      %18 = arith.maximumf %16, %17 : vector<32x256xf32>
      %c0_14 = arith.constant 0 : index
      %c0_15 = arith.constant 0 : index
      %19 = vector.load %arg6[%c0_14, %c0_15] : memref<32x256xf32, #tpu.memory_space<vmem>>, vector<32x256xf32>
      tpu.vector_store %arg6[%c0_14, %c0_15], %18 {strides = array<i32>} : memref<32x256xf32, #tpu.memory_space<vmem>>, vector<32x256xf32>,
    } else {
    }
    return
  }
  func.func @transform_0(%arg0: i32, %arg1: i32, %arg2: i32) -> (i32, i32) {
    %c0_i32 = arith.constant 0 : i32
    return %arg0, %arg2 : i32, i32
  }
  func.func @transform_1(%arg0: i32, %arg1: i32, %arg2: i32) -> (i32, i32) {
    %c0_i32 = arith.constant 0 : i32
    return %arg2, %arg1 : i32, i32
  }
  func.func @transform_2(%arg0: i32, %arg1: i32, %arg2: i32) -> (i32, i32) {
    %c0_i32 = arith.constant 0 : i32
    %c0_i32_0 = arith.constant 0 : i32
    return %c0_i32, %arg1 : i32, i32
  }
  func.func @transform_3(%arg0: i32, %arg1: i32, %arg2: i32) -> (i32, i32) {
    %c0_i32 = arith.constant 0 : i32
    return %arg0, %arg1 : i32, i32
  }
}

module attributes {stable_mosaic.version = 11 : i64} {
  func.func @_gap_kernel(%arg0: i32, %arg1: memref<2x16x2048xf32, #tpu.memory_space<vmem>>, %arg2: memref<2x2048xf32, #tpu.memory_space<vmem>>, %arg3: memref<2x2048xf32, #tpu.memory_space<vmem>>) attributes {dimension_semantics = [#tpu.dimension_semantics<arbitrary>], iteration_bounds = array<i64: 1>, scalar_prefetch = 0 : i64, scratch_operands = 1 : i64, tpu.core_type = #tpu.core_type<tc>, window_params = [{transform_indices = @transform_0, window_bounds = array<i64: 2, 16, 2048>}, {pipeline_mode = #tpu.pipeline_mode<synchronous>, transform_indices = @transform_1, window_bounds = array<i64: 2, 2048>}]} {
    %c0_i32 = arith.constant 0 : i32
    %0 = arith.cmpi eq, %arg0, %c0_i32 : i32
    %1 = arith.extui %0 : i1 to i32
    %c0_i32_0 = arith.constant 0 : i32
    %2 = arith.cmpi ne, %1, %c0_i32_0 : i32
    scf.if %2 {
      %cst_9 = arith.constant 0.000000e+00 : f32
      %11 = vector.broadcast %cst_9 : f32 to vector<2x2048xf32>
      %c0_10 = arith.constant 0 : index
      %c0_11 = arith.constant 0 : index
      %12 = vector.load %arg3[%c0_10, %c0_11] : memref<2x2048xf32, #tpu.memory_space<vmem>>, vector<2x2048xf32>
      tpu.vector_store %arg3[%c0_10, %c0_11], %11 {strides = array<i32>} : memref<2x2048xf32, #tpu.memory_space<vmem>>, vector<2x2048xf32>,
    } else {
    }
    %c0 = arith.constant 0 : index
    %c0_1 = arith.constant 0 : index
    %3 = vector.load %arg3[%c0, %c0_1] : memref<2x2048xf32, #tpu.memory_space<vmem>>, vector<2x2048xf32>
    %c0_2 = arith.constant 0 : index
    %c0_3 = arith.constant 0 : index
    %c0_4 = arith.constant 0 : index
    %4 = vector.load %arg1[%c0_2, %c0_3, %c0_4] : memref<2x16x2048xf32, #tpu.memory_space<vmem>>, vector<2x16x2048xf32>
    %cst = arith.constant dense<0.000000e+00> : vector<2x2048xf32>
    %5 = vector.multi_reduction <add>, %4, %cst [1] : vector<2x16x2048xf32> to vector<2x2048xf32>
    %6 = arith.addf %3, %5 : vector<2x2048xf32>
    %c0_5 = arith.constant 0 : index
    %c0_6 = arith.constant 0 : index
    %7 = vector.load %arg3[%c0_5, %c0_6] : memref<2x2048xf32, #tpu.memory_space<vmem>>, vector<2x2048xf32>
    tpu.vector_store %arg3[%c0_5, %c0_6], %6 {strides = array<i32>} : memref<2x2048xf32, #tpu.memory_space<vmem>>, vector<2x2048xf32>,
    %c0_i32_7 = arith.constant 0 : i32
    %8 = arith.cmpi eq, %arg0, %c0_i32_7 : i32
    %9 = arith.extui %8 : i1 to i32
    %c0_i32_8 = arith.constant 0 : i32
    %10 = arith.cmpi ne, %9, %c0_i32_8 : i32
    scf.if %10 {
      %c0_9 = arith.constant 0 : index
      %c0_10 = arith.constant 0 : index
      %11 = vector.load %arg3[%c0_9, %c0_10] : memref<2x2048xf32, #tpu.memory_space<vmem>>, vector<2x2048xf32>
      %cst_11 = arith.constant 6.250000e-02 : f32
      %12 = vector.broadcast %cst_11 : f32 to vector<2x2048xf32>
      %13 = arith.mulf %11, %12 : vector<2x2048xf32>
      %c0_12 = arith.constant 0 : index
      %c0_13 = arith.constant 0 : index
      %14 = vector.load %arg2[%c0_12, %c0_13] : memref<2x2048xf32, #tpu.memory_space<vmem>>, vector<2x2048xf32>
      tpu.vector_store %arg2[%c0_12, %c0_13], %13 {strides = array<i32>} : memref<2x2048xf32, #tpu.memory_space<vmem>>, vector<2x2048xf32>,
    } else {
    }
    return
  }
  func.func @transform_0(%arg0: i32) -> (i32, i32, i32) {
    %c0_i32 = arith.constant 0 : i32
    %c0_i32_0 = arith.constant 0 : i32
    %c0_i32_1 = arith.constant 0 : i32
    return %c0_i32, %arg0, %c0_i32_0 : i32, i32, i32
  }
  func.func @transform_1(%arg0: i32) -> (i32, i32) {
    %c0_i32 = arith.constant 0 : i32
    %c0_i32_0 = arith.constant 0 : i32
    %c0_i32_1 = arith.constant 0 : i32
    return %c0_i32, %c0_i32_0 : i32, i32
  }
}

module attributes {stable_mosaic.version = 11 : i64} {
  func.func @_matmul_kernel(%arg0: i32, %arg1: i32, %arg2: i32, %arg3: memref<2x512xf32, #tpu.memory_space<vmem>>, %arg4: memref<512x256xbf16, #tpu.memory_space<vmem>>, %arg5: memref<1x256xf32, #tpu.memory_space<vmem>>, %arg6: memref<2x256xf32, #tpu.memory_space<vmem>>, %arg7: memref<2x256xf32, #tpu.memory_space<vmem>>) attributes {dimension_semantics = [#tpu.dimension_semantics<parallel>, #tpu.dimension_semantics<parallel>, #tpu.dimension_semantics<arbitrary>], iteration_bounds = array<i64: 1, 4, 4>, scalar_prefetch = 0 : i64, scratch_operands = 1 : i64, tpu.core_type = #tpu.core_type<tc>, window_params = [{transform_indices = @transform_0, window_bounds = array<i64: 2, 512>}, {transform_indices = @transform_1, window_bounds = array<i64: 512, 256>}, {transform_indices = @transform_2, window_bounds = array<i64: 1, 256>}, {transform_indices = @transform_3, window_bounds = array<i64: 2, 256>}]} {
    %c0_i32 = arith.constant 0 : i32
    %0 = arith.cmpi eq, %arg2, %c0_i32 : i32
    %1 = arith.extui %0 : i1 to i32
    %c0_i32_0 = arith.constant 0 : i32
    %2 = arith.cmpi ne, %1, %c0_i32_0 : i32
    scf.if %2 {
      %cst_9 = arith.constant 0.000000e+00 : f32
      %13 = vector.broadcast %cst_9 : f32 to vector<2x256xf32>
      %c0_10 = arith.constant 0 : index
      %c0_11 = arith.constant 0 : index
      %14 = vector.load %arg7[%c0_10, %c0_11] : memref<2x256xf32, #tpu.memory_space<vmem>>, vector<2x256xf32>
      tpu.vector_store %arg7[%c0_10, %c0_11], %13 {strides = array<i32>} : memref<2x256xf32, #tpu.memory_space<vmem>>, vector<2x256xf32>,
    } else {
    }
    %c0 = arith.constant 0 : index
    %c0_1 = arith.constant 0 : index
    %3 = vector.load %arg7[%c0, %c0_1] : memref<2x256xf32, #tpu.memory_space<vmem>>, vector<2x256xf32>
    %c0_2 = arith.constant 0 : index
    %c0_3 = arith.constant 0 : index
    %4 = vector.load %arg3[%c0_2, %c0_3] : memref<2x512xf32, #tpu.memory_space<vmem>>, vector<2x512xf32>
    %5 = arith.truncf %4 : vector<2x512xf32> to vector<2x512xbf16>
    %c0_4 = arith.constant 0 : index
    %c0_5 = arith.constant 0 : index
    %6 = vector.load %arg4[%c0_4, %c0_5] : memref<512x256xbf16, #tpu.memory_space<vmem>>, vector<512x256xbf16>
    %cst = arith.constant dense<0.000000e+00> : vector<2x256xf32>
    %7 = tpu.matmul %5, %6, %cst {dimension_numbers = #tpu.dot_dimension_numbers<[1], [0], [0], [1], [0, 0, 1, 1], [], []>} : vector<2x512xbf16>, vector<512x256xbf16>, vector<2x256xf32> -> vector<2x256xf32>
    %8 = arith.addf %3, %7 : vector<2x256xf32>
    %c0_6 = arith.constant 0 : index
    %c0_7 = arith.constant 0 : index
    %9 = vector.load %arg7[%c0_6, %c0_7] : memref<2x256xf32, #tpu.memory_space<vmem>>, vector<2x256xf32>
    tpu.vector_store %arg7[%c0_6, %c0_7], %8 {strides = array<i32>} : memref<2x256xf32, #tpu.memory_space<vmem>>, vector<2x256xf32>,
    %c3_i32 = arith.constant 3 : i32
    %10 = arith.cmpi eq, %arg2, %c3_i32 : i32
    %11 = arith.extui %10 : i1 to i32
    %c0_i32_8 = arith.constant 0 : i32
    %12 = arith.cmpi ne, %11, %c0_i32_8 : i32
    scf.if %12 {
      %c0_9 = arith.constant 0 : index
      %c0_10 = arith.constant 0 : index
      %13 = vector.load %arg7[%c0_9, %c0_10] : memref<2x256xf32, #tpu.memory_space<vmem>>, vector<2x256xf32>
      %c0_11 = arith.constant 0 : index
      %c0_12 = arith.constant 0 : index
      %14 = vector.load %arg5[%c0_11, %c0_12] : memref<1x256xf32, #tpu.memory_space<vmem>>, vector<1x256xf32>
      %15 = vector.broadcast %14 : vector<1x256xf32> to vector<2x256xf32>
      %16 = arith.addf %13, %15 : vector<2x256xf32>
      %c0_13 = arith.constant 0 : index
      %c0_14 = arith.constant 0 : index
      %17 = vector.load %arg6[%c0_13, %c0_14] : memref<2x256xf32, #tpu.memory_space<vmem>>, vector<2x256xf32>
      tpu.vector_store %arg6[%c0_13, %c0_14], %16 {strides = array<i32>} : memref<2x256xf32, #tpu.memory_space<vmem>>, vector<2x256xf32>,
    } else {
    }
    return
  }
  func.func @transform_0(%arg0: i32, %arg1: i32, %arg2: i32) -> (i32, i32) {
    %c0_i32 = arith.constant 0 : i32
    return %arg0, %arg2 : i32, i32
  }
  func.func @transform_1(%arg0: i32, %arg1: i32, %arg2: i32) -> (i32, i32) {
    %c0_i32 = arith.constant 0 : i32
    return %arg2, %arg1 : i32, i32
  }
  func.func @transform_2(%arg0: i32, %arg1: i32, %arg2: i32) -> (i32, i32) {
    %c0_i32 = arith.constant 0 : i32
    %c0_i32_0 = arith.constant 0 : i32
    return %c0_i32, %arg1 : i32, i32
  }
  func.func @transform_3(%arg0: i32, %arg1: i32, %arg2: i32) -> (i32, i32) {
    %c0_i32 = arith.constant 0 : i32
    return %arg0, %arg1 : i32, i32
  }
}

module attributes {stable_mosaic.version = 11 : i64} {
  func.func @_matmul_kernel(%arg0: i32, %arg1: i32, %arg2: i32, %arg3: memref<2x512xf32, #tpu.memory_space<vmem>>, %arg4: memref<512x256xbf16, #tpu.memory_space<vmem>>, %arg5: memref<1x256xf32, #tpu.memory_space<vmem>>, %arg6: memref<2x256xf32, #tpu.memory_space<vmem>>, %arg7: memref<2x256xf32, #tpu.memory_space<vmem>>) attributes {dimension_semantics = [#tpu.dimension_semantics<parallel>, #tpu.dimension_semantics<parallel>, #tpu.dimension_semantics<arbitrary>], iteration_bounds = array<i64: 1, 1, 2>, scalar_prefetch = 0 : i64, scratch_operands = 1 : i64, tpu.core_type = #tpu.core_type<tc>, window_params = [{transform_indices = @transform_0, window_bounds = array<i64: 2, 512>}, {transform_indices = @transform_1, window_bounds = array<i64: 512, 256>}, {transform_indices = @transform_2, window_bounds = array<i64: 1, 256>}, {transform_indices = @transform_3, window_bounds = array<i64: 2, 256>}]} {
    %c0_i32 = arith.constant 0 : i32
    %0 = arith.cmpi eq, %arg2, %c0_i32 : i32
    %1 = arith.extui %0 : i1 to i32
    %c0_i32_0 = arith.constant 0 : i32
    %2 = arith.cmpi ne, %1, %c0_i32_0 : i32
    scf.if %2 {
      %cst_9 = arith.constant 0.000000e+00 : f32
      %13 = vector.broadcast %cst_9 : f32 to vector<2x256xf32>
      %c0_10 = arith.constant 0 : index
      %c0_11 = arith.constant 0 : index
      %14 = vector.load %arg7[%c0_10, %c0_11] : memref<2x256xf32, #tpu.memory_space<vmem>>, vector<2x256xf32>
      tpu.vector_store %arg7[%c0_10, %c0_11], %13 {strides = array<i32>} : memref<2x256xf32, #tpu.memory_space<vmem>>, vector<2x256xf32>,
    } else {
    }
    %c0 = arith.constant 0 : index
    %c0_1 = arith.constant 0 : index
    %3 = vector.load %arg7[%c0, %c0_1] : memref<2x256xf32, #tpu.memory_space<vmem>>, vector<2x256xf32>
    %c0_2 = arith.constant 0 : index
    %c0_3 = arith.constant 0 : index
    %4 = vector.load %arg3[%c0_2, %c0_3] : memref<2x512xf32, #tpu.memory_space<vmem>>, vector<2x512xf32>
    %5 = arith.truncf %4 : vector<2x512xf32> to vector<2x512xbf16>
    %c0_4 = arith.constant 0 : index
    %c0_5 = arith.constant 0 : index
    %6 = vector.load %arg4[%c0_4, %c0_5] : memref<512x256xbf16, #tpu.memory_space<vmem>>, vector<512x256xbf16>
    %cst = arith.constant dense<0.000000e+00> : vector<2x256xf32>
    %7 = tpu.matmul %5, %6, %cst {dimension_numbers = #tpu.dot_dimension_numbers<[1], [0], [0], [1], [0, 0, 1, 1], [], []>} : vector<2x512xbf16>, vector<512x256xbf16>, vector<2x256xf32> -> vector<2x256xf32>
    %8 = arith.addf %3, %7 : vector<2x256xf32>
    %c0_6 = arith.constant 0 : index
    %c0_7 = arith.constant 0 : index
    %9 = vector.load %arg7[%c0_6, %c0_7] : memref<2x256xf32, #tpu.memory_space<vmem>>, vector<2x256xf32>
    tpu.vector_store %arg7[%c0_6, %c0_7], %8 {strides = array<i32>} : memref<2x256xf32, #tpu.memory_space<vmem>>, vector<2x256xf32>,
    %c1_i32 = arith.constant 1 : i32
    %10 = arith.cmpi eq, %arg2, %c1_i32 : i32
    %11 = arith.extui %10 : i1 to i32
    %c0_i32_8 = arith.constant 0 : i32
    %12 = arith.cmpi ne, %11, %c0_i32_8 : i32
    scf.if %12 {
      %c0_9 = arith.constant 0 : index
      %c0_10 = arith.constant 0 : index
      %13 = vector.load %arg7[%c0_9, %c0_10] : memref<2x256xf32, #tpu.memory_space<vmem>>, vector<2x256xf32>
      %c0_11 = arith.constant 0 : index
      %c0_12 = arith.constant 0 : index
      %14 = vector.load %arg5[%c0_11, %c0_12] : memref<1x256xf32, #tpu.memory_space<vmem>>, vector<1x256xf32>
      %15 = vector.broadcast %14 : vector<1x256xf32> to vector<2x256xf32>
      %16 = arith.addf %13, %15 : vector<2x256xf32>
      %c0_13 = arith.constant 0 : index
      %c0_14 = arith.constant 0 : index
      %17 = vector.load %arg6[%c0_13, %c0_14] : memref<2x256xf32, #tpu.memory_space<vmem>>, vector<2x256xf32>
      tpu.vector_store %arg6[%c0_13, %c0_14], %16 {strides = array<i32>} : memref<2x256xf32, #tpu.memory_space<vmem>>, vector<2x256xf32>,
    } else {
    }
    return
  }
  func.func @transform_0(%arg0: i32, %arg1: i32, %arg2: i32) -> (i32, i32) {
    %c0_i32 = arith.constant 0 : i32
    return %arg0, %arg2 : i32, i32
  }
  func.func @transform_1(%arg0: i32, %arg1: i32, %arg2: i32) -> (i32, i32) {
    %c0_i32 = arith.constant 0 : i32
    return %arg2, %arg1 : i32, i32
  }
  func.func @transform_2(%arg0: i32, %arg1: i32, %arg2: i32) -> (i32, i32) {
    %c0_i32 = arith.constant 0 : i32
    %c0_i32_0 = arith.constant 0 : i32
    return %c0_i32, %arg1 : i32, i32
  }
  func.func @transform_3(%arg0: i32, %arg1: i32, %arg2: i32) -> (i32, i32) {
    %c0_i32 = arith.constant 0 : i32
    return %arg0, %arg1 : i32, i32
  }
}

module attributes {stable_mosaic.version = 11 : i64} {
  func.func @_matmul_kernel(%arg0: i32, %arg1: i32, %arg2: i32, %arg3: memref<2x256xf32, #tpu.memory_space<vmem>>, %arg4: memref<256x64xbf16, #tpu.memory_space<vmem>>, %arg5: memref<1x64xf32, #tpu.memory_space<vmem>>, %arg6: memref<2x64xf32, #tpu.memory_space<vmem>>, %arg7: memref<2x64xf32, #tpu.memory_space<vmem>>) attributes {dimension_semantics = [#tpu.dimension_semantics<parallel>, #tpu.dimension_semantics<parallel>, #tpu.dimension_semantics<arbitrary>], iteration_bounds = array<i64: 1, 1, 1>, scalar_prefetch = 0 : i64, scratch_operands = 1 : i64, tpu.core_type = #tpu.core_type<tc>, window_params = [{transform_indices = @transform_0, window_bounds = array<i64: 2, 256>}, {transform_indices = @transform_1, window_bounds = array<i64: 256, 64>}, {transform_indices = @transform_2, window_bounds = array<i64: 1, 64>}, {transform_indices = @transform_3, window_bounds = array<i64: 2, 64>}]} {
    %c0_i32 = arith.constant 0 : i32
    %0 = arith.cmpi eq, %arg2, %c0_i32 : i32
    %1 = arith.extui %0 : i1 to i32
    %c0_i32_0 = arith.constant 0 : i32
    %2 = arith.cmpi ne, %1, %c0_i32_0 : i32
    scf.if %2 {
      %cst_10 = arith.constant 0.000000e+00 : f32
      %13 = vector.broadcast %cst_10 : f32 to vector<2x64xf32>
      %c0_11 = arith.constant 0 : index
      %c0_12 = arith.constant 0 : index
      %14 = vector.load %arg7[%c0_11, %c0_12] : memref<2x64xf32, #tpu.memory_space<vmem>>, vector<2x64xf32>
      tpu.vector_store %arg7[%c0_11, %c0_12], %13 {strides = array<i32>} : memref<2x64xf32, #tpu.memory_space<vmem>>, vector<2x64xf32>,
    } else {
    }
    %c0 = arith.constant 0 : index
    %c0_1 = arith.constant 0 : index
    %3 = vector.load %arg7[%c0, %c0_1] : memref<2x64xf32, #tpu.memory_space<vmem>>, vector<2x64xf32>
    %c0_2 = arith.constant 0 : index
    %c0_3 = arith.constant 0 : index
    %4 = vector.load %arg3[%c0_2, %c0_3] : memref<2x256xf32, #tpu.memory_space<vmem>>, vector<2x256xf32>
    %5 = arith.truncf %4 : vector<2x256xf32> to vector<2x256xbf16>
    %c0_4 = arith.constant 0 : index
    %c0_5 = arith.constant 0 : index
    %6 = vector.load %arg4[%c0_4, %c0_5] : memref<256x64xbf16, #tpu.memory_space<vmem>>, vector<256x64xbf16>
    %cst = arith.constant dense<0.000000e+00> : vector<2x64xf32>
    %7 = tpu.matmul %5, %6, %cst {dimension_numbers = #tpu.dot_dimension_numbers<[1], [0], [0], [1], [0, 0, 1, 1], [], []>} : vector<2x256xbf16>, vector<256x64xbf16>, vector<2x64xf32> -> vector<2x64xf32>
    %8 = arith.addf %3, %7 : vector<2x64xf32>
    %c0_6 = arith.constant 0 : index
    %c0_7 = arith.constant 0 : index
    %9 = vector.load %arg7[%c0_6, %c0_7] : memref<2x64xf32, #tpu.memory_space<vmem>>, vector<2x64xf32>
    tpu.vector_store %arg7[%c0_6, %c0_7], %8 {strides = array<i32>} : memref<2x64xf32, #tpu.memory_space<vmem>>, vector<2x64xf32>,
    %c0_i32_8 = arith.constant 0 : i32
    %10 = arith.cmpi eq, %arg2, %c0_i32_8 : i32
    %11 = arith.extui %10 : i1 to i32
    %c0_i32_9 = arith.constant 0 : i32
    %12 = arith.cmpi ne, %11, %c0_i32_9 : i32
    scf.if %12 {
      %c0_10 = arith.constant 0 : index
      %c0_11 = arith.constant 0 : index
      %13 = vector.load %arg7[%c0_10, %c0_11] : memref<2x64xf32, #tpu.memory_space<vmem>>, vector<2x64xf32>
      %c0_12 = arith.constant 0 : index
      %c0_13 = arith.constant 0 : index
      %14 = vector.load %arg5[%c0_12, %c0_13] : memref<1x64xf32, #tpu.memory_space<vmem>>, vector<1x64xf32>
      %15 = vector.broadcast %14 : vector<1x64xf32> to vector<2x64xf32>
      %16 = arith.addf %13, %15 : vector<2x64xf32>
      %cst_14 = arith.constant 0.000000e+00 : f32
      %17 = vector.broadcast %cst_14 : f32 to vector<2x64xf32>
      %18 = arith.maximumf %16, %17 : vector<2x64xf32>
      %c0_15 = arith.constant 0 : index
      %c0_16 = arith.constant 0 : index
      %19 = vector.load %arg6[%c0_15, %c0_16] : memref<2x64xf32, #tpu.memory_space<vmem>>, vector<2x64xf32>
      tpu.vector_store %arg6[%c0_15, %c0_16], %18 {strides = array<i32>} : memref<2x64xf32, #tpu.memory_space<vmem>>, vector<2x64xf32>,
    } else {
    }
    return
  }
  func.func @transform_0(%arg0: i32, %arg1: i32, %arg2: i32) -> (i32, i32) {
    %c0_i32 = arith.constant 0 : i32
    return %arg0, %arg2 : i32, i32
  }
  func.func @transform_1(%arg0: i32, %arg1: i32, %arg2: i32) -> (i32, i32) {
    %c0_i32 = arith.constant 0 : i32
    return %arg2, %arg1 : i32, i32
  }
  func.func @transform_2(%arg0: i32, %arg1: i32, %arg2: i32) -> (i32, i32) {
    %c0_i32 = arith.constant 0 : i32
    %c0_i32_0 = arith.constant 0 : i32
    return %c0_i32, %arg1 : i32, i32
  }
  func.func @transform_3(%arg0: i32, %arg1: i32, %arg2: i32) -> (i32, i32) {
    %c0_i32 = arith.constant 0 : i32
    return %arg0, %arg1 : i32, i32
  }
}

module attributes {stable_mosaic.version = 11 : i64} {
  func.func @_gap_kernel(%arg0: i32, %arg1: memref<2x64x1024xf32, #tpu.memory_space<vmem>>, %arg2: memref<2x1024xf32, #tpu.memory_space<vmem>>, %arg3: memref<2x1024xf32, #tpu.memory_space<vmem>>) attributes {dimension_semantics = [#tpu.dimension_semantics<arbitrary>], iteration_bounds = array<i64: 1>, scalar_prefetch = 0 : i64, scratch_operands = 1 : i64, tpu.core_type = #tpu.core_type<tc>, window_params = [{transform_indices = @transform_0, window_bounds = array<i64: 2, 64, 1024>}, {pipeline_mode = #tpu.pipeline_mode<synchronous>, transform_indices = @transform_1, window_bounds = array<i64: 2, 1024>}]} {
    %c0_i32 = arith.constant 0 : i32
    %0 = arith.cmpi eq, %arg0, %c0_i32 : i32
    %1 = arith.extui %0 : i1 to i32
    %c0_i32_0 = arith.constant 0 : i32
    %2 = arith.cmpi ne, %1, %c0_i32_0 : i32
    scf.if %2 {
      %cst_9 = arith.constant 0.000000e+00 : f32
      %11 = vector.broadcast %cst_9 : f32 to vector<2x1024xf32>
      %c0_10 = arith.constant 0 : index
      %c0_11 = arith.constant 0 : index
      %12 = vector.load %arg3[%c0_10, %c0_11] : memref<2x1024xf32, #tpu.memory_space<vmem>>, vector<2x1024xf32>
      tpu.vector_store %arg3[%c0_10, %c0_11], %11 {strides = array<i32>} : memref<2x1024xf32, #tpu.memory_space<vmem>>, vector<2x1024xf32>,
    } else {
    }
    %c0 = arith.constant 0 : index
    %c0_1 = arith.constant 0 : index
    %3 = vector.load %arg3[%c0, %c0_1] : memref<2x1024xf32, #tpu.memory_space<vmem>>, vector<2x1024xf32>
    %c0_2 = arith.constant 0 : index
    %c0_3 = arith.constant 0 : index
    %c0_4 = arith.constant 0 : index
    %4 = vector.load %arg1[%c0_2, %c0_3, %c0_4] : memref<2x64x1024xf32, #tpu.memory_space<vmem>>, vector<2x64x1024xf32>
    %cst = arith.constant dense<0.000000e+00> : vector<2x1024xf32>
    %5 = vector.multi_reduction <add>, %4, %cst [1] : vector<2x64x1024xf32> to vector<2x1024xf32>
    %6 = arith.addf %3, %5 : vector<2x1024xf32>
    %c0_5 = arith.constant 0 : index
    %c0_6 = arith.constant 0 : index
    %7 = vector.load %arg3[%c0_5, %c0_6] : memref<2x1024xf32, #tpu.memory_space<vmem>>, vector<2x1024xf32>
    tpu.vector_store %arg3[%c0_5, %c0_6], %6 {strides = array<i32>} : memref<2x1024xf32, #tpu.memory_space<vmem>>, vector<2x1024xf32>,
    %c0_i32_7 = arith.constant 0 : i32
    %8 = arith.cmpi eq, %arg0, %c0_i32_7 : i32
    %9 = arith.extui %8 : i1 to i32
    %c0_i32_8 = arith.constant 0 : i32
    %10 = arith.cmpi ne, %9, %c0_i32_8 : i32
    scf.if %10 {
      %c0_9 = arith.constant 0 : index
      %c0_10 = arith.constant 0 : index
      %11 = vector.load %arg3[%c0_9, %c0_10] : memref<2x1024xf32, #tpu.memory_space<vmem>>, vector<2x1024xf32>
      %cst_11 = arith.constant 1.562500e-02 : f32
      %12 = vector.broadcast %cst_11 : f32 to vector<2x1024xf32>
      %13 = arith.mulf %11, %12 : vector<2x1024xf32>
      %c0_12 = arith.constant 0 : index
      %c0_13 = arith.constant 0 : index
      %14 = vector.load %arg2[%c0_12, %c0_13] : memref<2x1024xf32, #tpu.memory_space<vmem>>, vector<2x1024xf32>
      tpu.vector_store %arg2[%c0_12, %c0_13], %13 {strides = array<i32>} : memref<2x1024xf32, #tpu.memory_space<vmem>>, vector<2x1024xf32>,
    } else {
    }
    return
  }
  func.func @transform_0(%arg0: i32) -> (i32, i32, i32) {
    %c0_i32 = arith.constant 0 : i32
    %c0_i32_0 = arith.constant 0 : i32
    %c0_i32_1 = arith.constant 0 : i32
    return %c0_i32, %arg0, %c0_i32_0 : i32, i32, i32
  }
  func.func @transform_1(%arg0: i32) -> (i32, i32) {
    %c0_i32 = arith.constant 0 : i32
    %c0_i32_0 = arith.constant 0 : i32
    %c0_i32_1 = arith.constant 0 : i32
    return %c0_i32, %c0_i32_0 : i32, i32
  }
}

module attributes {stable_mosaic.version = 11 : i64} {
  func.func @_matmul_kernel(%arg0: i32, %arg1: i32, %arg2: i32, %arg3: memref<2x512xf32, #tpu.memory_space<vmem>>, %arg4: memref<512x256xbf16, #tpu.memory_space<vmem>>, %arg5: memref<1x256xf32, #tpu.memory_space<vmem>>, %arg6: memref<2x256xf32, #tpu.memory_space<vmem>>, %arg7: memref<2x256xf32, #tpu.memory_space<vmem>>) attributes {dimension_semantics = [#tpu.dimension_semantics<parallel>, #tpu.dimension_semantics<parallel>, #tpu.dimension_semantics<arbitrary>], iteration_bounds = array<i64: 1, 4, 2>, scalar_prefetch = 0 : i64, scratch_operands = 1 : i64, tpu.core_type = #tpu.core_type<tc>, window_params = [{transform_indices = @transform_0, window_bounds = array<i64: 2, 512>}, {transform_indices = @transform_1, window_bounds = array<i64: 512, 256>}, {transform_indices = @transform_2, window_bounds = array<i64: 1, 256>}, {transform_indices = @transform_3, window_bounds = array<i64: 2, 256>}]} {
    %c0_i32 = arith.constant 0 : i32
    %0 = arith.cmpi eq, %arg2, %c0_i32 : i32
    %1 = arith.extui %0 : i1 to i32
    %c0_i32_0 = arith.constant 0 : i32
    %2 = arith.cmpi ne, %1, %c0_i32_0 : i32
    scf.if %2 {
      %cst_9 = arith.constant 0.000000e+00 : f32
      %13 = vector.broadcast %cst_9 : f32 to vector<2x256xf32>
      %c0_10 = arith.constant 0 : index
      %c0_11 = arith.constant 0 : index
      %14 = vector.load %arg7[%c0_10, %c0_11] : memref<2x256xf32, #tpu.memory_space<vmem>>, vector<2x256xf32>
      tpu.vector_store %arg7[%c0_10, %c0_11], %13 {strides = array<i32>} : memref<2x256xf32, #tpu.memory_space<vmem>>, vector<2x256xf32>,
    } else {
    }
    %c0 = arith.constant 0 : index
    %c0_1 = arith.constant 0 : index
    %3 = vector.load %arg7[%c0, %c0_1] : memref<2x256xf32, #tpu.memory_space<vmem>>, vector<2x256xf32>
    %c0_2 = arith.constant 0 : index
    %c0_3 = arith.constant 0 : index
    %4 = vector.load %arg3[%c0_2, %c0_3] : memref<2x512xf32, #tpu.memory_space<vmem>>, vector<2x512xf32>
    %5 = arith.truncf %4 : vector<2x512xf32> to vector<2x512xbf16>
    %c0_4 = arith.constant 0 : index
    %c0_5 = arith.constant 0 : index
    %6 = vector.load %arg4[%c0_4, %c0_5] : memref<512x256xbf16, #tpu.memory_space<vmem>>, vector<512x256xbf16>
    %cst = arith.constant dense<0.000000e+00> : vector<2x256xf32>
    %7 = tpu.matmul %5, %6, %cst {dimension_numbers = #tpu.dot_dimension_numbers<[1], [0], [0], [1], [0, 0, 1, 1], [], []>} : vector<2x512xbf16>, vector<512x256xbf16>, vector<2x256xf32> -> vector<2x256xf32>
    %8 = arith.addf %3, %7 : vector<2x256xf32>
    %c0_6 = arith.constant 0 : index
    %c0_7 = arith.constant 0 : index
    %9 = vector.load %arg7[%c0_6, %c0_7] : memref<2x256xf32, #tpu.memory_space<vmem>>, vector<2x256xf32>
    tpu.vector_store %arg7[%c0_6, %c0_7], %8 {strides = array<i32>} : memref<2x256xf32, #tpu.memory_space<vmem>>, vector<2x256xf32>,
    %c1_i32 = arith.constant 1 : i32
    %10 = arith.cmpi eq, %arg2, %c1_i32 : i32
    %11 = arith.extui %10 : i1 to i32
    %c0_i32_8 = arith.constant 0 : i32
    %12 = arith.cmpi ne, %11, %c0_i32_8 : i32
    scf.if %12 {
      %c0_9 = arith.constant 0 : index
      %c0_10 = arith.constant 0 : index
      %13 = vector.load %arg7[%c0_9, %c0_10] : memref<2x256xf32, #tpu.memory_space<vmem>>, vector<2x256xf32>
      %c0_11 = arith.constant 0 : index
      %c0_12 = arith.constant 0 : index
      %14 = vector.load %arg5[%c0_11, %c0_12] : memref<1x256xf32, #tpu.memory_space<vmem>>, vector<1x256xf32>
      %15 = vector.broadcast %14 : vector<1x256xf32> to vector<2x256xf32>
      %16 = arith.addf %13, %15 : vector<2x256xf32>
      %c0_13 = arith.constant 0 : index
      %c0_14 = arith.constant 0 : index
      %17 = vector.load %arg6[%c0_13, %c0_14] : memref<2x256xf32, #tpu.memory_space<vmem>>, vector<2x256xf32>
      tpu.vector_store %arg6[%c0_13, %c0_14], %16 {strides = array<i32>} : memref<2x256xf32, #tpu.memory_space<vmem>>, vector<2x256xf32>,
    } else {
    }
    return
  }
  func.func @transform_0(%arg0: i32, %arg1: i32, %arg2: i32) -> (i32, i32) {
    %c0_i32 = arith.constant 0 : i32
    return %arg0, %arg2 : i32, i32
  }
  func.func @transform_1(%arg0: i32, %arg1: i32, %arg2: i32) -> (i32, i32) {
    %c0_i32 = arith.constant 0 : i32
    return %arg2, %arg1 : i32, i32
  }
  func.func @transform_2(%arg0: i32, %arg1: i32, %arg2: i32) -> (i32, i32) {
    %c0_i32 = arith.constant 0 : i32
    %c0_i32_0 = arith.constant 0 : i32
    return %c0_i32, %arg1 : i32, i32
  }
  func.func @transform_3(%arg0: i32, %arg1: i32, %arg2: i32) -> (i32, i32) {
    %c0_i32 = arith.constant 0 : i32
    return %arg0, %arg1 : i32, i32
  }
}

module attributes {stable_mosaic.version = 11 : i64} {
  func.func @_head_kernel(%arg0: i32, %arg1: memref<2x128xf32, #tpu.memory_space<vmem>>, %arg2: memref<128x3xf32, #tpu.memory_space<vmem>>, %arg3: memref<1x3xf32, #tpu.memory_space<vmem>>, %arg4: memref<2x3xf32, #tpu.memory_space<vmem>>, %arg5: memref<2x1xi32, #tpu.memory_space<vmem>>) attributes {dimension_semantics = [#tpu.dimension_semantics<arbitrary>], iteration_bounds = array<i64: 1>, scalar_prefetch = 0 : i64, scratch_operands = 0 : i64, tpu.core_type = #tpu.core_type<tc>, window_params = [{pipeline_mode = #tpu.pipeline_mode<synchronous>, transform_indices = @transform_0, window_bounds = array<i64: 2, 128>}, {pipeline_mode = #tpu.pipeline_mode<synchronous>, transform_indices = @transform_1, window_bounds = array<i64: 128, 3>}, {pipeline_mode = #tpu.pipeline_mode<synchronous>, transform_indices = @transform_2, window_bounds = array<i64: 1, 3>}, {pipeline_mode = #tpu.pipeline_mode<synchronous>, transform_indices = @transform_3, window_bounds = array<i64: 2, 3>}, {pipeline_mode = #tpu.pipeline_mode<synchronous>, transform_indices = @transform_4, window_bounds = array<i64: 2, 1>}]} {
    %c0 = arith.constant 0 : index
    %c0_0 = arith.constant 0 : index
    %0 = vector.load %arg1[%c0, %c0_0] : memref<2x128xf32, #tpu.memory_space<vmem>>, vector<2x128xf32>
    %c0_1 = arith.constant 0 : index
    %c0_2 = arith.constant 0 : index
    %1 = vector.load %arg2[%c0_1, %c0_2] : memref<128x3xf32, #tpu.memory_space<vmem>>, vector<128x3xf32>
    %cst = arith.constant dense<0.000000e+00> : vector<2x3xf32>
    %2 = tpu.matmul %0, %1, %cst {dimension_numbers = #tpu.dot_dimension_numbers<[1], [0], [0], [1], [0, 0, 1, 1], [], []>} : vector<2x128xf32>, vector<128x3xf32>, vector<2x3xf32> -> vector<2x3xf32>
    %c0_3 = arith.constant 0 : index
    %c0_4 = arith.constant 0 : index
    %3 = vector.load %arg3[%c0_3, %c0_4] : memref<1x3xf32, #tpu.memory_space<vmem>>, vector<1x3xf32>
    %4 = vector.broadcast %3 : vector<1x3xf32> to vector<2x3xf32>
    %5 = arith.addf %2, %4 : vector<2x3xf32>
    %c0_5 = arith.constant 0 : index
    %c0_6 = arith.constant 0 : index
    %6 = vector.load %arg4[%c0_5, %c0_6] : memref<2x3xf32, #tpu.memory_space<vmem>>, vector<2x3xf32>
    tpu.vector_store %arg4[%c0_5, %c0_6], %5 {strides = array<i32>} : memref<2x3xf32, #tpu.memory_space<vmem>>, vector<2x3xf32>,
    %7 = vector.extract_strided_slice %5 {offsets = [0, 2], sizes = [2, 1], strides = [1, 1]} : vector<2x3xf32> to vector<2x1xf32>
    %cst_7 = arith.constant 1.000000e+00 : f32
    %8 = vector.broadcast %cst_7 : f32 to vector<2x1xf32>
    %9 = arith.mulf %7, %8 : vector<2x1xf32>
    %cst_8 = arith.constant 5.450000e+01 : f32
    %10 = vector.broadcast %cst_8 : f32 to vector<2x1xf32>
    %11 = arith.addf %9, %10 : vector<2x1xf32>
    %cst_9 = arith.constant 25.7806816 : f32
    %12 = vector.broadcast %cst_9 : f32 to vector<2x1xf32>
    %13 = arith.subf %11, %12 : vector<2x1xf32>
    %cst_10 = arith.constant 5.74462843 : f32
    %14 = vector.broadcast %cst_10 : f32 to vector<2x1xf32>
    %15 = arith.divf %13, %14 : vector<2x1xf32>
    %16 = math.ceil %15 : vector<2x1xf32>
    %cst_11 = arith.constant 25.7806816 : f32
    %17 = vector.broadcast %cst_11 : f32 to vector<2x1xf32>
    %18 = arith.cmpf ole, %11, %17 : vector<2x1xf32>
    %cst_12 = arith.constant 83.2269669 : f32
    %19 = vector.broadcast %cst_12 : f32 to vector<2x1xf32>
    %20 = arith.cmpf ogt, %11, %19 : vector<2x1xf32>
    %cst_13 = arith.constant 1.100000e+01 : f32
    %21 = vector.broadcast %cst_13 : f32 to vector<2x1xf32>
    %22 = arith.select %20, %21, %16 : vector<2x1xi1>, vector<2x1xf32>
    %cst_14 = arith.constant 0.000000e+00 : f32
    %23 = vector.broadcast %cst_14 : f32 to vector<2x1xf32>
    %24 = arith.select %18, %23, %22 : vector<2x1xi1>, vector<2x1xf32>
    %25 = arith.fptosi %24 : vector<2x1xf32> to vector<2x1xi32>
    %c0_15 = arith.constant 0 : index
    %c0_16 = arith.constant 0 : index
    %26 = vector.load %arg5[%c0_15, %c0_16] : memref<2x1xi32, #tpu.memory_space<vmem>>, vector<2x1xi32>
    tpu.vector_store %arg5[%c0_15, %c0_16], %25 {strides = array<i32>} : memref<2x1xi32, #tpu.memory_space<vmem>>, vector<2x1xi32>,
    return
  }
  func.func @transform_0(%arg0: i32) -> (i32, i32) {
    %c0_i32 = arith.constant 0 : i32
    %c0_i32_0 = arith.constant 0 : i32
    %c0_i32_1 = arith.constant 0 : i32
    return %c0_i32, %c0_i32_0 : i32, i32
  }
  func.func @transform_1(%arg0: i32) -> (i32, i32) {
    %c0_i32 = arith.constant 0 : i32
    %c0_i32_0 = arith.constant 0 : i32
    %c0_i32_1 = arith.constant 0 : i32
    return %c0_i32, %c0_i32_0 : i32, i32
  }
  func.func @transform_2(%arg0: i32) -> (i32, i32) {
    %c0_i32 = arith.constant 0 : i32
    %c0_i32_0 = arith.constant 0 : i32
    %c0_i32_1 = arith.constant 0 : i32
    return %c0_i32, %c0_i32_0 : i32, i32
  }
  func.func @transform_3(%arg0: i32) -> (i32, i32) {
    %c0_i32 = arith.constant 0 : i32
    %c0_i32_0 = arith.constant 0 : i32
    %c0_i32_1 = arith.constant 0 : i32
    return %c0_i32, %c0_i32_0 : i32, i32
  }
  func.func @transform_4(%arg0: i32) -> (i32, i32) {
    %c0_i32 = arith.constant 0 : i32
    %c0_i32_0 = arith.constant 0 : i32
    %c0_i32_1 = arith.constant 0 : i32
    return %c0_i32, %c0_i32_0 : i32, i32
  }
}

</mosaic_0001>

<llo_original>
// kernel: _lambda_.14
$region0: #{_lambda_.14}
  #allocation0 [shape = 'u32[]', space=smem, size = 0x4, offset = 0x4, fixed_abs, tag = 'smem constant byte address 0x4 - core index']
  #allocation1 [shape = 'u32[144,128]{1,0:T(1,128)}', space=vmem, size = 0x12000, scoped, tag = 'internal scratch']
  %s0 = inlined_call_operand.hbm [shape: f32[8], index: 0, kind: input, shape index: {}]
  %s1 = inlined_call_operand.vmem [shape: f32[27,512], index: 1, kind: input, shape index: {}]
  %s2 = inlined_call_operand.hbm [shape: f32[6,27], index: 2, kind: input, shape index: {}]
  %s3 = inlined_call_operand.vmem [shape: f32[6,1], index: 3, kind: input, shape index: {}]
  %s4 = inlined_call_operand.vmem [shape: f32[3,512], index: 4, kind: input, shape index: {}]
  %s5 = inlined_call_operand.vmem [shape: f32[3,512], index: 5, kind: input, shape index: {}]
  %s6 = inlined_call_operand.vmem [shape: f32[3,512], index: 6, kind: output, shape index: {}]
  %s7 = sld [smem:[#allocation0]]
  $region42: #{_lambda_.14} parent=0
    _
  %s9 = ssub.s32 1, %s7
  %s10 = scalar_select 0, %s9, %s7
  $region1: #{_lambda_.14} parent=0
    #allocation2 [shape = 'u8[512]{0}', space=smem, size = 0x200, scoped, tag = 'input window, operand 0, single buffered']
    #allocation3 [shape = 's32[1]{0}', space=sflag, size = 0x4, scoped, tag = 'scoped memory for _lambda_.14']
    #allocation4 [shape = 's32[1]{0}', space=sflag, size = 0x4, scoped, tag = 'scoped memory for _lambda_.14']
    #allocation5 [shape = 'u8[4096]{0}', space=vmem, size = 0x1000, scoped, tag = 'input window, operand 2, single buffered']
    %11 = vsyncpa [#allocation4], 0
    %12 = vsyncpa [#allocation3], 0
    // Predicated region
    $region2: #{_lambda_.14} parent=1 // pred_check
      _
    $region3: #{_lambda_.14} parent=1 // pred_check_branch
      %14 = sbr.rel (0) target = $region5
    $region4: #{_lambda_.14} parent=1 // pred_region
      %s16 = ssub.s32 16, 16
      %17 = vsyncadd [#allocation4], %s16
      %20 = dma.hbm_to_smem %s0, 16, [#allocation2], [#allocation4]
    $region5: #{_lambda_.14} parent=1 // pred_fallthru
      _
    // Predicated region
    $region6: #{_lambda_.14} parent=1 // pred_check
      _
    $region7: #{_lambda_.14} parent=1 // pred_check_branch
      %22 = sbr.rel (0) target = $region9
    $region8: #{_lambda_.14} parent=1 // pred_region
      _
    $region9: #{_lambda_.14} parent=1 // pred_fallthru
      _
    // Predicated region
    $region10: #{_lambda_.14} parent=1 // pred_check
      _
    $region11: #{_lambda_.14} parent=1 // pred_check_branch
      %24 = sbr.rel (0) target = $region13
    $region12: #{_lambda_.14} parent=1 // pred_region
      %s26 = ssub.s32 128, 128
      %27 = vsyncadd [#allocation3], %s26
      %s29 = sshll.u32 [#allocation5], 4
      %s30 = int_to_ptr.vmem [resolvable:$true] %s29
      %32 = dma.hbm_to_vmem [thread:$0]  %s2, 128, %s30, [#allocation3]
    $region13: #{_lambda_.14} parent=1 // pred_fallthru
      _
    // Predicated region
    $region14: #{_lambda_.14} parent=1 // pred_check
      _
    $region15: #{_lambda_.14} parent=1 // pred_check_branch
      %34 = sbr.rel (0) target = $region17
    $region16: #{_lambda_.14} parent=1 // pred_region
      _
    $region17: #{_lambda_.14} parent=1 // pred_fallthru
      _
    // Predicated region
    $region18: #{_lambda_.14} parent=1 // pred_check
      _
    $region19: #{_lambda_.14} parent=1 // pred_check_branch
      %36 = sbr.rel (0) target = $region21
    $region20: #{_lambda_.14} parent=1 // pred_region
      _
    $region21: #{_lambda_.14} parent=1 // pred_fallthru
      _
    // Predicated region
    $region22: #{_lambda_.14} parent=1 // pred_check
      _
    $region23: #{_lambda_.14} parent=1 // pred_check_branch
      %38 = sbr.rel (0) target = $region25
    $region24: #{_lambda_.14} parent=1 // pred_region
      _
    $region25: #{_lambda_.14} parent=1 // pred_fallthru
      _
    // Predicated region
    $region26: #{_lambda_.14} parent=1 // pred_check
      _
    $region27: #{_lambda_.14} parent=1 // pred_check_branch
      %40 = sbr.rel (0) target = $region29
    $region28: #{_lambda_.14} parent=1 // pred_region
      %41 = dma.done [#allocation4], 16
    $region29: #{_lambda_.14} parent=1 // pred_fallthru
      _
    // Predicated region
    $region30: #{_lambda_.14} parent=1 // pred_check
      _
    $region31: #{_lambda_.14} parent=1 // pred_check_branch
      %43 = sbr.rel (0) target = $region33
    $region32: #{_lambda_.14} parent=1 // pred_region
      %44 = dma.done [#allocation3], 128
    $region33: #{_lambda_.14} parent=1 // pred_fallthru
      _
    %45 = sfence
    %s46 = sld [smem:[#allocation2]]
    %s47 = sld [smem:[#allocation2 + $0x1]]
    %s48 = sld [smem:[#allocation2 + $0x2]]
    %s49 = sld [smem:[#allocation2 + $0x3]]
    %s50 = sld [smem:[#allocation2 + $0x4]]
    %v51 = vld [vmem:[#allocation5] sm:$0x3f]
    %v52 = vld [vmem:[%s1] sm:$0xff]
    %v53 = vld [vmem:[%s1 + $0x8] sm:$0xff]
    %v54 = vld [vmem:[%s1 + $0x10] sm:$0xff]
    %v55 = vld [vmem:[%s1 + $0x18] sm:$0xff]
    %v56 = vld [vmem:[%s1 + $0x20] sm:$0xff]
    %v57 = vld [vmem:[%s1 + $0x28] sm:$0xff]
    %v58 = vld [vmem:[%s1 + $0x30] sm:$0xff]
    %v59 = vld [vmem:[%s1 + $0x38] sm:$0xff]
    %v60 = vld [vmem:[%s1 + $0x40] sm:$0xff]
    %v61 = vld [vmem:[%s1 + $0x48] sm:$0xff]
    %v62 = vld [vmem:[%s1 + $0x50] sm:$0xff]
    %v63 = vld [vmem:[%s1 + $0x58] sm:$0xff]
    %v64 = vld [vmem:[%s1 + $0x60] sm:$0x7]
    %v65 = vld [vmem:[%s1 + $0x68] sm:$0x7]
    %v66 = vld [vmem:[%s1 + $0x70] sm:$0x7]
    %v67 = vld [vmem:[%s1 + $0x78] sm:$0x7]
    %v68 = vld [vmem:[%s3] sm:$0x3f]
    %70 = vset.pattern.permute.xlu0 0
    %71 = vperm.xlu0 %70, %v68
    %v72 = vpop.permute.xlu0 %71
    %vm74 = vcmask 220160
    %v76 = vsel %vm74, %v51, 0
    %vm78 = vcmask 1042432
    %v80 = vsel %vm78, %v64, 0
    %v83 = vsel %vm78, %v65, 0
    %v86 = vsel %vm78, %v66, 0
    %v89 = vsel %vm78, %v67, 0
    %91 = vmatprep.subr.mxu0 0.0
    %92 = vmatpush1.msra.mxu0 0.0
    %93 = vmatprep.subr.mxu0 0.0
    %94 = vmatpush1.msra.mxu0 0.0
    %95 = vmatprep.subr.mxu0 0.0
    %96 = vmatpush1.msra.mxu0 0.0
    %97 = vmatprep.subr.mxu0 0.0
    %98 = vmatpush1.msra.mxu0 0.0
    %99 = vmatprep.subr.mxu0 0.0
    %100 = vmatpush1.msra.mxu0 0.0
    %101 = vmatprep.subr.mxu0 0.0
    %102 = vmatpush1.msra.mxu0 0.0
    %103 = vmatprep.subr.mxu0 0.0
    %104 = vmatpush1.msra.mxu0 0.0
    %105 = vmatprep.subr.mxu0 0.0
    %106 = vmatpush1.msra.mxu0 0.0
    %107 = vmatprep.subr.mxu0 0.0
    %108 = vmatpush1.msra.mxu0 0.0
    %109 = vmatprep.subr.mxu0 0.0
    %110 = vmatpush1.msra.mxu0 0.0
    %111 = vmatprep.subr.mxu0 0.0
    %112 = vmatpush1.msra.mxu0 0.0
    %113 = vmatprep.subr.mxu0 0.0
    %114 = vmatpush1.msra.mxu0 0.0
    %115 = vmatprep.subr.mxu0 %v83
    %116 = vmatpush1.msra.mxu0 %v80
    %117 = vmatprep.subr.mxu0 %v61
    %118 = vmatpush1.msra.mxu0 %v60
    %119 = vmatprep.subr.mxu0 %v57
    %120 = vmatpush1.msra.mxu0 %v56
    %121 = vmatprep.subr.mxu0 %v53
    %122 = vmatpush1.msra.mxu0 %v52
    %123 = vmatprep.subr.mxu0 0.0
    %124 = vmatpush2.msra.mxu0 0.0
    %125 = vmatprep.subr.mxu0 0.0
    %126 = vmatpush2.msra.mxu0 0.0
    %127 = vmatprep.subr.mxu0 0.0
    %128 = vmatpush2.msra.mxu0 0.0
    %129 = vmatprep.subr.mxu0 0.0
    %130 = vmatpush2.msra.mxu0 0.0
    %131 = vmatprep.subr.mxu0 0.0
    %132 = vmatpush2.msra.mxu0 0.0
    %133 = vmatprep.subr.mxu0 0.0
    %134 = vmatpush2.msra.mxu0 0.0
    %135 = vmatprep.subr.mxu0 0.0
    %136 = vmatpush2.msra.mxu0 0.0
    %137 = vmatprep.subr.mxu0 0.0
    %138 = vmatpush2.msra.mxu0 0.0
    %139 = vmatprep.subr.mxu0 0.0
    %140 = vmatpush2.msra.mxu0 0.0
    %141 = vmatprep.subr.mxu0 0.0
    %142 = vmatpush2.msra.mxu0 0.0
    %143 = vmatprep.subr.mxu0 0.0
    %144 = vmatpush2.msra.mxu0 0.0
    %145 = vmatprep.subr.mxu0 0.0
    %146 = vmatpush2.msra.mxu0 0.0
    %147 = vmatprep.subr.mxu0 0.0
    %148 = vmatpush2.msra.mxu0 0.0
    %149 = vmatprep.subr.mxu0 0.0
    %150 = vmatpush2.msra.mxu0 0.0
    %151 = vmatprep.subr.mxu0 0.0
    %152 = vmatpush2.msra.mxu0 0.0
    %153 = vmatprep.subr.mxu0 0.0
    %154 = vmatpush2.msra.mxu0 0.0
    %155 = vmatprep.mubr.f32.mxu0 0.0
    %156 = vmatmul.mubr.f32.gmra.mxu0 %v76
    %v157 = vpop.f32.mrf.mxu0
    %v158 = vadd.f32 %v72, %v157
    %v159 = vpop.f32.mrf.mxu0
    %v160 = vadd.f32 %v72, %v159
    %161 = vdwg.mxu0
    %162 = vmatprep.subr.mxu0 0.0
    %163 = vmatpush1.msra.mxu0 0.0
    %164 = vmatprep.subr.mxu0 0.0
    %165 = vmatpush1.msra.mxu0 0.0
    %166 = vmatprep.subr.mxu0 0.0
    %167 = vmatpush1.msra.mxu0 0.0
    %168 = vmatprep.subr.mxu0 0.0
    %169 = vmatpush1.msra.mxu0 0.0
    %170 = vmatprep.subr.mxu0 0.0
    %171 = vmatpush1.msra.mxu0 0.0
    %172 = vmatprep.subr.mxu0 0.0
    %173 = vmatpush1.msra.mxu0 0.0
    %174 = vmatprep.subr.mxu0 0.0
    %175 = vmatpush1.msra.mxu0 0.0
    %176 = vmatprep.subr.mxu0 0.0
    %177 = vmatpush1.msra.mxu0 0.0
    %178 = vmatprep.subr.mxu0 0.0
    %179 = vmatpush1.msra.mxu0 0.0
    %180 = vmatprep.subr.mxu0 0.0
    %181 = vmatpush1.msra.mxu0 0.0
    %182 = vmatprep.subr.mxu0 0.0
    %183 = vmatpush1.msra.mxu0 0.0
    %184 = vmatprep.subr.mxu0 0.0
    %185 = vmatpush1.msra.mxu0 0.0
    %186 = vmatprep.subr.mxu0 %v89
    %187 = vmatpush1.msra.mxu0 %v86
    %188 = vmatprep.subr.mxu0 %v63
    %189 = vmatpush1.msra.mxu0 %v62
    %190 = vmatprep.subr.mxu0 %v59
    %191 = vmatpush1.msra.mxu0 %v58
    %192 = vmatprep.subr.mxu0 %v55
    %193 = vmatpush1.msra.mxu0 %v54
    %194 = vmatprep.subr.mxu0 0.0
    %195 = vmatpush2.msra.mxu0 0.0
    %196 = vmatprep.subr.mxu0 0.0
    %197 = vmatpush2.msra.mxu0 0.0
    %198 = vmatprep.subr.mxu0 0.0
    %199 = vmatpush2.msra.mxu0 0.0
    %200 = vmatprep.subr.mxu0 0.0
    %201 = vmatpush2.msra.mxu0 0.0
    %202 = vmatprep.subr.mxu0 0.0
    %203 = vmatpush2.msra.mxu0 0.0
    %204 = vmatprep.subr.mxu0 0.0
    %205 = vmatpush2.msra.mxu0 0.0
    %206 = vmatprep.subr.mxu0 0.0
    %207 = vmatpush2.msra.mxu0 0.0
    %208 = vmatprep.subr.mxu0 0.0
    %209 = vmatpush2.msra.mxu0 0.0
    %210 = vmatprep.subr.mxu0 0.0
    %211 = vmatpush2.msra.mxu0 0.0
    %212 = vmatprep.subr.mxu0 0.0
    %213 = vmatpush2.msra.mxu0 0.0
    %214 = vmatprep.subr.mxu0 0.0
    %215 = vmatpush2.msra.mxu0 0.0
    %216 = vmatprep.subr.mxu0 0.0
    %217 = vmatpush2.msra.mxu0 0.0
    %218 = vmatprep.subr.mxu0 0.0
    %219 = vmatpush2.msra.mxu0 0.0
    %220 = vmatprep.subr.mxu0 0.0
    %221 = vmatpush2.msra.mxu0 0.0
    %222 = vmatprep.subr.mxu0 0.0
    %223 = vmatpush2.msra.mxu0 0.0
    %224 = vmatprep.subr.mxu0 0.0
    %225 = vmatpush2.msra.mxu0 0.0
    %226 = vmatprep.mubr.f32.mxu0 0.0
    %227 = vmatmul.mubr.f32.gmra.mxu0 %v76
    %v228 = vpop.f32.mrf.mxu0
    %v229 = vadd.f32 %v72, %v228
    %v230 = vpop.f32.mrf.mxu0
    %v231 = vadd.f32 %v72, %v230
    %232 = vdwg.mxu0
    %v233 = vld [vmem:[%s4] sm:$0x77]
    %v234 = vld [vmem:[%s4 + $0x8] sm:$0x77]
    %v235 = vstv %s46
    %v236 = vmul.f32 %v235, %v233
    %v237 = vmul.f32 %v235, %v234
    %v238 = vstv %s47
    %v239 = vmul.f32 %v238, %v158
    %v240 = vmul.f32 %v238, %v160
    %v241 = vmul.f32 %v238, %v229
    %v242 = vmul.f32 %v238, %v231
    %v247 = vcombine.low %v239, %v240
    %v248 = vcombine.low %v241, %v242
    %v251 = vsub.f32 %v236, %v247
    %v252 = vsub.f32 %v237, %v248
    %v253 = vmax.f32 %v251, -1.0
    %v254 = vmax.f32 %v252, -1.0
    %v255 = vmin.f32 %v253, 1.0
    %v256 = vmin.f32 %v254, 1.0
    %v257 = vstv %s48
    %v258 = vmul.f32 %v257, %v255
    %v259 = vmul.f32 %v257, %v256
    %v260 = vstv %s49
    %v261 = vmul.f32 %v260, %v233
    %v262 = vmul.f32 %v260, %v234
    %v263 = vadd.f32 %v258, %v261
    %v264 = vadd.f32 %v259, %v262
    %v265 = vld [vmem:[%s5] sm:$0x77]
    %v266 = vld [vmem:[%s5 + $0x8] sm:$0x77]
    %v267 = vstv %s50
    %v268 = vmul.f32 %v267, %v265
    %v269 = vmul.f32 %v267, %v266
    %v270 = vadd.f32 %v263, %v268
    %v271 = vadd.f32 %v264, %v269
    %272 = vst [vmem:[%s6] sm:$0x77] %v270
    %273 = vst [vmem:[%s6 + $0x8] sm:$0x77] %v271
    // Predicated region
    $region34: #{_lambda_.14} parent=1 // pred_check
      _
    $region35: #{_lambda_.14} parent=1 // pred_check_branch
      %275 = sbr.rel (0) target = $region37
    $region36: #{_lambda_.14} parent=1 // pred_region
      _
    $region37: #{_lambda_.14} parent=1 // pred_fallthru
      _
    // Predicated region
    $region38: #{_lambda_.14} parent=1 // pred_check
      _
    $region39: #{_lambda_.14} parent=1 // pred_check_branch
      %277 = sbr.rel (0) target = $region41
    $region40: #{_lambda_.14} parent=1 // pred_region
      _
    $region41: #{_lambda_.14} parent=1 // pred_fallthru
      _
    %278 = vsyncpa [#allocation3], 1
    %279 = vsyncpa [#allocation4], 1

// kernel: _lambda_.15
$region0: #{_lambda_.15}
  #allocation0 [shape = 'u32[]', space=smem, size = 0x4, offset = 0x4, fixed_abs, tag = 'smem constant byte address 0x4 - core index']
  #allocation1 [shape = 'u32[144,128]{1,0:T(1,128)}', space=vmem, size = 0x12000, scoped, tag = 'internal scratch']
  %s0 = inlined_call_operand.vmem [shape: f32[8], index: 0, kind: input, shape index: {}]
  %s1 = inlined_call_operand.vmem [shape: f32[27,512], index: 1, kind: input, shape index: {}]
  %s2 = inlined_call_operand.vmem [shape: f32[6,27], index: 2, kind: input, shape index: {}]
  %s3 = inlined_call_operand.vmem [shape: f32[6,1], index: 3, kind: input, shape index: {}]
  %s4 = inlined_call_operand.vmem [shape: f32[3,512], index: 4, kind: input, shape index: {}]
  %s5 = inlined_call_operand.vmem [shape: f32[3,512], index: 5, kind: input, shape index: {}]
  %s6 = inlined_call_operand.vmem [shape: f32[3,512], index: 6, kind: output, shape index: {}]
  %s7 = sld [smem:[#allocation0]]
  $region38: #{_lambda_.15} parent=0
    _
  %s9 = ssub.s32 1, %s7
  %s10 = scalar_select 0, %s9, %s7
  $region1: #{_lambda_.15} parent=0
    #allocation2 [shape = 'u8[512]{0}', space=smem, size = 0x200, scoped, tag = 'input window, operand 0, single buffered']
    #allocation3 [shape = 's32[1]{0}', space=sflag, size = 0x4, scoped, tag = 'scoped memory for _lambda_.15']
    %11 = vsyncpa [#allocation3], 0
    // Predicated region
    $region2: #{_lambda_.15} parent=1 // pred_check
      _
    $region3: #{_lambda_.15} parent=1 // pred_check_branch
      %13 = sbr.rel (0) target = $region5
    $region4: #{_lambda_.15} parent=1 // pred_region
      %s15 = ssub.s32 16, 16
      %16 = vsyncadd [#allocation3], %s15
      %s18 = sshll.u32 %s0, 4
      %s19 = int_to_ptr.vmem [resolvable:$true] %s18
      %21 = dma.vmem_to_smem %s19, 16, [#allocation2], [#allocation3]
    $region5: #{_lambda_.15} parent=1 // pred_fallthru
      _
    // Predicated region
    $region6: #{_lambda_.15} parent=1 // pred_check
      _
    $region7: #{_lambda_.15} parent=1 // pred_check_branch
      %23 = sbr.rel (0) target = $region9
    $region8: #{_lambda_.15} parent=1 // pred_region
      _
    $region9: #{_lambda_.15} parent=1 // pred_fallthru
      _
    // Predicated region
    $region10: #{_lambda_.15} parent=1 // pred_check
      _
    $region11: #{_lambda_.15} parent=1 // pred_check_branch
      %25 = sbr.rel (0) target = $region13
    $region12: #{_lambda_.15} parent=1 // pred_region
      _
    $region13: #{_lambda_.15} parent=1 // pred_fallthru
      _
    // Predicated region
    $region14: #{_lambda_.15} parent=1 // pred_check
      _
    $region15: #{_lambda_.15} parent=1 // pred_check_branch
      %27 = sbr.rel (0) target = $region17
    $region16: #{_lambda_.15} parent=1 // pred_region
      _
    $region17: #{_lambda_.15} parent=1 // pred_fallthru
      _
    // Predicated region
    $region18: #{_lambda_.15} parent=1 // pred_check
      _
    $region19: #{_lambda_.15} parent=1 // pred_check_branch
      %29 = sbr.rel (0) target = $region21
    $region20: #{_lambda_.15} parent=1 // pred_region
      _
    $region21: #{_lambda_.15} parent=1 // pred_fallthru
      _
    // Predicated region
    $region22: #{_lambda_.15} parent=1 // pred_check
      _
    $region23: #{_lambda_.15} parent=1 // pred_check_branch
      %31 = sbr.rel (0) target = $region25
    $region24: #{_lambda_.15} parent=1 // pred_region
      _
    $region25: #{_lambda_.15} parent=1 // pred_fallthru
      _
    // Predicated region
    $region26: #{_lambda_.15} parent=1 // pred_check
      _
    $region27: #{_lambda_.15} parent=1 // pred_check_branch
      %33 = sbr.rel (0) target = $region29
    $region28: #{_lambda_.15} parent=1 // pred_region
      %34 = dma.done [#allocation3], 16
    $region29: #{_lambda_.15} parent=1 // pred_fallthru
      _
    %35 = sfence
    %s36 = sld [smem:[#allocation2]]
    %s37 = sld [smem:[#allocation2 + $0x1]]
    %s38 = sld [smem:[#allocation2 + $0x2]]
    %s39 = sld [smem:[#allocation2 + $0x3]]
    %s40 = sld [smem:[#allocation2 + $0x4]]
    %v41 = vld [vmem:[%s2] sm:$0x3f]
    %v42 = vld [vmem:[%s1] sm:$0xff]
    %v43 = vld [vmem:[%s1 + $0x8] sm:$0xff]
    %v44 = vld [vmem:[%s1 + $0x10] sm:$0xff]
    %v45 = vld [vmem:[%s1 + $0x18] sm:$0xff]
    %v46 = vld [vmem:[%s1 + $0x20] sm:$0xff]
    %v47 = vld [vmem:[%s1 + $0x28] sm:$0xff]
    %v48 = vld [vmem:[%s1 + $0x30] sm:$0xff]
    %v49 = vld [vmem:[%s1 + $0x38] sm:$0xff]
    %v50 = vld [vmem:[%s1 + $0x40] sm:$0xff]
    %v51 = vld [vmem:[%s1 + $0x48] sm:$0xff]
    %v52 = vld [vmem:[%s1 + $0x50] sm:$0xff]
    %v53 = vld [vmem:[%s1 + $0x58] sm:$0xff]
    %v54 = vld [vmem:[%s1 + $0x60] sm:$0x7]
    %v55 = vld [vmem:[%s1 + $0x68] sm:$0x7]
    %v56 = vld [vmem:[%s1 + $0x70] sm:$0x7]
    %v57 = vld [vmem:[%s1 + $0x78] sm:$0x7]
    %v58 = vld [vmem:[%s3] sm:$0x3f]
    %60 = vset.pattern.permute.xlu0 0
    %61 = vperm.xlu0 %60, %v58
    %v62 = vpop.permute.xlu0 %61
    %vm64 = vcmask 220160
    %v66 = vsel %vm64, %v41, 0
    %vm68 = vcmask 1042432
    %v70 = vsel %vm68, %v54, 0
    %v73 = vsel %vm68, %v55, 0
    %v76 = vsel %vm68, %v56, 0
    %v79 = vsel %vm68, %v57, 0
    %81 = vmatprep.subr.mxu0 0.0
    %82 = vmatpush1.msra.mxu0 0.0
    %83 = vmatprep.subr.mxu0 0.0
    %84 = vmatpush1.msra.mxu0 0.0
    %85 = vmatprep.subr.mxu0 0.0
    %86 = vmatpush1.msra.mxu0 0.0
    %87 = vmatprep.subr.mxu0 0.0
    %88 = vmatpush1.msra.mxu0 0.0
    %89 = vmatprep.subr.mxu0 0.0
    %90 = vmatpush1.msra.mxu0 0.0
    %91 = vmatprep.subr.mxu0 0.0
    %92 = vmatpush1.msra.mxu0 0.0
    %93 = vmatprep.subr.mxu0 0.0
    %94 = vmatpush1.msra.mxu0 0.0
    %95 = vmatprep.subr.mxu0 0.0
    %96 = vmatpush1.msra.mxu0 0.0
    %97 = vmatprep.subr.mxu0 0.0
    %98 = vmatpush1.msra.mxu0 0.0
    %99 = vmatprep.subr.mxu0 0.0
    %100 = vmatpush1.msra.mxu0 0.0
    %101 = vmatprep.subr.mxu0 0.0
    %102 = vmatpush1.msra.mxu0 0.0
    %103 = vmatprep.subr.mxu0 0.0
    %104 = vmatpush1.msra.mxu0 0.0
    %105 = vmatprep.subr.mxu0 %v73
    %106 = vmatpush1.msra.mxu0 %v70
    %107 = vmatprep.subr.mxu0 %v51
    %108 = vmatpush1.msra.mxu0 %v50
    %109 = vmatprep.subr.mxu0 %v47
    %110 = vmatpush1.msra.mxu0 %v46
    %111 = vmatprep.subr.mxu0 %v43
    %112 = vmatpush1.msra.mxu0 %v42
    %113 = vmatprep.subr.mxu0 0.0
    %114 = vmatpush2.msra.mxu0 0.0
    %115 = vmatprep.subr.mxu0 0.0
    %116 = vmatpush2.msra.mxu0 0.0
    %117 = vmatprep.subr.mxu0 0.0
    %118 = vmatpush2.msra.mxu0 0.0
    %119 = vmatprep.subr.mxu0 0.0
    %120 = vmatpush2.msra.mxu0 0.0
    %121 = vmatprep.subr.mxu0 0.0
    %122 = vmatpush2.msra.mxu0 0.0
    %123 = vmatprep.subr.mxu0 0.0
    %124 = vmatpush2.msra.mxu0 0.0
    %125 = vmatprep.subr.mxu0 0.0
    %126 = vmatpush2.msra.mxu0 0.0
    %127 = vmatprep.subr.mxu0 0.0
    %128 = vmatpush2.msra.mxu0 0.0
    %129 = vmatprep.subr.mxu0 0.0
    %130 = vmatpush2.msra.mxu0 0.0
    %131 = vmatprep.subr.mxu0 0.0
    %132 = vmatpush2.msra.mxu0 0.0
    %133 = vmatprep.subr.mxu0 0.0
    %134 = vmatpush2.msra.mxu0 0.0
    %135 = vmatprep.subr.mxu0 0.0
    %136 = vmatpush2.msra.mxu0 0.0
    %137 = vmatprep.subr.mxu0 0.0
    %138 = vmatpush2.msra.mxu0 0.0
    %139 = vmatprep.subr.mxu0 0.0
    %140 = vmatpush2.msra.mxu0 0.0
    %141 = vmatprep.subr.mxu0 0.0
    %142 = vmatpush2.msra.mxu0 0.0
    %143 = vmatprep.subr.mxu0 0.0
    %144 = vmatpush2.msra.mxu0 0.0
    %145 = vmatprep.mubr.f32.mxu0 0.0
    %146 = vmatmul.mubr.f32.gmra.mxu0 %v66
    %v147 = vpop.f32.mrf.mxu0
    %v148 = vadd.f32 %v62, %v147
    %v149 = vpop.f32.mrf.mxu0
    %v150 = vadd.f32 %v62, %v149
    %151 = vdwg.mxu0
    %152 = vmatprep.subr.mxu0 0.0
    %153 = vmatpush1.msra.mxu0 0.0
    %154 = vmatprep.subr.mxu0 0.0
    %155 = vmatpush1.msra.mxu0 0.0
    %156 = vmatprep.subr.mxu0 0.0
    %157 = vmatpush1.msra.mxu0 0.0
    %158 = vmatprep.subr.mxu0 0.0
    %159 = vmatpush1.msra.mxu0 0.0
    %160 = vmatprep.subr.mxu0 0.0
    %161 = vmatpush1.msra.mxu0 0.0
    %162 = vmatprep.subr.mxu0 0.0
    %163 = vmatpush1.msra.mxu0 0.0
    %164 = vmatprep.subr.mxu0 0.0
    %165 = vmatpush1.msra.mxu0 0.0
    %166 = vmatprep.subr.mxu0 0.0
    %167 = vmatpush1.msra.mxu0 0.0
    %168 = vmatprep.subr.mxu0 0.0
    %169 = vmatpush1.msra.mxu0 0.0
    %170 = vmatprep.subr.mxu0 0.0
    %171 = vmatpush1.msra.mxu0 0.0
    %172 = vmatprep.subr.mxu0 0.0
    %173 = vmatpush1.msra.mxu0 0.0
    %174 = vmatprep.subr.mxu0 0.0
    %175 = vmatpush1.msra.mxu0 0.0
    %176 = vmatprep.subr.mxu0 %v79
    %177 = vmatpush1.msra.mxu0 %v76
    %178 = vmatprep.subr.mxu0 %v53
    %179 = vmatpush1.msra.mxu0 %v52
    %180 = vmatprep.subr.mxu0 %v49
    %181 = vmatpush1.msra.mxu0 %v48
    %182 = vmatprep.subr.mxu0 %v45
    %183 = vmatpush1.msra.mxu0 %v44
    %184 = vmatprep.subr.mxu0 0.0
    %185 = vmatpush2.msra.mxu0 0.0
    %186 = vmatprep.subr.mxu0 0.0
    %187 = vmatpush2.msra.mxu0 0.0
    %188 = vmatprep.subr.mxu0 0.0
    %189 = vmatpush2.msra.mxu0 0.0
    %190 = vmatprep.subr.mxu0 0.0
    %191 = vmatpush2.msra.mxu0 0.0
    %192 = vmatprep.subr.mxu0 0.0
    %193 = vmatpush2.msra.mxu0 0.0
    %194 = vmatprep.subr.mxu0 0.0
    %195 = vmatpush2.msra.mxu0 0.0
    %196 = vmatprep.subr.mxu0 0.0
    %197 = vmatpush2.msra.mxu0 0.0
    %198 = vmatprep.subr.mxu0 0.0
    %199 = vmatpush2.msra.mxu0 0.0
    %200 = vmatprep.subr.mxu0 0.0
    %201 = vmatpush2.msra.mxu0 0.0
    %202 = vmatprep.subr.mxu0 0.0
    %203 = vmatpush2.msra.mxu0 0.0
    %204 = vmatprep.subr.mxu0 0.0
    %205 = vmatpush2.msra.mxu0 0.0
    %206 = vmatprep.subr.mxu0 0.0
    %207 = vmatpush2.msra.mxu0 0.0
    %208 = vmatprep.subr.mxu0 0.0
    %209 = vmatpush2.msra.mxu0 0.0
    %210 = vmatprep.subr.mxu0 0.0
    %211 = vmatpush2.msra.mxu0 0.0
    %212 = vmatprep.subr.mxu0 0.0
    %213 = vmatpush2.msra.mxu0 0.0
    %214 = vmatprep.subr.mxu0 0.0
    %215 = vmatpush2.msra.mxu0 0.0
    %216 = vmatprep.mubr.f32.mxu0 0.0
    %217 = vmatmul.mubr.f32.gmra.mxu0 %v66
    %v218 = vpop.f32.mrf.mxu0
    %v219 = vadd.f32 %v62, %v218
    %v220 = vpop.f32.mrf.mxu0
    %v221 = vadd.f32 %v62, %v220
    %222 = vdwg.mxu0
    %v223 = vld [vmem:[%s4] sm:$0x77]
    %v224 = vld [vmem:[%s4 + $0x8] sm:$0x77]
    %v225 = vstv %s36
    %v226 = vmul.f32 %v225, %v223
    %v227 = vmul.f32 %v225, %v224
    %v228 = vstv %s37
    %v229 = vmul.f32 %v228, %v148
    %v230 = vmul.f32 %v228, %v150
    %v231 = vmul.f32 %v228, %v219
    %v232 = vmul.f32 %v228, %v221
    %v237 = vcombine.low %v229, %v230
    %v238 = vcombine.low %v231, %v232
    %v241 = vsub.f32 %v226, %v237
    %v242 = vsub.f32 %v227, %v238
    %v243 = vmax.f32 %v241, -1.0
    %v244 = vmax.f32 %v242, -1.0
    %v245 = vmin.f32 %v243, 1.0
    %v246 = vmin.f32 %v244, 1.0
    %v247 = vstv %s38
    %v248 = vmul.f32 %v247, %v245
    %v249 = vmul.f32 %v247, %v246
    %v250 = vstv %s39
    %v251 = vmul.f32 %v250, %v223
    %v252 = vmul.f32 %v250, %v224
    %v253 = vadd.f32 %v248, %v251
    %v254 = vadd.f32 %v249, %v252
    %v255 = vld [vmem:[%s5] sm:$0x77]
    %v256 = vld [vmem:[%s5 + $0x8] sm:$0x77]
    %v257 = vstv %s40
    %v258 = vmul.f32 %v257, %v255
    %v259 = vmul.f32 %v257, %v256
    %v260 = vadd.f32 %v253, %v258
    %v261 = vadd.f32 %v254, %v259
    %262 = vst [vmem:[%s6] sm:$0x77] %v260
    %263 = vst [vmem:[%s6 + $0x8] sm:$0x77] %v261
    // Predicated region
    $region30: #{_lambda_.15} parent=1 // pred_check
      _
    $region31: #{_lambda_.15} parent=1 // pred_check_branch
      %265 = sbr.rel (0) target = $region33
    $region32: #{_lambda_.15} parent=1 // pred_region
      _
    $region33: #{_lambda_.15} parent=1 // pred_fallthru
      _
    // Predicated region
    $region34: #{_lambda_.15} parent=1 // pred_check
      _
    $region35: #{_lambda_.15} parent=1 // pred_check_branch
      %267 = sbr.rel (0) target = $region37
    $region36: #{_lambda_.15} parent=1 // pred_region
      _
    $region37: #{_lambda_.15} parent=1 // pred_fallthru
      _
    %268 = vsyncpa [#allocation3], 1

// kernel: _lambda_.16
$region0: #{_lambda_.16}
  #allocation0 [shape = 'u32[]', space=smem, size = 0x4, offset = 0x4, fixed_abs, tag = 'smem constant byte address 0x4 - core index']
  #allocation1 [shape = 'u32[144,128]{1,0:T(1,128)}', space=vmem, size = 0x12000, scoped, tag = 'internal scratch']
  #allocation2 [shape = 'f32[128,64]{1,0:T(8,128)}', space=vmem, size = 0x10000, scoped, tag = 'scratch operand']
  %s0 = inlined_call_operand.vmem [shape: f32[128,27], index: 0, kind: input, shape index: {}]
  %s1 = inlined_call_operand.vmem [shape: f32[27,64], index: 1, kind: input, shape index: {}]
  %s2 = inlined_call_operand.vmem [shape: f32[1,64], index: 2, kind: input, shape index: {}]
  %s3 = inlined_call_operand.vmem [shape: f32[128,64], index: 3, kind: output, shape index: {}]
  %s4 = sld [smem:[#allocation0]]
  $region30: #{_lambda_.16} parent=0
    _
  %s6 = ssub.s32 1, %s4
  %s7 = scalar_select 0, %s6, %s4
  // Predicated region
  $region2: #{_lambda_.16} parent=0 // pred_check
    _
  $region3: #{_lambda_.16} parent=0 // pred_check_branch
    %9 = sbr.rel (0) target = $region5
  $region4: #{_lambda_.16} parent=0 // pred_region
    _
  $region5: #{_lambda_.16} parent=0 // pred_fallthru
    _
  // Predicated region
  $region6: #{_lambda_.16} parent=0 // pred_check
    _
  $region7: #{_lambda_.16} parent=0 // pred_check_branch
    %11 = sbr.rel (0) target = $region9
  $region8: #{_lambda_.16} parent=0 // pred_region
    _
  $region9: #{_lambda_.16} parent=0 // pred_fallthru
    _
  // Predicated region
  $region10: #{_lambda_.16} parent=0 // pred_check
    _
  $region11: #{_lambda_.16} parent=0 // pred_check_branch
    %13 = sbr.rel (0) target = $region13
  $region12: #{_lambda_.16} parent=0 // pred_region
    _
  $region13: #{_lambda_.16} parent=0 // pred_fallthru
    _
  %p14 = scmp.eq.s32.totalorder 0, 0
  // Predicated region
  $region14: #{_lambda_.16} parent=0 // pred_check
    %p15 = pneg %p14
  $region15: #{_lambda_.16} parent=0 // pred_check_branch
    %17 = sbr.rel (%p15) target = $region17
  $region16: #{_lambda_.16} parent=0 // pred_region
    %vm18 = vcmask 523264
    %19 = vst.msk [vmem:[#allocation2] sm:$0xff] %vm18, 0.0
    %20 = vst.msk [vmem:[#allocation2 + $0x8] sm:$0xff] %vm18, 0.0
    %21 = vst.msk [vmem:[#allocation2 + $0x10] sm:$0xff] %vm18, 0.0
    %22 = vst.msk [vmem:[#allocation2 + $0x18] sm:$0xff] %vm18, 0.0
    %23 = vst.msk [vmem:[#allocation2 + $0x20] sm:$0xff] %vm18, 0.0
    %24 = vst.msk [vmem:[#allocation2 + $0x28] sm:$0xff] %vm18, 0.0
    %25 = vst.msk [vmem:[#allocation2 + $0x30] sm:$0xff] %vm18, 0.0
    %26 = vst.msk [vmem:[#allocation2 + $0x38] sm:$0xff] %vm18, 0.0
    %27 = vst.msk [vmem:[#allocation2 + $0x40] sm:$0xff] %vm18, 0.0
    %28 = vst.msk [vmem:[#allocation2 + $0x48] sm:$0xff] %vm18, 0.0
    %29 = vst.msk [vmem:[#allocation2 + $0x50] sm:$0xff] %vm18, 0.0
    %30 = vst.msk [vmem:[#allocation2 + $0x58] sm:$0xff] %vm18, 0.0
    %31 = vst.msk [vmem:[#allocation2 + $0x60] sm:$0xff] %vm18, 0.0
    %32 = vst.msk [vmem:[#allocation2 + $0x68] sm:$0xff] %vm18, 0.0
    %33 = vst.msk [vmem:[#allocation2 + $0x70] sm:$0xff] %vm18, 0.0
    %34 = vst.msk [vmem:[#allocation2 + $0x78] sm:$0xff] %vm18, 0.0
  $region17: #{_lambda_.16} parent=0 // pred_fallthru
    _
  %v35 = vld [vmem:[#allocation2] sm:$0xff]
  %v36 = vld [vmem:[#allocation2 + $0x8] sm:$0xff]
  %v37 = vld [vmem:[#allocation2 + $0x10] sm:$0xff]
  %v38 = vld [vmem:[#allocation2 + $0x18] sm:$0xff]
  %v39 = vld [vmem:[#allocation2 + $0x20] sm:$0xff]
  %v40 = vld [vmem:[#allocation2 + $0x28] sm:$0xff]
  %v41 = vld [vmem:[#allocation2 + $0x30] sm:$0xff]
  %v42 = vld [vmem:[#allocation2 + $0x38] sm:$0xff]
  %v43 = vld [vmem:[#allocation2 + $0x40] sm:$0xff]
  %v44 = vld [vmem:[#allocation2 + $0x48] sm:$0xff]
  %v45 = vld [vmem:[#allocation2 + $0x50] sm:$0xff]
  %v46 = vld [vmem:[#allocation2 + $0x58] sm:$0xff]
  %v47 = vld [vmem:[#allocation2 + $0x60] sm:$0xff]
  %v48 = vld [vmem:[#allocation2 + $0x68] sm:$0xff]
  %v49 = vld [vmem:[#allocation2 + $0x70] sm:$0xff]
  %v50 = vld [vmem:[#allocation2 + $0x78] sm:$0xff]
  %v51 = vld [vmem:[%s0] sm:$0xff]
  %v52 = vld [vmem:[%s0 + $0x8] sm:$0xff]
  %v53 = vld [vmem:[%s0 + $0x10] sm:$0xff]
  %v54 = vld [vmem:[%s0 + $0x18] sm:$0xff]
  %v55 = vld [vmem:[%s0 + $0x20] sm:$0xff]
  %v56 = vld [vmem:[%s0 + $0x28] sm:$0xff]
  %v57 = vld [vmem:[%s0 + $0x30] sm:$0xff]
  %v58 = vld [vmem:[%s0 + $0x38] sm:$0xff]
  %v59 = vld [vmem:[%s0 + $0x40] sm:$0xff]
  %v60 = vld [vmem:[%s0 + $0x48] sm:$0xff]
  %v61 = vld [vmem:[%s0 + $0x50] sm:$0xff]
  %v62 = vld [vmem:[%s0 + $0x58] sm:$0xff]
  %v63 = vld [vmem:[%s0 + $0x60] sm:$0xff]
  %v64 = vld [vmem:[%s0 + $0x68] sm:$0xff]
  %v65 = vld [vmem:[%s0 + $0x70] sm:$0xff]
  %v66 = vld [vmem:[%s0 + $0x78] sm:$0xff]
  %v67 = vld [vmem:[%s1] sm:$0xff]
  %v68 = vld [vmem:[%s1 + $0x8] sm:$0xff]
  %v69 = vld [vmem:[%s1 + $0x10] sm:$0xff]
  %v70 = vld [vmem:[%s1 + $0x18] sm:$0x7]
  %vm71 = vcmask 220160
  %v73 = vsel %vm71, %v51, 0
  %v76 = vsel %vm71, %v52, 0
  %v79 = vsel %vm71, %v53, 0
  %v82 = vsel %vm71, %v54, 0
  %v85 = vsel %vm71, %v55, 0
  %v88 = vsel %vm71, %v56, 0
  %v91 = vsel %vm71, %v57, 0
  %v94 = vsel %vm71, %v58, 0
  %v97 = vsel %vm71, %v59, 0
  %v100 = vsel %vm71, %v60, 0
  %v103 = vsel %vm71, %v61, 0
  %v106 = vsel %vm71, %v62, 0
  %v109 = vsel %vm71, %v63, 0
  %v112 = vsel %vm71, %v64, 0
  %v115 = vsel %vm71, %v65, 0
  %v118 = vsel %vm71, %v66, 0
  %vm120 = vcmask 1042432
  %v122 = vsel %vm120, %v70, 0
  %124 = vmatprep.subr.mxu0 0.0
  %125 = vmatpush1.msra.mxu0 0.0
  %126 = vmatprep.subr.mxu0 0.0
  %127 = vmatpush1.msra.mxu0 0.0
  %128 = vmatprep.subr.mxu0 0.0
  %129 = vmatpush1.msra.mxu0 0.0
  %130 = vmatprep.subr.mxu0 0.0
  %131 = vmatpush1.msra.mxu0 0.0
  %132 = vmatprep.subr.mxu0 0.0
  %133 = vmatpush1.msra.mxu0 0.0
  %134 = vmatprep.subr.mxu0 0.0
  %135 = vmatpush1.msra.mxu0 0.0
  %136 = vmatprep.subr.mxu0 0.0
  %137 = vmatpush1.msra.mxu0 0.0
  %138 = vmatprep.subr.mxu0 0.0
  %139 = vmatpush1.msra.mxu0 0.0
  %140 = vmatprep.subr.mxu0 0.0
  %141 = vmatpush1.msra.mxu0 0.0
  %142 = vmatprep.subr.mxu0 0.0
  %143 = vmatpush1.msra.mxu0 0.0
  %144 = vmatprep.subr.mxu0 0.0
  %145 = vmatpush1.msra.mxu0 0.0
  %146 = vmatprep.subr.mxu0 0.0
  %147 = vmatpush1.msra.mxu0 0.0
  %148 = vmatprep.subr.mxu0 0.0
  %149 = vmatpush1.msra.mxu0 %v122
  %150 = vmatprep.subr.mxu0 0.0
  %151 = vmatpush1.msra.mxu0 %v69
  %152 = vmatprep.subr.mxu0 0.0
  %153 = vmatpush1.msra.mxu0 %v68
  %154 = vmatprep.subr.mxu0 0.0
  %155 = vmatpush1.msra.mxu0 %v67
  %156 = vmatprep.subr.mxu0 0.0
  %157 = vmatpush2.msra.mxu0 0.0
  %158 = vmatprep.subr.mxu0 0.0
  %159 = vmatpush2.msra.mxu0 0.0
  %160 = vmatprep.subr.mxu0 0.0
  %161 = vmatpush2.msra.mxu0 0.0
  %162 = vmatprep.subr.mxu0 0.0
  %163 = vmatpush2.msra.mxu0 0.0
  %164 = vmatprep.subr.mxu0 0.0
  %165 = vmatpush2.msra.mxu0 0.0
  %166 = vmatprep.subr.mxu0 0.0
  %167 = vmatpush2.msra.mxu0 0.0
  %168 = vmatprep.subr.mxu0 0.0
  %169 = vmatpush2.msra.mxu0 0.0
  %170 = vmatprep.subr.mxu0 0.0
  %171 = vmatpush2.msra.mxu0 0.0
  %172 = vmatprep.subr.mxu0 0.0
  %173 = vmatpush2.msra.mxu0 0.0
  %174 = vmatprep.subr.mxu0 0.0
  %175 = vmatpush2.msra.mxu0 0.0
  %176 = vmatprep.subr.mxu0 0.0
  %177 = vmatpush2.msra.mxu0 0.0
  %178 = vmatprep.subr.mxu0 0.0
  %179 = vmatpush2.msra.mxu0 0.0
  %180 = vmatprep.subr.mxu0 0.0
  %181 = vmatpush2.msra.mxu0 0.0
  %182 = vmatprep.subr.mxu0 0.0
  %183 = vmatpush2.msra.mxu0 0.0
  %184 = vmatprep.subr.mxu0 0.0
  %185 = vmatpush2.msra.mxu0 0.0
  %186 = vmatprep.subr.mxu0 0.0
  %187 = vmatpush2.msra.mxu0 0.0
  %188 = vmatprep.mubr.f32.mxu0 0.0
  %189 = vmatmul.mubr.f32.gmra.mxu0 %v73
  %v190 = vpop.f32.mrf.mxu0
  %v191 = vadd.f32 0.0, %v190
  %v192 = vpop.f32.mrf.mxu0
  %193 = vmatprep.mubr.f32.mxu0 0.0
  %194 = vmatmul.mubr.f32.gmra.mxu0 %v76
  %v195 = vpop.f32.mrf.mxu0
  %v196 = vadd.f32 0.0, %v195
  %v197 = vpop.f32.mrf.mxu0
  %198 = vmatprep.mubr.f32.mxu0 0.0
  %199 = vmatmul.mubr.f32.gmra.mxu0 %v79
  %v200 = vpop.f32.mrf.mxu0
  %v201 = vadd.f32 0.0, %v200
  %v202 = vpop.f32.mrf.mxu0
  %203 = vmatprep.mubr.f32.mxu0 0.0
  %204 = vmatmul.mubr.f32.gmra.mxu0 %v82
  %v205 = vpop.f32.mrf.mxu0
  %v206 = vadd.f32 0.0, %v205
  %v207 = vpop.f32.mrf.mxu0
  %208 = vmatprep.mubr.f32.mxu0 0.0
  %209 = vmatmul.mubr.f32.gmra.mxu0 %v85
  %v210 = vpop.f32.mrf.mxu0
  %v211 = vadd.f32 0.0, %v210
  %v212 = vpop.f32.mrf.mxu0
  %213 = vmatprep.mubr.f32.mxu0 0.0
  %214 = vmatmul.mubr.f32.gmra.mxu0 %v88
  %v215 = vpop.f32.mrf.mxu0
  %v216 = vadd.f32 0.0, %v215
  %v217 = vpop.f32.mrf.mxu0
  %218 = vmatprep.mubr.f32.mxu0 0.0
  %219 = vmatmul.mubr.f32.gmra.mxu0 %v91
  %v220 = vpop.f32.mrf.mxu0
  %v221 = vadd.f32 0.0, %v220
  %v222 = vpop.f32.mrf.mxu0
  %223 = vmatprep.mubr.f32.mxu0 0.0
  %224 = vmatmul.mubr.f32.gmra.mxu0 %v94
  %v225 = vpop.f32.mrf.mxu0
  %v226 = vadd.f32 0.0, %v225
  %v227 = vpop.f32.mrf.mxu0
  %228 = vmatprep.mubr.f32.mxu0 0.0
  %229 = vmatmul.mubr.f32.gmra.mxu0 %v97
  %v230 = vpop.f32.mrf.mxu0
  %v231 = vadd.f32 0.0, %v230
  %v232 = vpop.f32.mrf.mxu0
  %233 = vmatprep.mubr.f32.mxu0 0.0
  %234 = vmatmul.mubr.f32.gmra.mxu0 %v100
  %v235 = vpop.f32.mrf.mxu0
  %v236 = vadd.f32 0.0, %v235
  %v237 = vpop.f32.mrf.mxu0
  %238 = vmatprep.mubr.f32.mxu0 0.0
  %239 = vmatmul.mubr.f32.gmra.mxu0 %v103
  %v240 = vpop.f32.mrf.mxu0
  %v241 = vadd.f32 0.0, %v240
  %v242 = vpop.f32.mrf.mxu0
  %243 = vmatprep.mubr.f32.mxu0 0.0
  %244 = vmatmul.mubr.f32.gmra.mxu0 %v106
  %v245 = vpop.f32.mrf.mxu0
  %v246 = vadd.f32 0.0, %v245
  %v247 = vpop.f32.mrf.mxu0
  %248 = vmatprep.mubr.f32.mxu0 0.0
  %249 = vmatmul.mubr.f32.gmra.mxu0 %v109
  %v250 = vpop.f32.mrf.mxu0
  %v251 = vadd.f32 0.0, %v250
  %v252 = vpop.f32.mrf.mxu0
  %253 = vmatprep.mubr.f32.mxu0 0.0
  %254 = vmatmul.mubr.f32.gmra.mxu0 %v112
  %v255 = vpop.f32.mrf.mxu0
  %v256 = vadd.f32 0.0, %v255
  %v257 = vpop.f32.mrf.mxu0
  %258 = vmatprep.mubr.f32.mxu0 0.0
  %259 = vmatmul.mubr.f32.gmra.mxu0 %v115
  %v260 = vpop.f32.mrf.mxu0
  %v261 = vadd.f32 0.0, %v260
  %v262 = vpop.f32.mrf.mxu0
  %263 = vmatprep.mubr.f32.mxu0 0.0
  %264 = vmatmul.mubr.f32.gmra.mxu0 %v118
  %v265 = vpop.f32.mrf.mxu0
  %v266 = vadd.f32 0.0, %v265
  %v267 = vpop.f32.mrf.mxu0
  %268 = vdwg.mxu0
  %v269 = vadd.f32 %v35, %v191
  %v270 = vadd.f32 %v36, %v196
  %v271 = vadd.f32 %v37, %v201
  %v272 = vadd.f32 %v38, %v206
  %v273 = vadd.f32 %v39, %v211
  %v274 = vadd.f32 %v40, %v216
  %v275 = vadd.f32 %v41, %v221
  %v276 = vadd.f32 %v42, %v226
  %v277 = vadd.f32 %v43, %v231
  %v278 = vadd.f32 %v44, %v236
  %v279 = vadd.f32 %v45, %v241
  %v280 = vadd.f32 %v46, %v246
  %v281 = vadd.f32 %v47, %v251
  %v282 = vadd.f32 %v48, %v256
  %v283 = vadd.f32 %v49, %v261
  %v284 = vadd.f32 %v50, %v266
  %vm285 = vcmask 523264
  %286 = vst.msk [vmem:[#allocation2] sm:$0xff] %vm285, %v269
  %287 = vst.msk [vmem:[#allocation2 + $0x8] sm:$0xff] %vm285, %v270
  %288 = vst.msk [vmem:[#allocation2 + $0x10] sm:$0xff] %vm285, %v271
  %289 = vst.msk [vmem:[#allocation2 + $0x18] sm:$0xff] %vm285, %v272
  %290 = vst.msk [vmem:[#allocation2 + $0x20] sm:$0xff] %vm285, %v273
  %291 = vst.msk [vmem:[#allocation2 + $0x28] sm:$0xff] %vm285, %v274
  %292 = vst.msk [vmem:[#allocation2 + $0x30] sm:$0xff] %vm285, %v275
  %293 = vst.msk [vmem:[#allocation2 + $0x38] sm:$0xff] %vm285, %v276
  %294 = vst.msk [vmem:[#allocation2 + $0x40] sm:$0xff] %vm285, %v277
  %295 = vst.msk [vmem:[#allocation2 + $0x48] sm:$0xff] %vm285, %v278
  %296 = vst.msk [vmem:[#allocation2 + $0x50] sm:$0xff] %vm285, %v279
  %297 = vst.msk [vmem:[#allocation2 + $0x58] sm:$0xff] %vm285, %v280
  %298 = vst.msk [vmem:[#allocation2 + $0x60] sm:$0xff] %vm285, %v281
  %299 = vst.msk [vmem:[#allocation2 + $0x68] sm:$0xff] %vm285, %v282
  %300 = vst.msk [vmem:[#allocation2 + $0x70] sm:$0xff] %vm285, %v283
  %301 = vst.msk [vmem:[#allocation2 + $0x78] sm:$0xff] %vm285, %v284
  // Predicated region
  $region18: #{_lambda_.16} parent=0 // pred_check
    %p302 = pneg %p14
  $region19: #{_lambda_.16} parent=0 // pred_check_branch
    %304 = sbr.rel (%p302) target = $region21
  $region20: #{_lambda_.16} parent=0 // pred_region
    %v305 = vld [vmem:[#allocation2] sm:$0xff]
    %v306 = vld [vmem:[#allocation2 + $0x8] sm:$0xff]
    %v307 = vld [vmem:[#allocation2 + $0x10] sm:$0xff]
    %v308 = vld [vmem:[#allocation2 + $0x18] sm:$0xff]
    %v309 = vld [vmem:[#allocation2 + $0x20] sm:$0xff]
    %v310 = vld [vmem:[#allocation2 + $0x28] sm:$0xff]
    %v311 = vld [vmem:[#allocation2 + $0x30] sm:$0xff]
    %v312 = vld [vmem:[#allocation2 + $0x38] sm:$0xff]
    %v313 = vld [vmem:[#allocation2 + $0x40] sm:$0xff]
    %v314 = vld [vmem:[#allocation2 + $0x48] sm:$0xff]
    %v315 = vld [vmem:[#allocation2 + $0x50] sm:$0xff]
    %v316 = vld [vmem:[#allocation2 + $0x58] sm:$0xff]
    %v317 = vld [vmem:[#allocation2 + $0x60] sm:$0xff]
    %v318 = vld [vmem:[#allocation2 + $0x68] sm:$0xff]
    %v319 = vld [vmem:[#allocation2 + $0x70] sm:$0xff]
    %v320 = vld [vmem:[#allocation2 + $0x78] sm:$0xff]
    %v321 = vld [vmem:[%s2] sm:$0x1]
    %v323 = vlaneseq
    %v324 = vshrl.u32 %v323, 7
    %v325 = vsub.s32 0, %v324
    %v326 = vrot.slane %v321, %v325
    %v328 = vadd.f32 %v305, %v326
    %v329 = vadd.f32 %v306, %v326
    %v330 = vadd.f32 %v307, %v326
    %v331 = vadd.f32 %v308, %v326
    %v332 = vadd.f32 %v309, %v326
    %v333 = vadd.f32 %v310, %v326
    %v334 = vadd.f32 %v311, %v326
    %v335 = vadd.f32 %v312, %v326
    %v336 = vadd.f32 %v313, %v326
    %v337 = vadd.f32 %v314, %v326
    %v338 = vadd.f32 %v315, %v326
    %v339 = vadd.f32 %v316, %v326
    %v340 = vadd.f32 %v317, %v326
    %v341 = vadd.f32 %v318, %v326
    %v342 = vadd.f32 %v319, %v326
    %v343 = vadd.f32 %v320, %v326
    %v344 = vmax.f32 %v328, 0.0
    %v345 = vmax.f32 %v329, 0.0
    %v346 = vmax.f32 %v330, 0.0
    %v347 = vmax.f32 %v331, 0.0
    %v348 = vmax.f32 %v332, 0.0
    %v349 = vmax.f32 %v333, 0.0
    %v350 = vmax.f32 %v334, 0.0
    %v351 = vmax.f32 %v335, 0.0
    %v352 = vmax.f32 %v336, 0.0
    %v353 = vmax.f32 %v337, 0.0
    %v354 = vmax.f32 %v338, 0.0
    %v355 = vmax.f32 %v339, 0.0
    %v356 = vmax.f32 %v340, 0.0
    %v357 = vmax.f32 %v341, 0.0
    %v358 = vmax.f32 %v342, 0.0
    %v359 = vmax.f32 %v343, 0.0
    %360 = vst.msk [vmem:[%s3] sm:$0xff] %vm285, %v344
    %361 = vst.msk [vmem:[%s3 + $0x8] sm:$0xff] %vm285, %v345
    %362 = vst.msk [vmem:[%s3 + $0x10] sm:$0xff] %vm285, %v346
    %363 = vst.msk [vmem:[%s3 + $0x18] sm:$0xff] %vm285, %v347
    %364 = vst.msk [vmem:[%s3 + $0x20] sm:$0xff] %vm285, %v348
    %365 = vst.msk [vmem:[%s3 + $0x28] sm:$0xff] %vm285, %v349
    %366 = vst.msk [vmem:[%s3 + $0x30] sm:$0xff] %vm285, %v350
    %367 = vst.msk [vmem:[%s3 + $0x38] sm:$0xff] %vm285, %v351
    %368 = vst.msk [vmem:[%s3 + $0x40] sm:$0xff] %vm285, %v352
    %369 = vst.msk [vmem:[%s3 + $0x48] sm:$0xff] %vm285, %v353
    %370 = vst.msk [vmem:[%s3 + $0x50] sm:$0xff] %vm285, %v354
    %371 = vst.msk [vmem:[%s3 + $0x58] sm:$0xff] %vm285, %v355
    %372 = vst.msk [vmem:[%s3 + $0x60] sm:$0xff] %vm285, %v356
    %373 = vst.msk [vmem:[%s3 + $0x68] sm:$0xff] %vm285, %v357
    %374 = vst.msk [vmem:[%s3 + $0x70] sm:$0xff] %vm285, %v358
    %375 = vst.msk [vmem:[%s3 + $0x78] sm:$0xff] %vm285, %v359
  $region21: #{_lambda_.16} parent=0 // pred_fallthru
    _
  // Predicated region
  $region22: #{_lambda_.16} parent=0 // pred_check
    _
  $region23: #{_lambda_.16} parent=0 // pred_check_branch
    %377 = sbr.rel (0) target = $region25
  $region24: #{_lambda_.16} parent=0 // pred_region
    _
  $region25: #{_lambda_.16} parent=0 // pred_fallthru
    _
  // Predicated region
  $region26: #{_lambda_.16} parent=0 // pred_check
    _
  $region27: #{_lambda_.16} parent=0 // pred_check_branch
    %379 = sbr.rel (0) target = $region29
  $region28: #{_lambda_.16} parent=0 // pred_region
    _
  $region29: #{_lambda_.16} parent=0 // pred_fallthru
    _

// kernel: _lambda_.17
$region0: #{_lambda_.17}
  #allocation0 [shape = 'u32[]', space=smem, size = 0x4, offset = 0x4, fixed_abs, tag = 'smem constant byte address 0x4 - core index']
  #allocation1 [shape = 'u32[144,128]{1,0:T(1,128)}', space=vmem, size = 0x12000, scoped, tag = 'internal scratch']
  #allocation2 [shape = 'f32[128,256]{1,0:T(8,128)}', space=vmem, size = 0x20000, scoped, tag = 'scratch operand']
  %s0 = inlined_call_operand.vmem [shape: f32[128,64], index: 0, kind: input, shape index: {}]
  %s1 = inlined_call_operand.vmem [shape: bf16[64,1024], index: 1, kind: input, shape index: {}]
  %s2 = inlined_call_operand.vmem [shape: f32[1,1024], index: 2, kind: input, shape index: {}]
  %s3 = inlined_call_operand.vmem [shape: f32[128,1024], index: 3, kind: output, shape index: {}]
  %s4 = sld [smem:[#allocation0]]
  $region110: #{_lambda_.17} parent=0
    _
  %s6 = ssub.s32 1, %s4
  %s7 = scalar_select 0, %s6, %s4
  $region1: #{_lambda_.17} parent=0
    #allocation3 [shape = 'u8[65536]{0}', space=vmem, size = 0x10000, scoped, tag = 'input window, operand 1']
    #allocation4 [shape = 'u8[262144]{0}', space=vmem, size = 0x40000, scoped, tag = 'output window, operand 0']
    loop: start=0, step=1, limit=6
    $region2: #{_lambda_.17} parent=1 // loop_pre_header
      _
    $region3: #{_lambda_.17} parent=1 // loop_header
      %s9 = sphi 0, %s13
      %p10 = scmp.ge.s32.totalorder %s9, 6
      %s16 = sphi 0, %s35
      %s17 = sphi 0, %s31
      %s18 = sphi 0, %s27
      %s19 = sphi 0, %s16
      %s20 = sphi 0, %s17
      %s21 = sphi 0, %s18
      %s22 = sphi 0, %s19
      %s23 = sphi 0, %s20
      %s24 = sphi 0, %s21
      %s40 = sphi 0, %s42
      %s43 = sphi 0, %s40
      %s44 = sphi 0, %s43
      %s60 = sphi 0, %s44
      %s68 = sphi 0, %s70
      %s71 = sphi 0, %s68
      %s72 = sphi 0, %s71
      %s88 = sphi 0, %s72
      %s94 = sphi 0, %s96
      %s97 = sphi 0, %s94
      %s98 = sphi 0, %s97
      %s114 = sphi 0, %s98
      %s122 = sphi 0, %s124
      %s125 = sphi 0, %s122
      %s126 = sphi 0, %s125
      %s142 = sphi 0, %s126
    $region4: #{_lambda_.17} parent=1 // loop_header_branch
      %12 = sbr.rel (%p10) target = $region8
    $region5: #{_lambda_.17} parent=1 // loop_body
      %s14 = ssub.s32 %s9, 1
      %s15 = ssub.s32 %s9, 2
      %s25 = sadd.s32 1, %s18
      %p26 = scmp.ge.s32.totalorder %s25, 1
      %s27 = scalar_select %p26, 0, %s25
      %s28 = sadd.s32 1, %s17
      %s29 = scalar_select %p26, %s28, %s17
      %p30 = scmp.ge.s32.totalorder %s29, 4
      %s31 = scalar_select %p30, 0, %s29
      %s32 = sadd.s32 1, %s16
      %s33 = scalar_select %p30, %s32, %s16
      %p34 = scmp.ge.s32.totalorder %s33, 1
      %s35 = scalar_select %p34, 0, %s33
      %s36 = ssub.s32 %s16, %s35
      %s37 = ssub.s32 %s18, %s27
      %s38 = sor.u32 %s36, %s37
      %p39 = scmp.eq.s32.totalorder %s38, 0
      %s41 = sadd.s32 %s40, 1
      %s42 = scalar_select %p39, %s40, %s41
      %p45 = pneg %p39
      %p46 = scmp.eq.s32.totalorder %s9, 3
      %p47 = por %p45, %p46
      %p48 = scmp.ne.s32.totalorder %s40, %s43
      %p49 = scmp.eq.s32.totalorder %s9, 0
      %p50 = por %p48, %p49
      %p51 = scmp.ne.s32.totalorder %s40, %s43
      %p52 = scmp.eq.s32.totalorder %s14, 3
      %p53 = por %p51, %p52
      %p54 = scmp.ne.s32.totalorder %s43, %s44
      %p55 = scmp.eq.s32.totalorder %s14, 0
      %p56 = por %p54, %p55
      %p57 = scmp.ne.s32.totalorder %s43, %s44
      %p58 = scmp.eq.s32.totalorder %s15, 3
      %p59 = por %p57, %p58
      %p61 = scmp.ne.s32.totalorder %s44, %s60
      %p62 = scmp.eq.s32.totalorder %s15, 0
      %p63 = por %p61, %p62
      %s64 = ssub.s32 %s18, %s27
      %s65 = ssub.s32 %s17, %s31
      %s66 = sor.u32 %s64, %s65
      %p67 = scmp.eq.s32.totalorder %s66, 0
      %s69 = sadd.s32 %s68, 1
      %s70 = scalar_select %p67, %s68, %s69
      %p73 = pneg %p67
      %p74 = scmp.eq.s32.totalorder %s9, 3
      %p75 = por %p73, %p74
      %p76 = scmp.ne.s32.totalorder %s68, %s71
      %p77 = scmp.eq.s32.totalorder %s9, 0
      %p78 = por %p76, %p77
      %p79 = scmp.ne.s32.totalorder %s68, %s71
      %p80 = scmp.eq.s32.totalorder %s14, 3
      %p81 = por %p79, %p80
      %p82 = scmp.ne.s32.totalorder %s71, %s72
      %p83 = scmp.eq.s32.totalorder %s14, 0
      %p84 = por %p82, %p83
      %p85 = scmp.ne.s32.totalorder %s71, %s72
      %p86 = scmp.eq.s32.totalorder %s15, 3
      %p87 = por %p85, %p86
      %p89 = scmp.ne.s32.totalorder %s72, %s88
      %p90 = scmp.eq.s32.totalorder %s15, 0
      %p91 = por %p89, %p90
      %s92 = ssub.s32 %s17, %s31
      %p93 = scmp.eq.s32.totalorder %s92, 0
      %s95 = sadd.s32 %s94, 1
      %s96 = scalar_select %p93, %s94, %s95
      %p99 = pneg %p93
      %p100 = scmp.eq.s32.totalorder %s9, 3
      %p101 = por %p99, %p100
      %p102 = scmp.ne.s32.totalorder %s94, %s97
      %p103 = scmp.eq.s32.totalorder %s9, 0
      %p104 = por %p102, %p103
      %p105 = scmp.ne.s32.totalorder %s94, %s97
      %p106 = scmp.eq.s32.totalorder %s14, 3
      %p107 = por %p105, %p106
      %p108 = scmp.ne.s32.totalorder %s97, %s98
      %p109 = scmp.eq.s32.totalorder %s14, 0
      %p110 = por %p108, %p109
      %p111 = scmp.ne.s32.totalorder %s97, %s98
      %p112 = scmp.eq.s32.totalorder %s15, 3
      %p113 = por %p111, %p112
      %p115 = scmp.ne.s32.totalorder %s98, %s114
      %p116 = scmp.eq.s32.totalorder %s15, 0
      %p117 = por %p115, %p116
      %s118 = ssub.s32 %s16, %s35
      %s119 = ssub.s32 %s17, %s31
      %s120 = sor.u32 %s118, %s119
      %p121 = scmp.eq.s32.totalorder %s120, 0
      %s123 = sadd.s32 %s122, 1
      %s124 = scalar_select %p121, %s122, %s123
      %p127 = pneg %p121
      %p128 = scmp.eq.s32.totalorder %s9, 3
      %p129 = por %p127, %p128
      %p130 = scmp.ne.s32.totalorder %s122, %s125
      %p131 = scmp.eq.s32.totalorder %s9, 0
      %p132 = por %p130, %p131
      %p133 = scmp.ne.s32.totalorder %s122, %s125
      %p134 = scmp.eq.s32.totalorder %s14, 3
      %p135 = por %p133, %p134
      %p136 = scmp.ne.s32.totalorder %s125, %s126
      %p137 = scmp.eq.s32.totalorder %s14, 0
      %p138 = por %p136, %p137
      %p139 = scmp.ne.s32.totalorder %s125, %s126
      %p140 = scmp.eq.s32.totalorder %s15, 3
      %p141 = por %p139, %p140
      %p143 = scmp.ne.s32.totalorder %s126, %s142
      %p144 = scmp.eq.s32.totalorder %s15, 0
      %p145 = por %p143, %p144
      %p146 = scmp.le.s32.totalorder 1, %s9
      %p147 = scmp.lt.s32.totalorder %s9, 5
      %p148 = pnand %p146, %p147
      %p149 = pneg %p148
      // Predicated region
      $region9: #{_lambda_.17} parent=5 // pred_check
        _
      $region10: #{_lambda_.17} parent=5 // pred_check_branch
        %151 = sbr.rel (%p148) target = $region12
      $region11: #{_lambda_.17} parent=5 // pred_region
        %s152 = ssub.s32 %s9, 1
        // Predicated region
        $region13: #{_lambda_.17} parent=11 // pred_check
          %p153 = pneg %p56
        $region14: #{_lambda_.17} parent=11 // pred_check_branch
          %155 = sbr.rel (%p153) target = $region16
        $region15: #{_lambda_.17} parent=11 // pred_region
          %s156 = smul.u32 16, %s19
          %p157 = scmp.lt.s32.totalorder %s156, 15
          %s158 = scalar_select %p157, %s156, 15
          %p159 = scmp.lt.s32.totalorder %s21, 0
          %s160 = scalar_select %p159, %s21, 0
          %s161 = sadd.s32 %s160, %s158
          %s162 = smul.addr %s161, 8
          %s163 = scalar_lea.vmem %s0, %s162
          %s164 = smul.u32 16, %s19
        $region16: #{_lambda_.17} parent=11 // pred_fallthru
          _
      $region12: #{_lambda_.17} parent=5 // pred_fallthru
        _
      %p165 = scmp.lt.s32.totalorder %s9, 4
      // Predicated region
      $region17: #{_lambda_.17} parent=5 // pred_check
        %p166 = pneg %p165
      $region18: #{_lambda_.17} parent=5 // pred_check_branch
        %168 = sbr.rel (%p166) target = $region20
      $region19: #{_lambda_.17} parent=5 // pred_region
        // Predicated region
        $region21: #{_lambda_.17} parent=19 // pred_check
          %p169 = pneg %p78
        $region22: #{_lambda_.17} parent=19 // pred_check_branch
          %171 = sbr.rel (%p169) target = $region24
        $region23: #{_lambda_.17} parent=19 // pred_region
          %s172 = sand.u32 %s68, 1
          %s173 = sand.u32 %s68, 1
          %s174 = smul.addr %s173, 64
          %s175 = scalar_lea.vmem [#allocation3], %s174
          %s176 = smul.u32 8, %s18
          %s177 = smul.u32 2, %s17
          %s178 = smul.addr %s176, 8
          %s179 = sadd.s32 %s177, %s178
          %s180 = smul.addr %s179, 4
          %s181 = scalar_lea.vmem %s1, %s180
          // Predicated region
          $region25: #{_lambda_.17} parent=23 // pred_check
            _
          $region26: #{_lambda_.17} parent=23 // pred_check_branch
            %183 = sbr.rel (0) target = $region28
          $region27: #{_lambda_.17} parent=23 // pred_region
            // Predicated region
            $region29: #{_lambda_.17} parent=27 // pred_check
              _
            $region30: #{_lambda_.17} parent=27 // pred_check_branch
              %185 = sbr.rel (0) target = $region32
            $region31: #{_lambda_.17} parent=27 // pred_region
              // Predicated region
              $region44: #{_lambda_.17} parent=31 // pred_check
                _
              $region45: #{_lambda_.17} parent=31 // pred_check_branch
                %215 = sbr.rel (0) target = $region47
              $region46: #{_lambda_.17} parent=31 // pred_region
                loop: start=0, step=1, limit=1
                $region48: #{_lambda_.17} parent=46 // loop_pre_header
                  _
                $region49: #{_lambda_.17} parent=46 // loop_header
                  %s217 = sphi 0, %s221
                  %p218 = scmp.ge.s32.totalorder %s217, 1
                  %s222 = sphi %s181, %s181
                  %s223 = sphi %s175, %s175
                $region50: #{_lambda_.17} parent=46 // loop_header_branch
                  %220 = sbr.rel (%p218) target = $region54
                $region51: #{_lambda_.17} parent=46 // loop_body
                  %v224 = vld [vmem:[%s222] sm:$0xff]
                  %225 = vst [vmem:[%s223] sm:$0xff] %v224
                  %v226 = vld [vmem:[%s222 + $0x20] sm:$0xff]
                  %227 = vst [vmem:[%s223 + $0x8] sm:$0xff] %v226
                  %v228 = vld [vmem:[%s222 + $0x40] sm:$0xff]
                  %229 = vst [vmem:[%s223 + $0x10] sm:$0xff] %v228
                  %v230 = vld [vmem:[%s222 + $0x60] sm:$0xff]
                  %231 = vst [vmem:[%s223 + $0x18] sm:$0xff] %v230
                  %v232 = vld [vmem:[%s222 + $0x80] sm:$0xff]
                  %233 = vst [vmem:[%s223 + $0x20] sm:$0xff] %v232
                  %v234 = vld [vmem:[%s222 + $0xa0] sm:$0xff]
                  %235 = vst [vmem:[%s223 + $0x28] sm:$0xff] %v234
                  %v236 = vld [vmem:[%s222 + $0xc0] sm:$0xff]
                  %237 = vst [vmem:[%s223 + $0x30] sm:$0xff] %v236
                  %v238 = vld [vmem:[%s222 + $0xe0] sm:$0xff]
                  %239 = vst [vmem:[%s223 + $0x38] sm:$0xff] %v238
                $region52: #{_lambda_.17} parent=46 // loop_footer
                  %s221 = sadd.s32 1, %s217
                $region53: #{_lambda_.17} parent=46 // loop_footer_branch
                  %216 = sbr.rel target = $region49
                $region54: #{_lambda_.17} parent=46 // loop_exit
                  _
              $region47: #{_lambda_.17} parent=31 // pred_fallthru
                _
              // Predicated region
              $region55: #{_lambda_.17} parent=31 // pred_check
                _
              $region56: #{_lambda_.17} parent=31 // pred_check_branch
                %241 = sbr.rel target = $region58
              $region57: #{_lambda_.17} parent=31 // pred_region
                _
              $region58: #{_lambda_.17} parent=31 // pred_fallthru
                _
            $region32: #{_lambda_.17} parent=27 // pred_fallthru
              _
            // Predicated region
            $region33: #{_lambda_.17} parent=27 // pred_check
              _
            $region34: #{_lambda_.17} parent=27 // pred_check_branch
              %187 = sbr.rel target = $region36
            $region35: #{_lambda_.17} parent=27 // pred_region
              %s189 = ssub.s32 256, 1
              loop: start=0, step=1, limit=1
              $region37: #{_lambda_.17} parent=35 // loop_pre_header
                _
              $region38: #{_lambda_.17} parent=35 // loop_header
                %s191 = sphi 0, %s195
                %p192 = scmp.ge.s32.totalorder %s191, 1
                %s196 = sphi %s181, %s181
                %s197 = sphi %s175, %s175
              $region39: #{_lambda_.17} parent=35 // loop_header_branch
                %194 = sbr.rel (%p192) target = $region43
              $region40: #{_lambda_.17} parent=35 // loop_body
                %v198 = vld [vmem:[%s196] sm:%s189]
                %199 = vst [vmem:[%s197] sm:%s189] %v198
                %v200 = vld [vmem:[%s196 + $0x20] sm:%s189]
                %201 = vst [vmem:[%s197 + $0x8] sm:%s189] %v200
                %v202 = vld [vmem:[%s196 + $0x40] sm:%s189]
                %203 = vst [vmem:[%s197 + $0x10] sm:%s189] %v202
                %v204 = vld [vmem:[%s196 + $0x60] sm:%s189]
                %205 = vst [vmem:[%s197 + $0x18] sm:%s189] %v204
                %v206 = vld [vmem:[%s196 + $0x80] sm:%s189]
                %207 = vst [vmem:[%s197 + $0x20] sm:%s189] %v206
                %v208 = vld [vmem:[%s196 + $0xa0] sm:%s189]
                %209 = vst [vmem:[%s197 + $0x28] sm:%s189] %v208
                %v210 = vld [vmem:[%s196 + $0xc0] sm:%s189]
                %211 = vst [vmem:[%s197 + $0x30] sm:%s189] %v210
                %v212 = vld [vmem:[%s196 + $0xe0] sm:%s189]
                %213 = vst [vmem:[%s197 + $0x38] sm:%s189] %v212
              $region41: #{_lambda_.17} parent=35 // loop_footer
                %s195 = sadd.s32 1, %s191
              $region42: #{_lambda_.17} parent=35 // loop_footer_branch
                %190 = sbr.rel target = $region38
              $region43: #{_lambda_.17} parent=35 // loop_exit
                _
            $region36: #{_lambda_.17} parent=27 // pred_fallthru
              _
          $region28: #{_lambda_.17} parent=23 // pred_fallthru
            _
          %242 = vnop
        $region24: #{_lambda_.17} parent=19 // pred_fallthru
          _
        // Predicated region
        $region59: #{_lambda_.17} parent=19 // pred_check
          %p243 = pneg %p104
        $region60: #{_lambda_.17} parent=19 // pred_check_branch
          %245 = sbr.rel (%p243) target = $region62
        $region61: #{_lambda_.17} parent=19 // pred_region
          %s246 = smul.u32 2, %s17
          %p247 = scmp.lt.s32.totalorder %s246, 7
          %s248 = scalar_select %p247, %s246, 7
          %s249 = scalar_lea.vmem %s2, %s248
          %s250 = smul.u32 2, %s17
        $region62: #{_lambda_.17} parent=19 // pred_fallthru
          _
      $region20: #{_lambda_.17} parent=5 // pred_fallthru
        _
      %p251 = scmp.le.s32.totalorder 1, %s9
      %p252 = scmp.lt.s32.totalorder %s9, 5
      %p253 = pnand %p251, %p252
      %p254 = pneg %p253
      // Predicated region
      $region63: #{_lambda_.17} parent=5 // pred_check
        _
      $region64: #{_lambda_.17} parent=5 // pred_check_branch
        %256 = sbr.rel (%p253) target = $region66
      $region65: #{_lambda_.17} parent=5 // pred_region
        %s257 = ssub.s32 %s9, 1
        %s258 = sand.u32 %s71, 1
        %s259 = sand.u32 %s71, 1
        %s260 = smul.addr %s259, 64
        %s261 = scalar_lea.vmem [#allocation3], %s260
        // Predicated region
        $region67: #{_lambda_.17} parent=65 // pred_check
          %p262 = pneg %p84
        $region68: #{_lambda_.17} parent=65 // pred_check_branch
          %264 = sbr.rel (%p262) target = $region70
        $region69: #{_lambda_.17} parent=65 // pred_region
          _
        $region70: #{_lambda_.17} parent=65 // pred_fallthru
          _
        %s265 = smul.u32 16, %s19
        %p266 = scmp.lt.s32.totalorder %s265, 15
        %s267 = scalar_select %p266, %s265, 15
        %p268 = scmp.lt.s32.totalorder %s21, 0
        %s269 = scalar_select %p268, %s21, 0
        %s270 = sadd.s32 %s269, %s267
        %s271 = smul.addr %s270, 8
        %s272 = scalar_lea.vmem %s0, %s271
        %p273 = pneg %p56
        %p274 = pneg %p53
        %s275 = sand.u32 %s71, 1
        %s276 = sand.u32 %s71, 1
        %s277 = smul.addr %s276, 64
        %s278 = scalar_lea.vmem [#allocation3], %s277
        %p279 = pneg %p84
        %p280 = pneg %p81
        %s281 = smul.u32 2, %s20
        %p282 = scmp.lt.s32.totalorder %s281, 7
        %s283 = scalar_select %p282, %s281, 7
        %s284 = scalar_lea.vmem %s2, %s283
        %p285 = pneg %p110
        %p286 = pneg %p107
        %p287 = pneg %p138
        %p288 = pneg %p135
        %s289 = sand.u32 %s125, 1
        %s290 = sand.u32 %s125, 1
        %s291 = smul.addr %s290, 256
        %s292 = scalar_lea.vmem [#allocation4], %s291
        %s293 = smul.u32 16, %s19
        %p294 = scmp.lt.s32.totalorder %s293, 15
        %s295 = scalar_select %p294, %s293, 15
        %p296 = scmp.lt.s32.totalorder %s21, 0
        %s297 = scalar_select %p296, %s21, 0
        %s298 = sadd.s32 %s297, %s295
        %s299 = smul.addr %s298, 8
        %s300 = scalar_lea.vmem %s0, %s299
        %s301 = smul.u32 16, %s19
        %s302 = smul.u32 8, %s21
        %s303 = smul.u32 2, %s20
        %s304 = smul.u32 2, %s20
        %p305 = scmp.lt.s32.totalorder %s304, 7
        %s306 = scalar_select %p305, %s304, 7
        %s307 = scalar_lea.vmem %s2, %s306
        %s308 = smul.u32 2, %s20
        %s309 = smul.u32 16, %s19
        %s310 = smul.u32 2, %s20
        %p312 = scmp.eq.s32.totalorder %s21, 0
        // Predicated region
        $region71: #{_lambda_.17} parent=65 // pred_check
          %p313 = pneg %p312
        $region72: #{_lambda_.17} parent=65 // pred_check_branch
          %315 = sbr.rel (%p313) target = $region74
        $region73: #{_lambda_.17} parent=65 // pred_region
          %316 = vst [vmem:[#allocation2] sm:$0xff] 0.0
          %317 = vst [vmem:[#allocation2 + $0x8] sm:$0xff] 0.0
          %318 = vst [vmem:[#allocation2 + $0x10] sm:$0xff] 0.0
          %319 = vst [vmem:[#allocation2 + $0x18] sm:$0xff] 0.0
          %320 = vst [vmem:[#allocation2 + $0x20] sm:$0xff] 0.0
          %321 = vst [vmem:[#allocation2 + $0x28] sm:$0xff] 0.0
          %322 = vst [vmem:[#allocation2 + $0x30] sm:$0xff] 0.0
          %323 = vst [vmem:[#allocation2 + $0x38] sm:$0xff] 0.0
          %324 = vst [vmem:[#allocation2 + $0x40] sm:$0xff] 0.0
          %325 = vst [vmem:[#allocation2 + $0x48] sm:$0xff] 0.0
          %326 = vst [vmem:[#allocation2 + $0x50] sm:$0xff] 0.0
          %327 = vst [vmem:[#allocation2 + $0x58] sm:$0xff] 0.0
          %328 = vst [vmem:[#allocation2 + $0x60] sm:$0xff] 0.0
          %329 = vst [vmem:[#allocation2 + $0x68] sm:$0xff] 0.0
          %330 = vst [vmem:[#allocation2 + $0x70] sm:$0xff] 0.0
          %331 = vst [vmem:[#allocation2 + $0x78] sm:$0xff] 0.0
          %332 = vst [vmem:[#allocation2 + $0x80] sm:$0xff] 0.0
          %333 = vst [vmem:[#allocation2 + $0x88] sm:$0xff] 0.0
          %334 = vst [vmem:[#allocation2 + $0x90] sm:$0xff] 0.0
          %335 = vst [vmem:[#allocation2 + $0x98] sm:$0xff] 0.0
          %336 = vst [vmem:[#allocation2 + $0xa0] sm:$0xff] 0.0
          %337 = vst [vmem:[#allocation2 + $0xa8] sm:$0xff] 0.0
          %338 = vst [vmem:[#allocation2 + $0xb0] sm:$0xff] 0.0
          %339 = vst [vmem:[#allocation2 + $0xb8] sm:$0xff] 0.0
          %340 = vst [vmem:[#allocation2 + $0xc0] sm:$0xff] 0.0
          %341 = vst [vmem:[#allocation2 + $0xc8] sm:$0xff] 0.0
          %342 = vst [vmem:[#allocation2 + $0xd0] sm:$0xff] 0.0
          %343 = vst [vmem:[#allocation2 + $0xd8] sm:$0xff] 0.0
          %344 = vst [vmem:[#allocation2 + $0xe0] sm:$0xff] 0.0
          %345 = vst [vmem:[#allocation2 + $0xe8] sm:$0xff] 0.0
          %346 = vst [vmem:[#allocation2 + $0xf0] sm:$0xff] 0.0
          %347 = vst [vmem:[#allocation2 + $0xf8] sm:$0xff] 0.0
        $region74: #{_lambda_.17} parent=65 // pred_fallthru
          _
        %v348 = vld [vmem:[#allocation2] sm:$0xff]
        %v349 = vld [vmem:[#allocation2 + $0x8] sm:$0xff]
        %v350 = vld [vmem:[#allocation2 + $0x10] sm:$0xff]
        %v351 = vld [vmem:[#allocation2 + $0x18] sm:$0xff]
        %v352 = vld [vmem:[#allocation2 + $0x20] sm:$0xff]
        %v353 = vld [vmem:[#allocation2 + $0x28] sm:$0xff]
        %v354 = vld [vmem:[#allocation2 + $0x30] sm:$0xff]
        %v355 = vld [vmem:[#allocation2 + $0x38] sm:$0xff]
        %v356 = vld [vmem:[#allocation2 + $0x40] sm:$0xff]
        %v357 = vld [vmem:[#allocation2 + $0x48] sm:$0xff]
        %v358 = vld [vmem:[#allocation2 + $0x50] sm:$0xff]
        %v359 = vld [vmem:[#allocation2 + $0x58] sm:$0xff]
        %v360 = vld [vmem:[#allocation2 + $0x60] sm:$0xff]
        %v361 = vld [vmem:[#allocation2 + $0x68] sm:$0xff]
        %v362 = vld [vmem:[#allocation2 + $0x70] sm:$0xff]
        %v363 = vld [vmem:[#allocation2 + $0x78] sm:$0xff]
        %v364 = vld [vmem:[#allocation2 + $0x80] sm:$0xff]
        %v365 = vld [vmem:[#allocation2 + $0x88] sm:$0xff]
        %v366 = vld [vmem:[#allocation2 + $0x90] sm:$0xff]
        %v367 = vld [vmem:[#allocation2 + $0x98] sm:$0xff]
        %v368 = vld [vmem:[#allocation2 + $0xa0] sm:$0xff]
        %v369 = vld [vmem:[#allocation2 + $0xa8] sm:$0xff]
        %v370 = vld [vmem:[#allocation2 + $0xb0] sm:$0xff]
        %v371 = vld [vmem:[#allocation2 + $0xb8] sm:$0xff]
        %v372 = vld [vmem:[#allocation2 + $0xc0] sm:$0xff]
        %v373 = vld [vmem:[#allocation2 + $0xc8] sm:$0xff]
        %v374 = vld [vmem:[#allocation2 + $0xd0] sm:$0xff]
        %v375 = vld [vmem:[#allocation2 + $0xd8] sm:$0xff]
        %v376 = vld [vmem:[#allocation2 + $0xe0] sm:$0xff]
        %v377 = vld [vmem:[#allocation2 + $0xe8] sm:$0xff]
        %v378 = vld [vmem:[#allocation2 + $0xf0] sm:$0xff]
        %v379 = vld [vmem:[#allocation2 + $0xf8] sm:$0xff]
        %v380 = vld [vmem:[%s300] sm:$0xff]
        %v381 = vld [vmem:[%s300 + $0x8] sm:$0xff]
        %v382 = vld [vmem:[%s300 + $0x10] sm:$0xff]
        %v383 = vld [vmem:[%s300 + $0x18] sm:$0xff]
        %v384 = vld [vmem:[%s300 + $0x20] sm:$0xff]
        %v385 = vld [vmem:[%s300 + $0x28] sm:$0xff]
        %v386 = vld [vmem:[%s300 + $0x30] sm:$0xff]
        %v387 = vld [vmem:[%s300 + $0x38] sm:$0xff]
        %v388 = vld [vmem:[%s300 + $0x40] sm:$0xff]
        %v389 = vld [vmem:[%s300 + $0x48] sm:$0xff]
        %v390 = vld [vmem:[%s300 + $0x50] sm:$0xff]
        %v391 = vld [vmem:[%s300 + $0x58] sm:$0xff]
        %v392 = vld [vmem:[%s300 + $0x60] sm:$0xff]
        %v393 = vld [vmem:[%s300 + $0x68] sm:$0xff]
        %v394 = vld [vmem:[%s300 + $0x70] sm:$0xff]
        %v395 = vld [vmem:[%s300 + $0x78] sm:$0xff]
        %v396 = vpack.c.bf16 %v381, %v380
        %v397 = vpack.c.bf16 %v383, %v382
        %v398 = vpack.c.bf16 %v385, %v384
        %v399 = vpack.c.bf16 %v387, %v386
        %v400 = vpack.c.bf16 %v389, %v388
        %v401 = vpack.c.bf16 %v391, %v390
        %v402 = vpack.c.bf16 %v393, %v392
        %v403 = vpack.c.bf16 %v395, %v394
        %v404 = vld [vmem:[%s261] sm:$0xff]
        %v405 = vld [vmem:[%s261 + $0x8] sm:$0xff]
        %v406 = vld [vmem:[%s261 + $0x10] sm:$0xff]
        %v407 = vld [vmem:[%s261 + $0x18] sm:$0xff]
        %v408 = vld [vmem:[%s261 + $0x20] sm:$0xff]
        %v409 = vld [vmem:[%s261 + $0x28] sm:$0xff]
        %v410 = vld [vmem:[%s261 + $0x30] sm:$0xff]
        %v411 = vld [vmem:[%s261 + $0x38] sm:$0xff]
        %v420 = vunpack.c.l.b16 %v404
        %v421 = vunpack.c.h.b16 %v404
        %v422 = vunpack.c.l.b16 %v405
        %v423 = vunpack.c.h.b16 %v405
        %v424 = vunpack.c.l.b16 %v406
        %v425 = vunpack.c.h.b16 %v406
        %v426 = vunpack.c.l.b16 %v407
        %v427 = vunpack.c.h.b16 %v407
        %v428 = vunpack.c.l.b16 %v408
        %v429 = vunpack.c.h.b16 %v408
        %v430 = vunpack.c.l.b16 %v409
        %v431 = vunpack.c.h.b16 %v409
        %v432 = vunpack.c.l.b16 %v410
        %v433 = vunpack.c.h.b16 %v410
        %v434 = vunpack.c.l.b16 %v411
        %v435 = vunpack.c.h.b16 %v411
        %v436 = vpack.c.b16 %v422, %v420
        %v437 = vpack.c.b16 %v423, %v421
        %v438 = vpack.c.b16 %v426, %v424
        %v439 = vpack.c.b16 %v427, %v425
        %v440 = vpack.c.b16 %v430, %v428
        %v441 = vpack.c.b16 %v431, %v429
        %v442 = vpack.c.b16 %v434, %v432
        %v443 = vpack.c.b16 %v435, %v433
        %vm452 = vcmask 523264
        %v454 = vsel %vm452, %v396, 0
        %v457 = vsel %vm452, %v397, 0
        %v460 = vsel %vm452, %v398, 0
        %v463 = vsel %vm452, %v399, 0
        %v466 = vsel %vm452, %v400, 0
        %v469 = vsel %vm452, %v401, 0
        %v472 = vsel %vm452, %v402, 0
        %v475 = vsel %vm452, %v403, 0
        %477 = vmatprep.subr.bf16.mxu0 0
        %478 = vmatpush1.bf16.msra.mxu0 0
        %479 = vmatprep.subr.bf16.mxu0 0
        %480 = vmatpush1.bf16.msra.mxu0 0
        %481 = vmatprep.subr.bf16.mxu0 0
        %482 = vmatpush1.bf16.msra.mxu0 0
        %483 = vmatprep.subr.bf16.mxu0 0
        %484 = vmatpush1.bf16.msra.mxu0 0
        %485 = vmatprep.subr.bf16.mxu0 %v443
        %486 = vmatpush1.bf16.msra.mxu0 %v442
        %487 = vmatprep.subr.bf16.mxu0 %v441
        %488 = vmatpush1.bf16.msra.mxu0 %v440
        %489 = vmatprep.subr.bf16.mxu0 %v439
        %490 = vmatpush1.bf16.msra.mxu0 %v438
        %491 = vmatprep.subr.bf16.mxu0 %v437
        %492 = vmatpush1.bf16.msra.mxu0 %v436
        %493 = vmatprep.subr.bf16.mxu0 0
        %494 = vmatpush2.bf16.msra.mxu0 0
        %495 = vmatprep.subr.bf16.mxu0 0
        %496 = vmatpush2.bf16.msra.mxu0 0
        %497 = vmatprep.subr.bf16.mxu0 0
        %498 = vmatpush2.bf16.msra.mxu0 0
        %499 = vmatprep.subr.bf16.mxu0 0
        %500 = vmatpush2.bf16.msra.mxu0 0
        %501 = vmatprep.subr.bf16.mxu0 0
        %502 = vmatpush2.bf16.msra.mxu0 0
        %503 = vmatprep.subr.bf16.mxu0 0
        %504 = vmatpush2.bf16.msra.mxu0 0
        %505 = vmatprep.subr.bf16.mxu0 0
        %506 = vmatpush2.bf16.msra.mxu0 0
        %507 = vmatprep.subr.bf16.mxu0 0
        %508 = vmatpush2.bf16.msra.mxu0 0
        %509 = vmatprep.mubr.bf16.mxu0 0
        %510 = vmatmul.mubr.bf16.gmra.mxu0 %v454
        %v511 = vpop.f32.mrf.mxu0
        %v512 = vadd.f32 0.0, %v511
        %v513 = vpop.f32.mrf.mxu0
        %v514 = vadd.f32 0.0, %v513
        %v515 = vpop.f32.mrf.mxu0
        %v516 = vadd.f32 0.0, %v515
        %v517 = vpop.f32.mrf.mxu0
        %v518 = vadd.f32 0.0, %v517
        %519 = vmatprep.mubr.bf16.mxu0 0
        %520 = vmatmul.mubr.bf16.gmra.mxu0 %v457
        %v521 = vpop.f32.mrf.mxu0
        %v522 = vadd.f32 0.0, %v521
        %v523 = vpop.f32.mrf.mxu0
        %v524 = vadd.f32 0.0, %v523
        %v525 = vpop.f32.mrf.mxu0
        %v526 = vadd.f32 0.0, %v525
        %v527 = vpop.f32.mrf.mxu0
        %v528 = vadd.f32 0.0, %v527
        %529 = vmatprep.mubr.bf16.mxu0 0
        %530 = vmatmul.mubr.bf16.gmra.mxu0 %v460
        %v531 = vpop.f32.mrf.mxu0
        %v532 = vadd.f32 0.0, %v531
        %v533 = vpop.f32.mrf.mxu0
        %v534 = vadd.f32 0.0, %v533
        %v535 = vpop.f32.mrf.mxu0
        %v536 = vadd.f32 0.0, %v535
        %v537 = vpop.f32.mrf.mxu0
        %v538 = vadd.f32 0.0, %v537
        %539 = vmatprep.mubr.bf16.mxu0 0
        %540 = vmatmul.mubr.bf16.gmra.mxu0 %v463
        %v541 = vpop.f32.mrf.mxu0
        %v542 = vadd.f32 0.0, %v541
        %v543 = vpop.f32.mrf.mxu0
        %v544 = vadd.f32 0.0, %v543
        %v545 = vpop.f32.mrf.mxu0
        %v546 = vadd.f32 0.0, %v545
        %v547 = vpop.f32.mrf.mxu0
        %v548 = vadd.f32 0.0, %v547
        %549 = vmatprep.mubr.bf16.mxu0 0
        %550 = vmatmul.mubr.bf16.gmra.mxu0 %v466
        %v551 = vpop.f32.mrf.mxu0
        %v552 = vadd.f32 0.0, %v551
        %v553 = vpop.f32.mrf.mxu0
        %v554 = vadd.f32 0.0, %v553
        %v555 = vpop.f32.mrf.mxu0
        %v556 = vadd.f32 0.0, %v555
        %v557 = vpop.f32.mrf.mxu0
        %v558 = vadd.f32 0.0, %v557
        %559 = vmatprep.mubr.bf16.mxu0 0
        %560 = vmatmul.mubr.bf16.gmra.mxu0 %v469
        %v561 = vpop.f32.mrf.mxu0
        %v562 = vadd.f32 0.0, %v561
        %v563 = vpop.f32.mrf.mxu0
        %v564 = vadd.f32 0.0, %v563
        %v565 = vpop.f32.mrf.mxu0
        %v566 = vadd.f32 0.0, %v565
        %v567 = vpop.f32.mrf.mxu0
        %v568 = vadd.f32 0.0, %v567
        %569 = vmatprep.mubr.bf16.mxu0 0
        %570 = vmatmul.mubr.bf16.gmra.mxu0 %v472
        %v571 = vpop.f32.mrf.mxu0
        %v572 = vadd.f32 0.0, %v571
        %v573 = vpop.f32.mrf.mxu0
        %v574 = vadd.f32 0.0, %v573
        %v575 = vpop.f32.mrf.mxu0
        %v576 = vadd.f32 0.0, %v575
        %v577 = vpop.f32.mrf.mxu0
        %v578 = vadd.f32 0.0, %v577
        %579 = vmatprep.mubr.bf16.mxu0 0
        %580 = vmatmul.mubr.bf16.gmra.mxu0 %v475
        %v581 = vpop.f32.mrf.mxu0
        %v582 = vadd.f32 0.0, %v581
        %v583 = vpop.f32.mrf.mxu0
        %v584 = vadd.f32 0.0, %v583
        %v585 = vpop.f32.mrf.mxu0
        %v586 = vadd.f32 0.0, %v585
        %v587 = vpop.f32.mrf.mxu0
        %v588 = vadd.f32 0.0, %v587
        %589 = vdwg.mxu0
        %v590 = vadd.f32 %v348, %v512
        %v591 = vadd.f32 %v349, %v514
        %v592 = vadd.f32 %v350, %v516
        %v593 = vadd.f32 %v351, %v518
        %v594 = vadd.f32 %v352, %v522
        %v595 = vadd.f32 %v353, %v524
        %v596 = vadd.f32 %v354, %v526
        %v597 = vadd.f32 %v355, %v528
        %v598 = vadd.f32 %v356, %v532
        %v599 = vadd.f32 %v357, %v534
        %v600 = vadd.f32 %v358, %v536
        %v601 = vadd.f32 %v359, %v538
        %v602 = vadd.f32 %v360, %v542
        %v603 = vadd.f32 %v361, %v544
        %v604 = vadd.f32 %v362, %v546
        %v605 = vadd.f32 %v363, %v548
        %v606 = vadd.f32 %v364, %v552
        %v607 = vadd.f32 %v365, %v554
        %v608 = vadd.f32 %v366, %v556
        %v609 = vadd.f32 %v367, %v558
        %v610 = vadd.f32 %v368, %v562
        %v611 = vadd.f32 %v369, %v564
        %v612 = vadd.f32 %v370, %v566
        %v613 = vadd.f32 %v371, %v568
        %v614 = vadd.f32 %v372, %v572
        %v615 = vadd.f32 %v373, %v574
        %v616 = vadd.f32 %v374, %v576
        %v617 = vadd.f32 %v375, %v578
        %v618 = vadd.f32 %v376, %v582
        %v619 = vadd.f32 %v377, %v584
        %v620 = vadd.f32 %v378, %v586
        %v621 = vadd.f32 %v379, %v588
        %622 = vst [vmem:[#allocation2] sm:$0xff] %v590
        %623 = vst [vmem:[#allocation2 + $0x8] sm:$0xff] %v591
        %624 = vst [vmem:[#allocation2 + $0x10] sm:$0xff] %v592
        %625 = vst [vmem:[#allocation2 + $0x18] sm:$0xff] %v593
        %626 = vst [vmem:[#allocation2 + $0x20] sm:$0xff] %v594
        %627 = vst [vmem:[#allocation2 + $0x28] sm:$0xff] %v595
        %628 = vst [vmem:[#allocation2 + $0x30] sm:$0xff] %v596
        %629 = vst [vmem:[#allocation2 + $0x38] sm:$0xff] %v597
        %630 = vst [vmem:[#allocation2 + $0x40] sm:$0xff] %v598
        %631 = vst [vmem:[#allocation2 + $0x48] sm:$0xff] %v599
        %632 = vst [vmem:[#allocation2 + $0x50] sm:$0xff] %v600
        %633 = vst [vmem:[#allocation2 + $0x58] sm:$0xff] %v601
        %634 = vst [vmem:[#allocation2 + $0x60] sm:$0xff] %v602
        %635 = vst [vmem:[#allocation2 + $0x68] sm:$0xff] %v603
        %636 = vst [vmem:[#allocation2 + $0x70] sm:$0xff] %v604
        %637 = vst [vmem:[#allocation2 + $0x78] sm:$0xff] %v605
        %638 = vst [vmem:[#allocation2 + $0x80] sm:$0xff] %v606
        %639 = vst [vmem:[#allocation2 + $0x88] sm:$0xff] %v607
        %640 = vst [vmem:[#allocation2 + $0x90] sm:$0xff] %v608
        %641 = vst [vmem:[#allocation2 + $0x98] sm:$0xff] %v609
        %642 = vst [vmem:[#allocation2 + $0xa0] sm:$0xff] %v610
        %643 = vst [vmem:[#allocation2 + $0xa8] sm:$0xff] %v611
        %644 = vst [vmem:[#allocation2 + $0xb0] sm:$0xff] %v612
        %645 = vst [vmem:[#allocation2 + $0xb8] sm:$0xff] %v613
        %646 = vst [vmem:[#allocation2 + $0xc0] sm:$0xff] %v614
        %647 = vst [vmem:[#allocation2 + $0xc8] sm:$0xff] %v615
        %648 = vst [vmem:[#allocation2 + $0xd0] sm:$0xff] %v616
        %649 = vst [vmem:[#allocation2 + $0xd8] sm:$0xff] %v617
        %650 = vst [vmem:[#allocation2 + $0xe0] sm:$0xff] %v618
        %651 = vst [vmem:[#allocation2 + $0xe8] sm:$0xff] %v619
        %652 = vst [vmem:[#allocation2 + $0xf0] sm:$0xff] %v620
        %653 = vst [vmem:[#allocation2 + $0xf8] sm:$0xff] %v621
        // Predicated region
        $region75: #{_lambda_.17} parent=65 // pred_check
          %p654 = pneg %p312
        $region76: #{_lambda_.17} parent=65 // pred_check_branch
          %656 = sbr.rel (%p654) target = $region78
        $region77: #{_lambda_.17} parent=65 // pred_region
          %v657 = vld [vmem:[#allocation2] sm:$0xff]
          %v658 = vld [vmem:[#allocation2 + $0x8] sm:$0xff]
          %v659 = vld [vmem:[#allocation2 + $0x10] sm:$0xff]
          %v660 = vld [vmem:[#allocation2 + $0x18] sm:$0xff]
          %v661 = vld [vmem:[#allocation2 + $0x20] sm:$0xff]
          %v662 = vld [vmem:[#allocation2 + $0x28] sm:$0xff]
          %v663 = vld [vmem:[#allocation2 + $0x30] sm:$0xff]
          %v664 = vld [vmem:[#allocation2 + $0x38] sm:$0xff]
          %v665 = vld [vmem:[#allocation2 + $0x40] sm:$0xff]
          %v666 = vld [vmem:[#allocation2 + $0x48] sm:$0xff]
          %v667 = vld [vmem:[#allocation2 + $0x50] sm:$0xff]
          %v668 = vld [vmem:[#allocation2 + $0x58] sm:$0xff]
          %v669 = vld [vmem:[#allocation2 + $0x60] sm:$0xff]
          %v670 = vld [vmem:[#allocation2 + $0x68] sm:$0xff]
          %v671 = vld [vmem:[#allocation2 + $0x70] sm:$0xff]
          %v672 = vld [vmem:[#allocation2 + $0x78] sm:$0xff]
          %v673 = vld [vmem:[#allocation2 + $0x80] sm:$0xff]
          %v674 = vld [vmem:[#allocation2 + $0x88] sm:$0xff]
          %v675 = vld [vmem:[#allocation2 + $0x90] sm:$0xff]
          %v676 = vld [vmem:[#allocation2 + $0x98] sm:$0xff]
          %v677 = vld [vmem:[#allocation2 + $0xa0] sm:$0xff]
          %v678 = vld [vmem:[#allocation2 + $0xa8] sm:$0xff]
          %v679 = vld [vmem:[#allocation2 + $0xb0] sm:$0xff]
          %v680 = vld [vmem:[#allocation2 + $0xb8] sm:$0xff]
          %v681 = vld [vmem:[#allocation2 + $0xc0] sm:$0xff]
          %v682 = vld [vmem:[#allocation2 + $0xc8] sm:$0xff]
          %v683 = vld [vmem:[#allocation2 + $0xd0] sm:$0xff]
          %v684 = vld [vmem:[#allocation2 + $0xd8] sm:$0xff]
          %v685 = vld [vmem:[#allocation2 + $0xe0] sm:$0xff]
          %v686 = vld [vmem:[#allocation2 + $0xe8] sm:$0xff]
          %v687 = vld [vmem:[#allocation2 + $0xf0] sm:$0xff]
          %v688 = vld [vmem:[#allocation2 + $0xf8] sm:$0xff]
          %v689 = vld [vmem:[%s307] sm:$0x3]
          %v691 = vlaneseq
          %v692 = vshrl.u32 %v691, 7
          %v693 = vsub.s32 0, %v692
          %v694 = vrot.slane %v689, %v693
          %v695 = vlaneseq
          %v696 = vshrl.u32 %v695, 7
          %v697 = vsub.s32 1, %v696
          %v698 = vrot.slane %v689, %v697
          %v701 = vadd.f32 %v657, %v694
          %v702 = vadd.f32 %v658, %v698
          %v703 = vadd.f32 %v659, %v694
          %v704 = vadd.f32 %v660, %v698
          %v705 = vadd.f32 %v661, %v694
          %v706 = vadd.f32 %v662, %v698
          %v707 = vadd.f32 %v663, %v694
          %v708 = vadd.f32 %v664, %v698
          %v709 = vadd.f32 %v665, %v694
          %v710 = vadd.f32 %v666, %v698
          %v711 = vadd.f32 %v667, %v694
          %v712 = vadd.f32 %v668, %v698
          %v713 = vadd.f32 %v669, %v694
          %v714 = vadd.f32 %v670, %v698
          %v715 = vadd.f32 %v671, %v694
          %v716 = vadd.f32 %v672, %v698
          %v717 = vadd.f32 %v673, %v694
          %v718 = vadd.f32 %v674, %v698
          %v719 = vadd.f32 %v675, %v694
          %v720 = vadd.f32 %v676, %v698
          %v721 = vadd.f32 %v677, %v694
          %v722 = vadd.f32 %v678, %v698
          %v723 = vadd.f32 %v679, %v694
          %v724 = vadd.f32 %v680, %v698
          %v725 = vadd.f32 %v681, %v694
          %v726 = vadd.f32 %v682, %v698
          %v727 = vadd.f32 %v683, %v694
          %v728 = vadd.f32 %v684, %v698
          %v729 = vadd.f32 %v685, %v694
          %v730 = vadd.f32 %v686, %v698
          %v731 = vadd.f32 %v687, %v694
          %v732 = vadd.f32 %v688, %v698
          %v733 = vmax.f32 %v701, 0.0
          %v734 = vmax.f32 %v702, 0.0
          %v735 = vmax.f32 %v703, 0.0
          %v736 = vmax.f32 %v704, 0.0
          %v737 = vmax.f32 %v705, 0.0
          %v738 = vmax.f32 %v706, 0.0
          %v739 = vmax.f32 %v707, 0.0
          %v740 = vmax.f32 %v708, 0.0
          %v741 = vmax.f32 %v709, 0.0
          %v742 = vmax.f32 %v710, 0.0
          %v743 = vmax.f32 %v711, 0.0
          %v744 = vmax.f32 %v712, 0.0
          %v745 = vmax.f32 %v713, 0.0
          %v746 = vmax.f32 %v714, 0.0
          %v747 = vmax.f32 %v715, 0.0
          %v748 = vmax.f32 %v716, 0.0
          %v749 = vmax.f32 %v717, 0.0
          %v750 = vmax.f32 %v718, 0.0
          %v751 = vmax.f32 %v719, 0.0
          %v752 = vmax.f32 %v720, 0.0
          %v753 = vmax.f32 %v721, 0.0
          %v754 = vmax.f32 %v722, 0.0
          %v755 = vmax.f32 %v723, 0.0
          %v756 = vmax.f32 %v724, 0.0
          %v757 = vmax.f32 %v725, 0.0
          %v758 = vmax.f32 %v726, 0.0
          %v759 = vmax.f32 %v727, 0.0
          %v760 = vmax.f32 %v728, 0.0
          %v761 = vmax.f32 %v729, 0.0
          %v762 = vmax.f32 %v730, 0.0
          %v763 = vmax.f32 %v731, 0.0
          %v764 = vmax.f32 %v732, 0.0
          %765 = vst [vmem:[%s292] sm:$0xff] %v733
          %766 = vst [vmem:[%s292 + $0x8] sm:$0xff] %v734
          %767 = vst [vmem:[%s292 + $0x10] sm:$0xff] %v735
          %768 = vst [vmem:[%s292 + $0x18] sm:$0xff] %v736
          %769 = vst [vmem:[%s292 + $0x20] sm:$0xff] %v737
          %770 = vst [vmem:[%s292 + $0x28] sm:$0xff] %v738
          %771 = vst [vmem:[%s292 + $0x30] sm:$0xff] %v739
          %772 = vst [vmem:[%s292 + $0x38] sm:$0xff] %v740
          %773 = vst [vmem:[%s292 + $0x40] sm:$0xff] %v741
          %774 = vst [vmem:[%s292 + $0x48] sm:$0xff] %v742
          %775 = vst [vmem:[%s292 + $0x50] sm:$0xff] %v743
          %776 = vst [vmem:[%s292 + $0x58] sm:$0xff] %v744
          %777 = vst [vmem:[%s292 + $0x60] sm:$0xff] %v745
          %778 = vst [vmem:[%s292 + $0x68] sm:$0xff] %v746
          %779 = vst [vmem:[%s292 + $0x70] sm:$0xff] %v747
          %780 = vst [vmem:[%s292 + $0x78] sm:$0xff] %v748
          %781 = vst [vmem:[%s292 + $0x80] sm:$0xff] %v749
          %782 = vst [vmem:[%s292 + $0x88] sm:$0xff] %v750
          %783 = vst [vmem:[%s292 + $0x90] sm:$0xff] %v751
          %784 = vst [vmem:[%s292 + $0x98] sm:$0xff] %v752
          %785 = vst [vmem:[%s292 + $0xa0] sm:$0xff] %v753
          %786 = vst [vmem:[%s292 + $0xa8] sm:$0xff] %v754
          %787 = vst [vmem:[%s292 + $0xb0] sm:$0xff] %v755
          %788 = vst [vmem:[%s292 + $0xb8] sm:$0xff] %v756
          %789 = vst [vmem:[%s292 + $0xc0] sm:$0xff] %v757
          %790 = vst [vmem:[%s292 + $0xc8] sm:$0xff] %v758
          %791 = vst [vmem:[%s292 + $0xd0] sm:$0xff] %v759
          %792 = vst [vmem:[%s292 + $0xd8] sm:$0xff] %v760
          %793 = vst [vmem:[%s292 + $0xe0] sm:$0xff] %v761
          %794 = vst [vmem:[%s292 + $0xe8] sm:$0xff] %v762
          %795 = vst [vmem:[%s292 + $0xf0] sm:$0xff] %v763
          %796 = vst [vmem:[%s292 + $0xf8] sm:$0xff] %v764
        $region78: #{_lambda_.17} parent=65 // pred_fallthru
          _
        %s797 = sand.u32 %s125, 1
        %s798 = sand.u32 %s125, 1
        %s799 = smul.addr %s798, 256
        %s800 = scalar_lea.vmem [#allocation4], %s799
        // Predicated region
        $region79: #{_lambda_.17} parent=65 // pred_check
          %p801 = pneg %p135
        $region80: #{_lambda_.17} parent=65 // pred_check_branch
          %803 = sbr.rel (%p801) target = $region82
        $region81: #{_lambda_.17} parent=65 // pred_region
          %s804 = smul.u32 16, %s19
          %s805 = smul.u32 2, %s20
          %s806 = smul.addr %s804, 8
          %s807 = sadd.s32 %s805, %s806
          %s808 = smul.addr %s807, 8
          %s809 = scalar_lea.vmem %s3, %s808
          // Predicated region
          $region83: #{_lambda_.17} parent=81 // pred_check
            _
          $region84: #{_lambda_.17} parent=81 // pred_check_branch
            %811 = sbr.rel (0) target = $region86
          $region85: #{_lambda_.17} parent=81 // pred_region
            // Predicated region
            $region87: #{_lambda_.17} parent=85 // pred_check
              _
            $region88: #{_lambda_.17} parent=85 // pred_check_branch
              %813 = sbr.rel (0) target = $region90
            $region89: #{_lambda_.17} parent=85 // pred_region
              loop: start=0, step=1, limit=1
              $region91: #{_lambda_.17} parent=89 // loop_pre_header
                _
              $region92: #{_lambda_.17} parent=89 // loop_header
                %s815 = sphi 0, %s819
                %p816 = scmp.ge.s32.totalorder %s815, 1
                %s820 = sphi %s800, %s800
                %s821 = sphi %s809, %s809
              $region93: #{_lambda_.17} parent=89 // loop_header_branch
                %818 = sbr.rel (%p816) target = $region97
              $region94: #{_lambda_.17} parent=89 // loop_body
                %v822 = vld [vmem:[%s820] sm:$0xff]
                %823 = vst [vmem:[%s821] sm:$0xff] %v822
                %v824 = vld [vmem:[%s820 + $0x8] sm:$0xff]
                %825 = vst [vmem:[%s821 + $0x8] sm:$0xff] %v824
                %v826 = vld [vmem:[%s820 + $0x10] sm:$0xff]
                %827 = vst [vmem:[%s821 + $0x40] sm:$0xff] %v826
                %v828 = vld [vmem:[%s820 + $0x18] sm:$0xff]
                %829 = vst [vmem:[%s821 + $0x48] sm:$0xff] %v828
                %v830 = vld [vmem:[%s820 + $0x20] sm:$0xff]
                %831 = vst [vmem:[%s821 + $0x80] sm:$0xff] %v830
                %v832 = vld [vmem:[%s820 + $0x28] sm:$0xff]
                %833 = vst [vmem:[%s821 + $0x88] sm:$0xff] %v832
                %v834 = vld [vmem:[%s820 + $0x30] sm:$0xff]
                %835 = vst [vmem:[%s821 + $0xc0] sm:$0xff] %v834
                %v836 = vld [vmem:[%s820 + $0x38] sm:$0xff]
                %837 = vst [vmem:[%s821 + $0xc8] sm:$0xff] %v836
                %v838 = vld [vmem:[%s820 + $0x40] sm:$0xff]
                %839 = vst [vmem:[%s821 + $0x100] sm:$0xff] %v838
                %v840 = vld [vmem:[%s820 + $0x48] sm:$0xff]
                %841 = vst [vmem:[%s821 + $0x108] sm:$0xff] %v840
                %v842 = vld [vmem:[%s820 + $0x50] sm:$0xff]
                %843 = vst [vmem:[%s821 + $0x140] sm:$0xff] %v842
                %v844 = vld [vmem:[%s820 + $0x58] sm:$0xff]
                %845 = vst [vmem:[%s821 + $0x148] sm:$0xff] %v844
                %v846 = vld [vmem:[%s820 + $0x60] sm:$0xff]
                %847 = vst [vmem:[%s821 + $0x180] sm:$0xff] %v846
                %v848 = vld [vmem:[%s820 + $0x68] sm:$0xff]
                %849 = vst [vmem:[%s821 + $0x188] sm:$0xff] %v848
                %v850 = vld [vmem:[%s820 + $0x70] sm:$0xff]
                %851 = vst [vmem:[%s821 + $0x1c0] sm:$0xff] %v850
                %v852 = vld [vmem:[%s820 + $0x78] sm:$0xff]
                %853 = vst [vmem:[%s821 + $0x1c8] sm:$0xff] %v852
                %v854 = vld [vmem:[%s820 + $0x80] sm:$0xff]
                %855 = vst [vmem:[%s821 + $0x200] sm:$0xff] %v854
                %v856 = vld [vmem:[%s820 + $0x88] sm:$0xff]
                %857 = vst [vmem:[%s821 + $0x208] sm:$0xff] %v856
                %v858 = vld [vmem:[%s820 + $0x90] sm:$0xff]
                %859 = vst [vmem:[%s821 + $0x240] sm:$0xff] %v858
                %v860 = vld [vmem:[%s820 + $0x98] sm:$0xff]
                %861 = vst [vmem:[%s821 + $0x248] sm:$0xff] %v860
                %v862 = vld [vmem:[%s820 + $0xa0] sm:$0xff]
                %863 = vst [vmem:[%s821 + $0x280] sm:$0xff] %v862
                %v864 = vld [vmem:[%s820 + $0xa8] sm:$0xff]
                %865 = vst [vmem:[%s821 + $0x288] sm:$0xff] %v864
                %v866 = vld [vmem:[%s820 + $0xb0] sm:$0xff]
                %867 = vst [vmem:[%s821 + $0x2c0] sm:$0xff] %v866
                %v868 = vld [vmem:[%s820 + $0xb8] sm:$0xff]
                %869 = vst [vmem:[%s821 + $0x2c8] sm:$0xff] %v868
                %v870 = vld [vmem:[%s820 + $0xc0] sm:$0xff]
                %871 = vst [vmem:[%s821 + $0x300] sm:$0xff] %v870
                %v872 = vld [vmem:[%s820 + $0xc8] sm:$0xff]
                %873 = vst [vmem:[%s821 + $0x308] sm:$0xff] %v872
                %v874 = vld [vmem:[%s820 + $0xd0] sm:$0xff]
                %875 = vst [vmem:[%s821 + $0x340] sm:$0xff] %v874
                %v876 = vld [vmem:[%s820 + $0xd8] sm:$0xff]
                %877 = vst [vmem:[%s821 + $0x348] sm:$0xff] %v876
                %v878 = vld [vmem:[%s820 + $0xe0] sm:$0xff]
                %879 = vst [vmem:[%s821 + $0x380] sm:$0xff] %v878
                %v880 = vld [vmem:[%s820 + $0xe8] sm:$0xff]
                %881 = vst [vmem:[%s821 + $0x388] sm:$0xff] %v880
                %v882 = vld [vmem:[%s820 + $0xf0] sm:$0xff]
                %883 = vst [vmem:[%s821 + $0x3c0] sm:$0xff] %v882
                %v884 = vld [vmem:[%s820 + $0xf8] sm:$0xff]
                %885 = vst [vmem:[%s821 + $0x3c8] sm:$0xff] %v884
              $region95: #{_lambda_.17} parent=89 // loop_footer
                %s819 = sadd.s32 1, %s815
              $region96: #{_lambda_.17} parent=89 // loop_footer_branch
                %814 = sbr.rel target = $region92
              $region97: #{_lambda_.17} parent=89 // loop_exit
                _
            $region90: #{_lambda_.17} parent=85 // pred_fallthru
              _
            // Predicated region
            $region98: #{_lambda_.17} parent=85 // pred_check
              _
            $region99: #{_lambda_.17} parent=85 // pred_check_branch
              %887 = sbr.rel target = $region101
            $region100: #{_lambda_.17} parent=85 // pred_region
              _
            $region101: #{_lambda_.17} parent=85 // pred_fallthru
              _
          $region86: #{_lambda_.17} parent=81 // pred_fallthru
            _
          %888 = vnop
        $region82: #{_lambda_.17} parent=65 // pred_fallthru
          _
      $region66: #{_lambda_.17} parent=5 // pred_fallthru
        _
      %p889 = scmp.le.s32.totalorder 2, %s9
      // Predicated region
      $region102: #{_lambda_.17} parent=5 // pred_check
        %p890 = pneg %p889
      $region103: #{_lambda_.17} parent=5 // pred_check_branch
        %892 = sbr.rel (%p890) target = $region105
      $region104: #{_lambda_.17} parent=5 // pred_region
        %s893 = ssub.s32 %s9, 2
        // Predicated region
        $region106: #{_lambda_.17} parent=104 // pred_check
          %p894 = pneg %p141
        $region107: #{_lambda_.17} parent=104 // pred_check_branch
          %896 = sbr.rel (%p894) target = $region109
        $region108: #{_lambda_.17} parent=104 // pred_region
          %s897 = sand.u32 %s126, 1
          %s898 = sand.u32 %s126, 1
          %s899 = smul.addr %s898, 256
          %s900 = scalar_lea.vmem [#allocation4], %s899
        $region109: #{_lambda_.17} parent=104 // pred_fallthru
          _
      $region105: #{_lambda_.17} parent=5 // pred_fallthru
        _
    $region6: #{_lambda_.17} parent=1 // loop_footer
      %s13 = sadd.s32 1, %s9
    $region7: #{_lambda_.17} parent=1 // loop_footer_branch
      %8 = sbr.rel target = $region3
    $region8: #{_lambda_.17} parent=1 // loop_exit
      _

// kernel: _lambda_.23
$region0: #{_lambda_.23}
  #allocation0 [shape = 'u32[]', space=smem, size = 0x4, offset = 0x4, fixed_abs, tag = 'smem constant byte address 0x4 - core index']
  #allocation1 [shape = 'u32[144,128]{1,0:T(1,128)}', space=vmem, size = 0x12000, scoped, tag = 'internal scratch']
  #allocation2 [shape = 'f32[2,2048]{1,0:T(2,128)}', space=vmem, size = 0x4000, scoped, tag = 'scratch operand']
  %s0 = inlined_call_operand.vmem [shape: f32[2,16,2048], index: 0, kind: input, shape index: {}]
  %s1 = inlined_call_operand.vmem [shape: f32[2,2048], index: 1, kind: output, shape index: {}]
  %s2 = sld [smem:[#allocation0]]
  $region22: #{_lambda_.23} parent=0
    _
  %s4 = ssub.s32 1, %s2
  %s5 = scalar_select 0, %s4, %s2
  // Predicated region
  $region2: #{_lambda_.23} parent=0 // pred_check
    _
  $region3: #{_lambda_.23} parent=0 // pred_check_branch
    %7 = sbr.rel (0) target = $region5
  $region4: #{_lambda_.23} parent=0 // pred_region
    _
  $region5: #{_lambda_.23} parent=0 // pred_fallthru
    _
  %p8 = scmp.eq.s32.totalorder 0, 0
  // Predicated region
  $region6: #{_lambda_.23} parent=0 // pred_check
    %p9 = pneg %p8
  $region7: #{_lambda_.23} parent=0 // pred_check_branch
    %11 = sbr.rel (%p9) target = $region9
  $region8: #{_lambda_.23} parent=0 // pred_region
    %12 = vst [vmem:[#allocation2] sm:$0xff] 0.0
    %13 = vst [vmem:[#allocation2 + $0x8] sm:$0xff] 0.0
    %14 = vst [vmem:[#allocation2 + $0x10] sm:$0xff] 0.0
    %15 = vst [vmem:[#allocation2 + $0x18] sm:$0xff] 0.0
  $region9: #{_lambda_.23} parent=0 // pred_fallthru
    _
  %v16 = vld [vmem:[#allocation2] sm:$0xff]
  %v17 = vld [vmem:[#allocation2 + $0x8] sm:$0xff]
  %v18 = vld [vmem:[#allocation2 + $0x10] sm:$0xff]
  %v19 = vld [vmem:[#allocation2 + $0x18] sm:$0xff]
  %v20 = vld [vmem:[%s0] sm:$0xff]
  %v21 = vld [vmem:[%s0 + $0x8] sm:$0xff]
  %v22 = vld [vmem:[%s0 + $0x10] sm:$0xff]
  %v23 = vld [vmem:[%s0 + $0x18] sm:$0xff]
  %v24 = vld [vmem:[%s0 + $0x20] sm:$0xff]
  %v25 = vld [vmem:[%s0 + $0x28] sm:$0xff]
  %v26 = vld [vmem:[%s0 + $0x30] sm:$0xff]
  %v27 = vld [vmem:[%s0 + $0x38] sm:$0xff]
  %v28 = vld [vmem:[%s0 + $0x40] sm:$0xff]
  %v29 = vld [vmem:[%s0 + $0x48] sm:$0xff]
  %v30 = vld [vmem:[%s0 + $0x50] sm:$0xff]
  %v31 = vld [vmem:[%s0 + $0x58] sm:$0xff]
  %v32 = vld [vmem:[%s0 + $0x60] sm:$0xff]
  %v33 = vld [vmem:[%s0 + $0x68] sm:$0xff]
  %v34 = vld [vmem:[%s0 + $0x70] sm:$0xff]
  %v35 = vld [vmem:[%s0 + $0x78] sm:$0xff]
  %v36 = vld [vmem:[%s0 + $0x80] sm:$0xff]
  %v37 = vld [vmem:[%s0 + $0x88] sm:$0xff]
  %v38 = vld [vmem:[%s0 + $0x90] sm:$0xff]
  %v39 = vld [vmem:[%s0 + $0x98] sm:$0xff]
  %v40 = vld [vmem:[%s0 + $0xa0] sm:$0xff]
  %v41 = vld [vmem:[%s0 + $0xa8] sm:$0xff]
  %v42 = vld [vmem:[%s0 + $0xb0] sm:$0xff]
  %v43 = vld [vmem:[%s0 + $0xb8] sm:$0xff]
  %v44 = vld [vmem:[%s0 + $0xc0] sm:$0xff]
  %v45 = vld [vmem:[%s0 + $0xc8] sm:$0xff]
  %v46 = vld [vmem:[%s0 + $0xd0] sm:$0xff]
  %v47 = vld [vmem:[%s0 + $0xd8] sm:$0xff]
  %v48 = vld [vmem:[%s0 + $0xe0] sm:$0xff]
  %v49 = vld [vmem:[%s0 + $0xe8] sm:$0xff]
  %v50 = vld [vmem:[%s0 + $0xf0] sm:$0xff]
  %v51 = vld [vmem:[%s0 + $0xf8] sm:$0xff]
  %v52 = vld [vmem:[%s0 + $0x100] sm:$0xff]
  %v53 = vld [vmem:[%s0 + $0x108] sm:$0xff]
  %v54 = vld [vmem:[%s0 + $0x110] sm:$0xff]
  %v55 = vld [vmem:[%s0 + $0x118] sm:$0xff]
  %v56 = vld [vmem:[%s0 + $0x120] sm:$0xff]
  %v57 = vld [vmem:[%s0 + $0x128] sm:$0xff]
  %v58 = vld [vmem:[%s0 + $0x130] sm:$0xff]
  %v59 = vld [vmem:[%s0 + $0x138] sm:$0xff]
  %v60 = vld [vmem:[%s0 + $0x140] sm:$0xff]
  %v61 = vld [vmem:[%s0 + $0x148] sm:$0xff]
  %v62 = vld [vmem:[%s0 + $0x150] sm:$0xff]
  %v63 = vld [vmem:[%s0 + $0x158] sm:$0xff]
  %v64 = vld [vmem:[%s0 + $0x160] sm:$0xff]
  %v65 = vld [vmem:[%s0 + $0x168] sm:$0xff]
  %v66 = vld [vmem:[%s0 + $0x170] sm:$0xff]
  %v67 = vld [vmem:[%s0 + $0x178] sm:$0xff]
  %v68 = vld [vmem:[%s0 + $0x180] sm:$0xff]
  %v69 = vld [vmem:[%s0 + $0x188] sm:$0xff]
  %v70 = vld [vmem:[%s0 + $0x190] sm:$0xff]
  %v71 = vld [vmem:[%s0 + $0x198] sm:$0xff]
  %v72 = vld [vmem:[%s0 + $0x1a0] sm:$0xff]
  %v73 = vld [vmem:[%s0 + $0x1a8] sm:$0xff]
  %v74 = vld [vmem:[%s0 + $0x1b0] sm:$0xff]
  %v75 = vld [vmem:[%s0 + $0x1b8] sm:$0xff]
  %v76 = vld [vmem:[%s0 + $0x1c0] sm:$0xff]
  %v77 = vld [vmem:[%s0 + $0x1c8] sm:$0xff]
  %v78 = vld [vmem:[%s0 + $0x1d0] sm:$0xff]
  %v79 = vld [vmem:[%s0 + $0x1d8] sm:$0xff]
  %v80 = vld [vmem:[%s0 + $0x1e0] sm:$0xff]
  %v81 = vld [vmem:[%s0 + $0x1e8] sm:$0xff]
  %v82 = vld [vmem:[%s0 + $0x1f0] sm:$0xff]
  %v83 = vld [vmem:[%s0 + $0x1f8] sm:$0xff]
  %v84 = vadd.f32 %v20, %v36
  %v85 = vrot.slane %v84, 4
  %v86 = vadd.f32 %v84, %v85
  %v87 = vrot.slane %v86, 2
  %v88 = vadd.f32 %v86, %v87
  %v89 = vrot.slane %v88, 1
  %v90 = vadd.f32 %v88, %v89
  %v91 = vadd.f32 %v21, %v37
  %v92 = vrot.slane %v91, 4
  %v93 = vadd.f32 %v91, %v92
  %v94 = vrot.slane %v93, 2
  %v95 = vadd.f32 %v93, %v94
  %v96 = vrot.slane %v95, 1
  %v97 = vadd.f32 %v95, %v96
  %v98 = vadd.f32 %v22, %v38
  %v99 = vrot.slane %v98, 4
  %v100 = vadd.f32 %v98, %v99
  %v101 = vrot.slane %v100, 2
  %v102 = vadd.f32 %v100, %v101
  %v103 = vrot.slane %v102, 1
  %v104 = vadd.f32 %v102, %v103
  %v105 = vadd.f32 %v23, %v39
  %v106 = vrot.slane %v105, 4
  %v107 = vadd.f32 %v105, %v106
  %v108 = vrot.slane %v107, 2
  %v109 = vadd.f32 %v107, %v108
  %v110 = vrot.slane %v109, 1
  %v111 = vadd.f32 %v109, %v110
  %v112 = vadd.f32 %v24, %v40
  %v113 = vrot.slane %v112, 4
  %v114 = vadd.f32 %v112, %v113
  %v115 = vrot.slane %v114, 2
  %v116 = vadd.f32 %v114, %v115
  %v117 = vrot.slane %v116, 1
  %v118 = vadd.f32 %v116, %v117
  %v119 = vadd.f32 %v25, %v41
  %v120 = vrot.slane %v119, 4
  %v121 = vadd.f32 %v119, %v120
  %v122 = vrot.slane %v121, 2
  %v123 = vadd.f32 %v121, %v122
  %v124 = vrot.slane %v123, 1
  %v125 = vadd.f32 %v123, %v124
  %v126 = vadd.f32 %v26, %v42
  %v127 = vrot.slane %v126, 4
  %v128 = vadd.f32 %v126, %v127
  %v129 = vrot.slane %v128, 2
  %v130 = vadd.f32 %v128, %v129
  %v131 = vrot.slane %v130, 1
  %v132 = vadd.f32 %v130, %v131
  %v133 = vadd.f32 %v27, %v43
  %v134 = vrot.slane %v133, 4
  %v135 = vadd.f32 %v133, %v134
  %v136 = vrot.slane %v135, 2
  %v137 = vadd.f32 %v135, %v136
  %v138 = vrot.slane %v137, 1
  %v139 = vadd.f32 %v137, %v138
  %v140 = vadd.f32 %v28, %v44
  %v141 = vrot.slane %v140, 4
  %v142 = vadd.f32 %v140, %v141
  %v143 = vrot.slane %v142, 2
  %v144 = vadd.f32 %v142, %v143
  %v145 = vrot.slane %v144, 1
  %v146 = vadd.f32 %v144, %v145
  %v147 = vadd.f32 %v29, %v45
  %v148 = vrot.slane %v147, 4
  %v149 = vadd.f32 %v147, %v148
  %v150 = vrot.slane %v149, 2
  %v151 = vadd.f32 %v149, %v150
  %v152 = vrot.slane %v151, 1
  %v153 = vadd.f32 %v151, %v152
  %v154 = vadd.f32 %v30, %v46
  %v155 = vrot.slane %v154, 4
  %v156 = vadd.f32 %v154, %v155
  %v157 = vrot.slane %v156, 2
  %v158 = vadd.f32 %v156, %v157
  %v159 = vrot.slane %v158, 1
  %v160 = vadd.f32 %v158, %v159
  %v161 = vadd.f32 %v31, %v47
  %v162 = vrot.slane %v161, 4
  %v163 = vadd.f32 %v161, %v162
  %v164 = vrot.slane %v163, 2
  %v165 = vadd.f32 %v163, %v164
  %v166 = vrot.slane %v165, 1
  %v167 = vadd.f32 %v165, %v166
  %v168 = vadd.f32 %v32, %v48
  %v169 = vrot.slane %v168, 4
  %v170 = vadd.f32 %v168, %v169
  %v171 = vrot.slane %v170, 2
  %v172 = vadd.f32 %v170, %v171
  %v173 = vrot.slane %v172, 1
  %v174 = vadd.f32 %v172, %v173
  %v175 = vadd.f32 %v33, %v49
  %v176 = vrot.slane %v175, 4
  %v177 = vadd.f32 %v175, %v176
  %v178 = vrot.slane %v177, 2
  %v179 = vadd.f32 %v177, %v178
  %v180 = vrot.slane %v179, 1
  %v181 = vadd.f32 %v179, %v180
  %v182 = vadd.f32 %v34, %v50
  %v183 = vrot.slane %v182, 4
  %v184 = vadd.f32 %v182, %v183
  %v185 = vrot.slane %v184, 2
  %v186 = vadd.f32 %v184, %v185
  %v187 = vrot.slane %v186, 1
  %v188 = vadd.f32 %v186, %v187
  %v189 = vadd.f32 %v35, %v51
  %v190 = vrot.slane %v189, 4
  %v191 = vadd.f32 %v189, %v190
  %v192 = vrot.slane %v191, 2
  %v193 = vadd.f32 %v191, %v192
  %v194 = vrot.slane %v193, 1
  %v195 = vadd.f32 %v193, %v194
  %v196 = vadd.f32 %v52, %v68
  %v197 = vrot.slane %v196, 4
  %v198 = vadd.f32 %v196, %v197
  %v199 = vrot.slane %v198, 2
  %v200 = vadd.f32 %v198, %v199
  %v201 = vrot.slane %v200, 1
  %v202 = vadd.f32 %v200, %v201
  %v203 = vadd.f32 %v53, %v69
  %v204 = vrot.slane %v203, 4
  %v205 = vadd.f32 %v203, %v204
  %v206 = vrot.slane %v205, 2
  %v207 = vadd.f32 %v205, %v206
  %v208 = vrot.slane %v207, 1
  %v209 = vadd.f32 %v207, %v208
  %v210 = vadd.f32 %v54, %v70
  %v211 = vrot.slane %v210, 4
  %v212 = vadd.f32 %v210, %v211
  %v213 = vrot.slane %v212, 2
  %v214 = vadd.f32 %v212, %v213
  %v215 = vrot.slane %v214, 1
  %v216 = vadd.f32 %v214, %v215
  %v217 = vadd.f32 %v55, %v71
  %v218 = vrot.slane %v217, 4
  %v219 = vadd.f32 %v217, %v218
  %v220 = vrot.slane %v219, 2
  %v221 = vadd.f32 %v219, %v220
  %v222 = vrot.slane %v221, 1
  %v223 = vadd.f32 %v221, %v222
  %v224 = vadd.f32 %v56, %v72
  %v225 = vrot.slane %v224, 4
  %v226 = vadd.f32 %v224, %v225
  %v227 = vrot.slane %v226, 2
  %v228 = vadd.f32 %v226, %v227
  %v229 = vrot.slane %v228, 1
  %v230 = vadd.f32 %v228, %v229
  %v231 = vadd.f32 %v57, %v73
  %v232 = vrot.slane %v231, 4
  %v233 = vadd.f32 %v231, %v232
  %v234 = vrot.slane %v233, 2
  %v235 = vadd.f32 %v233, %v234
  %v236 = vrot.slane %v235, 1
  %v237 = vadd.f32 %v235, %v236
  %v238 = vadd.f32 %v58, %v74
  %v239 = vrot.slane %v238, 4
  %v240 = vadd.f32 %v238, %v239
  %v241 = vrot.slane %v240, 2
  %v242 = vadd.f32 %v240, %v241
  %v243 = vrot.slane %v242, 1
  %v244 = vadd.f32 %v242, %v243
  %v245 = vadd.f32 %v59, %v75
  %v246 = vrot.slane %v245, 4
  %v247 = vadd.f32 %v245, %v246
  %v248 = vrot.slane %v247, 2
  %v249 = vadd.f32 %v247, %v248
  %v250 = vrot.slane %v249, 1
  %v251 = vadd.f32 %v249, %v250
  %v252 = vadd.f32 %v60, %v76
  %v253 = vrot.slane %v252, 4
  %v254 = vadd.f32 %v252, %v253
  %v255 = vrot.slane %v254, 2
  %v256 = vadd.f32 %v254, %v255
  %v257 = vrot.slane %v256, 1
  %v258 = vadd.f32 %v256, %v257
  %v259 = vadd.f32 %v61, %v77
  %v260 = vrot.slane %v259, 4
  %v261 = vadd.f32 %v259, %v260
  %v262 = vrot.slane %v261, 2
  %v263 = vadd.f32 %v261, %v262
  %v264 = vrot.slane %v263, 1
  %v265 = vadd.f32 %v263, %v264
  %v266 = vadd.f32 %v62, %v78
  %v267 = vrot.slane %v266, 4
  %v268 = vadd.f32 %v266, %v267
  %v269 = vrot.slane %v268, 2
  %v270 = vadd.f32 %v268, %v269
  %v271 = vrot.slane %v270, 1
  %v272 = vadd.f32 %v270, %v271
  %v273 = vadd.f32 %v63, %v79
  %v274 = vrot.slane %v273, 4
  %v275 = vadd.f32 %v273, %v274
  %v276 = vrot.slane %v275, 2
  %v277 = vadd.f32 %v275, %v276
  %v278 = vrot.slane %v277, 1
  %v279 = vadd.f32 %v277, %v278
  %v280 = vadd.f32 %v64, %v80
  %v281 = vrot.slane %v280, 4
  %v282 = vadd.f32 %v280, %v281
  %v283 = vrot.slane %v282, 2
  %v284 = vadd.f32 %v282, %v283
  %v285 = vrot.slane %v284, 1
  %v286 = vadd.f32 %v284, %v285
  %v287 = vadd.f32 %v65, %v81
  %v288 = vrot.slane %v287, 4
  %v289 = vadd.f32 %v287, %v288
  %v290 = vrot.slane %v289, 2
  %v291 = vadd.f32 %v289, %v290
  %v292 = vrot.slane %v291, 1
  %v293 = vadd.f32 %v291, %v292
  %v294 = vadd.f32 %v66, %v82
  %v295 = vrot.slane %v294, 4
  %v296 = vadd.f32 %v294, %v295
  %v297 = vrot.slane %v296, 2
  %v298 = vadd.f32 %v296, %v297
  %v299 = vrot.slane %v298, 1
  %v300 = vadd.f32 %v298, %v299
  %v301 = vadd.f32 %v67, %v83
  %v302 = vrot.slane %v301, 4
  %v303 = vadd.f32 %v301, %v302
  %v304 = vrot.slane %v303, 2
  %v305 = vadd.f32 %v303, %v304
  %v306 = vrot.slane %v305, 1
  %v307 = vadd.f32 %v305, %v306
  %v340 = vcombine.low %v90, %v97
  %v341 = vcombine.low %v104, %v111
  %v343 = vunpack.c.l.s4 1983009808
  %v344 = vunpack.c.0.s8 %v343
  %v345 = vlaneseq
  %v346 = vshrl.u32 %v345, 7
  %v347 = vsub.s32 %v344, %v346
  %v348 = vrot.slane %v340, %v347
  %v350 = vunpack.c.l.s4 1983009808
  %v351 = vunpack.c.0.s8 %v350
  %v352 = vlaneseq
  %v353 = vshrl.u32 %v352, 7
  %v354 = vsub.s32 %v351, %v353
  %v355 = vrot.slane %v341, %v354
  %v356 = vcombine.low %v348, %v355
  %v357 = vcombine.low %v118, %v125
  %v358 = vcombine.low %v132, %v139
  %v360 = vunpack.c.l.s4 1983009808
  %v361 = vunpack.c.0.s8 %v360
  %v362 = vlaneseq
  %v363 = vshrl.u32 %v362, 7
  %v364 = vsub.s32 %v361, %v363
  %v365 = vrot.slane %v357, %v364
  %v367 = vunpack.c.l.s4 1983009808
  %v368 = vunpack.c.0.s8 %v367
  %v369 = vlaneseq
  %v370 = vshrl.u32 %v369, 7
  %v371 = vsub.s32 %v368, %v370
  %v372 = vrot.slane %v358, %v371
  %v373 = vcombine.low %v365, %v372
  %v374 = vcombine.low %v146, %v153
  %v375 = vcombine.low %v160, %v167
  %v377 = vunpack.c.l.s4 1983009808
  %v378 = vunpack.c.0.s8 %v377
  %v379 = vlaneseq
  %v380 = vshrl.u32 %v379, 7
  %v381 = vsub.s32 %v378, %v380
  %v382 = vrot.slane %v374, %v381
  %v384 = vunpack.c.l.s4 1983009808
  %v385 = vunpack.c.0.s8 %v384
  %v386 = vlaneseq
  %v387 = vshrl.u32 %v386, 7
  %v388 = vsub.s32 %v385, %v387
  %v389 = vrot.slane %v375, %v388
  %v390 = vcombine.low %v382, %v389
  %v391 = vcombine.low %v174, %v181
  %v392 = vcombine.low %v188, %v195
  %v394 = vunpack.c.l.s4 1983009808
  %v395 = vunpack.c.0.s8 %v394
  %v396 = vlaneseq
  %v397 = vshrl.u32 %v396, 7
  %v398 = vsub.s32 %v395, %v397
  %v399 = vrot.slane %v391, %v398
  %v401 = vunpack.c.l.s4 1983009808
  %v402 = vunpack.c.0.s8 %v401
  %v403 = vlaneseq
  %v404 = vshrl.u32 %v403, 7
  %v405 = vsub.s32 %v402, %v404
  %v406 = vrot.slane %v392, %v405
  %v407 = vcombine.low %v399, %v406
  %v408 = vcombine.low %v202, %v209
  %v409 = vcombine.low %v216, %v223
  %v411 = vunpack.c.l.s4 1983009808
  %v412 = vunpack.c.0.s8 %v411
  %v413 = vlaneseq
  %v414 = vshrl.u32 %v413, 7
  %v415 = vsub.s32 %v412, %v414
  %v416 = vrot.slane %v408, %v415
  %v418 = vunpack.c.l.s4 1983009808
  %v419 = vunpack.c.0.s8 %v418
  %v420 = vlaneseq
  %v421 = vshrl.u32 %v420, 7
  %v422 = vsub.s32 %v419, %v421
  %v423 = vrot.slane %v409, %v422
  %v424 = vcombine.low %v416, %v423
  %v425 = vcombine.low %v230, %v237
  %v426 = vcombine.low %v244, %v251
  %v428 = vunpack.c.l.s4 1983009808
  %v429 = vunpack.c.0.s8 %v428
  %v430 = vlaneseq
  %v431 = vshrl.u32 %v430, 7
  %v432 = vsub.s32 %v429, %v431
  %v433 = vrot.slane %v425, %v432
  %v435 = vunpack.c.l.s4 1983009808
  %v436 = vunpack.c.0.s8 %v435
  %v437 = vlaneseq
  %v438 = vshrl.u32 %v437, 7
  %v439 = vsub.s32 %v436, %v438
  %v440 = vrot.slane %v426, %v439
  %v441 = vcombine.low %v433, %v440
  %v442 = vcombine.low %v258, %v265
  %v443 = vcombine.low %v272, %v279
  %v445 = vunpack.c.l.s4 1983009808
  %v446 = vunpack.c.0.s8 %v445
  %v447 = vlaneseq
  %v448 = vshrl.u32 %v447, 7
  %v449 = vsub.s32 %v446, %v448
  %v450 = vrot.slane %v442, %v449
  %v452 = vunpack.c.l.s4 1983009808
  %v453 = vunpack.c.0.s8 %v452
  %v454 = vlaneseq
  %v455 = vshrl.u32 %v454, 7
  %v456 = vsub.s32 %v453, %v455
  %v457 = vrot.slane %v443, %v456
  %v458 = vcombine.low %v450, %v457
  %v459 = vcombine.low %v286, %v293
  %v460 = vcombine.low %v300, %v307
  %v462 = vunpack.c.l.s4 1983009808
  %v463 = vunpack.c.0.s8 %v462
  %v464 = vlaneseq
  %v465 = vshrl.u32 %v464, 7
  %v466 = vsub.s32 %v463, %v465
  %v467 = vrot.slane %v459, %v466
  %v469 = vunpack.c.l.s4 1983009808
  %v470 = vunpack.c.0.s8 %v469
  %v471 = vlaneseq
  %v472 = vshrl.u32 %v471, 7
  %v473 = vsub.s32 %v470, %v472
  %v474 = vrot.slane %v460, %v473
  %v475 = vcombine.low %v467, %v474
  %vm476 = vcmask 1044484
  %v477 = vsel %vm476, %v356, %v356
  %vm478 = vcmask 1046534
  %v479 = vsel %vm478, %v356, %v477
  %v480 = vrot.slane %v424, 7
  %vm481 = vcmask 1041409
  %v482 = vsel %vm481, %v480, %v479
  %vm483 = vcmask 1043459
  %v484 = vsel %vm483, %v480, %v482
  %vm485 = vcmask 1045509
  %v486 = vsel %vm485, %v480, %v484
  %vm487 = vcmask 1047559
  %v488 = vsel %vm487, %v480, %v486
  %v489 = vsel %vm476, %v373, %v373
  %v490 = vsel %vm478, %v373, %v489
  %v491 = vrot.slane %v441, 7
  %v492 = vsel %vm481, %v491, %v490
  %v493 = vsel %vm483, %v491, %v492
  %v494 = vsel %vm485, %v491, %v493
  %v495 = vsel %vm487, %v491, %v494
  %v496 = vsel %vm476, %v390, %v390
  %v497 = vsel %vm478, %v390, %v496
  %v498 = vrot.slane %v458, 7
  %v499 = vsel %vm481, %v498, %v497
  %v500 = vsel %vm483, %v498, %v499
  %v501 = vsel %vm485, %v498, %v500
  %v502 = vsel %vm487, %v498, %v501
  %v503 = vsel %vm476, %v407, %v407
  %v504 = vsel %vm478, %v407, %v503
  %v505 = vrot.slane %v475, 7
  %v506 = vsel %vm481, %v505, %v504
  %v507 = vsel %vm483, %v505, %v506
  %v508 = vsel %vm485, %v505, %v507
  %v509 = vsel %vm487, %v505, %v508
  %v514 = vadd.f32 %v16, %v488
  %v515 = vadd.f32 %v17, %v495
  %v516 = vadd.f32 %v18, %v502
  %v517 = vadd.f32 %v19, %v509
  %518 = vst [vmem:[#allocation2] sm:$0xff] %v514
  %519 = vst [vmem:[#allocation2 + $0x8] sm:$0xff] %v515
  %520 = vst [vmem:[#allocation2 + $0x10] sm:$0xff] %v516
  %521 = vst [vmem:[#allocation2 + $0x18] sm:$0xff] %v517
  // Predicated region
  $region10: #{_lambda_.23} parent=0 // pred_check
    %p522 = pneg %p8
  $region11: #{_lambda_.23} parent=0 // pred_check_branch
    %524 = sbr.rel (%p522) target = $region13
  $region12: #{_lambda_.23} parent=0 // pred_region
    %v525 = vld [vmem:[#allocation2] sm:$0xff]
    %v526 = vld [vmem:[#allocation2 + $0x8] sm:$0xff]
    %v527 = vld [vmem:[#allocation2 + $0x10] sm:$0xff]
    %v528 = vld [vmem:[#allocation2 + $0x18] sm:$0xff]
    %v529 = vmul.f32 %v525, 0.0625
    %v530 = vmul.f32 %v526, 0.0625
    %v531 = vmul.f32 %v527, 0.0625
    %v532 = vmul.f32 %v528, 0.0625
    %533 = vst [vmem:[%s1] sm:$0xff] %v529
    %534 = vst [vmem:[%s1 + $0x8] sm:$0xff] %v530
    %535 = vst [vmem:[%s1 + $0x10] sm:$0xff] %v531
    %536 = vst [vmem:[%s1 + $0x18] sm:$0xff] %v532
  $region13: #{_lambda_.23} parent=0 // pred_fallthru
    _
  // Predicated region
  $region14: #{_lambda_.23} parent=0 // pred_check
    _
  $region15: #{_lambda_.23} parent=0 // pred_check_branch
    %538 = sbr.rel (0) target = $region17
  $region16: #{_lambda_.23} parent=0 // pred_region
    _
  $region17: #{_lambda_.23} parent=0 // pred_fallthru
    _
  // Predicated region
  $region18: #{_lambda_.23} parent=0 // pred_check
    _
  $region19: #{_lambda_.23} parent=0 // pred_check_branch
    %540 = sbr.rel (0) target = $region21
  $region20: #{_lambda_.23} parent=0 // pred_region
    _
  $region21: #{_lambda_.23} parent=0 // pred_fallthru
    _

// kernel: _lambda_.22
$region0: #{_lambda_.22}
  #allocation0 [shape = 'u32[]', space=smem, size = 0x4, offset = 0x4, fixed_abs, tag = 'smem constant byte address 0x4 - core index']
  #allocation1 [shape = 'u32[144,128]{1,0:T(1,128)}', space=vmem, size = 0x12000, scoped, tag = 'internal scratch']
  #allocation2 [shape = 'f32[32,256]{1,0:T(8,128)}', space=vmem, size = 0x8000, scoped, tag = 'scratch operand']
  %s0 = inlined_call_operand.vmem [shape: f32[32,1024], index: 0, kind: input, shape index: {}]
  %s1 = inlined_call_operand.vmem [shape: bf16[1024,2048], index: 1, kind: input, shape index: {}]
  %s2 = inlined_call_operand.vmem [shape: f32[1,2048], index: 2, kind: input, shape index: {}]
  %s3 = inlined_call_operand.vmem [shape: f32[32,2048], index: 3, kind: output, shape index: {}]
  %s4 = sld [smem:[#allocation0]]
  $region133: #{_lambda_.22} parent=0
    _
  %s6 = ssub.s32 1, %s4
  %s7 = scalar_select 0, %s6, %s4
  $region1: #{_lambda_.22} parent=0
    #allocation3 [shape = 'u8[131072]{0}', space=vmem, size = 0x20000, scoped, tag = 'input window, operand 0']
    #allocation4 [shape = 'u8[524288]{0}', space=vmem, size = 0x80000, scoped, tag = 'input window, operand 1']
    #allocation5 [shape = 'u8[65536]{0}', space=vmem, size = 0x10000, scoped, tag = 'output window, operand 0']
    loop: start=0, step=1, limit=18
    $region2: #{_lambda_.22} parent=1 // loop_pre_header
      _
    $region3: #{_lambda_.22} parent=1 // loop_header
      %s9 = sphi 0, %s13
      %p10 = scmp.ge.s32.totalorder %s9, 18
      %s16 = sphi 0, %s35
      %s17 = sphi 0, %s31
      %s18 = sphi 0, %s27
      %s19 = sphi 0, %s16
      %s20 = sphi 0, %s17
      %s21 = sphi 0, %s18
      %s22 = sphi 0, %s19
      %s23 = sphi 0, %s20
      %s24 = sphi 0, %s21
      %s40 = sphi 0, %s42
      %s43 = sphi 0, %s40
      %s44 = sphi 0, %s43
      %s60 = sphi 0, %s44
      %s68 = sphi 0, %s70
      %s71 = sphi 0, %s68
      %s72 = sphi 0, %s71
      %s88 = sphi 0, %s72
      %s94 = sphi 0, %s96
      %s97 = sphi 0, %s94
      %s98 = sphi 0, %s97
      %s114 = sphi 0, %s98
      %s122 = sphi 0, %s124
      %s125 = sphi 0, %s122
      %s126 = sphi 0, %s125
      %s142 = sphi 0, %s126
    $region4: #{_lambda_.22} parent=1 // loop_header_branch
      %12 = sbr.rel (%p10) target = $region8
    $region5: #{_lambda_.22} parent=1 // loop_body
      %s14 = ssub.s32 %s9, 1
      %s15 = ssub.s32 %s9, 2
      %s25 = sadd.s32 1, %s18
      %p26 = scmp.ge.s32.totalorder %s25, 2
      %s27 = scalar_select %p26, 0, %s25
      %s28 = sadd.s32 1, %s17
      %s29 = scalar_select %p26, %s28, %s17
      %p30 = scmp.ge.s32.totalorder %s29, 8
      %s31 = scalar_select %p30, 0, %s29
      %s32 = sadd.s32 1, %s16
      %s33 = scalar_select %p30, %s32, %s16
      %p34 = scmp.ge.s32.totalorder %s33, 1
      %s35 = scalar_select %p34, 0, %s33
      %s36 = ssub.s32 %s16, %s35
      %s37 = ssub.s32 %s18, %s27
      %s38 = sor.u32 %s36, %s37
      %p39 = scmp.eq.s32.totalorder %s38, 0
      %s41 = sadd.s32 %s40, 1
      %s42 = scalar_select %p39, %s40, %s41
      %p45 = pneg %p39
      %p46 = scmp.eq.s32.totalorder %s9, 15
      %p47 = por %p45, %p46
      %p48 = scmp.ne.s32.totalorder %s40, %s43
      %p49 = scmp.eq.s32.totalorder %s9, 0
      %p50 = por %p48, %p49
      %p51 = scmp.ne.s32.totalorder %s40, %s43
      %p52 = scmp.eq.s32.totalorder %s14, 15
      %p53 = por %p51, %p52
      %p54 = scmp.ne.s32.totalorder %s43, %s44
      %p55 = scmp.eq.s32.totalorder %s14, 0
      %p56 = por %p54, %p55
      %p57 = scmp.ne.s32.totalorder %s43, %s44
      %p58 = scmp.eq.s32.totalorder %s15, 15
      %p59 = por %p57, %p58
      %p61 = scmp.ne.s32.totalorder %s44, %s60
      %p62 = scmp.eq.s32.totalorder %s15, 0
      %p63 = por %p61, %p62
      %s64 = ssub.s32 %s18, %s27
      %s65 = ssub.s32 %s17, %s31
      %s66 = sor.u32 %s64, %s65
      %p67 = scmp.eq.s32.totalorder %s66, 0
      %s69 = sadd.s32 %s68, 1
      %s70 = scalar_select %p67, %s68, %s69
      %p73 = pneg %p67
      %p74 = scmp.eq.s32.totalorder %s9, 15
      %p75 = por %p73, %p74
      %p76 = scmp.ne.s32.totalorder %s68, %s71
      %p77 = scmp.eq.s32.totalorder %s9, 0
      %p78 = por %p76, %p77
      %p79 = scmp.ne.s32.totalorder %s68, %s71
      %p80 = scmp.eq.s32.totalorder %s14, 15
      %p81 = por %p79, %p80
      %p82 = scmp.ne.s32.totalorder %s71, %s72
      %p83 = scmp.eq.s32.totalorder %s14, 0
      %p84 = por %p82, %p83
      %p85 = scmp.ne.s32.totalorder %s71, %s72
      %p86 = scmp.eq.s32.totalorder %s15, 15
      %p87 = por %p85, %p86
      %p89 = scmp.ne.s32.totalorder %s72, %s88
      %p90 = scmp.eq.s32.totalorder %s15, 0
      %p91 = por %p89, %p90
      %s92 = ssub.s32 %s17, %s31
      %p93 = scmp.eq.s32.totalorder %s92, 0
      %s95 = sadd.s32 %s94, 1
      %s96 = scalar_select %p93, %s94, %s95
      %p99 = pneg %p93
      %p100 = scmp.eq.s32.totalorder %s9, 15
      %p101 = por %p99, %p100
      %p102 = scmp.ne.s32.totalorder %s94, %s97
      %p103 = scmp.eq.s32.totalorder %s9, 0
      %p104 = por %p102, %p103
      %p105 = scmp.ne.s32.totalorder %s94, %s97
      %p106 = scmp.eq.s32.totalorder %s14, 15
      %p107 = por %p105, %p106
      %p108 = scmp.ne.s32.totalorder %s97, %s98
      %p109 = scmp.eq.s32.totalorder %s14, 0
      %p110 = por %p108, %p109
      %p111 = scmp.ne.s32.totalorder %s97, %s98
      %p112 = scmp.eq.s32.totalorder %s15, 15
      %p113 = por %p111, %p112
      %p115 = scmp.ne.s32.totalorder %s98, %s114
      %p116 = scmp.eq.s32.totalorder %s15, 0
      %p117 = por %p115, %p116
      %s118 = ssub.s32 %s16, %s35
      %s119 = ssub.s32 %s17, %s31
      %s120 = sor.u32 %s118, %s119
      %p121 = scmp.eq.s32.totalorder %s120, 0
      %s123 = sadd.s32 %s122, 1
      %s124 = scalar_select %p121, %s122, %s123
      %p127 = pneg %p121
      %p128 = scmp.eq.s32.totalorder %s9, 15
      %p129 = por %p127, %p128
      %p130 = scmp.ne.s32.totalorder %s122, %s125
      %p131 = scmp.eq.s32.totalorder %s9, 0
      %p132 = por %p130, %p131
      %p133 = scmp.ne.s32.totalorder %s122, %s125
      %p134 = scmp.eq.s32.totalorder %s14, 15
      %p135 = por %p133, %p134
      %p136 = scmp.ne.s32.totalorder %s125, %s126
      %p137 = scmp.eq.s32.totalorder %s14, 0
      %p138 = por %p136, %p137
      %p139 = scmp.ne.s32.totalorder %s125, %s126
      %p140 = scmp.eq.s32.totalorder %s15, 15
      %p141 = por %p139, %p140
      %p143 = scmp.ne.s32.totalorder %s126, %s142
      %p144 = scmp.eq.s32.totalorder %s15, 0
      %p145 = por %p143, %p144
      %p146 = scmp.le.s32.totalorder 1, %s9
      %p147 = scmp.lt.s32.totalorder %s9, 17
      %p148 = pnand %p146, %p147
      %p149 = pneg %p148
      // Predicated region
      $region9: #{_lambda_.22} parent=5 // pred_check
        _
      $region10: #{_lambda_.22} parent=5 // pred_check_branch
        %151 = sbr.rel (%p148) target = $region12
      $region11: #{_lambda_.22} parent=5 // pred_region
        %s152 = ssub.s32 %s9, 1
      $region12: #{_lambda_.22} parent=5 // pred_fallthru
        _
      %p153 = scmp.lt.s32.totalorder %s9, 16
      // Predicated region
      $region13: #{_lambda_.22} parent=5 // pred_check
        %p154 = pneg %p153
      $region14: #{_lambda_.22} parent=5 // pred_check_branch
        %156 = sbr.rel (%p154) target = $region16
      $region15: #{_lambda_.22} parent=5 // pred_region
        // Predicated region
        $region17: #{_lambda_.22} parent=15 // pred_check
          %p157 = pneg %p50
        $region18: #{_lambda_.22} parent=15 // pred_check_branch
          %159 = sbr.rel (%p157) target = $region20
        $region19: #{_lambda_.22} parent=15 // pred_region
          %s160 = sand.u32 %s40, 1
          %s161 = sand.u32 %s40, 1
          %s162 = smul.addr %s161, 128
          %s163 = scalar_lea.vmem [#allocation3], %s162
          %s164 = smul.u32 4, %s16
          %s165 = smul.u32 4, %s18
          %s166 = smul.addr %s164, 8
          %s167 = sadd.s32 %s165, %s166
          %s168 = smul.addr %s167, 8
          %s169 = scalar_lea.vmem %s0, %s168
          // Predicated region
          $region21: #{_lambda_.22} parent=19 // pred_check
            _
          $region22: #{_lambda_.22} parent=19 // pred_check_branch
            %171 = sbr.rel (0) target = $region24
          $region23: #{_lambda_.22} parent=19 // pred_region
            // Predicated region
            $region25: #{_lambda_.22} parent=23 // pred_check
              _
            $region26: #{_lambda_.22} parent=23 // pred_check_branch
              %173 = sbr.rel (0) target = $region28
            $region27: #{_lambda_.22} parent=23 // pred_region
              loop: start=0, step=1, limit=1
              $region29: #{_lambda_.22} parent=27 // loop_pre_header
                _
              $region30: #{_lambda_.22} parent=27 // loop_header
                %s175 = sphi 0, %s179
                %p176 = scmp.ge.s32.totalorder %s175, 1
                %s180 = sphi %s169, %s169
                %s181 = sphi %s163, %s163
              $region31: #{_lambda_.22} parent=27 // loop_header_branch
                %178 = sbr.rel (%p176) target = $region35
              $region32: #{_lambda_.22} parent=27 // loop_body
                %v182 = vld [vmem:[%s180] sm:$0xff]
                %183 = vst [vmem:[%s181] sm:$0xff] %v182
                %v184 = vld [vmem:[%s180 + $0x8] sm:$0xff]
                %185 = vst [vmem:[%s181 + $0x8] sm:$0xff] %v184
                %v186 = vld [vmem:[%s180 + $0x10] sm:$0xff]
                %187 = vst [vmem:[%s181 + $0x10] sm:$0xff] %v186
                %v188 = vld [vmem:[%s180 + $0x18] sm:$0xff]
                %189 = vst [vmem:[%s181 + $0x18] sm:$0xff] %v188
                %v190 = vld [vmem:[%s180 + $0x40] sm:$0xff]
                %191 = vst [vmem:[%s181 + $0x20] sm:$0xff] %v190
                %v192 = vld [vmem:[%s180 + $0x48] sm:$0xff]
                %193 = vst [vmem:[%s181 + $0x28] sm:$0xff] %v192
                %v194 = vld [vmem:[%s180 + $0x50] sm:$0xff]
                %195 = vst [vmem:[%s181 + $0x30] sm:$0xff] %v194
                %v196 = vld [vmem:[%s180 + $0x58] sm:$0xff]
                %197 = vst [vmem:[%s181 + $0x38] sm:$0xff] %v196
                %v198 = vld [vmem:[%s180 + $0x80] sm:$0xff]
                %199 = vst [vmem:[%s181 + $0x40] sm:$0xff] %v198
                %v200 = vld [vmem:[%s180 + $0x88] sm:$0xff]
                %201 = vst [vmem:[%s181 + $0x48] sm:$0xff] %v200
                %v202 = vld [vmem:[%s180 + $0x90] sm:$0xff]
                %203 = vst [vmem:[%s181 + $0x50] sm:$0xff] %v202
                %v204 = vld [vmem:[%s180 + $0x98] sm:$0xff]
                %205 = vst [vmem:[%s181 + $0x58] sm:$0xff] %v204
                %v206 = vld [vmem:[%s180 + $0xc0] sm:$0xff]
                %207 = vst [vmem:[%s181 + $0x60] sm:$0xff] %v206
                %v208 = vld [vmem:[%s180 + $0xc8] sm:$0xff]
                %209 = vst [vmem:[%s181 + $0x68] sm:$0xff] %v208
                %v210 = vld [vmem:[%s180 + $0xd0] sm:$0xff]
                %211 = vst [vmem:[%s181 + $0x70] sm:$0xff] %v210
                %v212 = vld [vmem:[%s180 + $0xd8] sm:$0xff]
                %213 = vst [vmem:[%s181 + $0x78] sm:$0xff] %v212
              $region33: #{_lambda_.22} parent=27 // loop_footer
                %s179 = sadd.s32 1, %s175
              $region34: #{_lambda_.22} parent=27 // loop_footer_branch
                %174 = sbr.rel target = $region30
              $region35: #{_lambda_.22} parent=27 // loop_exit
                _
            $region28: #{_lambda_.22} parent=23 // pred_fallthru
              _
            // Predicated region
            $region36: #{_lambda_.22} parent=23 // pred_check
              _
            $region37: #{_lambda_.22} parent=23 // pred_check_branch
              %215 = sbr.rel target = $region39
            $region38: #{_lambda_.22} parent=23 // pred_region
              _
            $region39: #{_lambda_.22} parent=23 // pred_fallthru
              _
          $region24: #{_lambda_.22} parent=19 // pred_fallthru
            _
          %216 = vnop
        $region20: #{_lambda_.22} parent=15 // pred_fallthru
          _
        // Predicated region
        $region40: #{_lambda_.22} parent=15 // pred_check
          %p217 = pneg %p78
        $region41: #{_lambda_.22} parent=15 // pred_check_branch
          %219 = sbr.rel (%p217) target = $region43
        $region42: #{_lambda_.22} parent=15 // pred_region
          %s220 = sand.u32 %s68, 1
          %s221 = sand.u32 %s68, 1
          %s222 = smul.addr %s221, 512
          %s223 = scalar_lea.vmem [#allocation4], %s222
          %s224 = smul.u32 64, %s18
          %s225 = smul.u32 2, %s17
          %s226 = smul.addr %s224, 16
          %s227 = sadd.s32 %s225, %s226
          %s228 = smul.addr %s227, 4
          %s229 = scalar_lea.vmem %s1, %s228
          // Predicated region
          $region44: #{_lambda_.22} parent=42 // pred_check
            _
          $region45: #{_lambda_.22} parent=42 // pred_check_branch
            %231 = sbr.rel (0) target = $region47
          $region46: #{_lambda_.22} parent=42 // pred_region
            // Predicated region
            $region48: #{_lambda_.22} parent=46 // pred_check
              _
            $region49: #{_lambda_.22} parent=46 // pred_check_branch
              %233 = sbr.rel (0) target = $region51
            $region50: #{_lambda_.22} parent=46 // pred_region
              // Predicated region
              $region63: #{_lambda_.22} parent=50 // pred_check
                _
              $region64: #{_lambda_.22} parent=50 // pred_check_branch
                %375 = sbr.rel (0) target = $region66
              $region65: #{_lambda_.22} parent=50 // pred_region
                loop: start=0, step=1, limit=1
                $region67: #{_lambda_.22} parent=65 // loop_pre_header
                  _
                $region68: #{_lambda_.22} parent=65 // loop_header
                  %s377 = sphi 0, %s381
                  %p378 = scmp.ge.s32.totalorder %s377, 1
                  %s382 = sphi %s229, %s229
                  %s383 = sphi %s223, %s223
                $region69: #{_lambda_.22} parent=65 // loop_header_branch
                  %380 = sbr.rel (%p378) target = $region73
                $region70: #{_lambda_.22} parent=65 // loop_body
                  %v384 = vld [vmem:[%s382] sm:$0xff]
                  %385 = vst [vmem:[%s383] sm:$0xff] %v384
                  %v386 = vld [vmem:[%s382 + $0x40] sm:$0xff]
                  %387 = vst [vmem:[%s383 + $0x8] sm:$0xff] %v386
                  %v388 = vld [vmem:[%s382 + $0x80] sm:$0xff]
                  %389 = vst [vmem:[%s383 + $0x10] sm:$0xff] %v388
                  %v390 = vld [vmem:[%s382 + $0xc0] sm:$0xff]
                  %391 = vst [vmem:[%s383 + $0x18] sm:$0xff] %v390
                  %v392 = vld [vmem:[%s382 + $0x100] sm:$0xff]
                  %393 = vst [vmem:[%s383 + $0x20] sm:$0xff] %v392
                  %v394 = vld [vmem:[%s382 + $0x140] sm:$0xff]
                  %395 = vst [vmem:[%s383 + $0x28] sm:$0xff] %v394
                  %v396 = vld [vmem:[%s382 + $0x180] sm:$0xff]
                  %397 = vst [vmem:[%s383 + $0x30] sm:$0xff] %v396
                  %v398 = vld [vmem:[%s382 + $0x1c0] sm:$0xff]
                  %399 = vst [vmem:[%s383 + $0x38] sm:$0xff] %v398
                  %v400 = vld [vmem:[%s382 + $0x200] sm:$0xff]
                  %401 = vst [vmem:[%s383 + $0x40] sm:$0xff] %v400
                  %v402 = vld [vmem:[%s382 + $0x240] sm:$0xff]
                  %403 = vst [vmem:[%s383 + $0x48] sm:$0xff] %v402
                  %v404 = vld [vmem:[%s382 + $0x280] sm:$0xff]
                  %405 = vst [vmem:[%s383 + $0x50] sm:$0xff] %v404
                  %v406 = vld [vmem:[%s382 + $0x2c0] sm:$0xff]
                  %407 = vst [vmem:[%s383 + $0x58] sm:$0xff] %v406
                  %v408 = vld [vmem:[%s382 + $0x300] sm:$0xff]
                  %409 = vst [vmem:[%s383 + $0x60] sm:$0xff] %v408
                  %v410 = vld [vmem:[%s382 + $0x340] sm:$0xff]
                  %411 = vst [vmem:[%s383 + $0x68] sm:$0xff] %v410
                  %v412 = vld [vmem:[%s382 + $0x380] sm:$0xff]
                  %413 = vst [vmem:[%s383 + $0x70] sm:$0xff] %v412
                  %v414 = vld [vmem:[%s382 + $0x3c0] sm:$0xff]
                  %415 = vst [vmem:[%s383 + $0x78] sm:$0xff] %v414
                  %v416 = vld [vmem:[%s382 + $0x400] sm:$0xff]
                  %417 = vst [vmem:[%s383 + $0x80] sm:$0xff] %v416
                  %v418 = vld [vmem:[%s382 + $0x440] sm:$0xff]
                  %419 = vst [vmem:[%s383 + $0x88] sm:$0xff] %v418
                  %v420 = vld [vmem:[%s382 + $0x480] sm:$0xff]
                  %421 = vst [vmem:[%s383 + $0x90] sm:$0xff] %v420
                  %v422 = vld [vmem:[%s382 + $0x4c0] sm:$0xff]
                  %423 = vst [vmem:[%s383 + $0x98] sm:$0xff] %v422
                  %v424 = vld [vmem:[%s382 + $0x500] sm:$0xff]
                  %425 = vst [vmem:[%s383 + $0xa0] sm:$0xff] %v424
                  %v426 = vld [vmem:[%s382 + $0x540] sm:$0xff]
                  %427 = vst [vmem:[%s383 + $0xa8] sm:$0xff] %v426
                  %v428 = vld [vmem:[%s382 + $0x580] sm:$0xff]
                  %429 = vst [vmem:[%s383 + $0xb0] sm:$0xff] %v428
                  %v430 = vld [vmem:[%s382 + $0x5c0] sm:$0xff]
                  %431 = vst [vmem:[%s383 + $0xb8] sm:$0xff] %v430
                  %v432 = vld [vmem:[%s382 + $0x600] sm:$0xff]
                  %433 = vst [vmem:[%s383 + $0xc0] sm:$0xff] %v432
                  %v434 = vld [vmem:[%s382 + $0x640] sm:$0xff]
                  %435 = vst [vmem:[%s383 + $0xc8] sm:$0xff] %v434
                  %v436 = vld [vmem:[%s382 + $0x680] sm:$0xff]
                  %437 = vst [vmem:[%s383 + $0xd0] sm:$0xff] %v436
                  %v438 = vld [vmem:[%s382 + $0x6c0] sm:$0xff]
                  %439 = vst [vmem:[%s383 + $0xd8] sm:$0xff] %v438
                  %v440 = vld [vmem:[%s382 + $0x700] sm:$0xff]
                  %441 = vst [vmem:[%s383 + $0xe0] sm:$0xff] %v440
                  %v442 = vld [vmem:[%s382 + $0x740] sm:$0xff]
                  %443 = vst [vmem:[%s383 + $0xe8] sm:$0xff] %v442
                  %v444 = vld [vmem:[%s382 + $0x780] sm:$0xff]
                  %445 = vst [vmem:[%s383 + $0xf0] sm:$0xff] %v444
                  %v446 = vld [vmem:[%s382 + $0x7c0] sm:$0xff]
                  %447 = vst [vmem:[%s383 + $0xf8] sm:$0xff] %v446
                  %v448 = vld [vmem:[%s382 + $0x800] sm:$0xff]
                  %449 = vst [vmem:[%s383 + $0x100] sm:$0xff] %v448
                  %v450 = vld [vmem:[%s382 + $0x840] sm:$0xff]
                  %451 = vst [vmem:[%s383 + $0x108] sm:$0xff] %v450
                  %v452 = vld [vmem:[%s382 + $0x880] sm:$0xff]
                  %453 = vst [vmem:[%s383 + $0x110] sm:$0xff] %v452
                  %v454 = vld [vmem:[%s382 + $0x8c0] sm:$0xff]
                  %455 = vst [vmem:[%s383 + $0x118] sm:$0xff] %v454
                  %v456 = vld [vmem:[%s382 + $0x900] sm:$0xff]
                  %457 = vst [vmem:[%s383 + $0x120] sm:$0xff] %v456
                  %v458 = vld [vmem:[%s382 + $0x940] sm:$0xff]
                  %459 = vst [vmem:[%s383 + $0x128] sm:$0xff] %v458
                  %v460 = vld [vmem:[%s382 + $0x980] sm:$0xff]
                  %461 = vst [vmem:[%s383 + $0x130] sm:$0xff] %v460
                  %v462 = vld [vmem:[%s382 + $0x9c0] sm:$0xff]
                  %463 = vst [vmem:[%s383 + $0x138] sm:$0xff] %v462
                  %v464 = vld [vmem:[%s382 + $0xa00] sm:$0xff]
                  %465 = vst [vmem:[%s383 + $0x140] sm:$0xff] %v464
                  %v466 = vld [vmem:[%s382 + $0xa40] sm:$0xff]
                  %467 = vst [vmem:[%s383 + $0x148] sm:$0xff] %v466
                  %v468 = vld [vmem:[%s382 + $0xa80] sm:$0xff]
                  %469 = vst [vmem:[%s383 + $0x150] sm:$0xff] %v468
                  %v470 = vld [vmem:[%s382 + $0xac0] sm:$0xff]
                  %471 = vst [vmem:[%s383 + $0x158] sm:$0xff] %v470
                  %v472 = vld [vmem:[%s382 + $0xb00] sm:$0xff]
                  %473 = vst [vmem:[%s383 + $0x160] sm:$0xff] %v472
                  %v474 = vld [vmem:[%s382 + $0xb40] sm:$0xff]
                  %475 = vst [vmem:[%s383 + $0x168] sm:$0xff] %v474
                  %v476 = vld [vmem:[%s382 + $0xb80] sm:$0xff]
                  %477 = vst [vmem:[%s383 + $0x170] sm:$0xff] %v476
                  %v478 = vld [vmem:[%s382 + $0xbc0] sm:$0xff]
                  %479 = vst [vmem:[%s383 + $0x178] sm:$0xff] %v478
                  %v480 = vld [vmem:[%s382 + $0xc00] sm:$0xff]
                  %481 = vst [vmem:[%s383 + $0x180] sm:$0xff] %v480
                  %v482 = vld [vmem:[%s382 + $0xc40] sm:$0xff]
                  %483 = vst [vmem:[%s383 + $0x188] sm:$0xff] %v482
                  %v484 = vld [vmem:[%s382 + $0xc80] sm:$0xff]
                  %485 = vst [vmem:[%s383 + $0x190] sm:$0xff] %v484
                  %v486 = vld [vmem:[%s382 + $0xcc0] sm:$0xff]
                  %487 = vst [vmem:[%s383 + $0x198] sm:$0xff] %v486
                  %v488 = vld [vmem:[%s382 + $0xd00] sm:$0xff]
                  %489 = vst [vmem:[%s383 + $0x1a0] sm:$0xff] %v488
                  %v490 = vld [vmem:[%s382 + $0xd40] sm:$0xff]
                  %491 = vst [vmem:[%s383 + $0x1a8] sm:$0xff] %v490
                  %v492 = vld [vmem:[%s382 + $0xd80] sm:$0xff]
                  %493 = vst [vmem:[%s383 + $0x1b0] sm:$0xff] %v492
                  %v494 = vld [vmem:[%s382 + $0xdc0] sm:$0xff]
                  %495 = vst [vmem:[%s383 + $0x1b8] sm:$0xff] %v494
                  %v496 = vld [vmem:[%s382 + $0xe00] sm:$0xff]
                  %497 = vst [vmem:[%s383 + $0x1c0] sm:$0xff] %v496
                  %v498 = vld [vmem:[%s382 + $0xe40] sm:$0xff]
                  %499 = vst [vmem:[%s383 + $0x1c8] sm:$0xff] %v498
                  %v500 = vld [vmem:[%s382 + $0xe80] sm:$0xff]
                  %501 = vst [vmem:[%s383 + $0x1d0] sm:$0xff] %v500
                  %v502 = vld [vmem:[%s382 + $0xec0] sm:$0xff]
                  %503 = vst [vmem:[%s383 + $0x1d8] sm:$0xff] %v502
                  %v504 = vld [vmem:[%s382 + $0xf00] sm:$0xff]
                  %505 = vst [vmem:[%s383 + $0x1e0] sm:$0xff] %v504
                  %v506 = vld [vmem:[%s382 + $0xf40] sm:$0xff]
                  %507 = vst [vmem:[%s383 + $0x1e8] sm:$0xff] %v506
                  %v508 = vld [vmem:[%s382 + $0xf80] sm:$0xff]
                  %509 = vst [vmem:[%s383 + $0x1f0] sm:$0xff] %v508
                  %v510 = vld [vmem:[%s382 + $0xfc0] sm:$0xff]
                  %511 = vst [vmem:[%s383 + $0x1f8] sm:$0xff] %v510
                $region71: #{_lambda_.22} parent=65 // loop_footer
                  %s381 = sadd.s32 1, %s377
                $region72: #{_lambda_.22} parent=65 // loop_footer_branch
                  %376 = sbr.rel target = $region68
                $region73: #{_lambda_.22} parent=65 // loop_exit
                  _
              $region66: #{_lambda_.22} parent=50 // pred_fallthru
                _
              // Predicated region
              $region74: #{_lambda_.22} parent=50 // pred_check
                _
              $region75: #{_lambda_.22} parent=50 // pred_check_branch
                %513 = sbr.rel target = $region77
              $region76: #{_lambda_.22} parent=50 // pred_region
                _
              $region77: #{_lambda_.22} parent=50 // pred_fallthru
                _
            $region51: #{_lambda_.22} parent=46 // pred_fallthru
              _
            // Predicated region
            $region52: #{_lambda_.22} parent=46 // pred_check
              _
            $region53: #{_lambda_.22} parent=46 // pred_check_branch
              %235 = sbr.rel target = $region55
            $region54: #{_lambda_.22} parent=46 // pred_region
              %s237 = ssub.s32 256, 1
              loop: start=0, step=1, limit=1
              $region56: #{_lambda_.22} parent=54 // loop_pre_header
                _
              $region57: #{_lambda_.22} parent=54 // loop_header
                %s239 = sphi 0, %s243
                %p240 = scmp.ge.s32.totalorder %s239, 1
                %s244 = sphi %s229, %s229
                %s245 = sphi %s223, %s223
              $region58: #{_lambda_.22} parent=54 // loop_header_branch
                %242 = sbr.rel (%p240) target = $region62
              $region59: #{_lambda_.22} parent=54 // loop_body
                %v246 = vld [vmem:[%s244] sm:%s237]
                %247 = vst [vmem:[%s245] sm:%s237] %v246
                %v248 = vld [vmem:[%s244 + $0x40] sm:%s237]
                %249 = vst [vmem:[%s245 + $0x8] sm:%s237] %v248
                %v250 = vld [vmem:[%s244 + $0x80] sm:%s237]
                %251 = vst [vmem:[%s245 + $0x10] sm:%s237] %v250
                %v252 = vld [vmem:[%s244 + $0xc0] sm:%s237]
                %253 = vst [vmem:[%s245 + $0x18] sm:%s237] %v252
                %v254 = vld [vmem:[%s244 + $0x100] sm:%s237]
                %255 = vst [vmem:[%s245 + $0x20] sm:%s237] %v254
                %v256 = vld [vmem:[%s244 + $0x140] sm:%s237]
                %257 = vst [vmem:[%s245 + $0x28] sm:%s237] %v256
                %v258 = vld [vmem:[%s244 + $0x180] sm:%s237]
                %259 = vst [vmem:[%s245 + $0x30] sm:%s237] %v258
                %v260 = vld [vmem:[%s244 + $0x1c0] sm:%s237]
                %261 = vst [vmem:[%s245 + $0x38] sm:%s237] %v260
                %v262 = vld [vmem:[%s244 + $0x200] sm:%s237]
                %263 = vst [vmem:[%s245 + $0x40] sm:%s237] %v262
                %v264 = vld [vmem:[%s244 + $0x240] sm:%s237]
                %265 = vst [vmem:[%s245 + $0x48] sm:%s237] %v264
                %v266 = vld [vmem:[%s244 + $0x280] sm:%s237]
                %267 = vst [vmem:[%s245 + $0x50] sm:%s237] %v266
                %v268 = vld [vmem:[%s244 + $0x2c0] sm:%s237]
                %269 = vst [vmem:[%s245 + $0x58] sm:%s237] %v268
                %v270 = vld [vmem:[%s244 + $0x300] sm:%s237]
                %271 = vst [vmem:[%s245 + $0x60] sm:%s237] %v270
                %v272 = vld [vmem:[%s244 + $0x340] sm:%s237]
                %273 = vst [vmem:[%s245 + $0x68] sm:%s237] %v272
                %v274 = vld [vmem:[%s244 + $0x380] sm:%s237]
                %275 = vst [vmem:[%s245 + $0x70] sm:%s237] %v274
                %v276 = vld [vmem:[%s244 + $0x3c0] sm:%s237]
                %277 = vst [vmem:[%s245 + $0x78] sm:%s237] %v276
                %v278 = vld [vmem:[%s244 + $0x400] sm:%s237]
                %279 = vst [vmem:[%s245 + $0x80] sm:%s237] %v278
                %v280 = vld [vmem:[%s244 + $0x440] sm:%s237]
                %281 = vst [vmem:[%s245 + $0x88] sm:%s237] %v280
                %v282 = vld [vmem:[%s244 + $0x480] sm:%s237]
                %283 = vst [vmem:[%s245 + $0x90] sm:%s237] %v282
                %v284 = vld [vmem:[%s244 + $0x4c0] sm:%s237]
                %285 = vst [vmem:[%s245 + $0x98] sm:%s237] %v284
                %v286 = vld [vmem:[%s244 + $0x500] sm:%s237]
                %287 = vst [vmem:[%s245 + $0xa0] sm:%s237] %v286
                %v288 = vld [vmem:[%s244 + $0x540] sm:%s237]
                %289 = vst [vmem:[%s245 + $0xa8] sm:%s237] %v288
                %v290 = vld [vmem:[%s244 + $0x580] sm:%s237]
                %291 = vst [vmem:[%s245 + $0xb0] sm:%s237] %v290
                %v292 = vld [vmem:[%s244 + $0x5c0] sm:%s237]
                %293 = vst [vmem:[%s245 + $0xb8] sm:%s237] %v292
                %v294 = vld [vmem:[%s244 + $0x600] sm:%s237]
                %295 = vst [vmem:[%s245 + $0xc0] sm:%s237] %v294
                %v296 = vld [vmem:[%s244 + $0x640] sm:%s237]
                %297 = vst [vmem:[%s245 + $0xc8] sm:%s237] %v296
                %v298 = vld [vmem:[%s244 + $0x680] sm:%s237]
                %299 = vst [vmem:[%s245 + $0xd0] sm:%s237] %v298
                %v300 = vld [vmem:[%s244 + $0x6c0] sm:%s237]
                %301 = vst [vmem:[%s245 + $0xd8] sm:%s237] %v300
                %v302 = vld [vmem:[%s244 + $0x700] sm:%s237]
                %303 = vst [vmem:[%s245 + $0xe0] sm:%s237] %v302
                %v304 = vld [vmem:[%s244 + $0x740] sm:%s237]
                %305 = vst [vmem:[%s245 + $0xe8] sm:%s237] %v304
                %v306 = vld [vmem:[%s244 + $0x780] sm:%s237]
                %307 = vst [vmem:[%s245 + $0xf0] sm:%s237] %v306
                %v308 = vld [vmem:[%s244 + $0x7c0] sm:%s237]
                %309 = vst [vmem:[%s245 + $0xf8] sm:%s237] %v308
                %v310 = vld [vmem:[%s244 + $0x800] sm:%s237]
                %311 = vst [vmem:[%s245 + $0x100] sm:%s237] %v310
                %v312 = vld [vmem:[%s244 + $0x840] sm:%s237]
                %313 = vst [vmem:[%s245 + $0x108] sm:%s237] %v312
                %v314 = vld [vmem:[%s244 + $0x880] sm:%s237]
                %315 = vst [vmem:[%s245 + $0x110] sm:%s237] %v314
                %v316 = vld [vmem:[%s244 + $0x8c0] sm:%s237]
                %317 = vst [vmem:[%s245 + $0x118] sm:%s237] %v316
                %v318 = vld [vmem:[%s244 + $0x900] sm:%s237]
                %319 = vst [vmem:[%s245 + $0x120] sm:%s237] %v318
                %v320 = vld [vmem:[%s244 + $0x940] sm:%s237]
                %321 = vst [vmem:[%s245 + $0x128] sm:%s237] %v320
                %v322 = vld [vmem:[%s244 + $0x980] sm:%s237]
                %323 = vst [vmem:[%s245 + $0x130] sm:%s237] %v322
                %v324 = vld [vmem:[%s244 + $0x9c0] sm:%s237]
                %325 = vst [vmem:[%s245 + $0x138] sm:%s237] %v324
                %v326 = vld [vmem:[%s244 + $0xa00] sm:%s237]
                %327 = vst [vmem:[%s245 + $0x140] sm:%s237] %v326
                %v328 = vld [vmem:[%s244 + $0xa40] sm:%s237]
                %329 = vst [vmem:[%s245 + $0x148] sm:%s237] %v328
                %v330 = vld [vmem:[%s244 + $0xa80] sm:%s237]
                %331 = vst [vmem:[%s245 + $0x150] sm:%s237] %v330
                %v332 = vld [vmem:[%s244 + $0xac0] sm:%s237]
                %333 = vst [vmem:[%s245 + $0x158] sm:%s237] %v332
                %v334 = vld [vmem:[%s244 + $0xb00] sm:%s237]
                %335 = vst [vmem:[%s245 + $0x160] sm:%s237] %v334
                %v336 = vld [vmem:[%s244 + $0xb40] sm:%s237]
                %337 = vst [vmem:[%s245 + $0x168] sm:%s237] %v336
                %v338 = vld [vmem:[%s244 + $0xb80] sm:%s237]
                %339 = vst [vmem:[%s245 + $0x170] sm:%s237] %v338
                %v340 = vld [vmem:[%s244 + $0xbc0] sm:%s237]
                %341 = vst [vmem:[%s245 + $0x178] sm:%s237] %v340
                %v342 = vld [vmem:[%s244 + $0xc00] sm:%s237]
                %343 = vst [vmem:[%s245 + $0x180] sm:%s237] %v342
                %v344 = vld [vmem:[%s244 + $0xc40] sm:%s237]
                %345 = vst [vmem:[%s245 + $0x188] sm:%s237] %v344
                %v346 = vld [vmem:[%s244 + $0xc80] sm:%s237]
                %347 = vst [vmem:[%s245 + $0x190] sm:%s237] %v346
                %v348 = vld [vmem:[%s244 + $0xcc0] sm:%s237]
                %349 = vst [vmem:[%s245 + $0x198] sm:%s237] %v348
                %v350 = vld [vmem:[%s244 + $0xd00] sm:%s237]
                %351 = vst [vmem:[%s245 + $0x1a0] sm:%s237] %v350
                %v352 = vld [vmem:[%s244 + $0xd40] sm:%s237]
                %353 = vst [vmem:[%s245 + $0x1a8] sm:%s237] %v352
                %v354 = vld [vmem:[%s244 + $0xd80] sm:%s237]
                %355 = vst [vmem:[%s245 + $0x1b0] sm:%s237] %v354
                %v356 = vld [vmem:[%s244 + $0xdc0] sm:%s237]
                %357 = vst [vmem:[%s245 + $0x1b8] sm:%s237] %v356
                %v358 = vld [vmem:[%s244 + $0xe00] sm:%s237]
                %359 = vst [vmem:[%s245 + $0x1c0] sm:%s237] %v358
                %v360 = vld [vmem:[%s244 + $0xe40] sm:%s237]
                %361 = vst [vmem:[%s245 + $0x1c8] sm:%s237] %v360
                %v362 = vld [vmem:[%s244 + $0xe80] sm:%s237]
                %363 = vst [vmem:[%s245 + $0x1d0] sm:%s237] %v362
                %v364 = vld [vmem:[%s244 + $0xec0] sm:%s237]
                %365 = vst [vmem:[%s245 + $0x1d8] sm:%s237] %v364
                %v366 = vld [vmem:[%s244 + $0xf00] sm:%s237]
                %367 = vst [vmem:[%s245 + $0x1e0] sm:%s237] %v366
                %v368 = vld [vmem:[%s244 + $0xf40] sm:%s237]
                %369 = vst [vmem:[%s245 + $0x1e8] sm:%s237] %v368
                %v370 = vld [vmem:[%s244 + $0xf80] sm:%s237]
                %371 = vst [vmem:[%s245 + $0x1f0] sm:%s237] %v370
                %v372 = vld [vmem:[%s244 + $0xfc0] sm:%s237]
                %373 = vst [vmem:[%s245 + $0x1f8] sm:%s237] %v372
              $region60: #{_lambda_.22} parent=54 // loop_footer
                %s243 = sadd.s32 1, %s239
              $region61: #{_lambda_.22} parent=54 // loop_footer_branch
                %238 = sbr.rel target = $region57
              $region62: #{_lambda_.22} parent=54 // loop_exit
                _
            $region55: #{_lambda_.22} parent=46 // pred_fallthru
              _
          $region47: #{_lambda_.22} parent=42 // pred_fallthru
            _
          %514 = vnop
        $region43: #{_lambda_.22} parent=15 // pred_fallthru
          _
        // Predicated region
        $region78: #{_lambda_.22} parent=15 // pred_check
          %p515 = pneg %p104
        $region79: #{_lambda_.22} parent=15 // pred_check_branch
          %517 = sbr.rel (%p515) target = $region81
        $region80: #{_lambda_.22} parent=15 // pred_region
          %s518 = smul.u32 2, %s17
          %p519 = scmp.lt.s32.totalorder %s518, 15
          %s520 = scalar_select %p519, %s518, 15
          %s521 = scalar_lea.vmem %s2, %s520
          %s522 = smul.u32 2, %s17
        $region81: #{_lambda_.22} parent=15 // pred_fallthru
          _
      $region16: #{_lambda_.22} parent=5 // pred_fallthru
        _
      %p523 = scmp.le.s32.totalorder 1, %s9
      %p524 = scmp.lt.s32.totalorder %s9, 17
      %p525 = pnand %p523, %p524
      %p526 = pneg %p525
      // Predicated region
      $region82: #{_lambda_.22} parent=5 // pred_check
        _
      $region83: #{_lambda_.22} parent=5 // pred_check_branch
        %528 = sbr.rel (%p525) target = $region85
      $region84: #{_lambda_.22} parent=5 // pred_region
        %s529 = ssub.s32 %s9, 1
        %s530 = sand.u32 %s43, 1
        %s531 = sand.u32 %s43, 1
        %s532 = smul.addr %s531, 128
        %s533 = scalar_lea.vmem [#allocation3], %s532
        // Predicated region
        $region86: #{_lambda_.22} parent=84 // pred_check
          %p534 = pneg %p56
        $region87: #{_lambda_.22} parent=84 // pred_check_branch
          %536 = sbr.rel (%p534) target = $region89
        $region88: #{_lambda_.22} parent=84 // pred_region
          _
        $region89: #{_lambda_.22} parent=84 // pred_fallthru
          _
        %s537 = sand.u32 %s71, 1
        %s538 = sand.u32 %s71, 1
        %s539 = smul.addr %s538, 512
        %s540 = scalar_lea.vmem [#allocation4], %s539
        // Predicated region
        $region90: #{_lambda_.22} parent=84 // pred_check
          %p541 = pneg %p84
        $region91: #{_lambda_.22} parent=84 // pred_check_branch
          %543 = sbr.rel (%p541) target = $region93
        $region92: #{_lambda_.22} parent=84 // pred_region
          _
        $region93: #{_lambda_.22} parent=84 // pred_fallthru
          _
        %s544 = sand.u32 %s43, 1
        %s545 = sand.u32 %s43, 1
        %s546 = smul.addr %s545, 128
        %s547 = scalar_lea.vmem [#allocation3], %s546
        %p548 = pneg %p56
        %p549 = pneg %p53
        %s550 = sand.u32 %s71, 1
        %s551 = sand.u32 %s71, 1
        %s552 = smul.addr %s551, 512
        %s553 = scalar_lea.vmem [#allocation4], %s552
        %p554 = pneg %p84
        %p555 = pneg %p81
        %s556 = smul.u32 2, %s20
        %p557 = scmp.lt.s32.totalorder %s556, 15
        %s558 = scalar_select %p557, %s556, 15
        %s559 = scalar_lea.vmem %s2, %s558
        %p560 = pneg %p110
        %p561 = pneg %p107
        %p562 = pneg %p138
        %p563 = pneg %p135
        %s564 = sand.u32 %s125, 1
        %s565 = sand.u32 %s125, 1
        %s566 = smul.addr %s565, 64
        %s567 = scalar_lea.vmem [#allocation5], %s566
        %s568 = smul.u32 4, %s19
        %s569 = smul.u32 4, %s21
        %s570 = smul.u32 64, %s21
        %s571 = smul.u32 2, %s20
        %s572 = smul.u32 2, %s20
        %p573 = scmp.lt.s32.totalorder %s572, 15
        %s574 = scalar_select %p573, %s572, 15
        %s575 = scalar_lea.vmem %s2, %s574
        %s576 = smul.u32 2, %s20
        %s577 = smul.u32 4, %s19
        %s578 = smul.u32 2, %s20
        %p579 = scmp.eq.s32.totalorder %s21, 0
        // Predicated region
        $region94: #{_lambda_.22} parent=84 // pred_check
          %p580 = pneg %p579
        $region95: #{_lambda_.22} parent=84 // pred_check_branch
          %582 = sbr.rel (%p580) target = $region97
        $region96: #{_lambda_.22} parent=84 // pred_region
          %583 = vst [vmem:[#allocation2] sm:$0xff] 0.0
          %584 = vst [vmem:[#allocation2 + $0x8] sm:$0xff] 0.0
          %585 = vst [vmem:[#allocation2 + $0x10] sm:$0xff] 0.0
          %586 = vst [vmem:[#allocation2 + $0x18] sm:$0xff] 0.0
          %587 = vst [vmem:[#allocation2 + $0x20] sm:$0xff] 0.0
          %588 = vst [vmem:[#allocation2 + $0x28] sm:$0xff] 0.0
          %589 = vst [vmem:[#allocation2 + $0x30] sm:$0xff] 0.0
          %590 = vst [vmem:[#allocation2 + $0x38] sm:$0xff] 0.0
        $region97: #{_lambda_.22} parent=84 // pred_fallthru
          _
        %v591 = vld [vmem:[#allocation2] sm:$0xff]
        %v592 = vld [vmem:[#allocation2 + $0x8] sm:$0xff]
        %v593 = vld [vmem:[#allocation2 + $0x10] sm:$0xff]
        %v594 = vld [vmem:[#allocation2 + $0x18] sm:$0xff]
        %v595 = vld [vmem:[#allocation2 + $0x20] sm:$0xff]
        %v596 = vld [vmem:[#allocation2 + $0x28] sm:$0xff]
        %v597 = vld [vmem:[#allocation2 + $0x30] sm:$0xff]
        %v598 = vld [vmem:[#allocation2 + $0x38] sm:$0xff]
        %v599 = vld [vmem:[%s533] sm:$0xff]
        %v600 = vld [vmem:[%s533 + $0x8] sm:$0xff]
        %v601 = vld [vmem:[%s533 + $0x10] sm:$0xff]
        %v602 = vld [vmem:[%s533 + $0x18] sm:$0xff]
        %v603 = vld [vmem:[%s533 + $0x20] sm:$0xff]
        %v604 = vld [vmem:[%s533 + $0x28] sm:$0xff]
        %v605 = vld [vmem:[%s533 + $0x30] sm:$0xff]
        %v606 = vld [vmem:[%s533 + $0x38] sm:$0xff]
        %v607 = vld [vmem:[%s533 + $0x40] sm:$0xff]
        %v608 = vld [vmem:[%s533 + $0x48] sm:$0xff]
        %v609 = vld [vmem:[%s533 + $0x50] sm:$0xff]
        %v610 = vld [vmem:[%s533 + $0x58] sm:$0xff]
        %v611 = vld [vmem:[%s533 + $0x60] sm:$0xff]
        %v612 = vld [vmem:[%s533 + $0x68] sm:$0xff]
        %v613 = vld [vmem:[%s533 + $0x70] sm:$0xff]
        %v614 = vld [vmem:[%s533 + $0x78] sm:$0xff]
        %v615 = vpack.c.bf16 %v603, %v599
        %v616 = vpack.c.bf16 %v604, %v600
        %v617 = vpack.c.bf16 %v605, %v601
        %v618 = vpack.c.bf16 %v606, %v602
        %v619 = vpack.c.bf16 %v611, %v607
        %v620 = vpack.c.bf16 %v612, %v608
        %v621 = vpack.c.bf16 %v613, %v609
        %v622 = vpack.c.bf16 %v614, %v610
        %v623 = vld [vmem:[%s540] sm:$0xff]
        %v624 = vld [vmem:[%s540 + $0x8] sm:$0xff]
        %v625 = vld [vmem:[%s540 + $0x10] sm:$0xff]
        %v626 = vld [vmem:[%s540 + $0x18] sm:$0xff]
        %v627 = vld [vmem:[%s540 + $0x20] sm:$0xff]
        %v628 = vld [vmem:[%s540 + $0x28] sm:$0xff]
        %v629 = vld [vmem:[%s540 + $0x30] sm:$0xff]
        %v630 = vld [vmem:[%s540 + $0x38] sm:$0xff]
        %v631 = vld [vmem:[%s540 + $0x40] sm:$0xff]
        %v632 = vld [vmem:[%s540 + $0x48] sm:$0xff]
        %v633 = vld [vmem:[%s540 + $0x50] sm:$0xff]
        %v634 = vld [vmem:[%s540 + $0x58] sm:$0xff]
        %v635 = vld [vmem:[%s540 + $0x60] sm:$0xff]
        %v636 = vld [vmem:[%s540 + $0x68] sm:$0xff]
        %v637 = vld [vmem:[%s540 + $0x70] sm:$0xff]
        %v638 = vld [vmem:[%s540 + $0x78] sm:$0xff]
        %v639 = vld [vmem:[%s540 + $0x80] sm:$0xff]
        %v640 = vld [vmem:[%s540 + $0x88] sm:$0xff]
        %v641 = vld [vmem:[%s540 + $0x90] sm:$0xff]
        %v642 = vld [vmem:[%s540 + $0x98] sm:$0xff]
        %v643 = vld [vmem:[%s540 + $0xa0] sm:$0xff]
        %v644 = vld [vmem:[%s540 + $0xa8] sm:$0xff]
        %v645 = vld [vmem:[%s540 + $0xb0] sm:$0xff]
        %v646 = vld [vmem:[%s540 + $0xb8] sm:$0xff]
        %v647 = vld [vmem:[%s540 + $0xc0] sm:$0xff]
        %v648 = vld [vmem:[%s540 + $0xc8] sm:$0xff]
        %v649 = vld [vmem:[%s540 + $0xd0] sm:$0xff]
        %v650 = vld [vmem:[%s540 + $0xd8] sm:$0xff]
        %v651 = vld [vmem:[%s540 + $0xe0] sm:$0xff]
        %v652 = vld [vmem:[%s540 + $0xe8] sm:$0xff]
        %v653 = vld [vmem:[%s540 + $0xf0] sm:$0xff]
        %v654 = vld [vmem:[%s540 + $0xf8] sm:$0xff]
        %v655 = vld [vmem:[%s540 + $0x100] sm:$0xff]
        %v656 = vld [vmem:[%s540 + $0x108] sm:$0xff]
        %v657 = vld [vmem:[%s540 + $0x110] sm:$0xff]
        %v658 = vld [vmem:[%s540 + $0x118] sm:$0xff]
        %v659 = vld [vmem:[%s540 + $0x120] sm:$0xff]
        %v660 = vld [vmem:[%s540 + $0x128] sm:$0xff]
        %v661 = vld [vmem:[%s540 + $0x130] sm:$0xff]
        %v662 = vld [vmem:[%s540 + $0x138] sm:$0xff]
        %v663 = vld [vmem:[%s540 + $0x140] sm:$0xff]
        %v664 = vld [vmem:[%s540 + $0x148] sm:$0xff]
        %v665 = vld [vmem:[%s540 + $0x150] sm:$0xff]
        %v666 = vld [vmem:[%s540 + $0x158] sm:$0xff]
        %v667 = vld [vmem:[%s540 + $0x160] sm:$0xff]
        %v668 = vld [vmem:[%s540 + $0x168] sm:$0xff]
        %v669 = vld [vmem:[%s540 + $0x170] sm:$0xff]
        %v670 = vld [vmem:[%s540 + $0x178] sm:$0xff]
        %v671 = vld [vmem:[%s540 + $0x180] sm:$0xff]
        %v672 = vld [vmem:[%s540 + $0x188] sm:$0xff]
        %v673 = vld [vmem:[%s540 + $0x190] sm:$0xff]
        %v674 = vld [vmem:[%s540 + $0x198] sm:$0xff]
        %v675 = vld [vmem:[%s540 + $0x1a0] sm:$0xff]
        %v676 = vld [vmem:[%s540 + $0x1a8] sm:$0xff]
        %v677 = vld [vmem:[%s540 + $0x1b0] sm:$0xff]
        %v678 = vld [vmem:[%s540 + $0x1b8] sm:$0xff]
        %v679 = vld [vmem:[%s540 + $0x1c0] sm:$0xff]
        %v680 = vld [vmem:[%s540 + $0x1c8] sm:$0xff]
        %v681 = vld [vmem:[%s540 + $0x1d0] sm:$0xff]
        %v682 = vld [vmem:[%s540 + $0x1d8] sm:$0xff]
        %v683 = vld [vmem:[%s540 + $0x1e0] sm:$0xff]
        %v684 = vld [vmem:[%s540 + $0x1e8] sm:$0xff]
        %v685 = vld [vmem:[%s540 + $0x1f0] sm:$0xff]
        %v686 = vld [vmem:[%s540 + $0x1f8] sm:$0xff]
        %v751 = vunpack.c.l.b16 %v623
        %v752 = vunpack.c.h.b16 %v623
        %v753 = vunpack.c.l.b16 %v624
        %v754 = vunpack.c.h.b16 %v624
        %v755 = vunpack.c.l.b16 %v625
        %v756 = vunpack.c.h.b16 %v625
        %v757 = vunpack.c.l.b16 %v626
        %v758 = vunpack.c.h.b16 %v626
        %v759 = vunpack.c.l.b16 %v627
        %v760 = vunpack.c.h.b16 %v627
        %v761 = vunpack.c.l.b16 %v628
        %v762 = vunpack.c.h.b16 %v628
        %v763 = vunpack.c.l.b16 %v629
        %v764 = vunpack.c.h.b16 %v629
        %v765 = vunpack.c.l.b16 %v630
        %v766 = vunpack.c.h.b16 %v630
        %v767 = vunpack.c.l.b16 %v631
        %v768 = vunpack.c.h.b16 %v631
        %v769 = vunpack.c.l.b16 %v632
        %v770 = vunpack.c.h.b16 %v632
        %v771 = vunpack.c.l.b16 %v633
        %v772 = vunpack.c.h.b16 %v633
        %v773 = vunpack.c.l.b16 %v634
        %v774 = vunpack.c.h.b16 %v634
        %v775 = vunpack.c.l.b16 %v635
        %v776 = vunpack.c.h.b16 %v635
        %v777 = vunpack.c.l.b16 %v636
        %v778 = vunpack.c.h.b16 %v636
        %v779 = vunpack.c.l.b16 %v637
        %v780 = vunpack.c.h.b16 %v637
        %v781 = vunpack.c.l.b16 %v638
        %v782 = vunpack.c.h.b16 %v638
        %v783 = vunpack.c.l.b16 %v639
        %v784 = vunpack.c.h.b16 %v639
        %v785 = vunpack.c.l.b16 %v640
        %v786 = vunpack.c.h.b16 %v640
        %v787 = vunpack.c.l.b16 %v641
        %v788 = vunpack.c.h.b16 %v641
        %v789 = vunpack.c.l.b16 %v642
        %v790 = vunpack.c.h.b16 %v642
        %v791 = vunpack.c.l.b16 %v643
        %v792 = vunpack.c.h.b16 %v643
        %v793 = vunpack.c.l.b16 %v644
        %v794 = vunpack.c.h.b16 %v644
        %v795 = vunpack.c.l.b16 %v645
        %v796 = vunpack.c.h.b16 %v645
        %v797 = vunpack.c.l.b16 %v646
        %v798 = vunpack.c.h.b16 %v646
        %v799 = vunpack.c.l.b16 %v647
        %v800 = vunpack.c.h.b16 %v647
        %v801 = vunpack.c.l.b16 %v648
        %v802 = vunpack.c.h.b16 %v648
        %v803 = vunpack.c.l.b16 %v649
        %v804 = vunpack.c.h.b16 %v649
        %v805 = vunpack.c.l.b16 %v650
        %v806 = vunpack.c.h.b16 %v650
        %v807 = vunpack.c.l.b16 %v651
        %v808 = vunpack.c.h.b16 %v651
        %v809 = vunpack.c.l.b16 %v652
        %v810 = vunpack.c.h.b16 %v652
        %v811 = vunpack.c.l.b16 %v653
        %v812 = vunpack.c.h.b16 %v653
        %v813 = vunpack.c.l.b16 %v654
        %v814 = vunpack.c.h.b16 %v654
        %v815 = vunpack.c.l.b16 %v655
        %v816 = vunpack.c.h.b16 %v655
        %v817 = vunpack.c.l.b16 %v656
        %v818 = vunpack.c.h.b16 %v656
        %v819 = vunpack.c.l.b16 %v657
        %v820 = vunpack.c.h.b16 %v657
        %v821 = vunpack.c.l.b16 %v658
        %v822 = vunpack.c.h.b16 %v658
        %v823 = vunpack.c.l.b16 %v659
        %v824 = vunpack.c.h.b16 %v659
        %v825 = vunpack.c.l.b16 %v660
        %v826 = vunpack.c.h.b16 %v660
        %v827 = vunpack.c.l.b16 %v661
        %v828 = vunpack.c.h.b16 %v661
        %v829 = vunpack.c.l.b16 %v662
        %v830 = vunpack.c.h.b16 %v662
        %v831 = vunpack.c.l.b16 %v663
        %v832 = vunpack.c.h.b16 %v663
        %v833 = vunpack.c.l.b16 %v664
        %v834 = vunpack.c.h.b16 %v664
        %v835 = vunpack.c.l.b16 %v665
        %v836 = vunpack.c.h.b16 %v665
        %v837 = vunpack.c.l.b16 %v666
        %v838 = vunpack.c.h.b16 %v666
        %v839 = vunpack.c.l.b16 %v667
        %v840 = vunpack.c.h.b16 %v667
        %v841 = vunpack.c.l.b16 %v668
        %v842 = vunpack.c.h.b16 %v668
        %v843 = vunpack.c.l.b16 %v669
        %v844 = vunpack.c.h.b16 %v669
        %v845 = vunpack.c.l.b16 %v670
        %v846 = vunpack.c.h.b16 %v670
        %v847 = vunpack.c.l.b16 %v671
        %v848 = vunpack.c.h.b16 %v671
        %v849 = vunpack.c.l.b16 %v672
        %v850 = vunpack.c.h.b16 %v672
        %v851 = vunpack.c.l.b16 %v673
        %v852 = vunpack.c.h.b16 %v673
        %v853 = vunpack.c.l.b16 %v674
        %v854 = vunpack.c.h.b16 %v674
        %v855 = vunpack.c.l.b16 %v675
        %v856 = vunpack.c.h.b16 %v675
        %v857 = vunpack.c.l.b16 %v676
        %v858 = vunpack.c.h.b16 %v676
        %v859 = vunpack.c.l.b16 %v677
        %v860 = vunpack.c.h.b16 %v677
        %v861 = vunpack.c.l.b16 %v678
        %v862 = vunpack.c.h.b16 %v678
        %v863 = vunpack.c.l.b16 %v679
        %v864 = vunpack.c.h.b16 %v679
        %v865 = vunpack.c.l.b16 %v680
        %v866 = vunpack.c.h.b16 %v680
        %v867 = vunpack.c.l.b16 %v681
        %v868 = vunpack.c.h.b16 %v681
        %v869 = vunpack.c.l.b16 %v682
        %v870 = vunpack.c.h.b16 %v682
        %v871 = vunpack.c.l.b16 %v683
        %v872 = vunpack.c.h.b16 %v683
        %v873 = vunpack.c.l.b16 %v684
        %v874 = vunpack.c.h.b16 %v684
        %v875 = vunpack.c.l.b16 %v685
        %v876 = vunpack.c.h.b16 %v685
        %v877 = vunpack.c.l.b16 %v686
        %v878 = vunpack.c.h.b16 %v686
        %v879 = vpack.c.b16 %v753, %v751
        %v880 = vpack.c.b16 %v754, %v752
        %v881 = vpack.c.b16 %v757, %v755
        %v882 = vpack.c.b16 %v758, %v756
        %v883 = vpack.c.b16 %v761, %v759
        %v884 = vpack.c.b16 %v762, %v760
        %v885 = vpack.c.b16 %v765, %v763
        %v886 = vpack.c.b16 %v766, %v764
        %v887 = vpack.c.b16 %v769, %v767
        %v888 = vpack.c.b16 %v770, %v768
        %v889 = vpack.c.b16 %v773, %v771
        %v890 = vpack.c.b16 %v774, %v772
        %v891 = vpack.c.b16 %v777, %v775
        %v892 = vpack.c.b16 %v778, %v776
        %v893 = vpack.c.b16 %v781, %v779
        %v894 = vpack.c.b16 %v782, %v780
        %v895 = vpack.c.b16 %v785, %v783
        %v896 = vpack.c.b16 %v786, %v784
        %v897 = vpack.c.b16 %v789, %v787
        %v898 = vpack.c.b16 %v790, %v788
        %v899 = vpack.c.b16 %v793, %v791
        %v900 = vpack.c.b16 %v794, %v792
        %v901 = vpack.c.b16 %v797, %v795
        %v902 = vpack.c.b16 %v798, %v796
        %v903 = vpack.c.b16 %v801, %v799
        %v904 = vpack.c.b16 %v802, %v800
        %v905 = vpack.c.b16 %v805, %v803
        %v906 = vpack.c.b16 %v806, %v804
        %v907 = vpack.c.b16 %v809, %v807
        %v908 = vpack.c.b16 %v810, %v808
        %v909 = vpack.c.b16 %v813, %v811
        %v910 = vpack.c.b16 %v814, %v812
        %v911 = vpack.c.b16 %v817, %v815
        %v912 = vpack.c.b16 %v818, %v816
        %v913 = vpack.c.b16 %v821, %v819
        %v914 = vpack.c.b16 %v822, %v820
        %v915 = vpack.c.b16 %v825, %v823
        %v916 = vpack.c.b16 %v826, %v824
        %v917 = vpack.c.b16 %v829, %v827
        %v918 = vpack.c.b16 %v830, %v828
        %v919 = vpack.c.b16 %v833, %v831
        %v920 = vpack.c.b16 %v834, %v832
        %v921 = vpack.c.b16 %v837, %v835
        %v922 = vpack.c.b16 %v838, %v836
        %v923 = vpack.c.b16 %v841, %v839
        %v924 = vpack.c.b16 %v842, %v840
        %v925 = vpack.c.b16 %v845, %v843
        %v926 = vpack.c.b16 %v846, %v844
        %v927 = vpack.c.b16 %v849, %v847
        %v928 = vpack.c.b16 %v850, %v848
        %v929 = vpack.c.b16 %v853, %v851
        %v930 = vpack.c.b16 %v854, %v852
        %v931 = vpack.c.b16 %v857, %v855
        %v932 = vpack.c.b16 %v858, %v856
        %v933 = vpack.c.b16 %v861, %v859
        %v934 = vpack.c.b16 %v862, %v860
        %v935 = vpack.c.b16 %v865, %v863
        %v936 = vpack.c.b16 %v866, %v864
        %v937 = vpack.c.b16 %v869, %v867
        %v938 = vpack.c.b16 %v870, %v868
        %v939 = vpack.c.b16 %v873, %v871
        %v940 = vpack.c.b16 %v874, %v872
        %v941 = vpack.c.b16 %v877, %v875
        %v942 = vpack.c.b16 %v878, %v876
        %1007 = vmatprep.subr.bf16.mxu0 %v894
        %1008 = vmatpush1.bf16.msra.mxu0 %v893
        %1009 = vmatprep.subr.bf16.mxu0 %v892
        %1010 = vmatpush1.bf16.msra.mxu0 %v891
        %1011 = vmatprep.subr.bf16.mxu0 %v890
        %1012 = vmatpush1.bf16.msra.mxu0 %v889
        %1013 = vmatprep.subr.bf16.mxu0 %v888
        %1014 = vmatpush1.bf16.msra.mxu0 %v887
        %1015 = vmatprep.subr.bf16.mxu0 %v886
        %1016 = vmatpush1.bf16.msra.mxu0 %v885
        %1017 = vmatprep.subr.bf16.mxu0 %v884
        %1018 = vmatpush1.bf16.msra.mxu0 %v883
        %1019 = vmatprep.subr.bf16.mxu0 %v882
        %1020 = vmatpush1.bf16.msra.mxu0 %v881
        %1021 = vmatprep.subr.bf16.mxu0 %v880
        %1022 = vmatpush1.bf16.msra.mxu0 %v879
        %1023 = vmatprep.subr.bf16.mxu0 %v910
        %1024 = vmatpush2.bf16.msra.mxu0 %v909
        %1025 = vmatprep.subr.bf16.mxu0 %v908
        %1026 = vmatpush2.bf16.msra.mxu0 %v907
        %1027 = vmatprep.subr.bf16.mxu0 %v906
        %1028 = vmatpush2.bf16.msra.mxu0 %v905
        %1029 = vmatprep.subr.bf16.mxu0 %v904
        %1030 = vmatpush2.bf16.msra.mxu0 %v903
        %1031 = vmatprep.subr.bf16.mxu0 %v902
        %1032 = vmatpush2.bf16.msra.mxu0 %v901
        %1033 = vmatprep.subr.bf16.mxu0 %v900
        %1034 = vmatpush2.bf16.msra.mxu0 %v899
        %1035 = vmatprep.subr.bf16.mxu0 %v898
        %1036 = vmatpush2.bf16.msra.mxu0 %v897
        %1037 = vmatprep.subr.bf16.mxu0 %v896
        %1038 = vmatpush2.bf16.msra.mxu0 %v895
        %1039 = vmatprep.mubr.bf16.mxu0 %v616
        %1040 = vmatmul.mubr.bf16.gmra.mxu0 %v615
        %v1041 = vpop.f32.mrf.mxu0
        %v1042 = vadd.f32 0.0, %v1041
        %v1043 = vpop.f32.mrf.mxu0
        %v1044 = vadd.f32 0.0, %v1043
        %v1045 = vpop.f32.mrf.mxu0
        %v1046 = vadd.f32 0.0, %v1045
        %v1047 = vpop.f32.mrf.mxu0
        %v1048 = vadd.f32 0.0, %v1047
        %1049 = vmatprep.mubr.bf16.mxu0 %v620
        %1050 = vmatmul.mubr.bf16.gmra.mxu0 %v619
        %v1051 = vpop.f32.mrf.mxu0
        %v1052 = vadd.f32 0.0, %v1051
        %v1053 = vpop.f32.mrf.mxu0
        %v1054 = vadd.f32 0.0, %v1053
        %v1055 = vpop.f32.mrf.mxu0
        %v1056 = vadd.f32 0.0, %v1055
        %v1057 = vpop.f32.mrf.mxu0
        %v1058 = vadd.f32 0.0, %v1057
        %1059 = vdwg.mxu0
        %1060 = vmatprep.subr.bf16.mxu0 %v926
        %1061 = vmatpush1.bf16.msra.mxu0 %v925
        %1062 = vmatprep.subr.bf16.mxu0 %v924
        %1063 = vmatpush1.bf16.msra.mxu0 %v923
        %1064 = vmatprep.subr.bf16.mxu0 %v922
        %1065 = vmatpush1.bf16.msra.mxu0 %v921
        %1066 = vmatprep.subr.bf16.mxu0 %v920
        %1067 = vmatpush1.bf16.msra.mxu0 %v919
        %1068 = vmatprep.subr.bf16.mxu0 %v918
        %1069 = vmatpush1.bf16.msra.mxu0 %v917
        %1070 = vmatprep.subr.bf16.mxu0 %v916
        %1071 = vmatpush1.bf16.msra.mxu0 %v915
        %1072 = vmatprep.subr.bf16.mxu0 %v914
        %1073 = vmatpush1.bf16.msra.mxu0 %v913
        %1074 = vmatprep.subr.bf16.mxu0 %v912
        %1075 = vmatpush1.bf16.msra.mxu0 %v911
        %1076 = vmatprep.subr.bf16.mxu0 %v942
        %1077 = vmatpush2.bf16.msra.mxu0 %v941
        %1078 = vmatprep.subr.bf16.mxu0 %v940
        %1079 = vmatpush2.bf16.msra.mxu0 %v939
        %1080 = vmatprep.subr.bf16.mxu0 %v938
        %1081 = vmatpush2.bf16.msra.mxu0 %v937
        %1082 = vmatprep.subr.bf16.mxu0 %v936
        %1083 = vmatpush2.bf16.msra.mxu0 %v935
        %1084 = vmatprep.subr.bf16.mxu0 %v934
        %1085 = vmatpush2.bf16.msra.mxu0 %v933
        %1086 = vmatprep.subr.bf16.mxu0 %v932
        %1087 = vmatpush2.bf16.msra.mxu0 %v931
        %1088 = vmatprep.subr.bf16.mxu0 %v930
        %1089 = vmatpush2.bf16.msra.mxu0 %v929
        %1090 = vmatprep.subr.bf16.mxu0 %v928
        %1091 = vmatpush2.bf16.msra.mxu0 %v927
        %1092 = vmatprep.mubr.bf16.mxu0 %v618
        %1093 = vmatmul.mubr.bf16.gmra.mxu0 %v617
        %v1094 = vpop.f32.mrf.mxu0
        %v1095 = vadd.f32 %v1042, %v1094
        %v1096 = vpop.f32.mrf.mxu0
        %v1097 = vadd.f32 %v1044, %v1096
        %v1098 = vpop.f32.mrf.mxu0
        %v1099 = vadd.f32 %v1046, %v1098
        %v1100 = vpop.f32.mrf.mxu0
        %v1101 = vadd.f32 %v1048, %v1100
        %1102 = vmatprep.mubr.bf16.mxu0 %v622
        %1103 = vmatmul.mubr.bf16.gmra.mxu0 %v621
        %v1104 = vpop.f32.mrf.mxu0
        %v1105 = vadd.f32 %v1052, %v1104
        %v1106 = vpop.f32.mrf.mxu0
        %v1107 = vadd.f32 %v1054, %v1106
        %v1108 = vpop.f32.mrf.mxu0
        %v1109 = vadd.f32 %v1056, %v1108
        %v1110 = vpop.f32.mrf.mxu0
        %v1111 = vadd.f32 %v1058, %v1110
        %1112 = vdwg.mxu0
        %v1113 = vadd.f32 %v591, %v1095
        %v1114 = vadd.f32 %v592, %v1097
        %v1115 = vadd.f32 %v593, %v1099
        %v1116 = vadd.f32 %v594, %v1101
        %v1117 = vadd.f32 %v595, %v1105
        %v1118 = vadd.f32 %v596, %v1107
        %v1119 = vadd.f32 %v597, %v1109
        %v1120 = vadd.f32 %v598, %v1111
        %1121 = vst [vmem:[#allocation2] sm:$0xff] %v1113
        %1122 = vst [vmem:[#allocation2 + $0x8] sm:$0xff] %v1114
        %1123 = vst [vmem:[#allocation2 + $0x10] sm:$0xff] %v1115
        %1124 = vst [vmem:[#allocation2 + $0x18] sm:$0xff] %v1116
        %1125 = vst [vmem:[#allocation2 + $0x20] sm:$0xff] %v1117
        %1126 = vst [vmem:[#allocation2 + $0x28] sm:$0xff] %v1118
        %1127 = vst [vmem:[#allocation2 + $0x30] sm:$0xff] %v1119
        %1128 = vst [vmem:[#allocation2 + $0x38] sm:$0xff] %v1120
        %p1129 = scmp.eq.s32.totalorder %s21, 1
        // Predicated region
        $region98: #{_lambda_.22} parent=84 // pred_check
          %p1130 = pneg %p1129
        $region99: #{_lambda_.22} parent=84 // pred_check_branch
          %1132 = sbr.rel (%p1130) target = $region101
        $region100: #{_lambda_.22} parent=84 // pred_region
          %v1133 = vld [vmem:[#allocation2] sm:$0xff]
          %v1134 = vld [vmem:[#allocation2 + $0x8] sm:$0xff]
          %v1135 = vld [vmem:[#allocation2 + $0x10] sm:$0xff]
          %v1136 = vld [vmem:[#allocation2 + $0x18] sm:$0xff]
          %v1137 = vld [vmem:[#allocation2 + $0x20] sm:$0xff]
          %v1138 = vld [vmem:[#allocation2 + $0x28] sm:$0xff]
          %v1139 = vld [vmem:[#allocation2 + $0x30] sm:$0xff]
          %v1140 = vld [vmem:[#allocation2 + $0x38] sm:$0xff]
          %v1141 = vld [vmem:[%s575] sm:$0x3]
          %v1143 = vlaneseq
          %v1144 = vshrl.u32 %v1143, 7
          %v1145 = vsub.s32 0, %v1144
          %v1146 = vrot.slane %v1141, %v1145
          %v1147 = vlaneseq
          %v1148 = vshrl.u32 %v1147, 7
          %v1149 = vsub.s32 1, %v1148
          %v1150 = vrot.slane %v1141, %v1149
          %v1153 = vadd.f32 %v1133, %v1146
          %v1154 = vadd.f32 %v1134, %v1150
          %v1155 = vadd.f32 %v1135, %v1146
          %v1156 = vadd.f32 %v1136, %v1150
          %v1157 = vadd.f32 %v1137, %v1146
          %v1158 = vadd.f32 %v1138, %v1150
          %v1159 = vadd.f32 %v1139, %v1146
          %v1160 = vadd.f32 %v1140, %v1150
          %v1161 = vmax.f32 %v1153, 0.0
          %v1162 = vmax.f32 %v1154, 0.0
          %v1163 = vmax.f32 %v1155, 0.0
          %v1164 = vmax.f32 %v1156, 0.0
          %v1165 = vmax.f32 %v1157, 0.0
          %v1166 = vmax.f32 %v1158, 0.0
          %v1167 = vmax.f32 %v1159, 0.0
          %v1168 = vmax.f32 %v1160, 0.0
          %1169 = vst [vmem:[%s567] sm:$0xff] %v1161
          %1170 = vst [vmem:[%s567 + $0x8] sm:$0xff] %v1162
          %1171 = vst [vmem:[%s567 + $0x10] sm:$0xff] %v1163
          %1172 = vst [vmem:[%s567 + $0x18] sm:$0xff] %v1164
          %1173 = vst [vmem:[%s567 + $0x20] sm:$0xff] %v1165
          %1174 = vst [vmem:[%s567 + $0x28] sm:$0xff] %v1166
          %1175 = vst [vmem:[%s567 + $0x30] sm:$0xff] %v1167
          %1176 = vst [vmem:[%s567 + $0x38] sm:$0xff] %v1168
        $region101: #{_lambda_.22} parent=84 // pred_fallthru
          _
        %s1177 = sand.u32 %s125, 1
        %s1178 = sand.u32 %s125, 1
        %s1179 = smul.addr %s1178, 64
        %s1180 = scalar_lea.vmem [#allocation5], %s1179
        // Predicated region
        $region102: #{_lambda_.22} parent=84 // pred_check
          %p1181 = pneg %p135
        $region103: #{_lambda_.22} parent=84 // pred_check_branch
          %1183 = sbr.rel (%p1181) target = $region105
        $region104: #{_lambda_.22} parent=84 // pred_region
          %s1184 = smul.u32 4, %s19
          %s1185 = smul.u32 2, %s20
          %s1186 = smul.addr %s1184, 16
          %s1187 = sadd.s32 %s1185, %s1186
          %s1188 = smul.addr %s1187, 8
          %s1189 = scalar_lea.vmem %s3, %s1188
          // Predicated region
          $region106: #{_lambda_.22} parent=104 // pred_check
            _
          $region107: #{_lambda_.22} parent=104 // pred_check_branch
            %1191 = sbr.rel (0) target = $region109
          $region108: #{_lambda_.22} parent=104 // pred_region
            // Predicated region
            $region110: #{_lambda_.22} parent=108 // pred_check
              _
            $region111: #{_lambda_.22} parent=108 // pred_check_branch
              %1193 = sbr.rel (0) target = $region113
            $region112: #{_lambda_.22} parent=108 // pred_region
              loop: start=0, step=1, limit=1
              $region114: #{_lambda_.22} parent=112 // loop_pre_header
                _
              $region115: #{_lambda_.22} parent=112 // loop_header
                %s1195 = sphi 0, %s1199
                %p1196 = scmp.ge.s32.totalorder %s1195, 1
                %s1200 = sphi %s1180, %s1180
                %s1201 = sphi %s1189, %s1189
              $region116: #{_lambda_.22} parent=112 // loop_header_branch
                %1198 = sbr.rel (%p1196) target = $region120
              $region117: #{_lambda_.22} parent=112 // loop_body
                %v1202 = vld [vmem:[%s1200] sm:$0xff]
                %1203 = vst [vmem:[%s1201] sm:$0xff] %v1202
                %v1204 = vld [vmem:[%s1200 + $0x8] sm:$0xff]
                %1205 = vst [vmem:[%s1201 + $0x8] sm:$0xff] %v1204
                %v1206 = vld [vmem:[%s1200 + $0x10] sm:$0xff]
                %1207 = vst [vmem:[%s1201 + $0x80] sm:$0xff] %v1206
                %v1208 = vld [vmem:[%s1200 + $0x18] sm:$0xff]
                %1209 = vst [vmem:[%s1201 + $0x88] sm:$0xff] %v1208
                %v1210 = vld [vmem:[%s1200 + $0x20] sm:$0xff]
                %1211 = vst [vmem:[%s1201 + $0x100] sm:$0xff] %v1210
                %v1212 = vld [vmem:[%s1200 + $0x28] sm:$0xff]
                %1213 = vst [vmem:[%s1201 + $0x108] sm:$0xff] %v1212
                %v1214 = vld [vmem:[%s1200 + $0x30] sm:$0xff]
                %1215 = vst [vmem:[%s1201 + $0x180] sm:$0xff] %v1214
                %v1216 = vld [vmem:[%s1200 + $0x38] sm:$0xff]
                %1217 = vst [vmem:[%s1201 + $0x188] sm:$0xff] %v1216
              $region118: #{_lambda_.22} parent=112 // loop_footer
                %s1199 = sadd.s32 1, %s1195
              $region119: #{_lambda_.22} parent=112 // loop_footer_branch
                %1194 = sbr.rel target = $region115
              $region120: #{_lambda_.22} parent=112 // loop_exit
                _
            $region113: #{_lambda_.22} parent=108 // pred_fallthru
              _
            // Predicated region
            $region121: #{_lambda_.22} parent=108 // pred_check
              _
            $region122: #{_lambda_.22} parent=108 // pred_check_branch
              %1219 = sbr.rel target = $region124
            $region123: #{_lambda_.22} parent=108 // pred_region
              _
            $region124: #{_lambda_.22} parent=108 // pred_fallthru
              _
          $region109: #{_lambda_.22} parent=104 // pred_fallthru
            _
          %1220 = vnop
        $region105: #{_lambda_.22} parent=84 // pred_fallthru
          _
      $region85: #{_lambda_.22} parent=5 // pred_fallthru
        _
      %p1221 = scmp.le.s32.totalorder 2, %s9
      // Predicated region
      $region125: #{_lambda_.22} parent=5 // pred_check
        %p1222 = pneg %p1221
      $region126: #{_lambda_.22} parent=5 // pred_check_branch
        %1224 = sbr.rel (%p1222) target = $region128
      $region127: #{_lambda_.22} parent=5 // pred_region
        %s1225 = ssub.s32 %s9, 2
        // Predicated region
        $region129: #{_lambda_.22} parent=127 // pred_check
          %p1226 = pneg %p141
        $region130: #{_lambda_.22} parent=127 // pred_check_branch
          %1228 = sbr.rel (%p1226) target = $region132
        $region131: #{_lambda_.22} parent=127 // pred_region
          %s1229 = sand.u32 %s126, 1
          %s1230 = sand.u32 %s126, 1
          %s1231 = smul.addr %s1230, 64
          %s1232 = scalar_lea.vmem [#allocation5], %s1231
        $region132: #{_lambda_.22} parent=127 // pred_fallthru
          _
      $region128: #{_lambda_.22} parent=5 // pred_fallthru
        _
    $region6: #{_lambda_.22} parent=1 // loop_footer
      %s13 = sadd.s32 1, %s9
    $region7: #{_lambda_.22} parent=1 // loop_footer_branch
      %8 = sbr.rel target = $region3
    $region8: #{_lambda_.22} parent=1 // loop_exit
      _

// kernel: _lambda_.24
$region0: #{_lambda_.24}
  #allocation0 [shape = 'u32[]', space=smem, size = 0x4, offset = 0x4, fixed_abs, tag = 'smem constant byte address 0x4 - core index']
  #allocation1 [shape = 'u32[144,128]{1,0:T(1,128)}', space=vmem, size = 0x12000, scoped, tag = 'internal scratch']
  #allocation2 [shape = 'f32[2,256]{1,0:T(2,128)}', space=vmem, size = 0x800, scoped, tag = 'scratch operand']
  %s0 = inlined_call_operand.vmem [shape: f32[2,2048], index: 0, kind: input, shape index: {}]
  %s1 = inlined_call_operand.vmem [shape: bf16[2048,1024], index: 1, kind: input, shape index: {}]
  %s2 = inlined_call_operand.vmem [shape: f32[1,1024], index: 2, kind: input, shape index: {}]
  %s3 = inlined_call_operand.vmem [shape: f32[2,1024], index: 3, kind: output, shape index: {}]
  %s4 = sld [smem:[#allocation0]]
  $region91: #{_lambda_.24} parent=0
    _
  %s6 = ssub.s32 1, %s4
  %s7 = scalar_select 0, %s6, %s4
  $region1: #{_lambda_.24} parent=0
    #allocation3 [shape = 'u8[524288]{0}', space=vmem, size = 0x80000, scoped, tag = 'input window, operand 1']
    loop: start=0, step=1, limit=18
    $region2: #{_lambda_.24} parent=1 // loop_pre_header
      _
    $region3: #{_lambda_.24} parent=1 // loop_header
      %s9 = sphi 0, %s13
      %p10 = scmp.ge.s32.totalorder %s9, 18
      %s16 = sphi 0, %s35
      %s17 = sphi 0, %s31
      %s18 = sphi 0, %s27
      %s19 = sphi 0, %s16
      %s20 = sphi 0, %s17
      %s21 = sphi 0, %s18
      %s22 = sphi 0, %s19
      %s23 = sphi 0, %s20
      %s24 = sphi 0, %s21
      %s40 = sphi 0, %s42
      %s43 = sphi 0, %s40
      %s44 = sphi 0, %s43
      %s60 = sphi 0, %s44
      %s68 = sphi 0, %s70
      %s71 = sphi 0, %s68
      %s72 = sphi 0, %s71
      %s88 = sphi 0, %s72
      %s94 = sphi 0, %s96
      %s97 = sphi 0, %s94
      %s98 = sphi 0, %s97
      %s114 = sphi 0, %s98
      %s122 = sphi 0, %s124
      %s125 = sphi 0, %s122
      %s126 = sphi 0, %s125
      %s142 = sphi 0, %s126
    $region4: #{_lambda_.24} parent=1 // loop_header_branch
      %12 = sbr.rel (%p10) target = $region8
    $region5: #{_lambda_.24} parent=1 // loop_body
      %s14 = ssub.s32 %s9, 1
      %s15 = ssub.s32 %s9, 2
      %s25 = sadd.s32 1, %s18
      %p26 = scmp.ge.s32.totalorder %s25, 4
      %s27 = scalar_select %p26, 0, %s25
      %s28 = sadd.s32 1, %s17
      %s29 = scalar_select %p26, %s28, %s17
      %p30 = scmp.ge.s32.totalorder %s29, 4
      %s31 = scalar_select %p30, 0, %s29
      %s32 = sadd.s32 1, %s16
      %s33 = scalar_select %p30, %s32, %s16
      %p34 = scmp.ge.s32.totalorder %s33, 1
      %s35 = scalar_select %p34, 0, %s33
      %s36 = ssub.s32 %s16, %s35
      %s37 = ssub.s32 %s18, %s27
      %s38 = sor.u32 %s36, %s37
      %p39 = scmp.eq.s32.totalorder %s38, 0
      %s41 = sadd.s32 %s40, 1
      %s42 = scalar_select %p39, %s40, %s41
      %p45 = pneg %p39
      %p46 = scmp.eq.s32.totalorder %s9, 15
      %p47 = por %p45, %p46
      %p48 = scmp.ne.s32.totalorder %s40, %s43
      %p49 = scmp.eq.s32.totalorder %s9, 0
      %p50 = por %p48, %p49
      %p51 = scmp.ne.s32.totalorder %s40, %s43
      %p52 = scmp.eq.s32.totalorder %s14, 15
      %p53 = por %p51, %p52
      %p54 = scmp.ne.s32.totalorder %s43, %s44
      %p55 = scmp.eq.s32.totalorder %s14, 0
      %p56 = por %p54, %p55
      %p57 = scmp.ne.s32.totalorder %s43, %s44
      %p58 = scmp.eq.s32.totalorder %s15, 15
      %p59 = por %p57, %p58
      %p61 = scmp.ne.s32.totalorder %s44, %s60
      %p62 = scmp.eq.s32.totalorder %s15, 0
      %p63 = por %p61, %p62
      %s64 = ssub.s32 %s18, %s27
      %s65 = ssub.s32 %s17, %s31
      %s66 = sor.u32 %s64, %s65
      %p67 = scmp.eq.s32.totalorder %s66, 0
      %s69 = sadd.s32 %s68, 1
      %s70 = scalar_select %p67, %s68, %s69
      %p73 = pneg %p67
      %p74 = scmp.eq.s32.totalorder %s9, 15
      %p75 = por %p73, %p74
      %p76 = scmp.ne.s32.totalorder %s68, %s71
      %p77 = scmp.eq.s32.totalorder %s9, 0
      %p78 = por %p76, %p77
      %p79 = scmp.ne.s32.totalorder %s68, %s71
      %p80 = scmp.eq.s32.totalorder %s14, 15
      %p81 = por %p79, %p80
      %p82 = scmp.ne.s32.totalorder %s71, %s72
      %p83 = scmp.eq.s32.totalorder %s14, 0
      %p84 = por %p82, %p83
      %p85 = scmp.ne.s32.totalorder %s71, %s72
      %p86 = scmp.eq.s32.totalorder %s15, 15
      %p87 = por %p85, %p86
      %p89 = scmp.ne.s32.totalorder %s72, %s88
      %p90 = scmp.eq.s32.totalorder %s15, 0
      %p91 = por %p89, %p90
      %s92 = ssub.s32 %s17, %s31
      %p93 = scmp.eq.s32.totalorder %s92, 0
      %s95 = sadd.s32 %s94, 1
      %s96 = scalar_select %p93, %s94, %s95
      %p99 = pneg %p93
      %p100 = scmp.eq.s32.totalorder %s9, 15
      %p101 = por %p99, %p100
      %p102 = scmp.ne.s32.totalorder %s94, %s97
      %p103 = scmp.eq.s32.totalorder %s9, 0
      %p104 = por %p102, %p103
      %p105 = scmp.ne.s32.totalorder %s94, %s97
      %p106 = scmp.eq.s32.totalorder %s14, 15
      %p107 = por %p105, %p106
      %p108 = scmp.ne.s32.totalorder %s97, %s98
      %p109 = scmp.eq.s32.totalorder %s14, 0
      %p110 = por %p108, %p109
      %p111 = scmp.ne.s32.totalorder %s97, %s98
      %p112 = scmp.eq.s32.totalorder %s15, 15
      %p113 = por %p111, %p112
      %p115 = scmp.ne.s32.totalorder %s98, %s114
      %p116 = scmp.eq.s32.totalorder %s15, 0
      %p117 = por %p115, %p116
      %s118 = ssub.s32 %s16, %s35
      %s119 = ssub.s32 %s17, %s31
      %s120 = sor.u32 %s118, %s119
      %p121 = scmp.eq.s32.totalorder %s120, 0
      %s123 = sadd.s32 %s122, 1
      %s124 = scalar_select %p121, %s122, %s123
      %p127 = pneg %p121
      %p128 = scmp.eq.s32.totalorder %s9, 15
      %p129 = por %p127, %p128
      %p130 = scmp.ne.s32.totalorder %s122, %s125
      %p131 = scmp.eq.s32.totalorder %s9, 0
      %p132 = por %p130, %p131
      %p133 = scmp.ne.s32.totalorder %s122, %s125
      %p134 = scmp.eq.s32.totalorder %s14, 15
      %p135 = por %p133, %p134
      %p136 = scmp.ne.s32.totalorder %s125, %s126
      %p137 = scmp.eq.s32.totalorder %s14, 0
      %p138 = por %p136, %p137
      %p139 = scmp.ne.s32.totalorder %s125, %s126
      %p140 = scmp.eq.s32.totalorder %s15, 15
      %p141 = por %p139, %p140
      %p143 = scmp.ne.s32.totalorder %s126, %s142
      %p144 = scmp.eq.s32.totalorder %s15, 0
      %p145 = por %p143, %p144
      %p146 = scmp.le.s32.totalorder 1, %s9
      %p147 = scmp.lt.s32.totalorder %s9, 17
      %p148 = pnand %p146, %p147
      %p149 = pneg %p148
      // Predicated region
      $region9: #{_lambda_.24} parent=5 // pred_check
        _
      $region10: #{_lambda_.24} parent=5 // pred_check_branch
        %151 = sbr.rel (%p148) target = $region12
      $region11: #{_lambda_.24} parent=5 // pred_region
        %s152 = ssub.s32 %s9, 1
      $region12: #{_lambda_.24} parent=5 // pred_fallthru
        _
      %p153 = scmp.lt.s32.totalorder %s9, 16
      // Predicated region
      $region13: #{_lambda_.24} parent=5 // pred_check
        %p154 = pneg %p153
      $region14: #{_lambda_.24} parent=5 // pred_check_branch
        %156 = sbr.rel (%p154) target = $region16
      $region15: #{_lambda_.24} parent=5 // pred_region
        // Predicated region
        $region17: #{_lambda_.24} parent=15 // pred_check
          %p157 = pneg %p50
        $region18: #{_lambda_.24} parent=15 // pred_check_branch
          %159 = sbr.rel (%p157) target = $region20
        $region19: #{_lambda_.24} parent=15 // pred_region
          %s160 = smul.u32 4, %s18
          %p161 = scmp.lt.s32.totalorder %s16, 0
          %s162 = scalar_select %p161, %s16, 0
          %p163 = scmp.lt.s32.totalorder %s160, 15
          %s164 = scalar_select %p163, %s160, 15
          %s165 = smul.addr %s162, 16
          %s166 = sadd.s32 %s164, %s165
          %s167 = smul.addr %s166, 2
          %s168 = scalar_lea.vmem %s0, %s167
          %s169 = smul.u32 4, %s18
        $region20: #{_lambda_.24} parent=15 // pred_fallthru
          _
        // Predicated region
        $region21: #{_lambda_.24} parent=15 // pred_check
          %p170 = pneg %p78
        $region22: #{_lambda_.24} parent=15 // pred_check_branch
          %172 = sbr.rel (%p170) target = $region24
        $region23: #{_lambda_.24} parent=15 // pred_region
          %s173 = sand.u32 %s68, 1
          %s174 = sand.u32 %s68, 1
          %s175 = smul.addr %s174, 512
          %s176 = scalar_lea.vmem [#allocation3], %s175
          %s177 = smul.u32 64, %s18
          %s178 = smul.u32 2, %s17
          %s179 = smul.addr %s177, 8
          %s180 = sadd.s32 %s178, %s179
          %s181 = smul.addr %s180, 4
          %s182 = scalar_lea.vmem %s1, %s181
          // Predicated region
          $region25: #{_lambda_.24} parent=23 // pred_check
            _
          $region26: #{_lambda_.24} parent=23 // pred_check_branch
            %184 = sbr.rel (0) target = $region28
          $region27: #{_lambda_.24} parent=23 // pred_region
            // Predicated region
            $region29: #{_lambda_.24} parent=27 // pred_check
              _
            $region30: #{_lambda_.24} parent=27 // pred_check_branch
              %186 = sbr.rel (0) target = $region32
            $region31: #{_lambda_.24} parent=27 // pred_region
              // Predicated region
              $region44: #{_lambda_.24} parent=31 // pred_check
                _
              $region45: #{_lambda_.24} parent=31 // pred_check_branch
                %328 = sbr.rel (0) target = $region47
              $region46: #{_lambda_.24} parent=31 // pred_region
                loop: start=0, step=1, limit=1
                $region48: #{_lambda_.24} parent=46 // loop_pre_header
                  _
                $region49: #{_lambda_.24} parent=46 // loop_header
                  %s330 = sphi 0, %s334
                  %p331 = scmp.ge.s32.totalorder %s330, 1
                  %s335 = sphi %s182, %s182
                  %s336 = sphi %s176, %s176
                $region50: #{_lambda_.24} parent=46 // loop_header_branch
                  %333 = sbr.rel (%p331) target = $region54
                $region51: #{_lambda_.24} parent=46 // loop_body
                  %v337 = vld [vmem:[%s335] sm:$0xff]
                  %338 = vst [vmem:[%s336] sm:$0xff] %v337
                  %v339 = vld [vmem:[%s335 + $0x20] sm:$0xff]
                  %340 = vst [vmem:[%s336 + $0x8] sm:$0xff] %v339
                  %v341 = vld [vmem:[%s335 + $0x40] sm:$0xff]
                  %342 = vst [vmem:[%s336 + $0x10] sm:$0xff] %v341
                  %v343 = vld [vmem:[%s335 + $0x60] sm:$0xff]
                  %344 = vst [vmem:[%s336 + $0x18] sm:$0xff] %v343
                  %v345 = vld [vmem:[%s335 + $0x80] sm:$0xff]
                  %346 = vst [vmem:[%s336 + $0x20] sm:$0xff] %v345
                  %v347 = vld [vmem:[%s335 + $0xa0] sm:$0xff]
                  %348 = vst [vmem:[%s336 + $0x28] sm:$0xff] %v347
                  %v349 = vld [vmem:[%s335 + $0xc0] sm:$0xff]
                  %350 = vst [vmem:[%s336 + $0x30] sm:$0xff] %v349
                  %v351 = vld [vmem:[%s335 + $0xe0] sm:$0xff]
                  %352 = vst [vmem:[%s336 + $0x38] sm:$0xff] %v351
                  %v353 = vld [vmem:[%s335 + $0x100] sm:$0xff]
                  %354 = vst [vmem:[%s336 + $0x40] sm:$0xff] %v353
                  %v355 = vld [vmem:[%s335 + $0x120] sm:$0xff]
                  %356 = vst [vmem:[%s336 + $0x48] sm:$0xff] %v355
                  %v357 = vld [vmem:[%s335 + $0x140] sm:$0xff]
                  %358 = vst [vmem:[%s336 + $0x50] sm:$0xff] %v357
                  %v359 = vld [vmem:[%s335 + $0x160] sm:$0xff]
                  %360 = vst [vmem:[%s336 + $0x58] sm:$0xff] %v359
                  %v361 = vld [vmem:[%s335 + $0x180] sm:$0xff]
                  %362 = vst [vmem:[%s336 + $0x60] sm:$0xff] %v361
                  %v363 = vld [vmem:[%s335 + $0x1a0] sm:$0xff]
                  %364 = vst [vmem:[%s336 + $0x68] sm:$0xff] %v363
                  %v365 = vld [vmem:[%s335 + $0x1c0] sm:$0xff]
                  %366 = vst [vmem:[%s336 + $0x70] sm:$0xff] %v365
                  %v367 = vld [vmem:[%s335 + $0x1e0] sm:$0xff]
                  %368 = vst [vmem:[%s336 + $0x78] sm:$0xff] %v367
                  %v369 = vld [vmem:[%s335 + $0x200] sm:$0xff]
                  %370 = vst [vmem:[%s336 + $0x80] sm:$0xff] %v369
                  %v371 = vld [vmem:[%s335 + $0x220] sm:$0xff]
                  %372 = vst [vmem:[%s336 + $0x88] sm:$0xff] %v371
                  %v373 = vld [vmem:[%s335 + $0x240] sm:$0xff]
                  %374 = vst [vmem:[%s336 + $0x90] sm:$0xff] %v373
                  %v375 = vld [vmem:[%s335 + $0x260] sm:$0xff]
                  %376 = vst [vmem:[%s336 + $0x98] sm:$0xff] %v375
                  %v377 = vld [vmem:[%s335 + $0x280] sm:$0xff]
                  %378 = vst [vmem:[%s336 + $0xa0] sm:$0xff] %v377
                  %v379 = vld [vmem:[%s335 + $0x2a0] sm:$0xff]
                  %380 = vst [vmem:[%s336 + $0xa8] sm:$0xff] %v379
                  %v381 = vld [vmem:[%s335 + $0x2c0] sm:$0xff]
                  %382 = vst [vmem:[%s336 + $0xb0] sm:$0xff] %v381
                  %v383 = vld [vmem:[%s335 + $0x2e0] sm:$0xff]
                  %384 = vst [vmem:[%s336 + $0xb8] sm:$0xff] %v383
                  %v385 = vld [vmem:[%s335 + $0x300] sm:$0xff]
                  %386 = vst [vmem:[%s336 + $0xc0] sm:$0xff] %v385
                  %v387 = vld [vmem:[%s335 + $0x320] sm:$0xff]
                  %388 = vst [vmem:[%s336 + $0xc8] sm:$0xff] %v387
                  %v389 = vld [vmem:[%s335 + $0x340] sm:$0xff]
                  %390 = vst [vmem:[%s336 + $0xd0] sm:$0xff] %v389
                  %v391 = vld [vmem:[%s335 + $0x360] sm:$0xff]
                  %392 = vst [vmem:[%s336 + $0xd8] sm:$0xff] %v391
                  %v393 = vld [vmem:[%s335 + $0x380] sm:$0xff]
                  %394 = vst [vmem:[%s336 + $0xe0] sm:$0xff] %v393
                  %v395 = vld [vmem:[%s335 + $0x3a0] sm:$0xff]
                  %396 = vst [vmem:[%s336 + $0xe8] sm:$0xff] %v395
                  %v397 = vld [vmem:[%s335 + $0x3c0] sm:$0xff]
                  %398 = vst [vmem:[%s336 + $0xf0] sm:$0xff] %v397
                  %v399 = vld [vmem:[%s335 + $0x3e0] sm:$0xff]
                  %400 = vst [vmem:[%s336 + $0xf8] sm:$0xff] %v399
                  %v401 = vld [vmem:[%s335 + $0x400] sm:$0xff]
                  %402 = vst [vmem:[%s336 + $0x100] sm:$0xff] %v401
                  %v403 = vld [vmem:[%s335 + $0x420] sm:$0xff]
                  %404 = vst [vmem:[%s336 + $0x108] sm:$0xff] %v403
                  %v405 = vld [vmem:[%s335 + $0x440] sm:$0xff]
                  %406 = vst [vmem:[%s336 + $0x110] sm:$0xff] %v405
                  %v407 = vld [vmem:[%s335 + $0x460] sm:$0xff]
                  %408 = vst [vmem:[%s336 + $0x118] sm:$0xff] %v407
                  %v409 = vld [vmem:[%s335 + $0x480] sm:$0xff]
                  %410 = vst [vmem:[%s336 + $0x120] sm:$0xff] %v409
                  %v411 = vld [vmem:[%s335 + $0x4a0] sm:$0xff]
                  %412 = vst [vmem:[%s336 + $0x128] sm:$0xff] %v411
                  %v413 = vld [vmem:[%s335 + $0x4c0] sm:$0xff]
                  %414 = vst [vmem:[%s336 + $0x130] sm:$0xff] %v413
                  %v415 = vld [vmem:[%s335 + $0x4e0] sm:$0xff]
                  %416 = vst [vmem:[%s336 + $0x138] sm:$0xff] %v415
                  %v417 = vld [vmem:[%s335 + $0x500] sm:$0xff]
                  %418 = vst [vmem:[%s336 + $0x140] sm:$0xff] %v417
                  %v419 = vld [vmem:[%s335 + $0x520] sm:$0xff]
                  %420 = vst [vmem:[%s336 + $0x148] sm:$0xff] %v419
                  %v421 = vld [vmem:[%s335 + $0x540] sm:$0xff]
                  %422 = vst [vmem:[%s336 + $0x150] sm:$0xff] %v421
                  %v423 = vld [vmem:[%s335 + $0x560] sm:$0xff]
                  %424 = vst [vmem:[%s336 + $0x158] sm:$0xff] %v423
                  %v425 = vld [vmem:[%s335 + $0x580] sm:$0xff]
                  %426 = vst [vmem:[%s336 + $0x160] sm:$0xff] %v425
                  %v427 = vld [vmem:[%s335 + $0x5a0] sm:$0xff]
                  %428 = vst [vmem:[%s336 + $0x168] sm:$0xff] %v427
                  %v429 = vld [vmem:[%s335 + $0x5c0] sm:$0xff]
                  %430 = vst [vmem:[%s336 + $0x170] sm:$0xff] %v429
                  %v431 = vld [vmem:[%s335 + $0x5e0] sm:$0xff]
                  %432 = vst [vmem:[%s336 + $0x178] sm:$0xff] %v431
                  %v433 = vld [vmem:[%s335 + $0x600] sm:$0xff]
                  %434 = vst [vmem:[%s336 + $0x180] sm:$0xff] %v433
                  %v435 = vld [vmem:[%s335 + $0x620] sm:$0xff]
                  %436 = vst [vmem:[%s336 + $0x188] sm:$0xff] %v435
                  %v437 = vld [vmem:[%s335 + $0x640] sm:$0xff]
                  %438 = vst [vmem:[%s336 + $0x190] sm:$0xff] %v437
                  %v439 = vld [vmem:[%s335 + $0x660] sm:$0xff]
                  %440 = vst [vmem:[%s336 + $0x198] sm:$0xff] %v439
                  %v441 = vld [vmem:[%s335 + $0x680] sm:$0xff]
                  %442 = vst [vmem:[%s336 + $0x1a0] sm:$0xff] %v441
                  %v443 = vld [vmem:[%s335 + $0x6a0] sm:$0xff]
                  %444 = vst [vmem:[%s336 + $0x1a8] sm:$0xff] %v443
                  %v445 = vld [vmem:[%s335 + $0x6c0] sm:$0xff]
                  %446 = vst [vmem:[%s336 + $0x1b0] sm:$0xff] %v445
                  %v447 = vld [vmem:[%s335 + $0x6e0] sm:$0xff]
                  %448 = vst [vmem:[%s336 + $0x1b8] sm:$0xff] %v447
                  %v449 = vld [vmem:[%s335 + $0x700] sm:$0xff]
                  %450 = vst [vmem:[%s336 + $0x1c0] sm:$0xff] %v449
                  %v451 = vld [vmem:[%s335 + $0x720] sm:$0xff]
                  %452 = vst [vmem:[%s336 + $0x1c8] sm:$0xff] %v451
                  %v453 = vld [vmem:[%s335 + $0x740] sm:$0xff]
                  %454 = vst [vmem:[%s336 + $0x1d0] sm:$0xff] %v453
                  %v455 = vld [vmem:[%s335 + $0x760] sm:$0xff]
                  %456 = vst [vmem:[%s336 + $0x1d8] sm:$0xff] %v455
                  %v457 = vld [vmem:[%s335 + $0x780] sm:$0xff]
                  %458 = vst [vmem:[%s336 + $0x1e0] sm:$0xff] %v457
                  %v459 = vld [vmem:[%s335 + $0x7a0] sm:$0xff]
                  %460 = vst [vmem:[%s336 + $0x1e8] sm:$0xff] %v459
                  %v461 = vld [vmem:[%s335 + $0x7c0] sm:$0xff]
                  %462 = vst [vmem:[%s336 + $0x1f0] sm:$0xff] %v461
                  %v463 = vld [vmem:[%s335 + $0x7e0] sm:$0xff]
                  %464 = vst [vmem:[%s336 + $0x1f8] sm:$0xff] %v463
                $region52: #{_lambda_.24} parent=46 // loop_footer
                  %s334 = sadd.s32 1, %s330
                $region53: #{_lambda_.24} parent=46 // loop_footer_branch
                  %329 = sbr.rel target = $region49
                $region54: #{_lambda_.24} parent=46 // loop_exit
                  _
              $region47: #{_lambda_.24} parent=31 // pred_fallthru
                _
              // Predicated region
              $region55: #{_lambda_.24} parent=31 // pred_check
                _
              $region56: #{_lambda_.24} parent=31 // pred_check_branch
                %466 = sbr.rel target = $region58
              $region57: #{_lambda_.24} parent=31 // pred_region
                _
              $region58: #{_lambda_.24} parent=31 // pred_fallthru
                _
            $region32: #{_lambda_.24} parent=27 // pred_fallthru
              _
            // Predicated region
            $region33: #{_lambda_.24} parent=27 // pred_check
              _
            $region34: #{_lambda_.24} parent=27 // pred_check_branch
              %188 = sbr.rel target = $region36
            $region35: #{_lambda_.24} parent=27 // pred_region
              %s190 = ssub.s32 256, 1
              loop: start=0, step=1, limit=1
              $region37: #{_lambda_.24} parent=35 // loop_pre_header
                _
              $region38: #{_lambda_.24} parent=35 // loop_header
                %s192 = sphi 0, %s196
                %p193 = scmp.ge.s32.totalorder %s192, 1
                %s197 = sphi %s182, %s182
                %s198 = sphi %s176, %s176
              $region39: #{_lambda_.24} parent=35 // loop_header_branch
                %195 = sbr.rel (%p193) target = $region43
              $region40: #{_lambda_.24} parent=35 // loop_body
                %v199 = vld [vmem:[%s197] sm:%s190]
                %200 = vst [vmem:[%s198] sm:%s190] %v199
                %v201 = vld [vmem:[%s197 + $0x20] sm:%s190]
                %202 = vst [vmem:[%s198 + $0x8] sm:%s190] %v201
                %v203 = vld [vmem:[%s197 + $0x40] sm:%s190]
                %204 = vst [vmem:[%s198 + $0x10] sm:%s190] %v203
                %v205 = vld [vmem:[%s197 + $0x60] sm:%s190]
                %206 = vst [vmem:[%s198 + $0x18] sm:%s190] %v205
                %v207 = vld [vmem:[%s197 + $0x80] sm:%s190]
                %208 = vst [vmem:[%s198 + $0x20] sm:%s190] %v207
                %v209 = vld [vmem:[%s197 + $0xa0] sm:%s190]
                %210 = vst [vmem:[%s198 + $0x28] sm:%s190] %v209
                %v211 = vld [vmem:[%s197 + $0xc0] sm:%s190]
                %212 = vst [vmem:[%s198 + $0x30] sm:%s190] %v211
                %v213 = vld [vmem:[%s197 + $0xe0] sm:%s190]
                %214 = vst [vmem:[%s198 + $0x38] sm:%s190] %v213
                %v215 = vld [vmem:[%s197 + $0x100] sm:%s190]
                %216 = vst [vmem:[%s198 + $0x40] sm:%s190] %v215
                %v217 = vld [vmem:[%s197 + $0x120] sm:%s190]
                %218 = vst [vmem:[%s198 + $0x48] sm:%s190] %v217
                %v219 = vld [vmem:[%s197 + $0x140] sm:%s190]
                %220 = vst [vmem:[%s198 + $0x50] sm:%s190] %v219
                %v221 = vld [vmem:[%s197 + $0x160] sm:%s190]
                %222 = vst [vmem:[%s198 + $0x58] sm:%s190] %v221
                %v223 = vld [vmem:[%s197 + $0x180] sm:%s190]
                %224 = vst [vmem:[%s198 + $0x60] sm:%s190] %v223
                %v225 = vld [vmem:[%s197 + $0x1a0] sm:%s190]
                %226 = vst [vmem:[%s198 + $0x68] sm:%s190] %v225
                %v227 = vld [vmem:[%s197 + $0x1c0] sm:%s190]
                %228 = vst [vmem:[%s198 + $0x70] sm:%s190] %v227
                %v229 = vld [vmem:[%s197 + $0x1e0] sm:%s190]
                %230 = vst [vmem:[%s198 + $0x78] sm:%s190] %v229
                %v231 = vld [vmem:[%s197 + $0x200] sm:%s190]
                %232 = vst [vmem:[%s198 + $0x80] sm:%s190] %v231
                %v233 = vld [vmem:[%s197 + $0x220] sm:%s190]
                %234 = vst [vmem:[%s198 + $0x88] sm:%s190] %v233
                %v235 = vld [vmem:[%s197 + $0x240] sm:%s190]
                %236 = vst [vmem:[%s198 + $0x90] sm:%s190] %v235
                %v237 = vld [vmem:[%s197 + $0x260] sm:%s190]
                %238 = vst [vmem:[%s198 + $0x98] sm:%s190] %v237
                %v239 = vld [vmem:[%s197 + $0x280] sm:%s190]
                %240 = vst [vmem:[%s198 + $0xa0] sm:%s190] %v239
                %v241 = vld [vmem:[%s197 + $0x2a0] sm:%s190]
                %242 = vst [vmem:[%s198 + $0xa8] sm:%s190] %v241
                %v243 = vld [vmem:[%s197 + $0x2c0] sm:%s190]
                %244 = vst [vmem:[%s198 + $0xb0] sm:%s190] %v243
                %v245 = vld [vmem:[%s197 + $0x2e0] sm:%s190]
                %246 = vst [vmem:[%s198 + $0xb8] sm:%s190] %v245
                %v247 = vld [vmem:[%s197 + $0x300] sm:%s190]
                %248 = vst [vmem:[%s198 + $0xc0] sm:%s190] %v247
                %v249 = vld [vmem:[%s197 + $0x320] sm:%s190]
                %250 = vst [vmem:[%s198 + $0xc8] sm:%s190] %v249
                %v251 = vld [vmem:[%s197 + $0x340] sm:%s190]
                %252 = vst [vmem:[%s198 + $0xd0] sm:%s190] %v251
                %v253 = vld [vmem:[%s197 + $0x360] sm:%s190]
                %254 = vst [vmem:[%s198 + $0xd8] sm:%s190] %v253
                %v255 = vld [vmem:[%s197 + $0x380] sm:%s190]
                %256 = vst [vmem:[%s198 + $0xe0] sm:%s190] %v255
                %v257 = vld [vmem:[%s197 + $0x3a0] sm:%s190]
                %258 = vst [vmem:[%s198 + $0xe8] sm:%s190] %v257
                %v259 = vld [vmem:[%s197 + $0x3c0] sm:%s190]
                %260 = vst [vmem:[%s198 + $0xf0] sm:%s190] %v259
                %v261 = vld [vmem:[%s197 + $0x3e0] sm:%s190]
                %262 = vst [vmem:[%s198 + $0xf8] sm:%s190] %v261
                %v263 = vld [vmem:[%s197 + $0x400] sm:%s190]
                %264 = vst [vmem:[%s198 + $0x100] sm:%s190] %v263
                %v265 = vld [vmem:[%s197 + $0x420] sm:%s190]
                %266 = vst [vmem:[%s198 + $0x108] sm:%s190] %v265
                %v267 = vld [vmem:[%s197 + $0x440] sm:%s190]
                %268 = vst [vmem:[%s198 + $0x110] sm:%s190] %v267
                %v269 = vld [vmem:[%s197 + $0x460] sm:%s190]
                %270 = vst [vmem:[%s198 + $0x118] sm:%s190] %v269
                %v271 = vld [vmem:[%s197 + $0x480] sm:%s190]
                %272 = vst [vmem:[%s198 + $0x120] sm:%s190] %v271
                %v273 = vld [vmem:[%s197 + $0x4a0] sm:%s190]
                %274 = vst [vmem:[%s198 + $0x128] sm:%s190] %v273
                %v275 = vld [vmem:[%s197 + $0x4c0] sm:%s190]
                %276 = vst [vmem:[%s198 + $0x130] sm:%s190] %v275
                %v277 = vld [vmem:[%s197 + $0x4e0] sm:%s190]
                %278 = vst [vmem:[%s198 + $0x138] sm:%s190] %v277
                %v279 = vld [vmem:[%s197 + $0x500] sm:%s190]
                %280 = vst [vmem:[%s198 + $0x140] sm:%s190] %v279
                %v281 = vld [vmem:[%s197 + $0x520] sm:%s190]
                %282 = vst [vmem:[%s198 + $0x148] sm:%s190] %v281
                %v283 = vld [vmem:[%s197 + $0x540] sm:%s190]
                %284 = vst [vmem:[%s198 + $0x150] sm:%s190] %v283
                %v285 = vld [vmem:[%s197 + $0x560] sm:%s190]
                %286 = vst [vmem:[%s198 + $0x158] sm:%s190] %v285
                %v287 = vld [vmem:[%s197 + $0x580] sm:%s190]
                %288 = vst [vmem:[%s198 + $0x160] sm:%s190] %v287
                %v289 = vld [vmem:[%s197 + $0x5a0] sm:%s190]
                %290 = vst [vmem:[%s198 + $0x168] sm:%s190] %v289
                %v291 = vld [vmem:[%s197 + $0x5c0] sm:%s190]
                %292 = vst [vmem:[%s198 + $0x170] sm:%s190] %v291
                %v293 = vld [vmem:[%s197 + $0x5e0] sm:%s190]
                %294 = vst [vmem:[%s198 + $0x178] sm:%s190] %v293
                %v295 = vld [vmem:[%s197 + $0x600] sm:%s190]
                %296 = vst [vmem:[%s198 + $0x180] sm:%s190] %v295
                %v297 = vld [vmem:[%s197 + $0x620] sm:%s190]
                %298 = vst [vmem:[%s198 + $0x188] sm:%s190] %v297
                %v299 = vld [vmem:[%s197 + $0x640] sm:%s190]
                %300 = vst [vmem:[%s198 + $0x190] sm:%s190] %v299
                %v301 = vld [vmem:[%s197 + $0x660] sm:%s190]
                %302 = vst [vmem:[%s198 + $0x198] sm:%s190] %v301
                %v303 = vld [vmem:[%s197 + $0x680] sm:%s190]
                %304 = vst [vmem:[%s198 + $0x1a0] sm:%s190] %v303
                %v305 = vld [vmem:[%s197 + $0x6a0] sm:%s190]
                %306 = vst [vmem:[%s198 + $0x1a8] sm:%s190] %v305
                %v307 = vld [vmem:[%s197 + $0x6c0] sm:%s190]
                %308 = vst [vmem:[%s198 + $0x1b0] sm:%s190] %v307
                %v309 = vld [vmem:[%s197 + $0x6e0] sm:%s190]
                %310 = vst [vmem:[%s198 + $0x1b8] sm:%s190] %v309
                %v311 = vld [vmem:[%s197 + $0x700] sm:%s190]
                %312 = vst [vmem:[%s198 + $0x1c0] sm:%s190] %v311
                %v313 = vld [vmem:[%s197 + $0x720] sm:%s190]
                %314 = vst [vmem:[%s198 + $0x1c8] sm:%s190] %v313
                %v315 = vld [vmem:[%s197 + $0x740] sm:%s190]
                %316 = vst [vmem:[%s198 + $0x1d0] sm:%s190] %v315
                %v317 = vld [vmem:[%s197 + $0x760] sm:%s190]
                %318 = vst [vmem:[%s198 + $0x1d8] sm:%s190] %v317
                %v319 = vld [vmem:[%s197 + $0x780] sm:%s190]
                %320 = vst [vmem:[%s198 + $0x1e0] sm:%s190] %v319
                %v321 = vld [vmem:[%s197 + $0x7a0] sm:%s190]
                %322 = vst [vmem:[%s198 + $0x1e8] sm:%s190] %v321
                %v323 = vld [vmem:[%s197 + $0x7c0] sm:%s190]
                %324 = vst [vmem:[%s198 + $0x1f0] sm:%s190] %v323
                %v325 = vld [vmem:[%s197 + $0x7e0] sm:%s190]
                %326 = vst [vmem:[%s198 + $0x1f8] sm:%s190] %v325
              $region41: #{_lambda_.24} parent=35 // loop_footer
                %s196 = sadd.s32 1, %s192
              $region42: #{_lambda_.24} parent=35 // loop_footer_branch
                %191 = sbr.rel target = $region38
              $region43: #{_lambda_.24} parent=35 // loop_exit
                _
            $region36: #{_lambda_.24} parent=27 // pred_fallthru
              _
          $region28: #{_lambda_.24} parent=23 // pred_fallthru
            _
          %467 = vnop
        $region24: #{_lambda_.24} parent=15 // pred_fallthru
          _
        // Predicated region
        $region59: #{_lambda_.24} parent=15 // pred_check
          %p468 = pneg %p104
        $region60: #{_lambda_.24} parent=15 // pred_check_branch
          %470 = sbr.rel (%p468) target = $region62
        $region61: #{_lambda_.24} parent=15 // pred_region
          %s471 = smul.u32 2, %s17
          %p472 = scmp.lt.s32.totalorder %s471, 7
          %s473 = scalar_select %p472, %s471, 7
          %s474 = scalar_lea.vmem %s2, %s473
          %s475 = smul.u32 2, %s17
        $region62: #{_lambda_.24} parent=15 // pred_fallthru
          _
      $region16: #{_lambda_.24} parent=5 // pred_fallthru
        _
      %p476 = scmp.le.s32.totalorder 1, %s9
      %p477 = scmp.lt.s32.totalorder %s9, 17
      %p478 = pnand %p476, %p477
      %p479 = pneg %p478
      // Predicated region
      $region63: #{_lambda_.24} parent=5 // pred_check
        _
      $region64: #{_lambda_.24} parent=5 // pred_check_branch
        %481 = sbr.rel (%p478) target = $region66
      $region65: #{_lambda_.24} parent=5 // pred_region
        %s482 = ssub.s32 %s9, 1
        %s483 = sand.u32 %s71, 1
        %s484 = sand.u32 %s71, 1
        %s485 = smul.addr %s484, 512
        %s486 = scalar_lea.vmem [#allocation3], %s485
        // Predicated region
        $region67: #{_lambda_.24} parent=65 // pred_check
          %p487 = pneg %p84
        $region68: #{_lambda_.24} parent=65 // pred_check_branch
          %489 = sbr.rel (%p487) target = $region70
        $region69: #{_lambda_.24} parent=65 // pred_region
          _
        $region70: #{_lambda_.24} parent=65 // pred_fallthru
          _
        %s490 = smul.u32 4, %s21
        %p491 = scmp.lt.s32.totalorder %s19, 0
        %s492 = scalar_select %p491, %s19, 0
        %p493 = scmp.lt.s32.totalorder %s490, 15
        %s494 = scalar_select %p493, %s490, 15
        %s495 = smul.addr %s492, 16
        %s496 = sadd.s32 %s494, %s495
        %s497 = smul.addr %s496, 2
        %s498 = scalar_lea.vmem %s0, %s497
        %p499 = pneg %p56
        %p500 = pneg %p53
        %s501 = sand.u32 %s71, 1
        %s502 = sand.u32 %s71, 1
        %s503 = smul.addr %s502, 512
        %s504 = scalar_lea.vmem [#allocation3], %s503
        %p505 = pneg %p84
        %p506 = pneg %p81
        %s507 = smul.u32 2, %s20
        %p508 = scmp.lt.s32.totalorder %s507, 7
        %s509 = scalar_select %p508, %s507, 7
        %s510 = scalar_lea.vmem %s2, %s509
        %p511 = pneg %p110
        %p512 = pneg %p107
        %p513 = pneg %p138
        %p514 = pneg %p135
        %s515 = smul.u32 2, %s20
        %p516 = scmp.lt.s32.totalorder %s19, 0
        %s517 = scalar_select %p516, %s19, 0
        %p518 = scmp.lt.s32.totalorder %s515, 7
        %s519 = scalar_select %p518, %s515, 7
        %s520 = smul.addr %s517, 8
        %s521 = sadd.s32 %s519, %s520
        %s522 = smul.addr %s521, 2
        %s523 = scalar_lea.vmem %s3, %s522
        %s524 = smul.u32 4, %s21
        %p525 = scmp.lt.s32.totalorder %s19, 0
        %s526 = scalar_select %p525, %s19, 0
        %p527 = scmp.lt.s32.totalorder %s524, 15
        %s528 = scalar_select %p527, %s524, 15
        %s529 = smul.addr %s526, 16
        %s530 = sadd.s32 %s528, %s529
        %s531 = smul.addr %s530, 2
        %s532 = scalar_lea.vmem %s0, %s531
        %s533 = smul.u32 4, %s21
        %s534 = smul.u32 64, %s21
        %s535 = smul.u32 2, %s20
        %s536 = smul.u32 2, %s20
        %p537 = scmp.lt.s32.totalorder %s536, 7
        %s538 = scalar_select %p537, %s536, 7
        %s539 = scalar_lea.vmem %s2, %s538
        %s540 = smul.u32 2, %s20
        %s541 = smul.u32 2, %s20
        %p542 = scmp.lt.s32.totalorder %s19, 0
        %s543 = scalar_select %p542, %s19, 0
        %p544 = scmp.lt.s32.totalorder %s541, 7
        %s545 = scalar_select %p544, %s541, 7
        %s546 = smul.addr %s543, 8
        %s547 = sadd.s32 %s545, %s546
        %s548 = smul.addr %s547, 2
        %s549 = scalar_lea.vmem %s3, %s548
        %s550 = smul.u32 2, %s20
        %p551 = scmp.eq.s32.totalorder %s21, 0
        // Predicated region
        $region71: #{_lambda_.24} parent=65 // pred_check
          %p552 = pneg %p551
        $region72: #{_lambda_.24} parent=65 // pred_check_branch
          %554 = sbr.rel (%p552) target = $region74
        $region73: #{_lambda_.24} parent=65 // pred_region
          %555 = vst [vmem:[#allocation2] sm:$0xf] 0.0
        $region74: #{_lambda_.24} parent=65 // pred_fallthru
          _
        %v556 = vld [vmem:[#allocation2] sm:$0xf]
        %v557 = vld [vmem:[%s532] sm:$0xff]
        %v559 = vcombine.high %v557, %v557
        %v561 = vunpack.c.l.s4 1983009808
        %v562 = vunpack.c.0.s8 %v561
        %v563 = vlaneseq
        %v564 = vshrl.u32 %v563, 7
        %v565 = vsub.s32 %v562, %v564
        %v566 = vrot.slane %v557, %v565
        %v568 = vunpack.c.l.s4 1983009808
        %v569 = vunpack.c.0.s8 %v568
        %v570 = vlaneseq
        %v571 = vshrl.u32 %v570, 7
        %v572 = vsub.s32 %v569, %v571
        %v573 = vrot.slane %v559, %v572
        %v574 = vcombine.high %v566, %v566
        %v575 = vcombine.high %v573, %v573
        %v580 = vpack.c.bf16 %v566, %v566
        %v581 = vpack.c.bf16 %v574, %v574
        %v582 = vpack.c.bf16 %v573, %v573
        %v583 = vpack.c.bf16 %v575, %v575
        %v584 = vld [vmem:[%s486] sm:$0xff]
        %v585 = vld [vmem:[%s486 + $0x8] sm:$0xff]
        %v586 = vld [vmem:[%s486 + $0x10] sm:$0xff]
        %v587 = vld [vmem:[%s486 + $0x18] sm:$0xff]
        %v588 = vld [vmem:[%s486 + $0x20] sm:$0xff]
        %v589 = vld [vmem:[%s486 + $0x28] sm:$0xff]
        %v590 = vld [vmem:[%s486 + $0x30] sm:$0xff]
        %v591 = vld [vmem:[%s486 + $0x38] sm:$0xff]
        %v592 = vld [vmem:[%s486 + $0x40] sm:$0xff]
        %v593 = vld [vmem:[%s486 + $0x48] sm:$0xff]
        %v594 = vld [vmem:[%s486 + $0x50] sm:$0xff]
        %v595 = vld [vmem:[%s486 + $0x58] sm:$0xff]
        %v596 = vld [vmem:[%s486 + $0x60] sm:$0xff]
        %v597 = vld [vmem:[%s486 + $0x68] sm:$0xff]
        %v598 = vld [vmem:[%s486 + $0x70] sm:$0xff]
        %v599 = vld [vmem:[%s486 + $0x78] sm:$0xff]
        %v600 = vld [vmem:[%s486 + $0x80] sm:$0xff]
        %v601 = vld [vmem:[%s486 + $0x88] sm:$0xff]
        %v602 = vld [vmem:[%s486 + $0x90] sm:$0xff]
        %v603 = vld [vmem:[%s486 + $0x98] sm:$0xff]
        %v604 = vld [vmem:[%s486 + $0xa0] sm:$0xff]
        %v605 = vld [vmem:[%s486 + $0xa8] sm:$0xff]
        %v606 = vld [vmem:[%s486 + $0xb0] sm:$0xff]
        %v607 = vld [vmem:[%s486 + $0xb8] sm:$0xff]
        %v608 = vld [vmem:[%s486 + $0xc0] sm:$0xff]
        %v609 = vld [vmem:[%s486 + $0xc8] sm:$0xff]
        %v610 = vld [vmem:[%s486 + $0xd0] sm:$0xff]
        %v611 = vld [vmem:[%s486 + $0xd8] sm:$0xff]
        %v612 = vld [vmem:[%s486 + $0xe0] sm:$0xff]
        %v613 = vld [vmem:[%s486 + $0xe8] sm:$0xff]
        %v614 = vld [vmem:[%s486 + $0xf0] sm:$0xff]
        %v615 = vld [vmem:[%s486 + $0xf8] sm:$0xff]
        %v616 = vld [vmem:[%s486 + $0x100] sm:$0xff]
        %v617 = vld [vmem:[%s486 + $0x108] sm:$0xff]
        %v618 = vld [vmem:[%s486 + $0x110] sm:$0xff]
        %v619 = vld [vmem:[%s486 + $0x118] sm:$0xff]
        %v620 = vld [vmem:[%s486 + $0x120] sm:$0xff]
        %v621 = vld [vmem:[%s486 + $0x128] sm:$0xff]
        %v622 = vld [vmem:[%s486 + $0x130] sm:$0xff]
        %v623 = vld [vmem:[%s486 + $0x138] sm:$0xff]
        %v624 = vld [vmem:[%s486 + $0x140] sm:$0xff]
        %v625 = vld [vmem:[%s486 + $0x148] sm:$0xff]
        %v626 = vld [vmem:[%s486 + $0x150] sm:$0xff]
        %v627 = vld [vmem:[%s486 + $0x158] sm:$0xff]
        %v628 = vld [vmem:[%s486 + $0x160] sm:$0xff]
        %v629 = vld [vmem:[%s486 + $0x168] sm:$0xff]
        %v630 = vld [vmem:[%s486 + $0x170] sm:$0xff]
        %v631 = vld [vmem:[%s486 + $0x178] sm:$0xff]
        %v632 = vld [vmem:[%s486 + $0x180] sm:$0xff]
        %v633 = vld [vmem:[%s486 + $0x188] sm:$0xff]
        %v634 = vld [vmem:[%s486 + $0x190] sm:$0xff]
        %v635 = vld [vmem:[%s486 + $0x198] sm:$0xff]
        %v636 = vld [vmem:[%s486 + $0x1a0] sm:$0xff]
        %v637 = vld [vmem:[%s486 + $0x1a8] sm:$0xff]
        %v638 = vld [vmem:[%s486 + $0x1b0] sm:$0xff]
        %v639 = vld [vmem:[%s486 + $0x1b8] sm:$0xff]
        %v640 = vld [vmem:[%s486 + $0x1c0] sm:$0xff]
        %v641 = vld [vmem:[%s486 + $0x1c8] sm:$0xff]
        %v642 = vld [vmem:[%s486 + $0x1d0] sm:$0xff]
        %v643 = vld [vmem:[%s486 + $0x1d8] sm:$0xff]
        %v644 = vld [vmem:[%s486 + $0x1e0] sm:$0xff]
        %v645 = vld [vmem:[%s486 + $0x1e8] sm:$0xff]
        %v646 = vld [vmem:[%s486 + $0x1f0] sm:$0xff]
        %v647 = vld [vmem:[%s486 + $0x1f8] sm:$0xff]
        %v712 = vunpack.c.l.b16 %v584
        %v713 = vunpack.c.h.b16 %v584
        %v714 = vunpack.c.l.b16 %v585
        %v715 = vunpack.c.h.b16 %v585
        %v716 = vunpack.c.l.b16 %v586
        %v717 = vunpack.c.h.b16 %v586
        %v718 = vunpack.c.l.b16 %v587
        %v719 = vunpack.c.h.b16 %v587
        %v720 = vunpack.c.l.b16 %v588
        %v721 = vunpack.c.h.b16 %v588
        %v722 = vunpack.c.l.b16 %v589
        %v723 = vunpack.c.h.b16 %v589
        %v724 = vunpack.c.l.b16 %v590
        %v725 = vunpack.c.h.b16 %v590
        %v726 = vunpack.c.l.b16 %v591
        %v727 = vunpack.c.h.b16 %v591
        %v728 = vunpack.c.l.b16 %v592
        %v729 = vunpack.c.h.b16 %v592
        %v730 = vunpack.c.l.b16 %v593
        %v731 = vunpack.c.h.b16 %v593
        %v732 = vunpack.c.l.b16 %v594
        %v733 = vunpack.c.h.b16 %v594
        %v734 = vunpack.c.l.b16 %v595
        %v735 = vunpack.c.h.b16 %v595
        %v736 = vunpack.c.l.b16 %v596
        %v737 = vunpack.c.h.b16 %v596
        %v738 = vunpack.c.l.b16 %v597
        %v739 = vunpack.c.h.b16 %v597
        %v740 = vunpack.c.l.b16 %v598
        %v741 = vunpack.c.h.b16 %v598
        %v742 = vunpack.c.l.b16 %v599
        %v743 = vunpack.c.h.b16 %v599
        %v744 = vunpack.c.l.b16 %v600
        %v745 = vunpack.c.h.b16 %v600
        %v746 = vunpack.c.l.b16 %v601
        %v747 = vunpack.c.h.b16 %v601
        %v748 = vunpack.c.l.b16 %v602
        %v749 = vunpack.c.h.b16 %v602
        %v750 = vunpack.c.l.b16 %v603
        %v751 = vunpack.c.h.b16 %v603
        %v752 = vunpack.c.l.b16 %v604
        %v753 = vunpack.c.h.b16 %v604
        %v754 = vunpack.c.l.b16 %v605
        %v755 = vunpack.c.h.b16 %v605
        %v756 = vunpack.c.l.b16 %v606
        %v757 = vunpack.c.h.b16 %v606
        %v758 = vunpack.c.l.b16 %v607
        %v759 = vunpack.c.h.b16 %v607
        %v760 = vunpack.c.l.b16 %v608
        %v761 = vunpack.c.h.b16 %v608
        %v762 = vunpack.c.l.b16 %v609
        %v763 = vunpack.c.h.b16 %v609
        %v764 = vunpack.c.l.b16 %v610
        %v765 = vunpack.c.h.b16 %v610
        %v766 = vunpack.c.l.b16 %v611
        %v767 = vunpack.c.h.b16 %v611
        %v768 = vunpack.c.l.b16 %v612
        %v769 = vunpack.c.h.b16 %v612
        %v770 = vunpack.c.l.b16 %v613
        %v771 = vunpack.c.h.b16 %v613
        %v772 = vunpack.c.l.b16 %v614
        %v773 = vunpack.c.h.b16 %v614
        %v774 = vunpack.c.l.b16 %v615
        %v775 = vunpack.c.h.b16 %v615
        %v776 = vunpack.c.l.b16 %v616
        %v777 = vunpack.c.h.b16 %v616
        %v778 = vunpack.c.l.b16 %v617
        %v779 = vunpack.c.h.b16 %v617
        %v780 = vunpack.c.l.b16 %v618
        %v781 = vunpack.c.h.b16 %v618
        %v782 = vunpack.c.l.b16 %v619
        %v783 = vunpack.c.h.b16 %v619
        %v784 = vunpack.c.l.b16 %v620
        %v785 = vunpack.c.h.b16 %v620
        %v786 = vunpack.c.l.b16 %v621
        %v787 = vunpack.c.h.b16 %v621
        %v788 = vunpack.c.l.b16 %v622
        %v789 = vunpack.c.h.b16 %v622
        %v790 = vunpack.c.l.b16 %v623
        %v791 = vunpack.c.h.b16 %v623
        %v792 = vunpack.c.l.b16 %v624
        %v793 = vunpack.c.h.b16 %v624
        %v794 = vunpack.c.l.b16 %v625
        %v795 = vunpack.c.h.b16 %v625
        %v796 = vunpack.c.l.b16 %v626
        %v797 = vunpack.c.h.b16 %v626
        %v798 = vunpack.c.l.b16 %v627
        %v799 = vunpack.c.h.b16 %v627
        %v800 = vunpack.c.l.b16 %v628
        %v801 = vunpack.c.h.b16 %v628
        %v802 = vunpack.c.l.b16 %v629
        %v803 = vunpack.c.h.b16 %v629
        %v804 = vunpack.c.l.b16 %v630
        %v805 = vunpack.c.h.b16 %v630
        %v806 = vunpack.c.l.b16 %v631
        %v807 = vunpack.c.h.b16 %v631
        %v808 = vunpack.c.l.b16 %v632
        %v809 = vunpack.c.h.b16 %v632
        %v810 = vunpack.c.l.b16 %v633
        %v811 = vunpack.c.h.b16 %v633
        %v812 = vunpack.c.l.b16 %v634
        %v813 = vunpack.c.h.b16 %v634
        %v814 = vunpack.c.l.b16 %v635
        %v815 = vunpack.c.h.b16 %v635
        %v816 = vunpack.c.l.b16 %v636
        %v817 = vunpack.c.h.b16 %v636
        %v818 = vunpack.c.l.b16 %v637
        %v819 = vunpack.c.h.b16 %v637
        %v820 = vunpack.c.l.b16 %v638
        %v821 = vunpack.c.h.b16 %v638
        %v822 = vunpack.c.l.b16 %v639
        %v823 = vunpack.c.h.b16 %v639
        %v824 = vunpack.c.l.b16 %v640
        %v825 = vunpack.c.h.b16 %v640
        %v826 = vunpack.c.l.b16 %v641
        %v827 = vunpack.c.h.b16 %v641
        %v828 = vunpack.c.l.b16 %v642
        %v829 = vunpack.c.h.b16 %v642
        %v830 = vunpack.c.l.b16 %v643
        %v831 = vunpack.c.h.b16 %v643
        %v832 = vunpack.c.l.b16 %v644
        %v833 = vunpack.c.h.b16 %v644
        %v834 = vunpack.c.l.b16 %v645
        %v835 = vunpack.c.h.b16 %v645
        %v836 = vunpack.c.l.b16 %v646
        %v837 = vunpack.c.h.b16 %v646
        %v838 = vunpack.c.l.b16 %v647
        %v839 = vunpack.c.h.b16 %v647
        %v840 = vpack.c.b16 %v714, %v712
        %v841 = vpack.c.b16 %v715, %v713
        %v842 = vpack.c.b16 %v718, %v716
        %v843 = vpack.c.b16 %v719, %v717
        %v844 = vpack.c.b16 %v722, %v720
        %v845 = vpack.c.b16 %v723, %v721
        %v846 = vpack.c.b16 %v726, %v724
        %v847 = vpack.c.b16 %v727, %v725
        %v848 = vpack.c.b16 %v730, %v728
        %v849 = vpack.c.b16 %v731, %v729
        %v850 = vpack.c.b16 %v734, %v732
        %v851 = vpack.c.b16 %v735, %v733
        %v852 = vpack.c.b16 %v738, %v736
        %v853 = vpack.c.b16 %v739, %v737
        %v854 = vpack.c.b16 %v742, %v740
        %v855 = vpack.c.b16 %v743, %v741
        %v856 = vpack.c.b16 %v746, %v744
        %v857 = vpack.c.b16 %v747, %v745
        %v858 = vpack.c.b16 %v750, %v748
        %v859 = vpack.c.b16 %v751, %v749
        %v860 = vpack.c.b16 %v754, %v752
        %v861 = vpack.c.b16 %v755, %v753
        %v862 = vpack.c.b16 %v758, %v756
        %v863 = vpack.c.b16 %v759, %v757
        %v864 = vpack.c.b16 %v762, %v760
        %v865 = vpack.c.b16 %v763, %v761
        %v866 = vpack.c.b16 %v766, %v764
        %v867 = vpack.c.b16 %v767, %v765
        %v868 = vpack.c.b16 %v770, %v768
        %v869 = vpack.c.b16 %v771, %v769
        %v870 = vpack.c.b16 %v774, %v772
        %v871 = vpack.c.b16 %v775, %v773
        %v872 = vpack.c.b16 %v778, %v776
        %v873 = vpack.c.b16 %v779, %v777
        %v874 = vpack.c.b16 %v782, %v780
        %v875 = vpack.c.b16 %v783, %v781
        %v876 = vpack.c.b16 %v786, %v784
        %v877 = vpack.c.b16 %v787, %v785
        %v878 = vpack.c.b16 %v790, %v788
        %v879 = vpack.c.b16 %v791, %v789
        %v880 = vpack.c.b16 %v794, %v792
        %v881 = vpack.c.b16 %v795, %v793
        %v882 = vpack.c.b16 %v798, %v796
        %v883 = vpack.c.b16 %v799, %v797
        %v884 = vpack.c.b16 %v802, %v800
        %v885 = vpack.c.b16 %v803, %v801
        %v886 = vpack.c.b16 %v806, %v804
        %v887 = vpack.c.b16 %v807, %v805
        %v888 = vpack.c.b16 %v810, %v808
        %v889 = vpack.c.b16 %v811, %v809
        %v890 = vpack.c.b16 %v814, %v812
        %v891 = vpack.c.b16 %v815, %v813
        %v892 = vpack.c.b16 %v818, %v816
        %v893 = vpack.c.b16 %v819, %v817
        %v894 = vpack.c.b16 %v822, %v820
        %v895 = vpack.c.b16 %v823, %v821
        %v896 = vpack.c.b16 %v826, %v824
        %v897 = vpack.c.b16 %v827, %v825
        %v898 = vpack.c.b16 %v830, %v828
        %v899 = vpack.c.b16 %v831, %v829
        %v900 = vpack.c.b16 %v834, %v832
        %v901 = vpack.c.b16 %v835, %v833
        %v902 = vpack.c.b16 %v838, %v836
        %v903 = vpack.c.b16 %v839, %v837
        %968 = vmatprep.subr.bf16.mxu0 %v855
        %969 = vmatpush1.bf16.msra.mxu0 %v854
        %970 = vmatprep.subr.bf16.mxu0 %v853
        %971 = vmatpush1.bf16.msra.mxu0 %v852
        %972 = vmatprep.subr.bf16.mxu0 %v851
        %973 = vmatpush1.bf16.msra.mxu0 %v850
        %974 = vmatprep.subr.bf16.mxu0 %v849
        %975 = vmatpush1.bf16.msra.mxu0 %v848
        %976 = vmatprep.subr.bf16.mxu0 %v847
        %977 = vmatpush1.bf16.msra.mxu0 %v846
        %978 = vmatprep.subr.bf16.mxu0 %v845
        %979 = vmatpush1.bf16.msra.mxu0 %v844
        %980 = vmatprep.subr.bf16.mxu0 %v843
        %981 = vmatpush1.bf16.msra.mxu0 %v842
        %982 = vmatprep.subr.bf16.mxu0 %v841
        %983 = vmatpush1.bf16.msra.mxu0 %v840
        %984 = vmatprep.subr.bf16.mxu0 %v871
        %985 = vmatpush2.bf16.msra.mxu0 %v870
        %986 = vmatprep.subr.bf16.mxu0 %v869
        %987 = vmatpush2.bf16.msra.mxu0 %v868
        %988 = vmatprep.subr.bf16.mxu0 %v867
        %989 = vmatpush2.bf16.msra.mxu0 %v866
        %990 = vmatprep.subr.bf16.mxu0 %v865
        %991 = vmatpush2.bf16.msra.mxu0 %v864
        %992 = vmatprep.subr.bf16.mxu0 %v863
        %993 = vmatpush2.bf16.msra.mxu0 %v862
        %994 = vmatprep.subr.bf16.mxu0 %v861
        %995 = vmatpush2.bf16.msra.mxu0 %v860
        %996 = vmatprep.subr.bf16.mxu0 %v859
        %997 = vmatpush2.bf16.msra.mxu0 %v858
        %998 = vmatprep.subr.bf16.mxu0 %v857
        %999 = vmatpush2.bf16.msra.mxu0 %v856
        %1000 = vmatprep.mubr.bf16.mxu0 %v581
        %1001 = vmatmul.mubr.bf16.gmra.mxu0 %v580
        %v1002 = vpop.f32.mrf.mxu0
        %v1003 = vadd.f32 0.0, %v1002
        %v1004 = vpop.f32.mrf.mxu0
        %v1005 = vadd.f32 0.0, %v1004
        %v1006 = vpop.f32.mrf.mxu0
        %v1007 = vpop.f32.mrf.mxu0
        %1008 = vdwg.mxu0
        %1009 = vmatprep.subr.bf16.mxu0 %v887
        %1010 = vmatpush1.bf16.msra.mxu0 %v886
        %1011 = vmatprep.subr.bf16.mxu0 %v885
        %1012 = vmatpush1.bf16.msra.mxu0 %v884
        %1013 = vmatprep.subr.bf16.mxu0 %v883
        %1014 = vmatpush1.bf16.msra.mxu0 %v882
        %1015 = vmatprep.subr.bf16.mxu0 %v881
        %1016 = vmatpush1.bf16.msra.mxu0 %v880
        %1017 = vmatprep.subr.bf16.mxu0 %v879
        %1018 = vmatpush1.bf16.msra.mxu0 %v878
        %1019 = vmatprep.subr.bf16.mxu0 %v877
        %1020 = vmatpush1.bf16.msra.mxu0 %v876
        %1021 = vmatprep.subr.bf16.mxu0 %v875
        %1022 = vmatpush1.bf16.msra.mxu0 %v874
        %1023 = vmatprep.subr.bf16.mxu0 %v873
        %1024 = vmatpush1.bf16.msra.mxu0 %v872
        %1025 = vmatprep.subr.bf16.mxu0 %v903
        %1026 = vmatpush2.bf16.msra.mxu0 %v902
        %1027 = vmatprep.subr.bf16.mxu0 %v901
        %1028 = vmatpush2.bf16.msra.mxu0 %v900
        %1029 = vmatprep.subr.bf16.mxu0 %v899
        %1030 = vmatpush2.bf16.msra.mxu0 %v898
        %1031 = vmatprep.subr.bf16.mxu0 %v897
        %1032 = vmatpush2.bf16.msra.mxu0 %v896
        %1033 = vmatprep.subr.bf16.mxu0 %v895
        %1034 = vmatpush2.bf16.msra.mxu0 %v894
        %1035 = vmatprep.subr.bf16.mxu0 %v893
        %1036 = vmatpush2.bf16.msra.mxu0 %v892
        %1037 = vmatprep.subr.bf16.mxu0 %v891
        %1038 = vmatpush2.bf16.msra.mxu0 %v890
        %1039 = vmatprep.subr.bf16.mxu0 %v889
        %1040 = vmatpush2.bf16.msra.mxu0 %v888
        %1041 = vmatprep.mubr.bf16.mxu0 %v583
        %1042 = vmatmul.mubr.bf16.gmra.mxu0 %v582
        %v1043 = vpop.f32.mrf.mxu0
        %v1044 = vadd.f32 %v1003, %v1043
        %v1045 = vpop.f32.mrf.mxu0
        %v1046 = vadd.f32 %v1005, %v1045
        %v1047 = vpop.f32.mrf.mxu0
        %v1048 = vpop.f32.mrf.mxu0
        %1049 = vdwg.mxu0
        %v1052 = vcombine.low %v1044, %v1046
        %v1054 = vunpack.c.l.s4 1983009808
        %v1055 = vunpack.c.0.s8 %v1054
        %v1056 = vlaneseq
        %v1057 = vshrl.u32 %v1056, 7
        %v1058 = vsub.s32 %v1055, %v1057
        %v1059 = vrot.slane %v1052, %v1058
        %v1061 = vadd.f32 %v556, %v1059
        %1062 = vst [vmem:[#allocation2] sm:$0xf] %v1061
        %p1063 = scmp.eq.s32.totalorder %s21, 3
        // Predicated region
        $region75: #{_lambda_.24} parent=65 // pred_check
          %p1064 = pneg %p1063
        $region76: #{_lambda_.24} parent=65 // pred_check_branch
          %1066 = sbr.rel (%p1064) target = $region78
        $region77: #{_lambda_.24} parent=65 // pred_region
          %v1067 = vld [vmem:[#allocation2] sm:$0xf]
          %v1068 = vld [vmem:[%s539] sm:$0x3]
          %v1070 = vlaneseq
          %v1071 = vshrl.u32 %v1070, 7
          %v1072 = vsub.s32 0, %v1071
          %v1073 = vrot.slane %v1068, %v1072
          %v1074 = vlaneseq
          %v1075 = vshrl.u32 %v1074, 7
          %v1076 = vsub.s32 1, %v1075
          %v1077 = vrot.slane %v1068, %v1076
          %v1078 = vcombine.low %v1073, %v1077
          %v1080 = vunpack.c.l.s4 1983009808
          %v1081 = vunpack.c.0.s8 %v1080
          %v1082 = vlaneseq
          %v1083 = vshrl.u32 %v1082, 7
          %v1084 = vsub.s32 %v1081, %v1083
          %v1085 = vrot.slane %v1078, %v1084
          %v1087 = vadd.f32 %v1067, %v1085
          %1088 = vst [vmem:[%s549] sm:$0xf] %v1087
        $region78: #{_lambda_.24} parent=65 // pred_fallthru
          _
        %s1089 = smul.u32 2, %s20
        %p1090 = scmp.lt.s32.totalorder %s19, 0
        %s1091 = scalar_select %p1090, %s19, 0
        %p1092 = scmp.lt.s32.totalorder %s1089, 7
        %s1093 = scalar_select %p1092, %s1089, 7
        %s1094 = smul.addr %s1091, 8
        %s1095 = sadd.s32 %s1093, %s1094
        %s1096 = smul.addr %s1095, 2
        %s1097 = scalar_lea.vmem %s3, %s1096
        // Predicated region
        $region79: #{_lambda_.24} parent=65 // pred_check
          %p1098 = pneg %p135
        $region80: #{_lambda_.24} parent=65 // pred_check_branch
          %1100 = sbr.rel (%p1098) target = $region82
        $region81: #{_lambda_.24} parent=65 // pred_region
          %s1101 = smul.u32 2, %s20
        $region82: #{_lambda_.24} parent=65 // pred_fallthru
          _
      $region66: #{_lambda_.24} parent=5 // pred_fallthru
        _
      %p1102 = scmp.le.s32.totalorder 2, %s9
      // Predicated region
      $region83: #{_lambda_.24} parent=5 // pred_check
        %p1103 = pneg %p1102
      $region84: #{_lambda_.24} parent=5 // pred_check_branch
        %1105 = sbr.rel (%p1103) target = $region86
      $region85: #{_lambda_.24} parent=5 // pred_region
        %s1106 = ssub.s32 %s9, 2
        // Predicated region
        $region87: #{_lambda_.24} parent=85 // pred_check
          %p1107 = pneg %p141
        $region88: #{_lambda_.24} parent=85 // pred_check_branch
          %1109 = sbr.rel (%p1107) target = $region90
        $region89: #{_lambda_.24} parent=85 // pred_region
          %s1110 = smul.u32 2, %s23
          %p1111 = scmp.lt.s32.totalorder %s22, 0
          %s1112 = scalar_select %p1111, %s22, 0
          %p1113 = scmp.lt.s32.totalorder %s1110, 7
          %s1114 = scalar_select %p1113, %s1110, 7
          %s1115 = smul.addr %s1112, 8
          %s1116 = sadd.s32 %s1114, %s1115
          %s1117 = smul.addr %s1116, 2
          %s1118 = scalar_lea.vmem %s3, %s1117
        $region90: #{_lambda_.24} parent=85 // pred_fallthru
          _
      $region86: #{_lambda_.24} parent=5 // pred_fallthru
        _
    $region6: #{_lambda_.24} parent=1 // loop_footer
      %s13 = sadd.s32 1, %s9
    $region7: #{_lambda_.24} parent=1 // loop_footer_branch
      %8 = sbr.rel target = $region3
    $region8: #{_lambda_.24} parent=1 // loop_exit
      _

// kernel: _lambda_.25
$region0: #{_lambda_.25}
  #allocation0 [shape = 'u32[]', space=smem, size = 0x4, offset = 0x4, fixed_abs, tag = 'smem constant byte address 0x4 - core index']
  #allocation1 [shape = 'u32[144,128]{1,0:T(1,128)}', space=vmem, size = 0x12000, scoped, tag = 'internal scratch']
  #allocation2 [shape = 'f32[2,256]{1,0:T(2,128)}', space=vmem, size = 0x800, scoped, tag = 'scratch operand']
  %s0 = inlined_call_operand.vmem [shape: f32[2,1024], index: 0, kind: input, shape index: {}]
  %s1 = inlined_call_operand.vmem [shape: bf16[1024,256], index: 1, kind: input, shape index: {}]
  %s2 = inlined_call_operand.vmem [shape: f32[1,256], index: 2, kind: input, shape index: {}]
  %s3 = inlined_call_operand.vmem [shape: f32[2,256], index: 3, kind: output, shape index: {}]
  %s4 = sld [smem:[#allocation0]]
  $region53: #{_lambda_.25} parent=0
    _
  %s6 = ssub.s32 1, %s4
  %s7 = scalar_select 0, %s6, %s4
  loop: start=0, step=1, limit=4
  $region2: #{_lambda_.25} parent=0 // loop_pre_header
    _
  $region3: #{_lambda_.25} parent=0 // loop_header
    %s9 = sphi 0, %s13
    %p10 = scmp.ge.s32.totalorder %s9, 4
    %s16 = sphi 0, %s35
    %s17 = sphi 0, %s31
    %s18 = sphi 0, %s27
    %s19 = sphi 0, %s16
    %s20 = sphi 0, %s17
    %s21 = sphi 0, %s18
    %s22 = sphi 0, %s19
    %s23 = sphi 0, %s20
    %s24 = sphi 0, %s21
    %s40 = sphi 0, %s42
    %s43 = sphi 0, %s40
    %s44 = sphi 0, %s43
    %s60 = sphi 0, %s44
    %s68 = sphi 0, %s70
    %s71 = sphi 0, %s68
    %s72 = sphi 0, %s71
    %s88 = sphi 0, %s72
    %s94 = sphi 0, %s96
    %s97 = sphi 0, %s94
    %s98 = sphi 0, %s97
    %s114 = sphi 0, %s98
    %s122 = sphi 0, %s124
    %s125 = sphi 0, %s122
    %s126 = sphi 0, %s125
    %s142 = sphi 0, %s126
  $region4: #{_lambda_.25} parent=0 // loop_header_branch
    %12 = sbr.rel (%p10) target = $region8
  $region5: #{_lambda_.25} parent=0 // loop_body
    %s14 = ssub.s32 %s9, 1
    %s15 = ssub.s32 %s9, 2
    %s25 = sadd.s32 1, %s18
    %p26 = scmp.ge.s32.totalorder %s25, 2
    %s27 = scalar_select %p26, 0, %s25
    %s28 = sadd.s32 1, %s17
    %s29 = scalar_select %p26, %s28, %s17
    %p30 = scmp.ge.s32.totalorder %s29, 1
    %s31 = scalar_select %p30, 0, %s29
    %s32 = sadd.s32 1, %s16
    %s33 = scalar_select %p30, %s32, %s16
    %p34 = scmp.ge.s32.totalorder %s33, 1
    %s35 = scalar_select %p34, 0, %s33
    %s36 = ssub.s32 %s16, %s35
    %s37 = ssub.s32 %s18, %s27
    %s38 = sor.u32 %s36, %s37
    %p39 = scmp.eq.s32.totalorder %s38, 0
    %s41 = sadd.s32 %s40, 1
    %s42 = scalar_select %p39, %s40, %s41
    %p45 = pneg %p39
    %p46 = scmp.eq.s32.totalorder %s9, 1
    %p47 = por %p45, %p46
    %p48 = scmp.ne.s32.totalorder %s40, %s43
    %p49 = scmp.eq.s32.totalorder %s9, 0
    %p50 = por %p48, %p49
    %p51 = scmp.ne.s32.totalorder %s40, %s43
    %p52 = scmp.eq.s32.totalorder %s14, 1
    %p53 = por %p51, %p52
    %p54 = scmp.ne.s32.totalorder %s43, %s44
    %p55 = scmp.eq.s32.totalorder %s14, 0
    %p56 = por %p54, %p55
    %p57 = scmp.ne.s32.totalorder %s43, %s44
    %p58 = scmp.eq.s32.totalorder %s15, 1
    %p59 = por %p57, %p58
    %p61 = scmp.ne.s32.totalorder %s44, %s60
    %p62 = scmp.eq.s32.totalorder %s15, 0
    %p63 = por %p61, %p62
    %s64 = ssub.s32 %s18, %s27
    %s65 = ssub.s32 %s17, %s31
    %s66 = sor.u32 %s64, %s65
    %p67 = scmp.eq.s32.totalorder %s66, 0
    %s69 = sadd.s32 %s68, 1
    %s70 = scalar_select %p67, %s68, %s69
    %p73 = pneg %p67
    %p74 = scmp.eq.s32.totalorder %s9, 1
    %p75 = por %p73, %p74
    %p76 = scmp.ne.s32.totalorder %s68, %s71
    %p77 = scmp.eq.s32.totalorder %s9, 0
    %p78 = por %p76, %p77
    %p79 = scmp.ne.s32.totalorder %s68, %s71
    %p80 = scmp.eq.s32.totalorder %s14, 1
    %p81 = por %p79, %p80
    %p82 = scmp.ne.s32.totalorder %s71, %s72
    %p83 = scmp.eq.s32.totalorder %s14, 0
    %p84 = por %p82, %p83
    %p85 = scmp.ne.s32.totalorder %s71, %s72
    %p86 = scmp.eq.s32.totalorder %s15, 1
    %p87 = por %p85, %p86
    %p89 = scmp.ne.s32.totalorder %s72, %s88
    %p90 = scmp.eq.s32.totalorder %s15, 0
    %p91 = por %p89, %p90
    %s92 = ssub.s32 %s17, %s31
    %p93 = scmp.eq.s32.totalorder %s92, 0
    %s95 = sadd.s32 %s94, 1
    %s96 = scalar_select %p93, %s94, %s95
    %p99 = pneg %p93
    %p100 = scmp.eq.s32.totalorder %s9, 1
    %p101 = por %p99, %p100
    %p102 = scmp.ne.s32.totalorder %s94, %s97
    %p103 = scmp.eq.s32.totalorder %s9, 0
    %p104 = por %p102, %p103
    %p105 = scmp.ne.s32.totalorder %s94, %s97
    %p106 = scmp.eq.s32.totalorder %s14, 1
    %p107 = por %p105, %p106
    %p108 = scmp.ne.s32.totalorder %s97, %s98
    %p109 = scmp.eq.s32.totalorder %s14, 0
    %p110 = por %p108, %p109
    %p111 = scmp.ne.s32.totalorder %s97, %s98
    %p112 = scmp.eq.s32.totalorder %s15, 1
    %p113 = por %p111, %p112
    %p115 = scmp.ne.s32.totalorder %s98, %s114
    %p116 = scmp.eq.s32.totalorder %s15, 0
    %p117 = por %p115, %p116
    %s118 = ssub.s32 %s16, %s35
    %s119 = ssub.s32 %s17, %s31
    %s120 = sor.u32 %s118, %s119
    %p121 = scmp.eq.s32.totalorder %s120, 0
    %s123 = sadd.s32 %s122, 1
    %s124 = scalar_select %p121, %s122, %s123
    %p127 = pneg %p121
    %p128 = scmp.eq.s32.totalorder %s9, 1
    %p129 = por %p127, %p128
    %p130 = scmp.ne.s32.totalorder %s122, %s125
    %p131 = scmp.eq.s32.totalorder %s9, 0
    %p132 = por %p130, %p131
    %p133 = scmp.ne.s32.totalorder %s122, %s125
    %p134 = scmp.eq.s32.totalorder %s14, 1
    %p135 = por %p133, %p134
    %p136 = scmp.ne.s32.totalorder %s125, %s126
    %p137 = scmp.eq.s32.totalorder %s14, 0
    %p138 = por %p136, %p137
    %p139 = scmp.ne.s32.totalorder %s125, %s126
    %p140 = scmp.eq.s32.totalorder %s15, 1
    %p141 = por %p139, %p140
    %p143 = scmp.ne.s32.totalorder %s126, %s142
    %p144 = scmp.eq.s32.totalorder %s15, 0
    %p145 = por %p143, %p144
    %p146 = scmp.le.s32.totalorder 1, %s9
    %p147 = scmp.lt.s32.totalorder %s9, 3
    %p148 = pnand %p146, %p147
    %p149 = pneg %p148
    // Predicated region
    $region9: #{_lambda_.25} parent=5 // pred_check
      _
    $region10: #{_lambda_.25} parent=5 // pred_check_branch
      %151 = sbr.rel (%p148) target = $region12
    $region11: #{_lambda_.25} parent=5 // pred_region
      %s152 = ssub.s32 %s9, 1
      // Predicated region
      $region13: #{_lambda_.25} parent=11 // pred_check
        %p153 = pneg %p110
      $region14: #{_lambda_.25} parent=11 // pred_check_branch
        %155 = sbr.rel (%p153) target = $region16
      $region15: #{_lambda_.25} parent=11 // pred_region
        %s156 = smul.u32 2, %s20
        %p157 = scmp.lt.s32.totalorder %s156, 1
        %s158 = scalar_select %p157, %s156, 1
        %s159 = scalar_lea.vmem %s2, %s158
        %s160 = smul.u32 2, %s20
      $region16: #{_lambda_.25} parent=11 // pred_fallthru
        _
    $region12: #{_lambda_.25} parent=5 // pred_fallthru
      _
    %p161 = scmp.lt.s32.totalorder %s9, 2
    // Predicated region
    $region17: #{_lambda_.25} parent=5 // pred_check
      %p162 = pneg %p161
    $region18: #{_lambda_.25} parent=5 // pred_check_branch
      %164 = sbr.rel (%p162) target = $region20
    $region19: #{_lambda_.25} parent=5 // pred_region
      // Predicated region
      $region21: #{_lambda_.25} parent=19 // pred_check
        %p165 = pneg %p50
      $region22: #{_lambda_.25} parent=19 // pred_check_branch
        %167 = sbr.rel (%p165) target = $region24
      $region23: #{_lambda_.25} parent=19 // pred_region
        %s168 = smul.u32 4, %s18
        %p169 = scmp.lt.s32.totalorder %s16, 0
        %s170 = scalar_select %p169, %s16, 0
        %p171 = scmp.lt.s32.totalorder %s168, 7
        %s172 = scalar_select %p171, %s168, 7
        %s173 = smul.addr %s170, 8
        %s174 = sadd.s32 %s172, %s173
        %s175 = smul.addr %s174, 2
        %s176 = scalar_lea.vmem %s0, %s175
        %s177 = smul.u32 4, %s18
      $region24: #{_lambda_.25} parent=19 // pred_fallthru
        _
      // Predicated region
      $region25: #{_lambda_.25} parent=19 // pred_check
        %p178 = pneg %p78
      $region26: #{_lambda_.25} parent=19 // pred_check_branch
        %180 = sbr.rel (%p178) target = $region28
      $region27: #{_lambda_.25} parent=19 // pred_region
        %s181 = smul.u32 64, %s18
        %s182 = smul.u32 2, %s17
        %p183 = scmp.lt.s32.totalorder %s181, 127
        %s184 = scalar_select %p183, %s181, 127
        %p185 = scmp.lt.s32.totalorder %s182, 1
        %s186 = scalar_select %p185, %s182, 1
        %s187 = smul.addr %s184, 2
        %s188 = sadd.s32 %s186, %s187
        %s189 = smul.addr %s188, 4
        %s190 = scalar_lea.vmem %s1, %s189
        %s191 = smul.u32 64, %s18
        %s192 = smul.u32 2, %s17
      $region28: #{_lambda_.25} parent=19 // pred_fallthru
        _
    $region20: #{_lambda_.25} parent=5 // pred_fallthru
      _
    %p193 = scmp.le.s32.totalorder 1, %s9
    %p194 = scmp.lt.s32.totalorder %s9, 3
    %p195 = pnand %p193, %p194
    %p196 = pneg %p195
    // Predicated region
    $region29: #{_lambda_.25} parent=5 // pred_check
      _
    $region30: #{_lambda_.25} parent=5 // pred_check_branch
      %198 = sbr.rel (%p195) target = $region32
    $region31: #{_lambda_.25} parent=5 // pred_region
      %s199 = ssub.s32 %s9, 1
      %s200 = smul.u32 4, %s21
      %p201 = scmp.lt.s32.totalorder %s19, 0
      %s202 = scalar_select %p201, %s19, 0
      %p203 = scmp.lt.s32.totalorder %s200, 7
      %s204 = scalar_select %p203, %s200, 7
      %s205 = smul.addr %s202, 8
      %s206 = sadd.s32 %s204, %s205
      %s207 = smul.addr %s206, 2
      %s208 = scalar_lea.vmem %s0, %s207
      %p209 = pneg %p56
      %p210 = pneg %p53
      %s211 = smul.u32 64, %s21
      %s212 = smul.u32 2, %s20
      %p213 = scmp.lt.s32.totalorder %s211, 127
      %s214 = scalar_select %p213, %s211, 127
      %p215 = scmp.lt.s32.totalorder %s212, 1
      %s216 = scalar_select %p215, %s212, 1
      %s217 = smul.addr %s214, 2
      %s218 = sadd.s32 %s216, %s217
      %s219 = smul.addr %s218, 4
      %s220 = scalar_lea.vmem %s1, %s219
      %p221 = pneg %p84
      %p222 = pneg %p81
      %s223 = smul.u32 2, %s20
      %p224 = scmp.lt.s32.totalorder %s223, 1
      %s225 = scalar_select %p224, %s223, 1
      %s226 = scalar_lea.vmem %s2, %s225
      %p227 = pneg %p110
      %p228 = pneg %p107
      %p229 = pneg %p138
      %p230 = pneg %p135
      %s231 = smul.u32 2, %s20
      %p232 = scmp.lt.s32.totalorder %s19, 0
      %s233 = scalar_select %p232, %s19, 0
      %p234 = scmp.lt.s32.totalorder %s231, 1
      %s235 = scalar_select %p234, %s231, 1
      %s236 = smul.addr %s233, 2
      %s237 = sadd.s32 %s235, %s236
      %s238 = smul.addr %s237, 2
      %s239 = scalar_lea.vmem %s3, %s238
      %s240 = smul.u32 4, %s21
      %p241 = scmp.lt.s32.totalorder %s19, 0
      %s242 = scalar_select %p241, %s19, 0
      %p243 = scmp.lt.s32.totalorder %s240, 7
      %s244 = scalar_select %p243, %s240, 7
      %s245 = smul.addr %s242, 8
      %s246 = sadd.s32 %s244, %s245
      %s247 = smul.addr %s246, 2
      %s248 = scalar_lea.vmem %s0, %s247
      %s249 = smul.u32 4, %s21
      %s250 = smul.u32 64, %s21
      %s251 = smul.u32 2, %s20
      %p252 = scmp.lt.s32.totalorder %s250, 127
      %s253 = scalar_select %p252, %s250, 127
      %p254 = scmp.lt.s32.totalorder %s251, 1
      %s255 = scalar_select %p254, %s251, 1
      %s256 = smul.addr %s253, 2
      %s257 = sadd.s32 %s255, %s256
      %s258 = smul.addr %s257, 4
      %s259 = scalar_lea.vmem %s1, %s258
      %s260 = smul.u32 64, %s21
      %s261 = smul.u32 2, %s20
      %s262 = smul.u32 2, %s20
      %p263 = scmp.lt.s32.totalorder %s262, 1
      %s264 = scalar_select %p263, %s262, 1
      %s265 = scalar_lea.vmem %s2, %s264
      %s266 = smul.u32 2, %s20
      %s267 = smul.u32 2, %s20
      %p268 = scmp.lt.s32.totalorder %s19, 0
      %s269 = scalar_select %p268, %s19, 0
      %p270 = scmp.lt.s32.totalorder %s267, 1
      %s271 = scalar_select %p270, %s267, 1
      %s272 = smul.addr %s269, 2
      %s273 = sadd.s32 %s271, %s272
      %s274 = smul.addr %s273, 2
      %s275 = scalar_lea.vmem %s3, %s274
      %s276 = smul.u32 2, %s20
      %p277 = scmp.eq.s32.totalorder %s21, 0
      // Predicated region
      $region33: #{_lambda_.25} parent=31 // pred_check
        %p278 = pneg %p277
      $region34: #{_lambda_.25} parent=31 // pred_check_branch
        %280 = sbr.rel (%p278) target = $region36
      $region35: #{_lambda_.25} parent=31 // pred_region
        %281 = vst [vmem:[#allocation2] sm:$0xf] 0.0
      $region36: #{_lambda_.25} parent=31 // pred_fallthru
        _
      %v282 = vld [vmem:[#allocation2] sm:$0xf]
      %v283 = vld [vmem:[%s248] sm:$0xff]
      %v285 = vcombine.high %v283, %v283
      %v287 = vunpack.c.l.s4 1983009808
      %v288 = vunpack.c.0.s8 %v287
      %v289 = vlaneseq
      %v290 = vshrl.u32 %v289, 7
      %v291 = vsub.s32 %v288, %v290
      %v292 = vrot.slane %v283, %v291
      %v294 = vunpack.c.l.s4 1983009808
      %v295 = vunpack.c.0.s8 %v294
      %v296 = vlaneseq
      %v297 = vshrl.u32 %v296, 7
      %v298 = vsub.s32 %v295, %v297
      %v299 = vrot.slane %v285, %v298
      %v300 = vcombine.high %v292, %v292
      %v301 = vcombine.high %v299, %v299
      %v306 = vpack.c.bf16 %v292, %v292
      %v307 = vpack.c.bf16 %v300, %v300
      %v308 = vpack.c.bf16 %v299, %v299
      %v309 = vpack.c.bf16 %v301, %v301
      %v310 = vld [vmem:[%s259] sm:$0xff]
      %v311 = vld [vmem:[%s259 + $0x8] sm:$0xff]
      %v312 = vld [vmem:[%s259 + $0x10] sm:$0xff]
      %v313 = vld [vmem:[%s259 + $0x18] sm:$0xff]
      %v314 = vld [vmem:[%s259 + $0x20] sm:$0xff]
      %v315 = vld [vmem:[%s259 + $0x28] sm:$0xff]
      %v316 = vld [vmem:[%s259 + $0x30] sm:$0xff]
      %v317 = vld [vmem:[%s259 + $0x38] sm:$0xff]
      %v318 = vld [vmem:[%s259 + $0x40] sm:$0xff]
      %v319 = vld [vmem:[%s259 + $0x48] sm:$0xff]
      %v320 = vld [vmem:[%s259 + $0x50] sm:$0xff]
      %v321 = vld [vmem:[%s259 + $0x58] sm:$0xff]
      %v322 = vld [vmem:[%s259 + $0x60] sm:$0xff]
      %v323 = vld [vmem:[%s259 + $0x68] sm:$0xff]
      %v324 = vld [vmem:[%s259 + $0x70] sm:$0xff]
      %v325 = vld [vmem:[%s259 + $0x78] sm:$0xff]
      %v326 = vld [vmem:[%s259 + $0x80] sm:$0xff]
      %v327 = vld [vmem:[%s259 + $0x88] sm:$0xff]
      %v328 = vld [vmem:[%s259 + $0x90] sm:$0xff]
      %v329 = vld [vmem:[%s259 + $0x98] sm:$0xff]
      %v330 = vld [vmem:[%s259 + $0xa0] sm:$0xff]
      %v331 = vld [vmem:[%s259 + $0xa8] sm:$0xff]
      %v332 = vld [vmem:[%s259 + $0xb0] sm:$0xff]
      %v333 = vld [vmem:[%s259 + $0xb8] sm:$0xff]
      %v334 = vld [vmem:[%s259 + $0xc0] sm:$0xff]
      %v335 = vld [vmem:[%s259 + $0xc8] sm:$0xff]
      %v336 = vld [vmem:[%s259 + $0xd0] sm:$0xff]
      %v337 = vld [vmem:[%s259 + $0xd8] sm:$0xff]
      %v338 = vld [vmem:[%s259 + $0xe0] sm:$0xff]
      %v339 = vld [vmem:[%s259 + $0xe8] sm:$0xff]
      %v340 = vld [vmem:[%s259 + $0xf0] sm:$0xff]
      %v341 = vld [vmem:[%s259 + $0xf8] sm:$0xff]
      %v342 = vld [vmem:[%s259 + $0x100] sm:$0xff]
      %v343 = vld [vmem:[%s259 + $0x108] sm:$0xff]
      %v344 = vld [vmem:[%s259 + $0x110] sm:$0xff]
      %v345 = vld [vmem:[%s259 + $0x118] sm:$0xff]
      %v346 = vld [vmem:[%s259 + $0x120] sm:$0xff]
      %v347 = vld [vmem:[%s259 + $0x128] sm:$0xff]
      %v348 = vld [vmem:[%s259 + $0x130] sm:$0xff]
      %v349 = vld [vmem:[%s259 + $0x138] sm:$0xff]
      %v350 = vld [vmem:[%s259 + $0x140] sm:$0xff]
      %v351 = vld [vmem:[%s259 + $0x148] sm:$0xff]
      %v352 = vld [vmem:[%s259 + $0x150] sm:$0xff]
      %v353 = vld [vmem:[%s259 + $0x158] sm:$0xff]
      %v354 = vld [vmem:[%s259 + $0x160] sm:$0xff]
      %v355 = vld [vmem:[%s259 + $0x168] sm:$0xff]
      %v356 = vld [vmem:[%s259 + $0x170] sm:$0xff]
      %v357 = vld [vmem:[%s259 + $0x178] sm:$0xff]
      %v358 = vld [vmem:[%s259 + $0x180] sm:$0xff]
      %v359 = vld [vmem:[%s259 + $0x188] sm:$0xff]
      %v360 = vld [vmem:[%s259 + $0x190] sm:$0xff]
      %v361 = vld [vmem:[%s259 + $0x198] sm:$0xff]
      %v362 = vld [vmem:[%s259 + $0x1a0] sm:$0xff]
      %v363 = vld [vmem:[%s259 + $0x1a8] sm:$0xff]
      %v364 = vld [vmem:[%s259 + $0x1b0] sm:$0xff]
      %v365 = vld [vmem:[%s259 + $0x1b8] sm:$0xff]
      %v366 = vld [vmem:[%s259 + $0x1c0] sm:$0xff]
      %v367 = vld [vmem:[%s259 + $0x1c8] sm:$0xff]
      %v368 = vld [vmem:[%s259 + $0x1d0] sm:$0xff]
      %v369 = vld [vmem:[%s259 + $0x1d8] sm:$0xff]
      %v370 = vld [vmem:[%s259 + $0x1e0] sm:$0xff]
      %v371 = vld [vmem:[%s259 + $0x1e8] sm:$0xff]
      %v372 = vld [vmem:[%s259 + $0x1f0] sm:$0xff]
      %v373 = vld [vmem:[%s259 + $0x1f8] sm:$0xff]
      %v438 = vunpack.c.l.b16 %v310
      %v439 = vunpack.c.h.b16 %v310
      %v440 = vunpack.c.l.b16 %v311
      %v441 = vunpack.c.h.b16 %v311
      %v442 = vunpack.c.l.b16 %v312
      %v443 = vunpack.c.h.b16 %v312
      %v444 = vunpack.c.l.b16 %v313
      %v445 = vunpack.c.h.b16 %v313
      %v446 = vunpack.c.l.b16 %v314
      %v447 = vunpack.c.h.b16 %v314
      %v448 = vunpack.c.l.b16 %v315
      %v449 = vunpack.c.h.b16 %v315
      %v450 = vunpack.c.l.b16 %v316
      %v451 = vunpack.c.h.b16 %v316
      %v452 = vunpack.c.l.b16 %v317
      %v453 = vunpack.c.h.b16 %v317
      %v454 = vunpack.c.l.b16 %v318
      %v455 = vunpack.c.h.b16 %v318
      %v456 = vunpack.c.l.b16 %v319
      %v457 = vunpack.c.h.b16 %v319
      %v458 = vunpack.c.l.b16 %v320
      %v459 = vunpack.c.h.b16 %v320
      %v460 = vunpack.c.l.b16 %v321
      %v461 = vunpack.c.h.b16 %v321
      %v462 = vunpack.c.l.b16 %v322
      %v463 = vunpack.c.h.b16 %v322
      %v464 = vunpack.c.l.b16 %v323
      %v465 = vunpack.c.h.b16 %v323
      %v466 = vunpack.c.l.b16 %v324
      %v467 = vunpack.c.h.b16 %v324
      %v468 = vunpack.c.l.b16 %v325
      %v469 = vunpack.c.h.b16 %v325
      %v470 = vunpack.c.l.b16 %v326
      %v471 = vunpack.c.h.b16 %v326
      %v472 = vunpack.c.l.b16 %v327
      %v473 = vunpack.c.h.b16 %v327
      %v474 = vunpack.c.l.b16 %v328
      %v475 = vunpack.c.h.b16 %v328
      %v476 = vunpack.c.l.b16 %v329
      %v477 = vunpack.c.h.b16 %v329
      %v478 = vunpack.c.l.b16 %v330
      %v479 = vunpack.c.h.b16 %v330
      %v480 = vunpack.c.l.b16 %v331
      %v481 = vunpack.c.h.b16 %v331
      %v482 = vunpack.c.l.b16 %v332
      %v483 = vunpack.c.h.b16 %v332
      %v484 = vunpack.c.l.b16 %v333
      %v485 = vunpack.c.h.b16 %v333
      %v486 = vunpack.c.l.b16 %v334
      %v487 = vunpack.c.h.b16 %v334
      %v488 = vunpack.c.l.b16 %v335
      %v489 = vunpack.c.h.b16 %v335
      %v490 = vunpack.c.l.b16 %v336
      %v491 = vunpack.c.h.b16 %v336
      %v492 = vunpack.c.l.b16 %v337
      %v493 = vunpack.c.h.b16 %v337
      %v494 = vunpack.c.l.b16 %v338
      %v495 = vunpack.c.h.b16 %v338
      %v496 = vunpack.c.l.b16 %v339
      %v497 = vunpack.c.h.b16 %v339
      %v498 = vunpack.c.l.b16 %v340
      %v499 = vunpack.c.h.b16 %v340
      %v500 = vunpack.c.l.b16 %v341
      %v501 = vunpack.c.h.b16 %v341
      %v502 = vunpack.c.l.b16 %v342
      %v503 = vunpack.c.h.b16 %v342
      %v504 = vunpack.c.l.b16 %v343
      %v505 = vunpack.c.h.b16 %v343
      %v506 = vunpack.c.l.b16 %v344
      %v507 = vunpack.c.h.b16 %v344
      %v508 = vunpack.c.l.b16 %v345
      %v509 = vunpack.c.h.b16 %v345
      %v510 = vunpack.c.l.b16 %v346
      %v511 = vunpack.c.h.b16 %v346
      %v512 = vunpack.c.l.b16 %v347
      %v513 = vunpack.c.h.b16 %v347
      %v514 = vunpack.c.l.b16 %v348
      %v515 = vunpack.c.h.b16 %v348
      %v516 = vunpack.c.l.b16 %v349
      %v517 = vunpack.c.h.b16 %v349
      %v518 = vunpack.c.l.b16 %v350
      %v519 = vunpack.c.h.b16 %v350
      %v520 = vunpack.c.l.b16 %v351
      %v521 = vunpack.c.h.b16 %v351
      %v522 = vunpack.c.l.b16 %v352
      %v523 = vunpack.c.h.b16 %v352
      %v524 = vunpack.c.l.b16 %v353
      %v525 = vunpack.c.h.b16 %v353
      %v526 = vunpack.c.l.b16 %v354
      %v527 = vunpack.c.h.b16 %v354
      %v528 = vunpack.c.l.b16 %v355
      %v529 = vunpack.c.h.b16 %v355
      %v530 = vunpack.c.l.b16 %v356
      %v531 = vunpack.c.h.b16 %v356
      %v532 = vunpack.c.l.b16 %v357
      %v533 = vunpack.c.h.b16 %v357
      %v534 = vunpack.c.l.b16 %v358
      %v535 = vunpack.c.h.b16 %v358
      %v536 = vunpack.c.l.b16 %v359
      %v537 = vunpack.c.h.b16 %v359
      %v538 = vunpack.c.l.b16 %v360
      %v539 = vunpack.c.h.b16 %v360
      %v540 = vunpack.c.l.b16 %v361
      %v541 = vunpack.c.h.b16 %v361
      %v542 = vunpack.c.l.b16 %v362
      %v543 = vunpack.c.h.b16 %v362
      %v544 = vunpack.c.l.b16 %v363
      %v545 = vunpack.c.h.b16 %v363
      %v546 = vunpack.c.l.b16 %v364
      %v547 = vunpack.c.h.b16 %v364
      %v548 = vunpack.c.l.b16 %v365
      %v549 = vunpack.c.h.b16 %v365
      %v550 = vunpack.c.l.b16 %v366
      %v551 = vunpack.c.h.b16 %v366
      %v552 = vunpack.c.l.b16 %v367
      %v553 = vunpack.c.h.b16 %v367
      %v554 = vunpack.c.l.b16 %v368
      %v555 = vunpack.c.h.b16 %v368
      %v556 = vunpack.c.l.b16 %v369
      %v557 = vunpack.c.h.b16 %v369
      %v558 = vunpack.c.l.b16 %v370
      %v559 = vunpack.c.h.b16 %v370
      %v560 = vunpack.c.l.b16 %v371
      %v561 = vunpack.c.h.b16 %v371
      %v562 = vunpack.c.l.b16 %v372
      %v563 = vunpack.c.h.b16 %v372
      %v564 = vunpack.c.l.b16 %v373
      %v565 = vunpack.c.h.b16 %v373
      %v566 = vpack.c.b16 %v440, %v438
      %v567 = vpack.c.b16 %v441, %v439
      %v568 = vpack.c.b16 %v444, %v442
      %v569 = vpack.c.b16 %v445, %v443
      %v570 = vpack.c.b16 %v448, %v446
      %v571 = vpack.c.b16 %v449, %v447
      %v572 = vpack.c.b16 %v452, %v450
      %v573 = vpack.c.b16 %v453, %v451
      %v574 = vpack.c.b16 %v456, %v454
      %v575 = vpack.c.b16 %v457, %v455
      %v576 = vpack.c.b16 %v460, %v458
      %v577 = vpack.c.b16 %v461, %v459
      %v578 = vpack.c.b16 %v464, %v462
      %v579 = vpack.c.b16 %v465, %v463
      %v580 = vpack.c.b16 %v468, %v466
      %v581 = vpack.c.b16 %v469, %v467
      %v582 = vpack.c.b16 %v472, %v470
      %v583 = vpack.c.b16 %v473, %v471
      %v584 = vpack.c.b16 %v476, %v474
      %v585 = vpack.c.b16 %v477, %v475
      %v586 = vpack.c.b16 %v480, %v478
      %v587 = vpack.c.b16 %v481, %v479
      %v588 = vpack.c.b16 %v484, %v482
      %v589 = vpack.c.b16 %v485, %v483
      %v590 = vpack.c.b16 %v488, %v486
      %v591 = vpack.c.b16 %v489, %v487
      %v592 = vpack.c.b16 %v492, %v490
      %v593 = vpack.c.b16 %v493, %v491
      %v594 = vpack.c.b16 %v496, %v494
      %v595 = vpack.c.b16 %v497, %v495
      %v596 = vpack.c.b16 %v500, %v498
      %v597 = vpack.c.b16 %v501, %v499
      %v598 = vpack.c.b16 %v504, %v502
      %v599 = vpack.c.b16 %v505, %v503
      %v600 = vpack.c.b16 %v508, %v506
      %v601 = vpack.c.b16 %v509, %v507
      %v602 = vpack.c.b16 %v512, %v510
      %v603 = vpack.c.b16 %v513, %v511
      %v604 = vpack.c.b16 %v516, %v514
      %v605 = vpack.c.b16 %v517, %v515
      %v606 = vpack.c.b16 %v520, %v518
      %v607 = vpack.c.b16 %v521, %v519
      %v608 = vpack.c.b16 %v524, %v522
      %v609 = vpack.c.b16 %v525, %v523
      %v610 = vpack.c.b16 %v528, %v526
      %v611 = vpack.c.b16 %v529, %v527
      %v612 = vpack.c.b16 %v532, %v530
      %v613 = vpack.c.b16 %v533, %v531
      %v614 = vpack.c.b16 %v536, %v534
      %v615 = vpack.c.b16 %v537, %v535
      %v616 = vpack.c.b16 %v540, %v538
      %v617 = vpack.c.b16 %v541, %v539
      %v618 = vpack.c.b16 %v544, %v542
      %v619 = vpack.c.b16 %v545, %v543
      %v620 = vpack.c.b16 %v548, %v546
      %v621 = vpack.c.b16 %v549, %v547
      %v622 = vpack.c.b16 %v552, %v550
      %v623 = vpack.c.b16 %v553, %v551
      %v624 = vpack.c.b16 %v556, %v554
      %v625 = vpack.c.b16 %v557, %v555
      %v626 = vpack.c.b16 %v560, %v558
      %v627 = vpack.c.b16 %v561, %v559
      %v628 = vpack.c.b16 %v564, %v562
      %v629 = vpack.c.b16 %v565, %v563
      %694 = vmatprep.subr.bf16.mxu0 %v581
      %695 = vmatpush1.bf16.msra.mxu0 %v580
      %696 = vmatprep.subr.bf16.mxu0 %v579
      %697 = vmatpush1.bf16.msra.mxu0 %v578
      %698 = vmatprep.subr.bf16.mxu0 %v577
      %699 = vmatpush1.bf16.msra.mxu0 %v576
      %700 = vmatprep.subr.bf16.mxu0 %v575
      %701 = vmatpush1.bf16.msra.mxu0 %v574
      %702 = vmatprep.subr.bf16.mxu0 %v573
      %703 = vmatpush1.bf16.msra.mxu0 %v572
      %704 = vmatprep.subr.bf16.mxu0 %v571
      %705 = vmatpush1.bf16.msra.mxu0 %v570
      %706 = vmatprep.subr.bf16.mxu0 %v569
      %707 = vmatpush1.bf16.msra.mxu0 %v568
      %708 = vmatprep.subr.bf16.mxu0 %v567
      %709 = vmatpush1.bf16.msra.mxu0 %v566
      %710 = vmatprep.subr.bf16.mxu0 %v597
      %711 = vmatpush2.bf16.msra.mxu0 %v596
      %712 = vmatprep.subr.bf16.mxu0 %v595
      %713 = vmatpush2.bf16.msra.mxu0 %v594
      %714 = vmatprep.subr.bf16.mxu0 %v593
      %715 = vmatpush2.bf16.msra.mxu0 %v592
      %716 = vmatprep.subr.bf16.mxu0 %v591
      %717 = vmatpush2.bf16.msra.mxu0 %v590
      %718 = vmatprep.subr.bf16.mxu0 %v589
      %719 = vmatpush2.bf16.msra.mxu0 %v588
      %720 = vmatprep.subr.bf16.mxu0 %v587
      %721 = vmatpush2.bf16.msra.mxu0 %v586
      %722 = vmatprep.subr.bf16.mxu0 %v585
      %723 = vmatpush2.bf16.msra.mxu0 %v584
      %724 = vmatprep.subr.bf16.mxu0 %v583
      %725 = vmatpush2.bf16.msra.mxu0 %v582
      %726 = vmatprep.mubr.bf16.mxu0 %v307
      %727 = vmatmul.mubr.bf16.gmra.mxu0 %v306
      %v728 = vpop.f32.mrf.mxu0
      %v729 = vadd.f32 0.0, %v728
      %v730 = vpop.f32.mrf.mxu0
      %v731 = vadd.f32 0.0, %v730
      %v732 = vpop.f32.mrf.mxu0
      %v733 = vpop.f32.mrf.mxu0
      %734 = vdwg.mxu0
      %735 = vmatprep.subr.bf16.mxu0 %v613
      %736 = vmatpush1.bf16.msra.mxu0 %v612
      %737 = vmatprep.subr.bf16.mxu0 %v611
      %738 = vmatpush1.bf16.msra.mxu0 %v610
      %739 = vmatprep.subr.bf16.mxu0 %v609
      %740 = vmatpush1.bf16.msra.mxu0 %v608
      %741 = vmatprep.subr.bf16.mxu0 %v607
      %742 = vmatpush1.bf16.msra.mxu0 %v606
      %743 = vmatprep.subr.bf16.mxu0 %v605
      %744 = vmatpush1.bf16.msra.mxu0 %v604
      %745 = vmatprep.subr.bf16.mxu0 %v603
      %746 = vmatpush1.bf16.msra.mxu0 %v602
      %747 = vmatprep.subr.bf16.mxu0 %v601
      %748 = vmatpush1.bf16.msra.mxu0 %v600
      %749 = vmatprep.subr.bf16.mxu0 %v599
      %750 = vmatpush1.bf16.msra.mxu0 %v598
      %751 = vmatprep.subr.bf16.mxu0 %v629
      %752 = vmatpush2.bf16.msra.mxu0 %v628
      %753 = vmatprep.subr.bf16.mxu0 %v627
      %754 = vmatpush2.bf16.msra.mxu0 %v626
      %755 = vmatprep.subr.bf16.mxu0 %v625
      %756 = vmatpush2.bf16.msra.mxu0 %v624
      %757 = vmatprep.subr.bf16.mxu0 %v623
      %758 = vmatpush2.bf16.msra.mxu0 %v622
      %759 = vmatprep.subr.bf16.mxu0 %v621
      %760 = vmatpush2.bf16.msra.mxu0 %v620
      %761 = vmatprep.subr.bf16.mxu0 %v619
      %762 = vmatpush2.bf16.msra.mxu0 %v618
      %763 = vmatprep.subr.bf16.mxu0 %v617
      %764 = vmatpush2.bf16.msra.mxu0 %v616
      %765 = vmatprep.subr.bf16.mxu0 %v615
      %766 = vmatpush2.bf16.msra.mxu0 %v614
      %767 = vmatprep.mubr.bf16.mxu0 %v309
      %768 = vmatmul.mubr.bf16.gmra.mxu0 %v308
      %v769 = vpop.f32.mrf.mxu0
      %v770 = vadd.f32 %v729, %v769
      %v771 = vpop.f32.mrf.mxu0
      %v772 = vadd.f32 %v731, %v771
      %v773 = vpop.f32.mrf.mxu0
      %v774 = vpop.f32.mrf.mxu0
      %775 = vdwg.mxu0
      %v778 = vcombine.low %v770, %v772
      %v780 = vunpack.c.l.s4 1983009808
      %v781 = vunpack.c.0.s8 %v780
      %v782 = vlaneseq
      %v783 = vshrl.u32 %v782, 7
      %v784 = vsub.s32 %v781, %v783
      %v785 = vrot.slane %v778, %v784
      %v787 = vadd.f32 %v282, %v785
      %788 = vst [vmem:[#allocation2] sm:$0xf] %v787
      %p789 = scmp.eq.s32.totalorder %s21, 1
      // Predicated region
      $region37: #{_lambda_.25} parent=31 // pred_check
        %p790 = pneg %p789
      $region38: #{_lambda_.25} parent=31 // pred_check_branch
        %792 = sbr.rel (%p790) target = $region40
      $region39: #{_lambda_.25} parent=31 // pred_region
        %v793 = vld [vmem:[#allocation2] sm:$0xf]
        %v794 = vld [vmem:[%s265] sm:$0x3]
        %v796 = vlaneseq
        %v797 = vshrl.u32 %v796, 7
        %v798 = vsub.s32 0, %v797
        %v799 = vrot.slane %v794, %v798
        %v800 = vlaneseq
        %v801 = vshrl.u32 %v800, 7
        %v802 = vsub.s32 1, %v801
        %v803 = vrot.slane %v794, %v802
        %v804 = vcombine.low %v799, %v803
        %v806 = vunpack.c.l.s4 1983009808
        %v807 = vunpack.c.0.s8 %v806
        %v808 = vlaneseq
        %v809 = vshrl.u32 %v808, 7
        %v810 = vsub.s32 %v807, %v809
        %v811 = vrot.slane %v804, %v810
        %v813 = vadd.f32 %v793, %v811
        %814 = vst [vmem:[%s275] sm:$0xf] %v813
      $region40: #{_lambda_.25} parent=31 // pred_fallthru
        _
      %s815 = smul.u32 2, %s20
      %p816 = scmp.lt.s32.totalorder %s19, 0
      %s817 = scalar_select %p816, %s19, 0
      %p818 = scmp.lt.s32.totalorder %s815, 1
      %s819 = scalar_select %p818, %s815, 1
      %s820 = smul.addr %s817, 2
      %s821 = sadd.s32 %s819, %s820
      %s822 = smul.addr %s821, 2
      %s823 = scalar_lea.vmem %s3, %s822
      // Predicated region
      $region41: #{_lambda_.25} parent=31 // pred_check
        %p824 = pneg %p135
      $region42: #{_lambda_.25} parent=31 // pred_check_branch
        %826 = sbr.rel (%p824) target = $region44
      $region43: #{_lambda_.25} parent=31 // pred_region
        %s827 = smul.u32 2, %s20
      $region44: #{_lambda_.25} parent=31 // pred_fallthru
        _
      // Predicated region
      $region45: #{_lambda_.25} parent=31 // pred_check
        %p828 = pneg %p135
      $region46: #{_lambda_.25} parent=31 // pred_check_branch
        %830 = sbr.rel (%p828) target = $region48
      $region47: #{_lambda_.25} parent=31 // pred_region
        %s831 = smul.u32 2, %s20
        %p832 = scmp.lt.s32.totalorder %s19, 0
        %s833 = scalar_select %p832, %s19, 0
        %p834 = scmp.lt.s32.totalorder %s831, 1
        %s835 = scalar_select %p834, %s831, 1
        %s836 = smul.addr %s833, 2
        %s837 = sadd.s32 %s835, %s836
        %s838 = smul.addr %s837, 2
        %s839 = scalar_lea.vmem %s3, %s838
      $region48: #{_lambda_.25} parent=31 // pred_fallthru
        _
    $region32: #{_lambda_.25} parent=5 // pred_fallthru
      _
    %p840 = scmp.le.s32.totalorder 2, %s9
    // Predicated region
    $region49: #{_lambda_.25} parent=5 // pred_check
      %p841 = pneg %p840
    $region50: #{_lambda_.25} parent=5 // pred_check_branch
      %843 = sbr.rel (%p841) target = $region52
    $region51: #{_lambda_.25} parent=5 // pred_region
      %s844 = ssub.s32 %s9, 2
    $region52: #{_lambda_.25} parent=5 // pred_fallthru
      _
  $region6: #{_lambda_.25} parent=0 // loop_footer
    %s13 = sadd.s32 1, %s9
  $region7: #{_lambda_.25} parent=0 // loop_footer_branch
    %8 = sbr.rel target = $region3
  $region8: #{_lambda_.25} parent=0 // loop_exit
    _

// kernel: _lambda_.26
$region0: #{_lambda_.26}
  #allocation0 [shape = 'u32[]', space=smem, size = 0x4, offset = 0x4, fixed_abs, tag = 'smem constant byte address 0x4 - core index']
  #allocation1 [shape = 'u32[144,128]{1,0:T(1,128)}', space=vmem, size = 0x12000, scoped, tag = 'internal scratch']
  #allocation2 [shape = 'f32[2,64]{1,0:T(2,128)}', space=vmem, size = 0x400, scoped, tag = 'scratch operand']
  %s0 = inlined_call_operand.vmem [shape: f32[2,256], index: 0, kind: input, shape index: {}]
  %s1 = inlined_call_operand.vmem [shape: bf16[256,64], index: 1, kind: input, shape index: {}]
  %s2 = inlined_call_operand.vmem [shape: f32[1,64], index: 2, kind: input, shape index: {}]
  %s3 = inlined_call_operand.vmem [shape: f32[2,64], index: 3, kind: output, shape index: {}]
  %s4 = sld [smem:[#allocation0]]
  $region30: #{_lambda_.26} parent=0
    _
  %s6 = ssub.s32 1, %s4
  %s7 = scalar_select 0, %s6, %s4
  // Predicated region
  $region2: #{_lambda_.26} parent=0 // pred_check
    _
  $region3: #{_lambda_.26} parent=0 // pred_check_branch
    %9 = sbr.rel (0) target = $region5
  $region4: #{_lambda_.26} parent=0 // pred_region
    _
  $region5: #{_lambda_.26} parent=0 // pred_fallthru
    _
  // Predicated region
  $region6: #{_lambda_.26} parent=0 // pred_check
    _
  $region7: #{_lambda_.26} parent=0 // pred_check_branch
    %11 = sbr.rel (0) target = $region9
  $region8: #{_lambda_.26} parent=0 // pred_region
    _
  $region9: #{_lambda_.26} parent=0 // pred_fallthru
    _
  // Predicated region
  $region10: #{_lambda_.26} parent=0 // pred_check
    _
  $region11: #{_lambda_.26} parent=0 // pred_check_branch
    %13 = sbr.rel (0) target = $region13
  $region12: #{_lambda_.26} parent=0 // pred_region
    _
  $region13: #{_lambda_.26} parent=0 // pred_fallthru
    _
  %p15 = scmp.eq.s32.totalorder 0, 0
  // Predicated region
  $region14: #{_lambda_.26} parent=0 // pred_check
    %p16 = pneg %p15
  $region15: #{_lambda_.26} parent=0 // pred_check_branch
    %18 = sbr.rel (%p16) target = $region17
  $region16: #{_lambda_.26} parent=0 // pred_region
    %vm19 = vcmask 517120
    %20 = vst.msk [vmem:[#allocation2] sm:$0x3] %vm19, 0.0
  $region17: #{_lambda_.26} parent=0 // pred_fallthru
    _
  %v21 = vld [vmem:[#allocation2] sm:$0x3]
  %v22 = vld [vmem:[%s0] sm:$0xf]
  %v25 = vunpack.c.l.s4 1983009808
  %v26 = vunpack.c.0.s8 %v25
  %v27 = vlaneseq
  %v28 = vshrl.u32 %v27, 7
  %v29 = vsub.s32 %v26, %v28
  %v30 = vrot.slane %v22, %v29
  %v31 = vcombine.high %v30, %v30
  %v34 = vpack.c.bf16 %v30, %v30
  %v35 = vpack.c.bf16 %v31, %v31
  %v36 = vld [vmem:[%s1] sm:$0xf]
  %v37 = vld [vmem:[%s1 + $0x4] sm:$0xf]
  %v38 = vld [vmem:[%s1 + $0x8] sm:$0xf]
  %v39 = vld [vmem:[%s1 + $0xc] sm:$0xf]
  %v40 = vld [vmem:[%s1 + $0x10] sm:$0xf]
  %v41 = vld [vmem:[%s1 + $0x14] sm:$0xf]
  %v42 = vld [vmem:[%s1 + $0x18] sm:$0xf]
  %v43 = vld [vmem:[%s1 + $0x1c] sm:$0xf]
  %v44 = vld [vmem:[%s1 + $0x20] sm:$0xf]
  %v45 = vld [vmem:[%s1 + $0x24] sm:$0xf]
  %v46 = vld [vmem:[%s1 + $0x28] sm:$0xf]
  %v47 = vld [vmem:[%s1 + $0x2c] sm:$0xf]
  %v48 = vld [vmem:[%s1 + $0x30] sm:$0xf]
  %v49 = vld [vmem:[%s1 + $0x34] sm:$0xf]
  %v50 = vld [vmem:[%s1 + $0x38] sm:$0xf]
  %v51 = vld [vmem:[%s1 + $0x3c] sm:$0xf]
  %v52 = vld [vmem:[%s1 + $0x40] sm:$0xf]
  %v53 = vld [vmem:[%s1 + $0x44] sm:$0xf]
  %v54 = vld [vmem:[%s1 + $0x48] sm:$0xf]
  %v55 = vld [vmem:[%s1 + $0x4c] sm:$0xf]
  %v56 = vld [vmem:[%s1 + $0x50] sm:$0xf]
  %v57 = vld [vmem:[%s1 + $0x54] sm:$0xf]
  %v58 = vld [vmem:[%s1 + $0x58] sm:$0xf]
  %v59 = vld [vmem:[%s1 + $0x5c] sm:$0xf]
  %v60 = vld [vmem:[%s1 + $0x60] sm:$0xf]
  %v61 = vld [vmem:[%s1 + $0x64] sm:$0xf]
  %v62 = vld [vmem:[%s1 + $0x68] sm:$0xf]
  %v63 = vld [vmem:[%s1 + $0x6c] sm:$0xf]
  %v64 = vld [vmem:[%s1 + $0x70] sm:$0xf]
  %v65 = vld [vmem:[%s1 + $0x74] sm:$0xf]
  %v66 = vld [vmem:[%s1 + $0x78] sm:$0xf]
  %v67 = vld [vmem:[%s1 + $0x7c] sm:$0xf]
  %v100 = vunpack.c.l.b16 %v36
  %v101 = vunpack.c.l.b16 %v37
  %v102 = vunpack.c.l.b16 %v38
  %v103 = vunpack.c.l.b16 %v39
  %v104 = vunpack.c.l.b16 %v40
  %v105 = vunpack.c.l.b16 %v41
  %v106 = vunpack.c.l.b16 %v42
  %v107 = vunpack.c.l.b16 %v43
  %v108 = vunpack.c.l.b16 %v44
  %v109 = vunpack.c.l.b16 %v45
  %v110 = vunpack.c.l.b16 %v46
  %v111 = vunpack.c.l.b16 %v47
  %v112 = vunpack.c.l.b16 %v48
  %v113 = vunpack.c.l.b16 %v49
  %v114 = vunpack.c.l.b16 %v50
  %v115 = vunpack.c.l.b16 %v51
  %v116 = vunpack.c.l.b16 %v52
  %v117 = vunpack.c.l.b16 %v53
  %v118 = vunpack.c.l.b16 %v54
  %v119 = vunpack.c.l.b16 %v55
  %v120 = vunpack.c.l.b16 %v56
  %v121 = vunpack.c.l.b16 %v57
  %v122 = vunpack.c.l.b16 %v58
  %v123 = vunpack.c.l.b16 %v59
  %v124 = vunpack.c.l.b16 %v60
  %v125 = vunpack.c.l.b16 %v61
  %v126 = vunpack.c.l.b16 %v62
  %v127 = vunpack.c.l.b16 %v63
  %v128 = vunpack.c.l.b16 %v64
  %v129 = vunpack.c.l.b16 %v65
  %v130 = vunpack.c.l.b16 %v66
  %v131 = vunpack.c.l.b16 %v67
  %v132 = vpack.c.b16 %v101, %v100
  %v133 = vpack.c.b16 %v103, %v102
  %v134 = vpack.c.b16 %v105, %v104
  %v135 = vpack.c.b16 %v107, %v106
  %v136 = vpack.c.b16 %v109, %v108
  %v137 = vpack.c.b16 %v111, %v110
  %v138 = vpack.c.b16 %v113, %v112
  %v139 = vpack.c.b16 %v115, %v114
  %v140 = vpack.c.b16 %v117, %v116
  %v141 = vpack.c.b16 %v119, %v118
  %v142 = vpack.c.b16 %v121, %v120
  %v143 = vpack.c.b16 %v123, %v122
  %v144 = vpack.c.b16 %v125, %v124
  %v145 = vpack.c.b16 %v127, %v126
  %v146 = vpack.c.b16 %v129, %v128
  %v147 = vpack.c.b16 %v131, %v130
  %164 = vmatprep.subr.bf16.mxu0 0
  %165 = vmatpush1.bf16.msra.mxu0 %v139
  %166 = vmatprep.subr.bf16.mxu0 0
  %167 = vmatpush1.bf16.msra.mxu0 %v138
  %168 = vmatprep.subr.bf16.mxu0 0
  %169 = vmatpush1.bf16.msra.mxu0 %v137
  %170 = vmatprep.subr.bf16.mxu0 0
  %171 = vmatpush1.bf16.msra.mxu0 %v136
  %172 = vmatprep.subr.bf16.mxu0 0
  %173 = vmatpush1.bf16.msra.mxu0 %v135
  %174 = vmatprep.subr.bf16.mxu0 0
  %175 = vmatpush1.bf16.msra.mxu0 %v134
  %176 = vmatprep.subr.bf16.mxu0 0
  %177 = vmatpush1.bf16.msra.mxu0 %v133
  %178 = vmatprep.subr.bf16.mxu0 0
  %179 = vmatpush1.bf16.msra.mxu0 %v132
  %180 = vmatprep.subr.bf16.mxu0 0
  %181 = vmatpush2.bf16.msra.mxu0 %v147
  %182 = vmatprep.subr.bf16.mxu0 0
  %183 = vmatpush2.bf16.msra.mxu0 %v146
  %184 = vmatprep.subr.bf16.mxu0 0
  %185 = vmatpush2.bf16.msra.mxu0 %v145
  %186 = vmatprep.subr.bf16.mxu0 0
  %187 = vmatpush2.bf16.msra.mxu0 %v144
  %188 = vmatprep.subr.bf16.mxu0 0
  %189 = vmatpush2.bf16.msra.mxu0 %v143
  %190 = vmatprep.subr.bf16.mxu0 0
  %191 = vmatpush2.bf16.msra.mxu0 %v142
  %192 = vmatprep.subr.bf16.mxu0 0
  %193 = vmatpush2.bf16.msra.mxu0 %v141
  %194 = vmatprep.subr.bf16.mxu0 0
  %195 = vmatpush2.bf16.msra.mxu0 %v140
  %196 = vmatprep.mubr.bf16.mxu0 %v35
  %197 = vmatmul.mubr.bf16.gmra.mxu0 %v34
  %v198 = vpop.f32.mrf.mxu0
  %v199 = vadd.f32 0.0, %v198
  %v200 = vpop.f32.mrf.mxu0
  %v201 = vpop.f32.mrf.mxu0
  %v202 = vpop.f32.mrf.mxu0
  %203 = vdwg.mxu0
  %v204 = vadd.f32 %v21, %v199
  %vm205 = vcmask 517120
  %206 = vst.msk [vmem:[#allocation2] sm:$0x3] %vm205, %v204
  // Predicated region
  $region18: #{_lambda_.26} parent=0 // pred_check
    %p207 = pneg %p15
  $region19: #{_lambda_.26} parent=0 // pred_check_branch
    %209 = sbr.rel (%p207) target = $region21
  $region20: #{_lambda_.26} parent=0 // pred_region
    %v210 = vld [vmem:[#allocation2] sm:$0x3]
    %v211 = vld [vmem:[%s2] sm:$0x1]
    %v213 = vlaneseq
    %v214 = vshrl.u32 %v213, 7
    %v215 = vsub.s32 0, %v214
    %v216 = vrot.slane %v211, %v215
    %v218 = vadd.f32 %v210, %v216
    %v219 = vmax.f32 %v218, 0.0
    %220 = vst.msk [vmem:[%s3] sm:$0x3] %vm205, %v219
  $region21: #{_lambda_.26} parent=0 // pred_fallthru
    _
  // Predicated region
  $region22: #{_lambda_.26} parent=0 // pred_check
    _
  $region23: #{_lambda_.26} parent=0 // pred_check_branch
    %222 = sbr.rel (0) target = $region25
  $region24: #{_lambda_.26} parent=0 // pred_region
    _
  $region25: #{_lambda_.26} parent=0 // pred_fallthru
    _
  // Predicated region
  $region26: #{_lambda_.26} parent=0 // pred_check
    _
  $region27: #{_lambda_.26} parent=0 // pred_check_branch
    %224 = sbr.rel (0) target = $region29
  $region28: #{_lambda_.26} parent=0 // pred_region
    _
  $region29: #{_lambda_.26} parent=0 // pred_fallthru
    _

// kernel: _lambda_.18
$region0: #{_lambda_.18}
  #allocation0 [shape = 'u32[]', space=smem, size = 0x4, offset = 0x4, fixed_abs, tag = 'smem constant byte address 0x4 - core index']
  #allocation1 [shape = 'u32[144,128]{1,0:T(1,128)}', space=vmem, size = 0x12000, scoped, tag = 'internal scratch']
  #allocation2 [shape = 'f32[2,1024]{1,0:T(2,128)}', space=vmem, size = 0x2000, scoped, tag = 'scratch operand']
  %s0 = inlined_call_operand.vmem [shape: f32[2,64,1024], index: 0, kind: input, shape index: {}]
  %s1 = inlined_call_operand.vmem [shape: f32[2,1024], index: 1, kind: output, shape index: {}]
  %s2 = sld [smem:[#allocation0]]
  $region22: #{_lambda_.18} parent=0
    _
  %s4 = ssub.s32 1, %s2
  %s5 = scalar_select 0, %s4, %s2
  // Predicated region
  $region2: #{_lambda_.18} parent=0 // pred_check
    _
  $region3: #{_lambda_.18} parent=0 // pred_check_branch
    %7 = sbr.rel (0) target = $region5
  $region4: #{_lambda_.18} parent=0 // pred_region
    _
  $region5: #{_lambda_.18} parent=0 // pred_fallthru
    _
  %p8 = scmp.eq.s32.totalorder 0, 0
  // Predicated region
  $region6: #{_lambda_.18} parent=0 // pred_check
    %p9 = pneg %p8
  $region7: #{_lambda_.18} parent=0 // pred_check_branch
    %11 = sbr.rel (%p9) target = $region9
  $region8: #{_lambda_.18} parent=0 // pred_region
    %12 = vst [vmem:[#allocation2] sm:$0xff] 0.0
    %13 = vst [vmem:[#allocation2 + $0x8] sm:$0xff] 0.0
  $region9: #{_lambda_.18} parent=0 // pred_fallthru
    _
  %v14 = vld [vmem:[#allocation2] sm:$0xff]
  %v15 = vld [vmem:[#allocation2 + $0x8] sm:$0xff]
  %v16 = vld [vmem:[%s0] sm:$0xff]
  %v17 = vld [vmem:[%s0 + $0x8] sm:$0xff]
  %v18 = vld [vmem:[%s0 + $0x10] sm:$0xff]
  %v19 = vld [vmem:[%s0 + $0x18] sm:$0xff]
  %v20 = vld [vmem:[%s0 + $0x20] sm:$0xff]
  %v21 = vld [vmem:[%s0 + $0x28] sm:$0xff]
  %v22 = vld [vmem:[%s0 + $0x30] sm:$0xff]
  %v23 = vld [vmem:[%s0 + $0x38] sm:$0xff]
  %v24 = vld [vmem:[%s0 + $0x40] sm:$0xff]
  %v25 = vld [vmem:[%s0 + $0x48] sm:$0xff]
  %v26 = vld [vmem:[%s0 + $0x50] sm:$0xff]
  %v27 = vld [vmem:[%s0 + $0x58] sm:$0xff]
  %v28 = vld [vmem:[%s0 + $0x60] sm:$0xff]
  %v29 = vld [vmem:[%s0 + $0x68] sm:$0xff]
  %v30 = vld [vmem:[%s0 + $0x70] sm:$0xff]
  %v31 = vld [vmem:[%s0 + $0x78] sm:$0xff]
  %v32 = vld [vmem:[%s0 + $0x80] sm:$0xff]
  %v33 = vld [vmem:[%s0 + $0x88] sm:$0xff]
  %v34 = vld [vmem:[%s0 + $0x90] sm:$0xff]
  %v35 = vld [vmem:[%s0 + $0x98] sm:$0xff]
  %v36 = vld [vmem:[%s0 + $0xa0] sm:$0xff]
  %v37 = vld [vmem:[%s0 + $0xa8] sm:$0xff]
  %v38 = vld [vmem:[%s0 + $0xb0] sm:$0xff]
  %v39 = vld [vmem:[%s0 + $0xb8] sm:$0xff]
  %v40 = vld [vmem:[%s0 + $0xc0] sm:$0xff]
  %v41 = vld [vmem:[%s0 + $0xc8] sm:$0xff]
  %v42 = vld [vmem:[%s0 + $0xd0] sm:$0xff]
  %v43 = vld [vmem:[%s0 + $0xd8] sm:$0xff]
  %v44 = vld [vmem:[%s0 + $0xe0] sm:$0xff]
  %v45 = vld [vmem:[%s0 + $0xe8] sm:$0xff]
  %v46 = vld [vmem:[%s0 + $0xf0] sm:$0xff]
  %v47 = vld [vmem:[%s0 + $0xf8] sm:$0xff]
  %v48 = vld [vmem:[%s0 + $0x100] sm:$0xff]
  %v49 = vld [vmem:[%s0 + $0x108] sm:$0xff]
  %v50 = vld [vmem:[%s0 + $0x110] sm:$0xff]
  %v51 = vld [vmem:[%s0 + $0x118] sm:$0xff]
  %v52 = vld [vmem:[%s0 + $0x120] sm:$0xff]
  %v53 = vld [vmem:[%s0 + $0x128] sm:$0xff]
  %v54 = vld [vmem:[%s0 + $0x130] sm:$0xff]
  %v55 = vld [vmem:[%s0 + $0x138] sm:$0xff]
  %v56 = vld [vmem:[%s0 + $0x140] sm:$0xff]
  %v57 = vld [vmem:[%s0 + $0x148] sm:$0xff]
  %v58 = vld [vmem:[%s0 + $0x150] sm:$0xff]
  %v59 = vld [vmem:[%s0 + $0x158] sm:$0xff]
  %v60 = vld [vmem:[%s0 + $0x160] sm:$0xff]
  %v61 = vld [vmem:[%s0 + $0x168] sm:$0xff]
  %v62 = vld [vmem:[%s0 + $0x170] sm:$0xff]
  %v63 = vld [vmem:[%s0 + $0x178] sm:$0xff]
  %v64 = vld [vmem:[%s0 + $0x180] sm:$0xff]
  %v65 = vld [vmem:[%s0 + $0x188] sm:$0xff]
  %v66 = vld [vmem:[%s0 + $0x190] sm:$0xff]
  %v67 = vld [vmem:[%s0 + $0x198] sm:$0xff]
  %v68 = vld [vmem:[%s0 + $0x1a0] sm:$0xff]
  %v69 = vld [vmem:[%s0 + $0x1a8] sm:$0xff]
  %v70 = vld [vmem:[%s0 + $0x1b0] sm:$0xff]
  %v71 = vld [vmem:[%s0 + $0x1b8] sm:$0xff]
  %v72 = vld [vmem:[%s0 + $0x1c0] sm:$0xff]
  %v73 = vld [vmem:[%s0 + $0x1c8] sm:$0xff]
  %v74 = vld [vmem:[%s0 + $0x1d0] sm:$0xff]
  %v75 = vld [vmem:[%s0 + $0x1d8] sm:$0xff]
  %v76 = vld [vmem:[%s0 + $0x1e0] sm:$0xff]
  %v77 = vld [vmem:[%s0 + $0x1e8] sm:$0xff]
  %v78 = vld [vmem:[%s0 + $0x1f0] sm:$0xff]
  %v79 = vld [vmem:[%s0 + $0x1f8] sm:$0xff]
  %v80 = vld [vmem:[%s0 + $0x200] sm:$0xff]
  %v81 = vld [vmem:[%s0 + $0x208] sm:$0xff]
  %v82 = vld [vmem:[%s0 + $0x210] sm:$0xff]
  %v83 = vld [vmem:[%s0 + $0x218] sm:$0xff]
  %v84 = vld [vmem:[%s0 + $0x220] sm:$0xff]
  %v85 = vld [vmem:[%s0 + $0x228] sm:$0xff]
  %v86 = vld [vmem:[%s0 + $0x230] sm:$0xff]
  %v87 = vld [vmem:[%s0 + $0x238] sm:$0xff]
  %v88 = vld [vmem:[%s0 + $0x240] sm:$0xff]
  %v89 = vld [vmem:[%s0 + $0x248] sm:$0xff]
  %v90 = vld [vmem:[%s0 + $0x250] sm:$0xff]
  %v91 = vld [vmem:[%s0 + $0x258] sm:$0xff]
  %v92 = vld [vmem:[%s0 + $0x260] sm:$0xff]
  %v93 = vld [vmem:[%s0 + $0x268] sm:$0xff]
  %v94 = vld [vmem:[%s0 + $0x270] sm:$0xff]
  %v95 = vld [vmem:[%s0 + $0x278] sm:$0xff]
  %v96 = vld [vmem:[%s0 + $0x280] sm:$0xff]
  %v97 = vld [vmem:[%s0 + $0x288] sm:$0xff]
  %v98 = vld [vmem:[%s0 + $0x290] sm:$0xff]
  %v99 = vld [vmem:[%s0 + $0x298] sm:$0xff]
  %v100 = vld [vmem:[%s0 + $0x2a0] sm:$0xff]
  %v101 = vld [vmem:[%s0 + $0x2a8] sm:$0xff]
  %v102 = vld [vmem:[%s0 + $0x2b0] sm:$0xff]
  %v103 = vld [vmem:[%s0 + $0x2b8] sm:$0xff]
  %v104 = vld [vmem:[%s0 + $0x2c0] sm:$0xff]
  %v105 = vld [vmem:[%s0 + $0x2c8] sm:$0xff]
  %v106 = vld [vmem:[%s0 + $0x2d0] sm:$0xff]
  %v107 = vld [vmem:[%s0 + $0x2d8] sm:$0xff]
  %v108 = vld [vmem:[%s0 + $0x2e0] sm:$0xff]
  %v109 = vld [vmem:[%s0 + $0x2e8] sm:$0xff]
  %v110 = vld [vmem:[%s0 + $0x2f0] sm:$0xff]
  %v111 = vld [vmem:[%s0 + $0x2f8] sm:$0xff]
  %v112 = vld [vmem:[%s0 + $0x300] sm:$0xff]
  %v113 = vld [vmem:[%s0 + $0x308] sm:$0xff]
  %v114 = vld [vmem:[%s0 + $0x310] sm:$0xff]
  %v115 = vld [vmem:[%s0 + $0x318] sm:$0xff]
  %v116 = vld [vmem:[%s0 + $0x320] sm:$0xff]
  %v117 = vld [vmem:[%s0 + $0x328] sm:$0xff]
  %v118 = vld [vmem:[%s0 + $0x330] sm:$0xff]
  %v119 = vld [vmem:[%s0 + $0x338] sm:$0xff]
  %v120 = vld [vmem:[%s0 + $0x340] sm:$0xff]
  %v121 = vld [vmem:[%s0 + $0x348] sm:$0xff]
  %v122 = vld [vmem:[%s0 + $0x350] sm:$0xff]
  %v123 = vld [vmem:[%s0 + $0x358] sm:$0xff]
  %v124 = vld [vmem:[%s0 + $0x360] sm:$0xff]
  %v125 = vld [vmem:[%s0 + $0x368] sm:$0xff]
  %v126 = vld [vmem:[%s0 + $0x370] sm:$0xff]
  %v127 = vld [vmem:[%s0 + $0x378] sm:$0xff]
  %v128 = vld [vmem:[%s0 + $0x380] sm:$0xff]
  %v129 = vld [vmem:[%s0 + $0x388] sm:$0xff]
  %v130 = vld [vmem:[%s0 + $0x390] sm:$0xff]
  %v131 = vld [vmem:[%s0 + $0x398] sm:$0xff]
  %v132 = vld [vmem:[%s0 + $0x3a0] sm:$0xff]
  %v133 = vld [vmem:[%s0 + $0x3a8] sm:$0xff]
  %v134 = vld [vmem:[%s0 + $0x3b0] sm:$0xff]
  %v135 = vld [vmem:[%s0 + $0x3b8] sm:$0xff]
  %v136 = vld [vmem:[%s0 + $0x3c0] sm:$0xff]
  %v137 = vld [vmem:[%s0 + $0x3c8] sm:$0xff]
  %v138 = vld [vmem:[%s0 + $0x3d0] sm:$0xff]
  %v139 = vld [vmem:[%s0 + $0x3d8] sm:$0xff]
  %v140 = vld [vmem:[%s0 + $0x3e0] sm:$0xff]
  %v141 = vld [vmem:[%s0 + $0x3e8] sm:$0xff]
  %v142 = vld [vmem:[%s0 + $0x3f0] sm:$0xff]
  %v143 = vld [vmem:[%s0 + $0x3f8] sm:$0xff]
  %v144 = vadd.f32 %v16, %v24
  %v145 = vadd.f32 %v144, %v32
  %v146 = vadd.f32 %v145, %v40
  %v147 = vadd.f32 %v146, %v48
  %v148 = vadd.f32 %v147, %v56
  %v149 = vadd.f32 %v148, %v64
  %v150 = vadd.f32 %v149, %v72
  %v151 = vrot.slane %v150, 4
  %v152 = vadd.f32 %v150, %v151
  %v153 = vrot.slane %v152, 2
  %v154 = vadd.f32 %v152, %v153
  %v155 = vrot.slane %v154, 1
  %v156 = vadd.f32 %v154, %v155
  %v157 = vadd.f32 %v17, %v25
  %v158 = vadd.f32 %v157, %v33
  %v159 = vadd.f32 %v158, %v41
  %v160 = vadd.f32 %v159, %v49
  %v161 = vadd.f32 %v160, %v57
  %v162 = vadd.f32 %v161, %v65
  %v163 = vadd.f32 %v162, %v73
  %v164 = vrot.slane %v163, 4
  %v165 = vadd.f32 %v163, %v164
  %v166 = vrot.slane %v165, 2
  %v167 = vadd.f32 %v165, %v166
  %v168 = vrot.slane %v167, 1
  %v169 = vadd.f32 %v167, %v168
  %v170 = vadd.f32 %v18, %v26
  %v171 = vadd.f32 %v170, %v34
  %v172 = vadd.f32 %v171, %v42
  %v173 = vadd.f32 %v172, %v50
  %v174 = vadd.f32 %v173, %v58
  %v175 = vadd.f32 %v174, %v66
  %v176 = vadd.f32 %v175, %v74
  %v177 = vrot.slane %v176, 4
  %v178 = vadd.f32 %v176, %v177
  %v179 = vrot.slane %v178, 2
  %v180 = vadd.f32 %v178, %v179
  %v181 = vrot.slane %v180, 1
  %v182 = vadd.f32 %v180, %v181
  %v183 = vadd.f32 %v19, %v27
  %v184 = vadd.f32 %v183, %v35
  %v185 = vadd.f32 %v184, %v43
  %v186 = vadd.f32 %v185, %v51
  %v187 = vadd.f32 %v186, %v59
  %v188 = vadd.f32 %v187, %v67
  %v189 = vadd.f32 %v188, %v75
  %v190 = vrot.slane %v189, 4
  %v191 = vadd.f32 %v189, %v190
  %v192 = vrot.slane %v191, 2
  %v193 = vadd.f32 %v191, %v192
  %v194 = vrot.slane %v193, 1
  %v195 = vadd.f32 %v193, %v194
  %v196 = vadd.f32 %v20, %v28
  %v197 = vadd.f32 %v196, %v36
  %v198 = vadd.f32 %v197, %v44
  %v199 = vadd.f32 %v198, %v52
  %v200 = vadd.f32 %v199, %v60
  %v201 = vadd.f32 %v200, %v68
  %v202 = vadd.f32 %v201, %v76
  %v203 = vrot.slane %v202, 4
  %v204 = vadd.f32 %v202, %v203
  %v205 = vrot.slane %v204, 2
  %v206 = vadd.f32 %v204, %v205
  %v207 = vrot.slane %v206, 1
  %v208 = vadd.f32 %v206, %v207
  %v209 = vadd.f32 %v21, %v29
  %v210 = vadd.f32 %v209, %v37
  %v211 = vadd.f32 %v210, %v45
  %v212 = vadd.f32 %v211, %v53
  %v213 = vadd.f32 %v212, %v61
  %v214 = vadd.f32 %v213, %v69
  %v215 = vadd.f32 %v214, %v77
  %v216 = vrot.slane %v215, 4
  %v217 = vadd.f32 %v215, %v216
  %v218 = vrot.slane %v217, 2
  %v219 = vadd.f32 %v217, %v218
  %v220 = vrot.slane %v219, 1
  %v221 = vadd.f32 %v219, %v220
  %v222 = vadd.f32 %v22, %v30
  %v223 = vadd.f32 %v222, %v38
  %v224 = vadd.f32 %v223, %v46
  %v225 = vadd.f32 %v224, %v54
  %v226 = vadd.f32 %v225, %v62
  %v227 = vadd.f32 %v226, %v70
  %v228 = vadd.f32 %v227, %v78
  %v229 = vrot.slane %v228, 4
  %v230 = vadd.f32 %v228, %v229
  %v231 = vrot.slane %v230, 2
  %v232 = vadd.f32 %v230, %v231
  %v233 = vrot.slane %v232, 1
  %v234 = vadd.f32 %v232, %v233
  %v235 = vadd.f32 %v23, %v31
  %v236 = vadd.f32 %v235, %v39
  %v237 = vadd.f32 %v236, %v47
  %v238 = vadd.f32 %v237, %v55
  %v239 = vadd.f32 %v238, %v63
  %v240 = vadd.f32 %v239, %v71
  %v241 = vadd.f32 %v240, %v79
  %v242 = vrot.slane %v241, 4
  %v243 = vadd.f32 %v241, %v242
  %v244 = vrot.slane %v243, 2
  %v245 = vadd.f32 %v243, %v244
  %v246 = vrot.slane %v245, 1
  %v247 = vadd.f32 %v245, %v246
  %v248 = vadd.f32 %v80, %v88
  %v249 = vadd.f32 %v248, %v96
  %v250 = vadd.f32 %v249, %v104
  %v251 = vadd.f32 %v250, %v112
  %v252 = vadd.f32 %v251, %v120
  %v253 = vadd.f32 %v252, %v128
  %v254 = vadd.f32 %v253, %v136
  %v255 = vrot.slane %v254, 4
  %v256 = vadd.f32 %v254, %v255
  %v257 = vrot.slane %v256, 2
  %v258 = vadd.f32 %v256, %v257
  %v259 = vrot.slane %v258, 1
  %v260 = vadd.f32 %v258, %v259
  %v261 = vadd.f32 %v81, %v89
  %v262 = vadd.f32 %v261, %v97
  %v263 = vadd.f32 %v262, %v105
  %v264 = vadd.f32 %v263, %v113
  %v265 = vadd.f32 %v264, %v121
  %v266 = vadd.f32 %v265, %v129
  %v267 = vadd.f32 %v266, %v137
  %v268 = vrot.slane %v267, 4
  %v269 = vadd.f32 %v267, %v268
  %v270 = vrot.slane %v269, 2
  %v271 = vadd.f32 %v269, %v270
  %v272 = vrot.slane %v271, 1
  %v273 = vadd.f32 %v271, %v272
  %v274 = vadd.f32 %v82, %v90
  %v275 = vadd.f32 %v274, %v98
  %v276 = vadd.f32 %v275, %v106
  %v277 = vadd.f32 %v276, %v114
  %v278 = vadd.f32 %v277, %v122
  %v279 = vadd.f32 %v278, %v130
  %v280 = vadd.f32 %v279, %v138
  %v281 = vrot.slane %v280, 4
  %v282 = vadd.f32 %v280, %v281
  %v283 = vrot.slane %v282, 2
  %v284 = vadd.f32 %v282, %v283
  %v285 = vrot.slane %v284, 1
  %v286 = vadd.f32 %v284, %v285
  %v287 = vadd.f32 %v83, %v91
  %v288 = vadd.f32 %v287, %v99
  %v289 = vadd.f32 %v288, %v107
  %v290 = vadd.f32 %v289, %v115
  %v291 = vadd.f32 %v290, %v123
  %v292 = vadd.f32 %v291, %v131
  %v293 = vadd.f32 %v292, %v139
  %v294 = vrot.slane %v293, 4
  %v295 = vadd.f32 %v293, %v294
  %v296 = vrot.slane %v295, 2
  %v297 = vadd.f32 %v295, %v296
  %v298 = vrot.slane %v297, 1
  %v299 = vadd.f32 %v297, %v298
  %v300 = vadd.f32 %v84, %v92
  %v301 = vadd.f32 %v300, %v100
  %v302 = vadd.f32 %v301, %v108
  %v303 = vadd.f32 %v302, %v116
  %v304 = vadd.f32 %v303, %v124
  %v305 = vadd.f32 %v304, %v132
  %v306 = vadd.f32 %v305, %v140
  %v307 = vrot.slane %v306, 4
  %v308 = vadd.f32 %v306, %v307
  %v309 = vrot.slane %v308, 2
  %v310 = vadd.f32 %v308, %v309
  %v311 = vrot.slane %v310, 1
  %v312 = vadd.f32 %v310, %v311
  %v313 = vadd.f32 %v85, %v93
  %v314 = vadd.f32 %v313, %v101
  %v315 = vadd.f32 %v314, %v109
  %v316 = vadd.f32 %v315, %v117
  %v317 = vadd.f32 %v316, %v125
  %v318 = vadd.f32 %v317, %v133
  %v319 = vadd.f32 %v318, %v141
  %v320 = vrot.slane %v319, 4
  %v321 = vadd.f32 %v319, %v320
  %v322 = vrot.slane %v321, 2
  %v323 = vadd.f32 %v321, %v322
  %v324 = vrot.slane %v323, 1
  %v325 = vadd.f32 %v323, %v324
  %v326 = vadd.f32 %v86, %v94
  %v327 = vadd.f32 %v326, %v102
  %v328 = vadd.f32 %v327, %v110
  %v329 = vadd.f32 %v328, %v118
  %v330 = vadd.f32 %v329, %v126
  %v331 = vadd.f32 %v330, %v134
  %v332 = vadd.f32 %v331, %v142
  %v333 = vrot.slane %v332, 4
  %v334 = vadd.f32 %v332, %v333
  %v335 = vrot.slane %v334, 2
  %v336 = vadd.f32 %v334, %v335
  %v337 = vrot.slane %v336, 1
  %v338 = vadd.f32 %v336, %v337
  %v339 = vadd.f32 %v87, %v95
  %v340 = vadd.f32 %v339, %v103
  %v341 = vadd.f32 %v340, %v111
  %v342 = vadd.f32 %v341, %v119
  %v343 = vadd.f32 %v342, %v127
  %v344 = vadd.f32 %v343, %v135
  %v345 = vadd.f32 %v344, %v143
  %v346 = vrot.slane %v345, 4
  %v347 = vadd.f32 %v345, %v346
  %v348 = vrot.slane %v347, 2
  %v349 = vadd.f32 %v347, %v348
  %v350 = vrot.slane %v349, 1
  %v351 = vadd.f32 %v349, %v350
  %v368 = vcombine.low %v156, %v169
  %v369 = vcombine.low %v182, %v195
  %v371 = vunpack.c.l.s4 1983009808
  %v372 = vunpack.c.0.s8 %v371
  %v373 = vlaneseq
  %v374 = vshrl.u32 %v373, 7
  %v375 = vsub.s32 %v372, %v374
  %v376 = vrot.slane %v368, %v375
  %v378 = vunpack.c.l.s4 1983009808
  %v379 = vunpack.c.0.s8 %v378
  %v380 = vlaneseq
  %v381 = vshrl.u32 %v380, 7
  %v382 = vsub.s32 %v379, %v381
  %v383 = vrot.slane %v369, %v382
  %v384 = vcombine.low %v376, %v383
  %v385 = vcombine.low %v208, %v221
  %v386 = vcombine.low %v234, %v247
  %v388 = vunpack.c.l.s4 1983009808
  %v389 = vunpack.c.0.s8 %v388
  %v390 = vlaneseq
  %v391 = vshrl.u32 %v390, 7
  %v392 = vsub.s32 %v389, %v391
  %v393 = vrot.slane %v385, %v392
  %v395 = vunpack.c.l.s4 1983009808
  %v396 = vunpack.c.0.s8 %v395
  %v397 = vlaneseq
  %v398 = vshrl.u32 %v397, 7
  %v399 = vsub.s32 %v396, %v398
  %v400 = vrot.slane %v386, %v399
  %v401 = vcombine.low %v393, %v400
  %v402 = vcombine.low %v260, %v273
  %v403 = vcombine.low %v286, %v299
  %v405 = vunpack.c.l.s4 1983009808
  %v406 = vunpack.c.0.s8 %v405
  %v407 = vlaneseq
  %v408 = vshrl.u32 %v407, 7
  %v409 = vsub.s32 %v406, %v408
  %v410 = vrot.slane %v402, %v409
  %v412 = vunpack.c.l.s4 1983009808
  %v413 = vunpack.c.0.s8 %v412
  %v414 = vlaneseq
  %v415 = vshrl.u32 %v414, 7
  %v416 = vsub.s32 %v413, %v415
  %v417 = vrot.slane %v403, %v416
  %v418 = vcombine.low %v410, %v417
  %v419 = vcombine.low %v312, %v325
  %v420 = vcombine.low %v338, %v351
  %v422 = vunpack.c.l.s4 1983009808
  %v423 = vunpack.c.0.s8 %v422
  %v424 = vlaneseq
  %v425 = vshrl.u32 %v424, 7
  %v426 = vsub.s32 %v423, %v425
  %v427 = vrot.slane %v419, %v426
  %v429 = vunpack.c.l.s4 1983009808
  %v430 = vunpack.c.0.s8 %v429
  %v431 = vlaneseq
  %v432 = vshrl.u32 %v431, 7
  %v433 = vsub.s32 %v430, %v432
  %v434 = vrot.slane %v420, %v433
  %v435 = vcombine.low %v427, %v434
  %vm436 = vcmask 1044484
  %v437 = vsel %vm436, %v384, %v384
  %vm438 = vcmask 1046534
  %v439 = vsel %vm438, %v384, %v437
  %v440 = vrot.slane %v418, 7
  %vm441 = vcmask 1041409
  %v442 = vsel %vm441, %v440, %v439
  %vm443 = vcmask 1043459
  %v444 = vsel %vm443, %v440, %v442
  %vm445 = vcmask 1045509
  %v446 = vsel %vm445, %v440, %v444
  %vm447 = vcmask 1047559
  %v448 = vsel %vm447, %v440, %v446
  %v449 = vsel %vm436, %v401, %v401
  %v450 = vsel %vm438, %v401, %v449
  %v451 = vrot.slane %v435, 7
  %v452 = vsel %vm441, %v451, %v450
  %v453 = vsel %vm443, %v451, %v452
  %v454 = vsel %vm445, %v451, %v453
  %v455 = vsel %vm447, %v451, %v454
  %v458 = vadd.f32 %v14, %v448
  %v459 = vadd.f32 %v15, %v455
  %460 = vst [vmem:[#allocation2] sm:$0xff] %v458
  %461 = vst [vmem:[#allocation2 + $0x8] sm:$0xff] %v459
  // Predicated region
  $region10: #{_lambda_.18} parent=0 // pred_check
    %p462 = pneg %p8
  $region11: #{_lambda_.18} parent=0 // pred_check_branch
    %464 = sbr.rel (%p462) target = $region13
  $region12: #{_lambda_.18} parent=0 // pred_region
    %v465 = vld [vmem:[#allocation2] sm:$0xff]
    %v466 = vld [vmem:[#allocation2 + $0x8] sm:$0xff]
    %v467 = vmul.f32 %v465, 0.015625
    %v468 = vmul.f32 %v466, 0.015625
    %469 = vst [vmem:[%s1] sm:$0xff] %v467
    %470 = vst [vmem:[%s1 + $0x8] sm:$0xff] %v468
  $region13: #{_lambda_.18} parent=0 // pred_fallthru
    _
  // Predicated region
  $region14: #{_lambda_.18} parent=0 // pred_check
    _
  $region15: #{_lambda_.18} parent=0 // pred_check_branch
    %472 = sbr.rel (0) target = $region17
  $region16: #{_lambda_.18} parent=0 // pred_region
    _
  $region17: #{_lambda_.18} parent=0 // pred_fallthru
    _
  // Predicated region
  $region18: #{_lambda_.18} parent=0 // pred_check
    _
  $region19: #{_lambda_.18} parent=0 // pred_check_branch
    %474 = sbr.rel (0) target = $region21
  $region20: #{_lambda_.18} parent=0 // pred_region
    _
  $region21: #{_lambda_.18} parent=0 // pred_fallthru
    _

// kernel: _lambda_.19
$region0: #{_lambda_.19}
  #allocation0 [shape = 'u32[]', space=smem, size = 0x4, offset = 0x4, fixed_abs, tag = 'smem constant byte address 0x4 - core index']
  #allocation1 [shape = 'u32[144,128]{1,0:T(1,128)}', space=vmem, size = 0x12000, scoped, tag = 'internal scratch']
  #allocation2 [shape = 'f32[2,256]{1,0:T(2,128)}', space=vmem, size = 0x800, scoped, tag = 'scratch operand']
  %s0 = inlined_call_operand.vmem [shape: f32[2,1024], index: 0, kind: input, shape index: {}]
  %s1 = inlined_call_operand.vmem [shape: bf16[1024,1024], index: 1, kind: input, shape index: {}]
  %s2 = inlined_call_operand.vmem [shape: f32[1,1024], index: 2, kind: input, shape index: {}]
  %s3 = inlined_call_operand.vmem [shape: f32[2,1024], index: 3, kind: output, shape index: {}]
  %s4 = sld [smem:[#allocation0]]
  $region91: #{_lambda_.19} parent=0
    _
  %s6 = ssub.s32 1, %s4
  %s7 = scalar_select 0, %s6, %s4
  $region1: #{_lambda_.19} parent=0
    #allocation3 [shape = 'u8[524288]{0}', space=vmem, size = 0x80000, scoped, tag = 'input window, operand 1']
    loop: start=0, step=1, limit=10
    $region2: #{_lambda_.19} parent=1 // loop_pre_header
      _
    $region3: #{_lambda_.19} parent=1 // loop_header
      %s9 = sphi 0, %s13
      %p10 = scmp.ge.s32.totalorder %s9, 10
      %s16 = sphi 0, %s35
      %s17 = sphi 0, %s31
      %s18 = sphi 0, %s27
      %s19 = sphi 0, %s16
      %s20 = sphi 0, %s17
      %s21 = sphi 0, %s18
      %s22 = sphi 0, %s19
      %s23 = sphi 0, %s20
      %s24 = sphi 0, %s21
      %s40 = sphi 0, %s42
      %s43 = sphi 0, %s40
      %s44 = sphi 0, %s43
      %s60 = sphi 0, %s44
      %s68 = sphi 0, %s70
      %s71 = sphi 0, %s68
      %s72 = sphi 0, %s71
      %s88 = sphi 0, %s72
      %s94 = sphi 0, %s96
      %s97 = sphi 0, %s94
      %s98 = sphi 0, %s97
      %s114 = sphi 0, %s98
      %s122 = sphi 0, %s124
      %s125 = sphi 0, %s122
      %s126 = sphi 0, %s125
      %s142 = sphi 0, %s126
    $region4: #{_lambda_.19} parent=1 // loop_header_branch
      %12 = sbr.rel (%p10) target = $region8
    $region5: #{_lambda_.19} parent=1 // loop_body
      %s14 = ssub.s32 %s9, 1
      %s15 = ssub.s32 %s9, 2
      %s25 = sadd.s32 1, %s18
      %p26 = scmp.ge.s32.totalorder %s25, 2
      %s27 = scalar_select %p26, 0, %s25
      %s28 = sadd.s32 1, %s17
      %s29 = scalar_select %p26, %s28, %s17
      %p30 = scmp.ge.s32.totalorder %s29, 4
      %s31 = scalar_select %p30, 0, %s29
      %s32 = sadd.s32 1, %s16
      %s33 = scalar_select %p30, %s32, %s16
      %p34 = scmp.ge.s32.totalorder %s33, 1
      %s35 = scalar_select %p34, 0, %s33
      %s36 = ssub.s32 %s16, %s35
      %s37 = ssub.s32 %s18, %s27
      %s38 = sor.u32 %s36, %s37
      %p39 = scmp.eq.s32.totalorder %s38, 0
      %s41 = sadd.s32 %s40, 1
      %s42 = scalar_select %p39, %s40, %s41
      %p45 = pneg %p39
      %p46 = scmp.eq.s32.totalorder %s9, 7
      %p47 = por %p45, %p46
      %p48 = scmp.ne.s32.totalorder %s40, %s43
      %p49 = scmp.eq.s32.totalorder %s9, 0
      %p50 = por %p48, %p49
      %p51 = scmp.ne.s32.totalorder %s40, %s43
      %p52 = scmp.eq.s32.totalorder %s14, 7
      %p53 = por %p51, %p52
      %p54 = scmp.ne.s32.totalorder %s43, %s44
      %p55 = scmp.eq.s32.totalorder %s14, 0
      %p56 = por %p54, %p55
      %p57 = scmp.ne.s32.totalorder %s43, %s44
      %p58 = scmp.eq.s32.totalorder %s15, 7
      %p59 = por %p57, %p58
      %p61 = scmp.ne.s32.totalorder %s44, %s60
      %p62 = scmp.eq.s32.totalorder %s15, 0
      %p63 = por %p61, %p62
      %s64 = ssub.s32 %s18, %s27
      %s65 = ssub.s32 %s17, %s31
      %s66 = sor.u32 %s64, %s65
      %p67 = scmp.eq.s32.totalorder %s66, 0
      %s69 = sadd.s32 %s68, 1
      %s70 = scalar_select %p67, %s68, %s69
      %p73 = pneg %p67
      %p74 = scmp.eq.s32.totalorder %s9, 7
      %p75 = por %p73, %p74
      %p76 = scmp.ne.s32.totalorder %s68, %s71
      %p77 = scmp.eq.s32.totalorder %s9, 0
      %p78 = por %p76, %p77
      %p79 = scmp.ne.s32.totalorder %s68, %s71
      %p80 = scmp.eq.s32.totalorder %s14, 7
      %p81 = por %p79, %p80
      %p82 = scmp.ne.s32.totalorder %s71, %s72
      %p83 = scmp.eq.s32.totalorder %s14, 0
      %p84 = por %p82, %p83
      %p85 = scmp.ne.s32.totalorder %s71, %s72
      %p86 = scmp.eq.s32.totalorder %s15, 7
      %p87 = por %p85, %p86
      %p89 = scmp.ne.s32.totalorder %s72, %s88
      %p90 = scmp.eq.s32.totalorder %s15, 0
      %p91 = por %p89, %p90
      %s92 = ssub.s32 %s17, %s31
      %p93 = scmp.eq.s32.totalorder %s92, 0
      %s95 = sadd.s32 %s94, 1
      %s96 = scalar_select %p93, %s94, %s95
      %p99 = pneg %p93
      %p100 = scmp.eq.s32.totalorder %s9, 7
      %p101 = por %p99, %p100
      %p102 = scmp.ne.s32.totalorder %s94, %s97
      %p103 = scmp.eq.s32.totalorder %s9, 0
      %p104 = por %p102, %p103
      %p105 = scmp.ne.s32.totalorder %s94, %s97
      %p106 = scmp.eq.s32.totalorder %s14, 7
      %p107 = por %p105, %p106
      %p108 = scmp.ne.s32.totalorder %s97, %s98
      %p109 = scmp.eq.s32.totalorder %s14, 0
      %p110 = por %p108, %p109
      %p111 = scmp.ne.s32.totalorder %s97, %s98
      %p112 = scmp.eq.s32.totalorder %s15, 7
      %p113 = por %p111, %p112
      %p115 = scmp.ne.s32.totalorder %s98, %s114
      %p116 = scmp.eq.s32.totalorder %s15, 0
      %p117 = por %p115, %p116
      %s118 = ssub.s32 %s16, %s35
      %s119 = ssub.s32 %s17, %s31
      %s120 = sor.u32 %s118, %s119
      %p121 = scmp.eq.s32.totalorder %s120, 0
      %s123 = sadd.s32 %s122, 1
      %s124 = scalar_select %p121, %s122, %s123
      %p127 = pneg %p121
      %p128 = scmp.eq.s32.totalorder %s9, 7
      %p129 = por %p127, %p128
      %p130 = scmp.ne.s32.totalorder %s122, %s125
      %p131 = scmp.eq.s32.totalorder %s9, 0
      %p132 = por %p130, %p131
      %p133 = scmp.ne.s32.totalorder %s122, %s125
      %p134 = scmp.eq.s32.totalorder %s14, 7
      %p135 = por %p133, %p134
      %p136 = scmp.ne.s32.totalorder %s125, %s126
      %p137 = scmp.eq.s32.totalorder %s14, 0
      %p138 = por %p136, %p137
      %p139 = scmp.ne.s32.totalorder %s125, %s126
      %p140 = scmp.eq.s32.totalorder %s15, 7
      %p141 = por %p139, %p140
      %p143 = scmp.ne.s32.totalorder %s126, %s142
      %p144 = scmp.eq.s32.totalorder %s15, 0
      %p145 = por %p143, %p144
      %p146 = scmp.le.s32.totalorder 1, %s9
      %p147 = scmp.lt.s32.totalorder %s9, 9
      %p148 = pnand %p146, %p147
      %p149 = pneg %p148
      // Predicated region
      $region9: #{_lambda_.19} parent=5 // pred_check
        _
      $region10: #{_lambda_.19} parent=5 // pred_check_branch
        %151 = sbr.rel (%p148) target = $region12
      $region11: #{_lambda_.19} parent=5 // pred_region
        %s152 = ssub.s32 %s9, 1
      $region12: #{_lambda_.19} parent=5 // pred_fallthru
        _
      %p153 = scmp.lt.s32.totalorder %s9, 8
      // Predicated region
      $region13: #{_lambda_.19} parent=5 // pred_check
        %p154 = pneg %p153
      $region14: #{_lambda_.19} parent=5 // pred_check_branch
        %156 = sbr.rel (%p154) target = $region16
      $region15: #{_lambda_.19} parent=5 // pred_region
        // Predicated region
        $region17: #{_lambda_.19} parent=15 // pred_check
          %p157 = pneg %p50
        $region18: #{_lambda_.19} parent=15 // pred_check_branch
          %159 = sbr.rel (%p157) target = $region20
        $region19: #{_lambda_.19} parent=15 // pred_region
          %s160 = smul.u32 4, %s18
          %p161 = scmp.lt.s32.totalorder %s16, 0
          %s162 = scalar_select %p161, %s16, 0
          %p163 = scmp.lt.s32.totalorder %s160, 7
          %s164 = scalar_select %p163, %s160, 7
          %s165 = smul.addr %s162, 8
          %s166 = sadd.s32 %s164, %s165
          %s167 = smul.addr %s166, 2
          %s168 = scalar_lea.vmem %s0, %s167
          %s169 = smul.u32 4, %s18
        $region20: #{_lambda_.19} parent=15 // pred_fallthru
          _
        // Predicated region
        $region21: #{_lambda_.19} parent=15 // pred_check
          %p170 = pneg %p78
        $region22: #{_lambda_.19} parent=15 // pred_check_branch
          %172 = sbr.rel (%p170) target = $region24
        $region23: #{_lambda_.19} parent=15 // pred_region
          %s173 = sand.u32 %s68, 1
          %s174 = sand.u32 %s68, 1
          %s175 = smul.addr %s174, 512
          %s176 = scalar_lea.vmem [#allocation3], %s175
          %s177 = smul.u32 64, %s18
          %s178 = smul.u32 2, %s17
          %s179 = smul.addr %s177, 8
          %s180 = sadd.s32 %s178, %s179
          %s181 = smul.addr %s180, 4
          %s182 = scalar_lea.vmem %s1, %s181
          // Predicated region
          $region25: #{_lambda_.19} parent=23 // pred_check
            _
          $region26: #{_lambda_.19} parent=23 // pred_check_branch
            %184 = sbr.rel (0) target = $region28
          $region27: #{_lambda_.19} parent=23 // pred_region
            // Predicated region
            $region29: #{_lambda_.19} parent=27 // pred_check
              _
            $region30: #{_lambda_.19} parent=27 // pred_check_branch
              %186 = sbr.rel (0) target = $region32
            $region31: #{_lambda_.19} parent=27 // pred_region
              // Predicated region
              $region44: #{_lambda_.19} parent=31 // pred_check
                _
              $region45: #{_lambda_.19} parent=31 // pred_check_branch
                %328 = sbr.rel (0) target = $region47
              $region46: #{_lambda_.19} parent=31 // pred_region
                loop: start=0, step=1, limit=1
                $region48: #{_lambda_.19} parent=46 // loop_pre_header
                  _
                $region49: #{_lambda_.19} parent=46 // loop_header
                  %s330 = sphi 0, %s334
                  %p331 = scmp.ge.s32.totalorder %s330, 1
                  %s335 = sphi %s182, %s182
                  %s336 = sphi %s176, %s176
                $region50: #{_lambda_.19} parent=46 // loop_header_branch
                  %333 = sbr.rel (%p331) target = $region54
                $region51: #{_lambda_.19} parent=46 // loop_body
                  %v337 = vld [vmem:[%s335] sm:$0xff]
                  %338 = vst [vmem:[%s336] sm:$0xff] %v337
                  %v339 = vld [vmem:[%s335 + $0x20] sm:$0xff]
                  %340 = vst [vmem:[%s336 + $0x8] sm:$0xff] %v339
                  %v341 = vld [vmem:[%s335 + $0x40] sm:$0xff]
                  %342 = vst [vmem:[%s336 + $0x10] sm:$0xff] %v341
                  %v343 = vld [vmem:[%s335 + $0x60] sm:$0xff]
                  %344 = vst [vmem:[%s336 + $0x18] sm:$0xff] %v343
                  %v345 = vld [vmem:[%s335 + $0x80] sm:$0xff]
                  %346 = vst [vmem:[%s336 + $0x20] sm:$0xff] %v345
                  %v347 = vld [vmem:[%s335 + $0xa0] sm:$0xff]
                  %348 = vst [vmem:[%s336 + $0x28] sm:$0xff] %v347
                  %v349 = vld [vmem:[%s335 + $0xc0] sm:$0xff]
                  %350 = vst [vmem:[%s336 + $0x30] sm:$0xff] %v349
                  %v351 = vld [vmem:[%s335 + $0xe0] sm:$0xff]
                  %352 = vst [vmem:[%s336 + $0x38] sm:$0xff] %v351
                  %v353 = vld [vmem:[%s335 + $0x100] sm:$0xff]
                  %354 = vst [vmem:[%s336 + $0x40] sm:$0xff] %v353
                  %v355 = vld [vmem:[%s335 + $0x120] sm:$0xff]
                  %356 = vst [vmem:[%s336 + $0x48] sm:$0xff] %v355
                  %v357 = vld [vmem:[%s335 + $0x140] sm:$0xff]
                  %358 = vst [vmem:[%s336 + $0x50] sm:$0xff] %v357
                  %v359 = vld [vmem:[%s335 + $0x160] sm:$0xff]
                  %360 = vst [vmem:[%s336 + $0x58] sm:$0xff] %v359
                  %v361 = vld [vmem:[%s335 + $0x180] sm:$0xff]
                  %362 = vst [vmem:[%s336 + $0x60] sm:$0xff] %v361
                  %v363 = vld [vmem:[%s335 + $0x1a0] sm:$0xff]
                  %364 = vst [vmem:[%s336 + $0x68] sm:$0xff] %v363
                  %v365 = vld [vmem:[%s335 + $0x1c0] sm:$0xff]
                  %366 = vst [vmem:[%s336 + $0x70] sm:$0xff] %v365
                  %v367 = vld [vmem:[%s335 + $0x1e0] sm:$0xff]
                  %368 = vst [vmem:[%s336 + $0x78] sm:$0xff] %v367
                  %v369 = vld [vmem:[%s335 + $0x200] sm:$0xff]
                  %370 = vst [vmem:[%s336 + $0x80] sm:$0xff] %v369
                  %v371 = vld [vmem:[%s335 + $0x220] sm:$0xff]
                  %372 = vst [vmem:[%s336 + $0x88] sm:$0xff] %v371
                  %v373 = vld [vmem:[%s335 + $0x240] sm:$0xff]
                  %374 = vst [vmem:[%s336 + $0x90] sm:$0xff] %v373
                  %v375 = vld [vmem:[%s335 + $0x260] sm:$0xff]
                  %376 = vst [vmem:[%s336 + $0x98] sm:$0xff] %v375
                  %v377 = vld [vmem:[%s335 + $0x280] sm:$0xff]
                  %378 = vst [vmem:[%s336 + $0xa0] sm:$0xff] %v377
                  %v379 = vld [vmem:[%s335 + $0x2a0] sm:$0xff]
                  %380 = vst [vmem:[%s336 + $0xa8] sm:$0xff] %v379
                  %v381 = vld [vmem:[%s335 + $0x2c0] sm:$0xff]
                  %382 = vst [vmem:[%s336 + $0xb0] sm:$0xff] %v381
                  %v383 = vld [vmem:[%s335 + $0x2e0] sm:$0xff]
                  %384 = vst [vmem:[%s336 + $0xb8] sm:$0xff] %v383
                  %v385 = vld [vmem:[%s335 + $0x300] sm:$0xff]
                  %386 = vst [vmem:[%s336 + $0xc0] sm:$0xff] %v385
                  %v387 = vld [vmem:[%s335 + $0x320] sm:$0xff]
                  %388 = vst [vmem:[%s336 + $0xc8] sm:$0xff] %v387
                  %v389 = vld [vmem:[%s335 + $0x340] sm:$0xff]
                  %390 = vst [vmem:[%s336 + $0xd0] sm:$0xff] %v389
                  %v391 = vld [vmem:[%s335 + $0x360] sm:$0xff]
                  %392 = vst [vmem:[%s336 + $0xd8] sm:$0xff] %v391
                  %v393 = vld [vmem:[%s335 + $0x380] sm:$0xff]
                  %394 = vst [vmem:[%s336 + $0xe0] sm:$0xff] %v393
                  %v395 = vld [vmem:[%s335 + $0x3a0] sm:$0xff]
                  %396 = vst [vmem:[%s336 + $0xe8] sm:$0xff] %v395
                  %v397 = vld [vmem:[%s335 + $0x3c0] sm:$0xff]
                  %398 = vst [vmem:[%s336 + $0xf0] sm:$0xff] %v397
                  %v399 = vld [vmem:[%s335 + $0x3e0] sm:$0xff]
                  %400 = vst [vmem:[%s336 + $0xf8] sm:$0xff] %v399
                  %v401 = vld [vmem:[%s335 + $0x400] sm:$0xff]
                  %402 = vst [vmem:[%s336 + $0x100] sm:$0xff] %v401
                  %v403 = vld [vmem:[%s335 + $0x420] sm:$0xff]
                  %404 = vst [vmem:[%s336 + $0x108] sm:$0xff] %v403
                  %v405 = vld [vmem:[%s335 + $0x440] sm:$0xff]
                  %406 = vst [vmem:[%s336 + $0x110] sm:$0xff] %v405
                  %v407 = vld [vmem:[%s335 + $0x460] sm:$0xff]
                  %408 = vst [vmem:[%s336 + $0x118] sm:$0xff] %v407
                  %v409 = vld [vmem:[%s335 + $0x480] sm:$0xff]
                  %410 = vst [vmem:[%s336 + $0x120] sm:$0xff] %v409
                  %v411 = vld [vmem:[%s335 + $0x4a0] sm:$0xff]
                  %412 = vst [vmem:[%s336 + $0x128] sm:$0xff] %v411
                  %v413 = vld [vmem:[%s335 + $0x4c0] sm:$0xff]
                  %414 = vst [vmem:[%s336 + $0x130] sm:$0xff] %v413
                  %v415 = vld [vmem:[%s335 + $0x4e0] sm:$0xff]
                  %416 = vst [vmem:[%s336 + $0x138] sm:$0xff] %v415
                  %v417 = vld [vmem:[%s335 + $0x500] sm:$0xff]
                  %418 = vst [vmem:[%s336 + $0x140] sm:$0xff] %v417
                  %v419 = vld [vmem:[%s335 + $0x520] sm:$0xff]
                  %420 = vst [vmem:[%s336 + $0x148] sm:$0xff] %v419
                  %v421 = vld [vmem:[%s335 + $0x540] sm:$0xff]
                  %422 = vst [vmem:[%s336 + $0x150] sm:$0xff] %v421
                  %v423 = vld [vmem:[%s335 + $0x560] sm:$0xff]
                  %424 = vst [vmem:[%s336 + $0x158] sm:$0xff] %v423
                  %v425 = vld [vmem:[%s335 + $0x580] sm:$0xff]
                  %426 = vst [vmem:[%s336 + $0x160] sm:$0xff] %v425
                  %v427 = vld [vmem:[%s335 + $0x5a0] sm:$0xff]
                  %428 = vst [vmem:[%s336 + $0x168] sm:$0xff] %v427
                  %v429 = vld [vmem:[%s335 + $0x5c0] sm:$0xff]
                  %430 = vst [vmem:[%s336 + $0x170] sm:$0xff] %v429
                  %v431 = vld [vmem:[%s335 + $0x5e0] sm:$0xff]
                  %432 = vst [vmem:[%s336 + $0x178] sm:$0xff] %v431
                  %v433 = vld [vmem:[%s335 + $0x600] sm:$0xff]
                  %434 = vst [vmem:[%s336 + $0x180] sm:$0xff] %v433
                  %v435 = vld [vmem:[%s335 + $0x620] sm:$0xff]
                  %436 = vst [vmem:[%s336 + $0x188] sm:$0xff] %v435
                  %v437 = vld [vmem:[%s335 + $0x640] sm:$0xff]
                  %438 = vst [vmem:[%s336 + $0x190] sm:$0xff] %v437
                  %v439 = vld [vmem:[%s335 + $0x660] sm:$0xff]
                  %440 = vst [vmem:[%s336 + $0x198] sm:$0xff] %v439
                  %v441 = vld [vmem:[%s335 + $0x680] sm:$0xff]
                  %442 = vst [vmem:[%s336 + $0x1a0] sm:$0xff] %v441
                  %v443 = vld [vmem:[%s335 + $0x6a0] sm:$0xff]
                  %444 = vst [vmem:[%s336 + $0x1a8] sm:$0xff] %v443
                  %v445 = vld [vmem:[%s335 + $0x6c0] sm:$0xff]
                  %446 = vst [vmem:[%s336 + $0x1b0] sm:$0xff] %v445
                  %v447 = vld [vmem:[%s335 + $0x6e0] sm:$0xff]
                  %448 = vst [vmem:[%s336 + $0x1b8] sm:$0xff] %v447
                  %v449 = vld [vmem:[%s335 + $0x700] sm:$0xff]
                  %450 = vst [vmem:[%s336 + $0x1c0] sm:$0xff] %v449
                  %v451 = vld [vmem:[%s335 + $0x720] sm:$0xff]
                  %452 = vst [vmem:[%s336 + $0x1c8] sm:$0xff] %v451
                  %v453 = vld [vmem:[%s335 + $0x740] sm:$0xff]
                  %454 = vst [vmem:[%s336 + $0x1d0] sm:$0xff] %v453
                  %v455 = vld [vmem:[%s335 + $0x760] sm:$0xff]
                  %456 = vst [vmem:[%s336 + $0x1d8] sm:$0xff] %v455
                  %v457 = vld [vmem:[%s335 + $0x780] sm:$0xff]
                  %458 = vst [vmem:[%s336 + $0x1e0] sm:$0xff] %v457
                  %v459 = vld [vmem:[%s335 + $0x7a0] sm:$0xff]
                  %460 = vst [vmem:[%s336 + $0x1e8] sm:$0xff] %v459
                  %v461 = vld [vmem:[%s335 + $0x7c0] sm:$0xff]
                  %462 = vst [vmem:[%s336 + $0x1f0] sm:$0xff] %v461
                  %v463 = vld [vmem:[%s335 + $0x7e0] sm:$0xff]
                  %464 = vst [vmem:[%s336 + $0x1f8] sm:$0xff] %v463
                $region52: #{_lambda_.19} parent=46 // loop_footer
                  %s334 = sadd.s32 1, %s330
                $region53: #{_lambda_.19} parent=46 // loop_footer_branch
                  %329 = sbr.rel target = $region49
                $region54: #{_lambda_.19} parent=46 // loop_exit
                  _
              $region47: #{_lambda_.19} parent=31 // pred_fallthru
                _
              // Predicated region
              $region55: #{_lambda_.19} parent=31 // pred_check
                _
              $region56: #{_lambda_.19} parent=31 // pred_check_branch
                %466 = sbr.rel target = $region58
              $region57: #{_lambda_.19} parent=31 // pred_region
                _
              $region58: #{_lambda_.19} parent=31 // pred_fallthru
                _
            $region32: #{_lambda_.19} parent=27 // pred_fallthru
              _
            // Predicated region
            $region33: #{_lambda_.19} parent=27 // pred_check
              _
            $region34: #{_lambda_.19} parent=27 // pred_check_branch
              %188 = sbr.rel target = $region36
            $region35: #{_lambda_.19} parent=27 // pred_region
              %s190 = ssub.s32 256, 1
              loop: start=0, step=1, limit=1
              $region37: #{_lambda_.19} parent=35 // loop_pre_header
                _
              $region38: #{_lambda_.19} parent=35 // loop_header
                %s192 = sphi 0, %s196
                %p193 = scmp.ge.s32.totalorder %s192, 1
                %s197 = sphi %s182, %s182
                %s198 = sphi %s176, %s176
              $region39: #{_lambda_.19} parent=35 // loop_header_branch
                %195 = sbr.rel (%p193) target = $region43
              $region40: #{_lambda_.19} parent=35 // loop_body
                %v199 = vld [vmem:[%s197] sm:%s190]
                %200 = vst [vmem:[%s198] sm:%s190] %v199
                %v201 = vld [vmem:[%s197 + $0x20] sm:%s190]
                %202 = vst [vmem:[%s198 + $0x8] sm:%s190] %v201
                %v203 = vld [vmem:[%s197 + $0x40] sm:%s190]
                %204 = vst [vmem:[%s198 + $0x10] sm:%s190] %v203
                %v205 = vld [vmem:[%s197 + $0x60] sm:%s190]
                %206 = vst [vmem:[%s198 + $0x18] sm:%s190] %v205
                %v207 = vld [vmem:[%s197 + $0x80] sm:%s190]
                %208 = vst [vmem:[%s198 + $0x20] sm:%s190] %v207
                %v209 = vld [vmem:[%s197 + $0xa0] sm:%s190]
                %210 = vst [vmem:[%s198 + $0x28] sm:%s190] %v209
                %v211 = vld [vmem:[%s197 + $0xc0] sm:%s190]
                %212 = vst [vmem:[%s198 + $0x30] sm:%s190] %v211
                %v213 = vld [vmem:[%s197 + $0xe0] sm:%s190]
                %214 = vst [vmem:[%s198 + $0x38] sm:%s190] %v213
                %v215 = vld [vmem:[%s197 + $0x100] sm:%s190]
                %216 = vst [vmem:[%s198 + $0x40] sm:%s190] %v215
                %v217 = vld [vmem:[%s197 + $0x120] sm:%s190]
                %218 = vst [vmem:[%s198 + $0x48] sm:%s190] %v217
                %v219 = vld [vmem:[%s197 + $0x140] sm:%s190]
                %220 = vst [vmem:[%s198 + $0x50] sm:%s190] %v219
                %v221 = vld [vmem:[%s197 + $0x160] sm:%s190]
                %222 = vst [vmem:[%s198 + $0x58] sm:%s190] %v221
                %v223 = vld [vmem:[%s197 + $0x180] sm:%s190]
                %224 = vst [vmem:[%s198 + $0x60] sm:%s190] %v223
                %v225 = vld [vmem:[%s197 + $0x1a0] sm:%s190]
                %226 = vst [vmem:[%s198 + $0x68] sm:%s190] %v225
                %v227 = vld [vmem:[%s197 + $0x1c0] sm:%s190]
                %228 = vst [vmem:[%s198 + $0x70] sm:%s190] %v227
                %v229 = vld [vmem:[%s197 + $0x1e0] sm:%s190]
                %230 = vst [vmem:[%s198 + $0x78] sm:%s190] %v229
                %v231 = vld [vmem:[%s197 + $0x200] sm:%s190]
                %232 = vst [vmem:[%s198 + $0x80] sm:%s190] %v231
                %v233 = vld [vmem:[%s197 + $0x220] sm:%s190]
                %234 = vst [vmem:[%s198 + $0x88] sm:%s190] %v233
                %v235 = vld [vmem:[%s197 + $0x240] sm:%s190]
                %236 = vst [vmem:[%s198 + $0x90] sm:%s190] %v235
                %v237 = vld [vmem:[%s197 + $0x260] sm:%s190]
                %238 = vst [vmem:[%s198 + $0x98] sm:%s190] %v237
                %v239 = vld [vmem:[%s197 + $0x280] sm:%s190]
                %240 = vst [vmem:[%s198 + $0xa0] sm:%s190] %v239
                %v241 = vld [vmem:[%s197 + $0x2a0] sm:%s190]
                %242 = vst [vmem:[%s198 + $0xa8] sm:%s190] %v241
                %v243 = vld [vmem:[%s197 + $0x2c0] sm:%s190]
                %244 = vst [vmem:[%s198 + $0xb0] sm:%s190] %v243
                %v245 = vld [vmem:[%s197 + $0x2e0] sm:%s190]
                %246 = vst [vmem:[%s198 + $0xb8] sm:%s190] %v245
                %v247 = vld [vmem:[%s197 + $0x300] sm:%s190]
                %248 = vst [vmem:[%s198 + $0xc0] sm:%s190] %v247
                %v249 = vld [vmem:[%s197 + $0x320] sm:%s190]
                %250 = vst [vmem:[%s198 + $0xc8] sm:%s190] %v249
                %v251 = vld [vmem:[%s197 + $0x340] sm:%s190]
                %252 = vst [vmem:[%s198 + $0xd0] sm:%s190] %v251
                %v253 = vld [vmem:[%s197 + $0x360] sm:%s190]
                %254 = vst [vmem:[%s198 + $0xd8] sm:%s190] %v253
                %v255 = vld [vmem:[%s197 + $0x380] sm:%s190]
                %256 = vst [vmem:[%s198 + $0xe0] sm:%s190] %v255
                %v257 = vld [vmem:[%s197 + $0x3a0] sm:%s190]
                %258 = vst [vmem:[%s198 + $0xe8] sm:%s190] %v257
                %v259 = vld [vmem:[%s197 + $0x3c0] sm:%s190]
                %260 = vst [vmem:[%s198 + $0xf0] sm:%s190] %v259
                %v261 = vld [vmem:[%s197 + $0x3e0] sm:%s190]
                %262 = vst [vmem:[%s198 + $0xf8] sm:%s190] %v261
                %v263 = vld [vmem:[%s197 + $0x400] sm:%s190]
                %264 = vst [vmem:[%s198 + $0x100] sm:%s190] %v263
                %v265 = vld [vmem:[%s197 + $0x420] sm:%s190]
                %266 = vst [vmem:[%s198 + $0x108] sm:%s190] %v265
                %v267 = vld [vmem:[%s197 + $0x440] sm:%s190]
                %268 = vst [vmem:[%s198 + $0x110] sm:%s190] %v267
                %v269 = vld [vmem:[%s197 + $0x460] sm:%s190]
                %270 = vst [vmem:[%s198 + $0x118] sm:%s190] %v269
                %v271 = vld [vmem:[%s197 + $0x480] sm:%s190]
                %272 = vst [vmem:[%s198 + $0x120] sm:%s190] %v271
                %v273 = vld [vmem:[%s197 + $0x4a0] sm:%s190]
                %274 = vst [vmem:[%s198 + $0x128] sm:%s190] %v273
                %v275 = vld [vmem:[%s197 + $0x4c0] sm:%s190]
                %276 = vst [vmem:[%s198 + $0x130] sm:%s190] %v275
                %v277 = vld [vmem:[%s197 + $0x4e0] sm:%s190]
                %278 = vst [vmem:[%s198 + $0x138] sm:%s190] %v277
                %v279 = vld [vmem:[%s197 + $0x500] sm:%s190]
                %280 = vst [vmem:[%s198 + $0x140] sm:%s190] %v279
                %v281 = vld [vmem:[%s197 + $0x520] sm:%s190]
                %282 = vst [vmem:[%s198 + $0x148] sm:%s190] %v281
                %v283 = vld [vmem:[%s197 + $0x540] sm:%s190]
                %284 = vst [vmem:[%s198 + $0x150] sm:%s190] %v283
                %v285 = vld [vmem:[%s197 + $0x560] sm:%s190]
                %286 = vst [vmem:[%s198 + $0x158] sm:%s190] %v285
                %v287 = vld [vmem:[%s197 + $0x580] sm:%s190]
                %288 = vst [vmem:[%s198 + $0x160] sm:%s190] %v287
                %v289 = vld [vmem:[%s197 + $0x5a0] sm:%s190]
                %290 = vst [vmem:[%s198 + $0x168] sm:%s190] %v289
                %v291 = vld [vmem:[%s197 + $0x5c0] sm:%s190]
                %292 = vst [vmem:[%s198 + $0x170] sm:%s190] %v291
                %v293 = vld [vmem:[%s197 + $0x5e0] sm:%s190]
                %294 = vst [vmem:[%s198 + $0x178] sm:%s190] %v293
                %v295 = vld [vmem:[%s197 + $0x600] sm:%s190]
                %296 = vst [vmem:[%s198 + $0x180] sm:%s190] %v295
                %v297 = vld [vmem:[%s197 + $0x620] sm:%s190]
                %298 = vst [vmem:[%s198 + $0x188] sm:%s190] %v297
                %v299 = vld [vmem:[%s197 + $0x640] sm:%s190]
                %300 = vst [vmem:[%s198 + $0x190] sm:%s190] %v299
                %v301 = vld [vmem:[%s197 + $0x660] sm:%s190]
                %302 = vst [vmem:[%s198 + $0x198] sm:%s190] %v301
                %v303 = vld [vmem:[%s197 + $0x680] sm:%s190]
                %304 = vst [vmem:[%s198 + $0x1a0] sm:%s190] %v303
                %v305 = vld [vmem:[%s197 + $0x6a0] sm:%s190]
                %306 = vst [vmem:[%s198 + $0x1a8] sm:%s190] %v305
                %v307 = vld [vmem:[%s197 + $0x6c0] sm:%s190]
                %308 = vst [vmem:[%s198 + $0x1b0] sm:%s190] %v307
                %v309 = vld [vmem:[%s197 + $0x6e0] sm:%s190]
                %310 = vst [vmem:[%s198 + $0x1b8] sm:%s190] %v309
                %v311 = vld [vmem:[%s197 + $0x700] sm:%s190]
                %312 = vst [vmem:[%s198 + $0x1c0] sm:%s190] %v311
                %v313 = vld [vmem:[%s197 + $0x720] sm:%s190]
                %314 = vst [vmem:[%s198 + $0x1c8] sm:%s190] %v313
                %v315 = vld [vmem:[%s197 + $0x740] sm:%s190]
                %316 = vst [vmem:[%s198 + $0x1d0] sm:%s190] %v315
                %v317 = vld [vmem:[%s197 + $0x760] sm:%s190]
                %318 = vst [vmem:[%s198 + $0x1d8] sm:%s190] %v317
                %v319 = vld [vmem:[%s197 + $0x780] sm:%s190]
                %320 = vst [vmem:[%s198 + $0x1e0] sm:%s190] %v319
                %v321 = vld [vmem:[%s197 + $0x7a0] sm:%s190]
                %322 = vst [vmem:[%s198 + $0x1e8] sm:%s190] %v321
                %v323 = vld [vmem:[%s197 + $0x7c0] sm:%s190]
                %324 = vst [vmem:[%s198 + $0x1f0] sm:%s190] %v323
                %v325 = vld [vmem:[%s197 + $0x7e0] sm:%s190]
                %326 = vst [vmem:[%s198 + $0x1f8] sm:%s190] %v325
              $region41: #{_lambda_.19} parent=35 // loop_footer
                %s196 = sadd.s32 1, %s192
              $region42: #{_lambda_.19} parent=35 // loop_footer_branch
                %191 = sbr.rel target = $region38
              $region43: #{_lambda_.19} parent=35 // loop_exit
                _
            $region36: #{_lambda_.19} parent=27 // pred_fallthru
              _
          $region28: #{_lambda_.19} parent=23 // pred_fallthru
            _
          %467 = vnop
        $region24: #{_lambda_.19} parent=15 // pred_fallthru
          _
        // Predicated region
        $region59: #{_lambda_.19} parent=15 // pred_check
          %p468 = pneg %p104
        $region60: #{_lambda_.19} parent=15 // pred_check_branch
          %470 = sbr.rel (%p468) target = $region62
        $region61: #{_lambda_.19} parent=15 // pred_region
          %s471 = smul.u32 2, %s17
          %p472 = scmp.lt.s32.totalorder %s471, 7
          %s473 = scalar_select %p472, %s471, 7
          %s474 = scalar_lea.vmem %s2, %s473
          %s475 = smul.u32 2, %s17
        $region62: #{_lambda_.19} parent=15 // pred_fallthru
          _
      $region16: #{_lambda_.19} parent=5 // pred_fallthru
        _
      %p476 = scmp.le.s32.totalorder 1, %s9
      %p477 = scmp.lt.s32.totalorder %s9, 9
      %p478 = pnand %p476, %p477
      %p479 = pneg %p478
      // Predicated region
      $region63: #{_lambda_.19} parent=5 // pred_check
        _
      $region64: #{_lambda_.19} parent=5 // pred_check_branch
        %481 = sbr.rel (%p478) target = $region66
      $region65: #{_lambda_.19} parent=5 // pred_region
        %s482 = ssub.s32 %s9, 1
        %s483 = sand.u32 %s71, 1
        %s484 = sand.u32 %s71, 1
        %s485 = smul.addr %s484, 512
        %s486 = scalar_lea.vmem [#allocation3], %s485
        // Predicated region
        $region67: #{_lambda_.19} parent=65 // pred_check
          %p487 = pneg %p84
        $region68: #{_lambda_.19} parent=65 // pred_check_branch
          %489 = sbr.rel (%p487) target = $region70
        $region69: #{_lambda_.19} parent=65 // pred_region
          _
        $region70: #{_lambda_.19} parent=65 // pred_fallthru
          _
        %s490 = smul.u32 4, %s21
        %p491 = scmp.lt.s32.totalorder %s19, 0
        %s492 = scalar_select %p491, %s19, 0
        %p493 = scmp.lt.s32.totalorder %s490, 7
        %s494 = scalar_select %p493, %s490, 7
        %s495 = smul.addr %s492, 8
        %s496 = sadd.s32 %s494, %s495
        %s497 = smul.addr %s496, 2
        %s498 = scalar_lea.vmem %s0, %s497
        %p499 = pneg %p56
        %p500 = pneg %p53
        %s501 = sand.u32 %s71, 1
        %s502 = sand.u32 %s71, 1
        %s503 = smul.addr %s502, 512
        %s504 = scalar_lea.vmem [#allocation3], %s503
        %p505 = pneg %p84
        %p506 = pneg %p81
        %s507 = smul.u32 2, %s20
        %p508 = scmp.lt.s32.totalorder %s507, 7
        %s509 = scalar_select %p508, %s507, 7
        %s510 = scalar_lea.vmem %s2, %s509
        %p511 = pneg %p110
        %p512 = pneg %p107
        %p513 = pneg %p138
        %p514 = pneg %p135
        %s515 = smul.u32 2, %s20
        %p516 = scmp.lt.s32.totalorder %s19, 0
        %s517 = scalar_select %p516, %s19, 0
        %p518 = scmp.lt.s32.totalorder %s515, 7
        %s519 = scalar_select %p518, %s515, 7
        %s520 = smul.addr %s517, 8
        %s521 = sadd.s32 %s519, %s520
        %s522 = smul.addr %s521, 2
        %s523 = scalar_lea.vmem %s3, %s522
        %s524 = smul.u32 4, %s21
        %p525 = scmp.lt.s32.totalorder %s19, 0
        %s526 = scalar_select %p525, %s19, 0
        %p527 = scmp.lt.s32.totalorder %s524, 7
        %s528 = scalar_select %p527, %s524, 7
        %s529 = smul.addr %s526, 8
        %s530 = sadd.s32 %s528, %s529
        %s531 = smul.addr %s530, 2
        %s532 = scalar_lea.vmem %s0, %s531
        %s533 = smul.u32 4, %s21
        %s534 = smul.u32 64, %s21
        %s535 = smul.u32 2, %s20
        %s536 = smul.u32 2, %s20
        %p537 = scmp.lt.s32.totalorder %s536, 7
        %s538 = scalar_select %p537, %s536, 7
        %s539 = scalar_lea.vmem %s2, %s538
        %s540 = smul.u32 2, %s20
        %s541 = smul.u32 2, %s20
        %p542 = scmp.lt.s32.totalorder %s19, 0
        %s543 = scalar_select %p542, %s19, 0
        %p544 = scmp.lt.s32.totalorder %s541, 7
        %s545 = scalar_select %p544, %s541, 7
        %s546 = smul.addr %s543, 8
        %s547 = sadd.s32 %s545, %s546
        %s548 = smul.addr %s547, 2
        %s549 = scalar_lea.vmem %s3, %s548
        %s550 = smul.u32 2, %s20
        %p551 = scmp.eq.s32.totalorder %s21, 0
        // Predicated region
        $region71: #{_lambda_.19} parent=65 // pred_check
          %p552 = pneg %p551
        $region72: #{_lambda_.19} parent=65 // pred_check_branch
          %554 = sbr.rel (%p552) target = $region74
        $region73: #{_lambda_.19} parent=65 // pred_region
          %555 = vst [vmem:[#allocation2] sm:$0xf] 0.0
        $region74: #{_lambda_.19} parent=65 // pred_fallthru
          _
        %v556 = vld [vmem:[#allocation2] sm:$0xf]
        %v557 = vld [vmem:[%s532] sm:$0xff]
        %v559 = vcombine.high %v557, %v557
        %v561 = vunpack.c.l.s4 1983009808
        %v562 = vunpack.c.0.s8 %v561
        %v563 = vlaneseq
        %v564 = vshrl.u32 %v563, 7
        %v565 = vsub.s32 %v562, %v564
        %v566 = vrot.slane %v557, %v565
        %v568 = vunpack.c.l.s4 1983009808
        %v569 = vunpack.c.0.s8 %v568
        %v570 = vlaneseq
        %v571 = vshrl.u32 %v570, 7
        %v572 = vsub.s32 %v569, %v571
        %v573 = vrot.slane %v559, %v572
        %v574 = vcombine.high %v566, %v566
        %v575 = vcombine.high %v573, %v573
        %v580 = vpack.c.bf16 %v566, %v566
        %v581 = vpack.c.bf16 %v574, %v574
        %v582 = vpack.c.bf16 %v573, %v573
        %v583 = vpack.c.bf16 %v575, %v575
        %v584 = vld [vmem:[%s486] sm:$0xff]
        %v585 = vld [vmem:[%s486 + $0x8] sm:$0xff]
        %v586 = vld [vmem:[%s486 + $0x10] sm:$0xff]
        %v587 = vld [vmem:[%s486 + $0x18] sm:$0xff]
        %v588 = vld [vmem:[%s486 + $0x20] sm:$0xff]
        %v589 = vld [vmem:[%s486 + $0x28] sm:$0xff]
        %v590 = vld [vmem:[%s486 + $0x30] sm:$0xff]
        %v591 = vld [vmem:[%s486 + $0x38] sm:$0xff]
        %v592 = vld [vmem:[%s486 + $0x40] sm:$0xff]
        %v593 = vld [vmem:[%s486 + $0x48] sm:$0xff]
        %v594 = vld [vmem:[%s486 + $0x50] sm:$0xff]
        %v595 = vld [vmem:[%s486 + $0x58] sm:$0xff]
        %v596 = vld [vmem:[%s486 + $0x60] sm:$0xff]
        %v597 = vld [vmem:[%s486 + $0x68] sm:$0xff]
        %v598 = vld [vmem:[%s486 + $0x70] sm:$0xff]
        %v599 = vld [vmem:[%s486 + $0x78] sm:$0xff]
        %v600 = vld [vmem:[%s486 + $0x80] sm:$0xff]
        %v601 = vld [vmem:[%s486 + $0x88] sm:$0xff]
        %v602 = vld [vmem:[%s486 + $0x90] sm:$0xff]
        %v603 = vld [vmem:[%s486 + $0x98] sm:$0xff]
        %v604 = vld [vmem:[%s486 + $0xa0] sm:$0xff]
        %v605 = vld [vmem:[%s486 + $0xa8] sm:$0xff]
        %v606 = vld [vmem:[%s486 + $0xb0] sm:$0xff]
        %v607 = vld [vmem:[%s486 + $0xb8] sm:$0xff]
        %v608 = vld [vmem:[%s486 + $0xc0] sm:$0xff]
        %v609 = vld [vmem:[%s486 + $0xc8] sm:$0xff]
        %v610 = vld [vmem:[%s486 + $0xd0] sm:$0xff]
        %v611 = vld [vmem:[%s486 + $0xd8] sm:$0xff]
        %v612 = vld [vmem:[%s486 + $0xe0] sm:$0xff]
        %v613 = vld [vmem:[%s486 + $0xe8] sm:$0xff]
        %v614 = vld [vmem:[%s486 + $0xf0] sm:$0xff]
        %v615 = vld [vmem:[%s486 + $0xf8] sm:$0xff]
        %v616 = vld [vmem:[%s486 + $0x100] sm:$0xff]
        %v617 = vld [vmem:[%s486 + $0x108] sm:$0xff]
        %v618 = vld [vmem:[%s486 + $0x110] sm:$0xff]
        %v619 = vld [vmem:[%s486 + $0x118] sm:$0xff]
        %v620 = vld [vmem:[%s486 + $0x120] sm:$0xff]
        %v621 = vld [vmem:[%s486 + $0x128] sm:$0xff]
        %v622 = vld [vmem:[%s486 + $0x130] sm:$0xff]
        %v623 = vld [vmem:[%s486 + $0x138] sm:$0xff]
        %v624 = vld [vmem:[%s486 + $0x140] sm:$0xff]
        %v625 = vld [vmem:[%s486 + $0x148] sm:$0xff]
        %v626 = vld [vmem:[%s486 + $0x150] sm:$0xff]
        %v627 = vld [vmem:[%s486 + $0x158] sm:$0xff]
        %v628 = vld [vmem:[%s486 + $0x160] sm:$0xff]
        %v629 = vld [vmem:[%s486 + $0x168] sm:$0xff]
        %v630 = vld [vmem:[%s486 + $0x170] sm:$0xff]
        %v631 = vld [vmem:[%s486 + $0x178] sm:$0xff]
        %v632 = vld [vmem:[%s486 + $0x180] sm:$0xff]
        %v633 = vld [vmem:[%s486 + $0x188] sm:$0xff]
        %v634 = vld [vmem:[%s486 + $0x190] sm:$0xff]
        %v635 = vld [vmem:[%s486 + $0x198] sm:$0xff]
        %v636 = vld [vmem:[%s486 + $0x1a0] sm:$0xff]
        %v637 = vld [vmem:[%s486 + $0x1a8] sm:$0xff]
        %v638 = vld [vmem:[%s486 + $0x1b0] sm:$0xff]
        %v639 = vld [vmem:[%s486 + $0x1b8] sm:$0xff]
        %v640 = vld [vmem:[%s486 + $0x1c0] sm:$0xff]
        %v641 = vld [vmem:[%s486 + $0x1c8] sm:$0xff]
        %v642 = vld [vmem:[%s486 + $0x1d0] sm:$0xff]
        %v643 = vld [vmem:[%s486 + $0x1d8] sm:$0xff]
        %v644 = vld [vmem:[%s486 + $0x1e0] sm:$0xff]
        %v645 = vld [vmem:[%s486 + $0x1e8] sm:$0xff]
        %v646 = vld [vmem:[%s486 + $0x1f0] sm:$0xff]
        %v647 = vld [vmem:[%s486 + $0x1f8] sm:$0xff]
        %v712 = vunpack.c.l.b16 %v584
        %v713 = vunpack.c.h.b16 %v584
        %v714 = vunpack.c.l.b16 %v585
        %v715 = vunpack.c.h.b16 %v585
        %v716 = vunpack.c.l.b16 %v586
        %v717 = vunpack.c.h.b16 %v586
        %v718 = vunpack.c.l.b16 %v587
        %v719 = vunpack.c.h.b16 %v587
        %v720 = vunpack.c.l.b16 %v588
        %v721 = vunpack.c.h.b16 %v588
        %v722 = vunpack.c.l.b16 %v589
        %v723 = vunpack.c.h.b16 %v589
        %v724 = vunpack.c.l.b16 %v590
        %v725 = vunpack.c.h.b16 %v590
        %v726 = vunpack.c.l.b16 %v591
        %v727 = vunpack.c.h.b16 %v591
        %v728 = vunpack.c.l.b16 %v592
        %v729 = vunpack.c.h.b16 %v592
        %v730 = vunpack.c.l.b16 %v593
        %v731 = vunpack.c.h.b16 %v593
        %v732 = vunpack.c.l.b16 %v594
        %v733 = vunpack.c.h.b16 %v594
        %v734 = vunpack.c.l.b16 %v595
        %v735 = vunpack.c.h.b16 %v595
        %v736 = vunpack.c.l.b16 %v596
        %v737 = vunpack.c.h.b16 %v596
        %v738 = vunpack.c.l.b16 %v597
        %v739 = vunpack.c.h.b16 %v597
        %v740 = vunpack.c.l.b16 %v598
        %v741 = vunpack.c.h.b16 %v598
        %v742 = vunpack.c.l.b16 %v599
        %v743 = vunpack.c.h.b16 %v599
        %v744 = vunpack.c.l.b16 %v600
        %v745 = vunpack.c.h.b16 %v600
        %v746 = vunpack.c.l.b16 %v601
        %v747 = vunpack.c.h.b16 %v601
        %v748 = vunpack.c.l.b16 %v602
        %v749 = vunpack.c.h.b16 %v602
        %v750 = vunpack.c.l.b16 %v603
        %v751 = vunpack.c.h.b16 %v603
        %v752 = vunpack.c.l.b16 %v604
        %v753 = vunpack.c.h.b16 %v604
        %v754 = vunpack.c.l.b16 %v605
        %v755 = vunpack.c.h.b16 %v605
        %v756 = vunpack.c.l.b16 %v606
        %v757 = vunpack.c.h.b16 %v606
        %v758 = vunpack.c.l.b16 %v607
        %v759 = vunpack.c.h.b16 %v607
        %v760 = vunpack.c.l.b16 %v608
        %v761 = vunpack.c.h.b16 %v608
        %v762 = vunpack.c.l.b16 %v609
        %v763 = vunpack.c.h.b16 %v609
        %v764 = vunpack.c.l.b16 %v610
        %v765 = vunpack.c.h.b16 %v610
        %v766 = vunpack.c.l.b16 %v611
        %v767 = vunpack.c.h.b16 %v611
        %v768 = vunpack.c.l.b16 %v612
        %v769 = vunpack.c.h.b16 %v612
        %v770 = vunpack.c.l.b16 %v613
        %v771 = vunpack.c.h.b16 %v613
        %v772 = vunpack.c.l.b16 %v614
        %v773 = vunpack.c.h.b16 %v614
        %v774 = vunpack.c.l.b16 %v615
        %v775 = vunpack.c.h.b16 %v615
        %v776 = vunpack.c.l.b16 %v616
        %v777 = vunpack.c.h.b16 %v616
        %v778 = vunpack.c.l.b16 %v617
        %v779 = vunpack.c.h.b16 %v617
        %v780 = vunpack.c.l.b16 %v618
        %v781 = vunpack.c.h.b16 %v618
        %v782 = vunpack.c.l.b16 %v619
        %v783 = vunpack.c.h.b16 %v619
        %v784 = vunpack.c.l.b16 %v620
        %v785 = vunpack.c.h.b16 %v620
        %v786 = vunpack.c.l.b16 %v621
        %v787 = vunpack.c.h.b16 %v621
        %v788 = vunpack.c.l.b16 %v622
        %v789 = vunpack.c.h.b16 %v622
        %v790 = vunpack.c.l.b16 %v623
        %v791 = vunpack.c.h.b16 %v623
        %v792 = vunpack.c.l.b16 %v624
        %v793 = vunpack.c.h.b16 %v624
        %v794 = vunpack.c.l.b16 %v625
        %v795 = vunpack.c.h.b16 %v625
        %v796 = vunpack.c.l.b16 %v626
        %v797 = vunpack.c.h.b16 %v626
        %v798 = vunpack.c.l.b16 %v627
        %v799 = vunpack.c.h.b16 %v627
        %v800 = vunpack.c.l.b16 %v628
        %v801 = vunpack.c.h.b16 %v628
        %v802 = vunpack.c.l.b16 %v629
        %v803 = vunpack.c.h.b16 %v629
        %v804 = vunpack.c.l.b16 %v630
        %v805 = vunpack.c.h.b16 %v630
        %v806 = vunpack.c.l.b16 %v631
        %v807 = vunpack.c.h.b16 %v631
        %v808 = vunpack.c.l.b16 %v632
        %v809 = vunpack.c.h.b16 %v632
        %v810 = vunpack.c.l.b16 %v633
        %v811 = vunpack.c.h.b16 %v633
        %v812 = vunpack.c.l.b16 %v634
        %v813 = vunpack.c.h.b16 %v634
        %v814 = vunpack.c.l.b16 %v635
        %v815 = vunpack.c.h.b16 %v635
        %v816 = vunpack.c.l.b16 %v636
        %v817 = vunpack.c.h.b16 %v636
        %v818 = vunpack.c.l.b16 %v637
        %v819 = vunpack.c.h.b16 %v637
        %v820 = vunpack.c.l.b16 %v638
        %v821 = vunpack.c.h.b16 %v638
        %v822 = vunpack.c.l.b16 %v639
        %v823 = vunpack.c.h.b16 %v639
        %v824 = vunpack.c.l.b16 %v640
        %v825 = vunpack.c.h.b16 %v640
        %v826 = vunpack.c.l.b16 %v641
        %v827 = vunpack.c.h.b16 %v641
        %v828 = vunpack.c.l.b16 %v642
        %v829 = vunpack.c.h.b16 %v642
        %v830 = vunpack.c.l.b16 %v643
        %v831 = vunpack.c.h.b16 %v643
        %v832 = vunpack.c.l.b16 %v644
        %v833 = vunpack.c.h.b16 %v644
        %v834 = vunpack.c.l.b16 %v645
        %v835 = vunpack.c.h.b16 %v645
        %v836 = vunpack.c.l.b16 %v646
        %v837 = vunpack.c.h.b16 %v646
        %v838 = vunpack.c.l.b16 %v647
        %v839 = vunpack.c.h.b16 %v647
        %v840 = vpack.c.b16 %v714, %v712
        %v841 = vpack.c.b16 %v715, %v713
        %v842 = vpack.c.b16 %v718, %v716
        %v843 = vpack.c.b16 %v719, %v717
        %v844 = vpack.c.b16 %v722, %v720
        %v845 = vpack.c.b16 %v723, %v721
        %v846 = vpack.c.b16 %v726, %v724
        %v847 = vpack.c.b16 %v727, %v725
        %v848 = vpack.c.b16 %v730, %v728
        %v849 = vpack.c.b16 %v731, %v729
        %v850 = vpack.c.b16 %v734, %v732
        %v851 = vpack.c.b16 %v735, %v733
        %v852 = vpack.c.b16 %v738, %v736
        %v853 = vpack.c.b16 %v739, %v737
        %v854 = vpack.c.b16 %v742, %v740
        %v855 = vpack.c.b16 %v743, %v741
        %v856 = vpack.c.b16 %v746, %v744
        %v857 = vpack.c.b16 %v747, %v745
        %v858 = vpack.c.b16 %v750, %v748
        %v859 = vpack.c.b16 %v751, %v749
        %v860 = vpack.c.b16 %v754, %v752
        %v861 = vpack.c.b16 %v755, %v753
        %v862 = vpack.c.b16 %v758, %v756
        %v863 = vpack.c.b16 %v759, %v757
        %v864 = vpack.c.b16 %v762, %v760
        %v865 = vpack.c.b16 %v763, %v761
        %v866 = vpack.c.b16 %v766, %v764
        %v867 = vpack.c.b16 %v767, %v765
        %v868 = vpack.c.b16 %v770, %v768
        %v869 = vpack.c.b16 %v771, %v769
        %v870 = vpack.c.b16 %v774, %v772
        %v871 = vpack.c.b16 %v775, %v773
        %v872 = vpack.c.b16 %v778, %v776
        %v873 = vpack.c.b16 %v779, %v777
        %v874 = vpack.c.b16 %v782, %v780
        %v875 = vpack.c.b16 %v783, %v781
        %v876 = vpack.c.b16 %v786, %v784
        %v877 = vpack.c.b16 %v787, %v785
        %v878 = vpack.c.b16 %v790, %v788
        %v879 = vpack.c.b16 %v791, %v789
        %v880 = vpack.c.b16 %v794, %v792
        %v881 = vpack.c.b16 %v795, %v793
        %v882 = vpack.c.b16 %v798, %v796
        %v883 = vpack.c.b16 %v799, %v797
        %v884 = vpack.c.b16 %v802, %v800
        %v885 = vpack.c.b16 %v803, %v801
        %v886 = vpack.c.b16 %v806, %v804
        %v887 = vpack.c.b16 %v807, %v805
        %v888 = vpack.c.b16 %v810, %v808
        %v889 = vpack.c.b16 %v811, %v809
        %v890 = vpack.c.b16 %v814, %v812
        %v891 = vpack.c.b16 %v815, %v813
        %v892 = vpack.c.b16 %v818, %v816
        %v893 = vpack.c.b16 %v819, %v817
        %v894 = vpack.c.b16 %v822, %v820
        %v895 = vpack.c.b16 %v823, %v821
        %v896 = vpack.c.b16 %v826, %v824
        %v897 = vpack.c.b16 %v827, %v825
        %v898 = vpack.c.b16 %v830, %v828
        %v899 = vpack.c.b16 %v831, %v829
        %v900 = vpack.c.b16 %v834, %v832
        %v901 = vpack.c.b16 %v835, %v833
        %v902 = vpack.c.b16 %v838, %v836
        %v903 = vpack.c.b16 %v839, %v837
        %968 = vmatprep.subr.bf16.mxu0 %v855
        %969 = vmatpush1.bf16.msra.mxu0 %v854
        %970 = vmatprep.subr.bf16.mxu0 %v853
        %971 = vmatpush1.bf16.msra.mxu0 %v852
        %972 = vmatprep.subr.bf16.mxu0 %v851
        %973 = vmatpush1.bf16.msra.mxu0 %v850
        %974 = vmatprep.subr.bf16.mxu0 %v849
        %975 = vmatpush1.bf16.msra.mxu0 %v848
        %976 = vmatprep.subr.bf16.mxu0 %v847
        %977 = vmatpush1.bf16.msra.mxu0 %v846
        %978 = vmatprep.subr.bf16.mxu0 %v845
        %979 = vmatpush1.bf16.msra.mxu0 %v844
        %980 = vmatprep.subr.bf16.mxu0 %v843
        %981 = vmatpush1.bf16.msra.mxu0 %v842
        %982 = vmatprep.subr.bf16.mxu0 %v841
        %983 = vmatpush1.bf16.msra.mxu0 %v840
        %984 = vmatprep.subr.bf16.mxu0 %v871
        %985 = vmatpush2.bf16.msra.mxu0 %v870
        %986 = vmatprep.subr.bf16.mxu0 %v869
        %987 = vmatpush2.bf16.msra.mxu0 %v868
        %988 = vmatprep.subr.bf16.mxu0 %v867
        %989 = vmatpush2.bf16.msra.mxu0 %v866
        %990 = vmatprep.subr.bf16.mxu0 %v865
        %991 = vmatpush2.bf16.msra.mxu0 %v864
        %992 = vmatprep.subr.bf16.mxu0 %v863
        %993 = vmatpush2.bf16.msra.mxu0 %v862
        %994 = vmatprep.subr.bf16.mxu0 %v861
        %995 = vmatpush2.bf16.msra.mxu0 %v860
        %996 = vmatprep.subr.bf16.mxu0 %v859
        %997 = vmatpush2.bf16.msra.mxu0 %v858
        %998 = vmatprep.subr.bf16.mxu0 %v857
        %999 = vmatpush2.bf16.msra.mxu0 %v856
        %1000 = vmatprep.mubr.bf16.mxu0 %v581
        %1001 = vmatmul.mubr.bf16.gmra.mxu0 %v580
        %v1002 = vpop.f32.mrf.mxu0
        %v1003 = vadd.f32 0.0, %v1002
        %v1004 = vpop.f32.mrf.mxu0
        %v1005 = vadd.f32 0.0, %v1004
        %v1006 = vpop.f32.mrf.mxu0
        %v1007 = vpop.f32.mrf.mxu0
        %1008 = vdwg.mxu0
        %1009 = vmatprep.subr.bf16.mxu0 %v887
        %1010 = vmatpush1.bf16.msra.mxu0 %v886
        %1011 = vmatprep.subr.bf16.mxu0 %v885
        %1012 = vmatpush1.bf16.msra.mxu0 %v884
        %1013 = vmatprep.subr.bf16.mxu0 %v883
        %1014 = vmatpush1.bf16.msra.mxu0 %v882
        %1015 = vmatprep.subr.bf16.mxu0 %v881
        %1016 = vmatpush1.bf16.msra.mxu0 %v880
        %1017 = vmatprep.subr.bf16.mxu0 %v879
        %1018 = vmatpush1.bf16.msra.mxu0 %v878
        %1019 = vmatprep.subr.bf16.mxu0 %v877
        %1020 = vmatpush1.bf16.msra.mxu0 %v876
        %1021 = vmatprep.subr.bf16.mxu0 %v875
        %1022 = vmatpush1.bf16.msra.mxu0 %v874
        %1023 = vmatprep.subr.bf16.mxu0 %v873
        %1024 = vmatpush1.bf16.msra.mxu0 %v872
        %1025 = vmatprep.subr.bf16.mxu0 %v903
        %1026 = vmatpush2.bf16.msra.mxu0 %v902
        %1027 = vmatprep.subr.bf16.mxu0 %v901
        %1028 = vmatpush2.bf16.msra.mxu0 %v900
        %1029 = vmatprep.subr.bf16.mxu0 %v899
        %1030 = vmatpush2.bf16.msra.mxu0 %v898
        %1031 = vmatprep.subr.bf16.mxu0 %v897
        %1032 = vmatpush2.bf16.msra.mxu0 %v896
        %1033 = vmatprep.subr.bf16.mxu0 %v895
        %1034 = vmatpush2.bf16.msra.mxu0 %v894
        %1035 = vmatprep.subr.bf16.mxu0 %v893
        %1036 = vmatpush2.bf16.msra.mxu0 %v892
        %1037 = vmatprep.subr.bf16.mxu0 %v891
        %1038 = vmatpush2.bf16.msra.mxu0 %v890
        %1039 = vmatprep.subr.bf16.mxu0 %v889
        %1040 = vmatpush2.bf16.msra.mxu0 %v888
        %1041 = vmatprep.mubr.bf16.mxu0 %v583
        %1042 = vmatmul.mubr.bf16.gmra.mxu0 %v582
        %v1043 = vpop.f32.mrf.mxu0
        %v1044 = vadd.f32 %v1003, %v1043
        %v1045 = vpop.f32.mrf.mxu0
        %v1046 = vadd.f32 %v1005, %v1045
        %v1047 = vpop.f32.mrf.mxu0
        %v1048 = vpop.f32.mrf.mxu0
        %1049 = vdwg.mxu0
        %v1052 = vcombine.low %v1044, %v1046
        %v1054 = vunpack.c.l.s4 1983009808
        %v1055 = vunpack.c.0.s8 %v1054
        %v1056 = vlaneseq
        %v1057 = vshrl.u32 %v1056, 7
        %v1058 = vsub.s32 %v1055, %v1057
        %v1059 = vrot.slane %v1052, %v1058
        %v1061 = vadd.f32 %v556, %v1059
        %1062 = vst [vmem:[#allocation2] sm:$0xf] %v1061
        %p1063 = scmp.eq.s32.totalorder %s21, 1
        // Predicated region
        $region75: #{_lambda_.19} parent=65 // pred_check
          %p1064 = pneg %p1063
        $region76: #{_lambda_.19} parent=65 // pred_check_branch
          %1066 = sbr.rel (%p1064) target = $region78
        $region77: #{_lambda_.19} parent=65 // pred_region
          %v1067 = vld [vmem:[#allocation2] sm:$0xf]
          %v1068 = vld [vmem:[%s539] sm:$0x3]
          %v1070 = vlaneseq
          %v1071 = vshrl.u32 %v1070, 7
          %v1072 = vsub.s32 0, %v1071
          %v1073 = vrot.slane %v1068, %v1072
          %v1074 = vlaneseq
          %v1075 = vshrl.u32 %v1074, 7
          %v1076 = vsub.s32 1, %v1075
          %v1077 = vrot.slane %v1068, %v1076
          %v1078 = vcombine.low %v1073, %v1077
          %v1080 = vunpack.c.l.s4 1983009808
          %v1081 = vunpack.c.0.s8 %v1080
          %v1082 = vlaneseq
          %v1083 = vshrl.u32 %v1082, 7
          %v1084 = vsub.s32 %v1081, %v1083
          %v1085 = vrot.slane %v1078, %v1084
          %v1087 = vadd.f32 %v1067, %v1085
          %1088 = vst [vmem:[%s549] sm:$0xf] %v1087
        $region78: #{_lambda_.19} parent=65 // pred_fallthru
          _
        %s1089 = smul.u32 2, %s20
        %p1090 = scmp.lt.s32.totalorder %s19, 0
        %s1091 = scalar_select %p1090, %s19, 0
        %p1092 = scmp.lt.s32.totalorder %s1089, 7
        %s1093 = scalar_select %p1092, %s1089, 7
        %s1094 = smul.addr %s1091, 8
        %s1095 = sadd.s32 %s1093, %s1094
        %s1096 = smul.addr %s1095, 2
        %s1097 = scalar_lea.vmem %s3, %s1096
        // Predicated region
        $region79: #{_lambda_.19} parent=65 // pred_check
          %p1098 = pneg %p135
        $region80: #{_lambda_.19} parent=65 // pred_check_branch
          %1100 = sbr.rel (%p1098) target = $region82
        $region81: #{_lambda_.19} parent=65 // pred_region
          %s1101 = smul.u32 2, %s20
        $region82: #{_lambda_.19} parent=65 // pred_fallthru
          _
      $region66: #{_lambda_.19} parent=5 // pred_fallthru
        _
      %p1102 = scmp.le.s32.totalorder 2, %s9
      // Predicated region
      $region83: #{_lambda_.19} parent=5 // pred_check
        %p1103 = pneg %p1102
      $region84: #{_lambda_.19} parent=5 // pred_check_branch
        %1105 = sbr.rel (%p1103) target = $region86
      $region85: #{_lambda_.19} parent=5 // pred_region
        %s1106 = ssub.s32 %s9, 2
        // Predicated region
        $region87: #{_lambda_.19} parent=85 // pred_check
          %p1107 = pneg %p141
        $region88: #{_lambda_.19} parent=85 // pred_check_branch
          %1109 = sbr.rel (%p1107) target = $region90
        $region89: #{_lambda_.19} parent=85 // pred_region
          %s1110 = smul.u32 2, %s23
          %p1111 = scmp.lt.s32.totalorder %s22, 0
          %s1112 = scalar_select %p1111, %s22, 0
          %p1113 = scmp.lt.s32.totalorder %s1110, 7
          %s1114 = scalar_select %p1113, %s1110, 7
          %s1115 = smul.addr %s1112, 8
          %s1116 = sadd.s32 %s1114, %s1115
          %s1117 = smul.addr %s1116, 2
          %s1118 = scalar_lea.vmem %s3, %s1117
        $region90: #{_lambda_.19} parent=85 // pred_fallthru
          _
      $region86: #{_lambda_.19} parent=5 // pred_fallthru
        _
    $region6: #{_lambda_.19} parent=1 // loop_footer
      %s13 = sadd.s32 1, %s9
    $region7: #{_lambda_.19} parent=1 // loop_footer_branch
      %8 = sbr.rel target = $region3
    $region8: #{_lambda_.19} parent=1 // loop_exit
      _

// kernel: _lambda_.27
$region0: #{_lambda_.27}
  #allocation0 [shape = 'u32[]', space=smem, size = 0x4, offset = 0x4, fixed_abs, tag = 'smem constant byte address 0x4 - core index']
  #allocation1 [shape = 'u32[144,128]{1,0:T(1,128)}', space=vmem, size = 0x12000, scoped, tag = 'internal scratch']
  %s0 = inlined_call_operand.vmem [shape: f32[2,128], index: 0, kind: input, shape index: {}]
  %s1 = inlined_call_operand.vmem [shape: f32[128,3], index: 1, kind: input, shape index: {}]
  %s2 = inlined_call_operand.vmem [shape: f32[1,3], index: 2, kind: input, shape index: {}]
  %s3 = inlined_call_operand.hbm [shape: f32[2,3], index: 3, kind: output, shape index: {0}]
  %s4 = inlined_call_operand.vmem [shape: s32[2,1], index: 4, kind: output, shape index: {1}]
  %5 = xla_tuple %s3, %s4
  %s6 = sld [smem:[#allocation0]]
  $region30: #{_lambda_.27} parent=0
    _
  %s8 = ssub.s32 1, %s6
  %s9 = scalar_select 0, %s8, %s6
  $region1: #{_lambda_.27} parent=0
    #allocation2 [shape = 'u8[1024]{0}', space=vmem, size = 0x400, scoped, tag = 'output window, operand 0, single buffered']
    #allocation3 [shape = 's32[1]{0}', space=sflag, size = 0x4, scoped, tag = 'scoped memory for _lambda_.27']
    %10 = vsyncpa [#allocation3], 0
    // Predicated region
    $region2: #{_lambda_.27} parent=1 // pred_check
      _
    $region3: #{_lambda_.27} parent=1 // pred_check_branch
      %12 = sbr.rel (0) target = $region5
    $region4: #{_lambda_.27} parent=1 // pred_region
      _
    $region5: #{_lambda_.27} parent=1 // pred_fallthru
      _
    // Predicated region
    $region6: #{_lambda_.27} parent=1 // pred_check
      _
    $region7: #{_lambda_.27} parent=1 // pred_check_branch
      %14 = sbr.rel (0) target = $region9
    $region8: #{_lambda_.27} parent=1 // pred_region
      _
    $region9: #{_lambda_.27} parent=1 // pred_fallthru
      _
    // Predicated region
    $region10: #{_lambda_.27} parent=1 // pred_check
      _
    $region11: #{_lambda_.27} parent=1 // pred_check_branch
      %16 = sbr.rel (0) target = $region13
    $region12: #{_lambda_.27} parent=1 // pred_region
      _
    $region13: #{_lambda_.27} parent=1 // pred_fallthru
      _
    %v17 = vld [vmem:[%s0] sm:$0x3]
    %v18 = vld [vmem:[%s1] sm:$0xff]
    %v19 = vld [vmem:[%s1 + $0x8] sm:$0xff]
    %v20 = vld [vmem:[%s1 + $0x10] sm:$0xff]
    %v21 = vld [vmem:[%s1 + $0x18] sm:$0xff]
    %v22 = vld [vmem:[%s1 + $0x20] sm:$0xff]
    %v23 = vld [vmem:[%s1 + $0x28] sm:$0xff]
    %v24 = vld [vmem:[%s1 + $0x30] sm:$0xff]
    %v25 = vld [vmem:[%s1 + $0x38] sm:$0xff]
    %v26 = vld [vmem:[%s1 + $0x40] sm:$0xff]
    %v27 = vld [vmem:[%s1 + $0x48] sm:$0xff]
    %v28 = vld [vmem:[%s1 + $0x50] sm:$0xff]
    %v29 = vld [vmem:[%s1 + $0x58] sm:$0xff]
    %v30 = vld [vmem:[%s1 + $0x60] sm:$0xff]
    %v31 = vld [vmem:[%s1 + $0x68] sm:$0xff]
    %v32 = vld [vmem:[%s1 + $0x70] sm:$0xff]
    %v33 = vld [vmem:[%s1 + $0x78] sm:$0xff]
    %v34 = vld [vmem:[%s2] sm:$0x1]
    %v36 = vlaneseq
    %v37 = vshrl.u32 %v36, 7
    %v38 = vsub.s32 0, %v37
    %v39 = vrot.slane %v34, %v38
    %41 = vmatprep.subr.mxu0 0.0
    %42 = vmatpush1.msra.mxu0 %v33
    %43 = vmatprep.subr.mxu0 0.0
    %44 = vmatpush1.msra.mxu0 %v32
    %45 = vmatprep.subr.mxu0 0.0
    %46 = vmatpush1.msra.mxu0 %v31
    %47 = vmatprep.subr.mxu0 0.0
    %48 = vmatpush1.msra.mxu0 %v30
    %49 = vmatprep.subr.mxu0 0.0
    %50 = vmatpush1.msra.mxu0 %v29
    %51 = vmatprep.subr.mxu0 0.0
    %52 = vmatpush1.msra.mxu0 %v28
    %53 = vmatprep.subr.mxu0 0.0
    %54 = vmatpush1.msra.mxu0 %v27
    %55 = vmatprep.subr.mxu0 0.0
    %56 = vmatpush1.msra.mxu0 %v26
    %57 = vmatprep.subr.mxu0 0.0
    %58 = vmatpush1.msra.mxu0 %v25
    %59 = vmatprep.subr.mxu0 0.0
    %60 = vmatpush1.msra.mxu0 %v24
    %61 = vmatprep.subr.mxu0 0.0
    %62 = vmatpush1.msra.mxu0 %v23
    %63 = vmatprep.subr.mxu0 0.0
    %64 = vmatpush1.msra.mxu0 %v22
    %65 = vmatprep.subr.mxu0 0.0
    %66 = vmatpush1.msra.mxu0 %v21
    %67 = vmatprep.subr.mxu0 0.0
    %68 = vmatpush1.msra.mxu0 %v20
    %69 = vmatprep.subr.mxu0 0.0
    %70 = vmatpush1.msra.mxu0 %v19
    %71 = vmatprep.subr.mxu0 0.0
    %72 = vmatpush1.msra.mxu0 %v18
    %73 = vmatprep.subr.mxu0 0.0
    %74 = vmatpush2.msra.mxu0 0.0
    %75 = vmatprep.subr.mxu0 0.0
    %76 = vmatpush2.msra.mxu0 0.0
    %77 = vmatprep.subr.mxu0 0.0
    %78 = vmatpush2.msra.mxu0 0.0
    %79 = vmatprep.subr.mxu0 0.0
    %80 = vmatpush2.msra.mxu0 0.0
    %81 = vmatprep.subr.mxu0 0.0
    %82 = vmatpush2.msra.mxu0 0.0
    %83 = vmatprep.subr.mxu0 0.0
    %84 = vmatpush2.msra.mxu0 0.0
    %85 = vmatprep.subr.mxu0 0.0
    %86 = vmatpush2.msra.mxu0 0.0
    %87 = vmatprep.subr.mxu0 0.0
    %88 = vmatpush2.msra.mxu0 0.0
    %89 = vmatprep.subr.mxu0 0.0
    %90 = vmatpush2.msra.mxu0 0.0
    %91 = vmatprep.subr.mxu0 0.0
    %92 = vmatpush2.msra.mxu0 0.0
    %93 = vmatprep.subr.mxu0 0.0
    %94 = vmatpush2.msra.mxu0 0.0
    %95 = vmatprep.subr.mxu0 0.0
    %96 = vmatpush2.msra.mxu0 0.0
    %97 = vmatprep.subr.mxu0 0.0
    %98 = vmatpush2.msra.mxu0 0.0
    %99 = vmatprep.subr.mxu0 0.0
    %100 = vmatpush2.msra.mxu0 0.0
    %101 = vmatprep.subr.mxu0 0.0
    %102 = vmatpush2.msra.mxu0 0.0
    %103 = vmatprep.subr.mxu0 0.0
    %104 = vmatpush2.msra.mxu0 0.0
    %105 = vmatprep.mubr.f32.mxu0 0.0
    %106 = vmatmul.mubr.f32.gmra.mxu0 %v17
    %v107 = vpop.f32.mrf.mxu0
    %v108 = vadd.f32 %v39, %v107
    %v109 = vpop.f32.mrf.mxu0
    %110 = vdwg.mxu0
    %vm111 = vcmask 17408
    %112 = vst.msk [vmem:[#allocation2] sm:$0x3] %vm111, %v108
    %v113 = vadd.f32 %v108, 54.5
    %v114 = vsub.f32 %v113, 25.780682
    %v115 = vrcp.pop 5.7446284
    %v116 = vmul.f32 %v114, %v115
    %v117 = vceil.f32 %v116
    %vm118 = vcmp.le.f32.partialorder %v113, 25.780682
    %vm119 = vcmp.gt.f32.partialorder %v113, 83.22697
    %v120 = vsel %vm119, 11.0, %v117
    %v121 = vsel %vm118, 0.0, %v120
    %v122 = vcvt.f32.s32.to.zero.pseudo %v121
    %123 = vrot.lane.b32.xlu0 %v122, 126
    %v124 = vpop.permute.xlu0 %123
    %vm125 = vcmask 1024
    %126 = vst.msk [vmem:[%s4] sm:$0x3] %vm125, %v124
    // Predicated region
    $region14: #{_lambda_.27} parent=1 // pred_check
      _
    $region15: #{_lambda_.27} parent=1 // pred_check_branch
      %128 = sbr.rel (0) target = $region17
    $region16: #{_lambda_.27} parent=1 // pred_region
      %s130 = ssub.s32 32, 32
      %131 = vsyncadd [#allocation3], %s130
      %s133 = sshll.u32 [#allocation2], 4
      %s134 = int_to_ptr.vmem [resolvable:$true] %s133
      %136 = dma.vmem_to_hbm [thread:$0]  %s134, 32, %s3, [#allocation3]
    $region17: #{_lambda_.27} parent=1 // pred_fallthru
      _
    // Predicated region
    $region18: #{_lambda_.27} parent=1 // pred_check
      _
    $region19: #{_lambda_.27} parent=1 // pred_check_branch
      %138 = sbr.rel (0) target = $region21
    $region20: #{_lambda_.27} parent=1 // pred_region
      _
    $region21: #{_lambda_.27} parent=1 // pred_fallthru
      _
    // Predicated region
    $region22: #{_lambda_.27} parent=1 // pred_check
      _
    $region23: #{_lambda_.27} parent=1 // pred_check_branch
      %140 = sbr.rel (0) target = $region25
    $region24: #{_lambda_.27} parent=1 // pred_region
      %141 = dma.done [#allocation3], 32
    $region25: #{_lambda_.27} parent=1 // pred_fallthru
      _
    // Predicated region
    $region26: #{_lambda_.27} parent=1 // pred_check
      _
    $region27: #{_lambda_.27} parent=1 // pred_check_branch
      %143 = sbr.rel (0) target = $region29
    $region28: #{_lambda_.27} parent=1 // pred_region
      _
    $region29: #{_lambda_.27} parent=1 // pred_fallthru
      _
    %144 = vsyncpa [#allocation3], 1

</llo_original>
